<compile_context>
chip_gen: v5e
topology: v5e:2x2
jax: 0.10.0
libtpu: 0.0.40
codegen_flags: <defaults>
</compile_context>

<pallas_src>
import functools

import jax
import jax.numpy as jnp
import numpy as np
from jax.experimental import pallas as pl
from jax.experimental.pallas import tpu as pltpu

NUM_CLASSES = 6
OUT_PAD = 128   # lane-dense padded logit width
MAX_TN = 512    # point-tile cap


def _round_up(x, m):
    return (x + m - 1) // m * m


def _choose_tile(n):
    """Largest tile <= MAX_TN (multiple of 8) whose padding waste is <= 25% of N."""
    tn = min(MAX_TN, _round_up(n, 8))
    while tn > 8:
        if 4 * (_round_up(n, tn) - n) <= n:
            break
        tn //= 2
    return max(tn, 8)


# ----------------------------------------------------------------------------
# Fused kernel: grid = (B, 2, N_pad // TN), last axis fastest so pass 0 finishes
# before pass 1 for each batch element. Scratch persists across grid steps.
# ----------------------------------------------------------------------------
def seg_kernel(x_ref,
               w1_ref, b1_ref, w2_ref, b2_ref,
               w3_ref, b3_ref, w4_ref, b4_ref,
               w5l_ref, w5g_ref, b5_ref,
               w6_ref, b6_ref, w7_ref, b7_ref,
               w8_ref, b8_ref,
               out_ref, gmax_sc, gbias_sc,
               *, n_valid, tile_n, need_mask):
    p = pl.program_id(1)   # 0: mlp1+mlp2+running max, 1: mlp1(recompute)+mlp3
    j = pl.program_id(2)   # point-tile index

    bf16 = jnp.bfloat16
    x = x_ref[0].astype(bf16)           # (TN, 3)

    # mlp1 (needed in both passes): 3 -> 64 -> 64, conv1x1 + folded BN + ReLU.
    h = jnp.maximum(
        jnp.dot(x, w1_ref[...], preferred_element_type=jnp.float32) + b1_ref[...], 0.0)
    h = jnp.maximum(
        jnp.dot(h.astype(bf16), w2_ref[...],
                preferred_element_type=jnp.float32) + b2_ref[...], 0.0)
    h_bf = h.astype(bf16)               # (TN, 64) local point features

    @pl.when(jnp.logical_and(p == 0, j == 0))
    def _():
        # zeros init is valid because g below is post-ReLU (>= 0)
        gmax_sc[...] = jnp.zeros_like(gmax_sc)

    @pl.when(p == 0)
    def _():
        # mlp2: 64 -> 128 -> 1024, then running max over points.
        g = jnp.maximum(
            jnp.dot(h_bf, w3_ref[...],
                    preferred_element_type=jnp.float32) + b3_ref[...], 0.0)
        g = jnp.maximum(
            jnp.dot(g.astype(bf16), w4_ref[...],
                    preferred_element_type=jnp.float32) + b4_ref[...], 0.0)
        if need_mask:
            # Zero out padded rows so they never win the max (valid g >= 0).
            row = jax.lax.broadcasted_iota(jnp.int32, (tile_n, 1), 0)
            g = jnp.where(j * tile_n + row < n_valid, g, 0.0)
        gmax_sc[...] = jnp.maximum(gmax_sc[...], jnp.max(g, axis=0, keepdims=True))

    @pl.when(jnp.logical_and(p == 1, j == 0))
    def _():
        # Hoisted once per batch element: (1,1024)@(1024,512) global-feature branch.
        gbias_sc[...] = (
            jnp.dot(gmax_sc[...].astype(bf16), w5g_ref[...],
                    preferred_element_type=jnp.float32) + b5_ref[...])

    @pl.when(p == 1)
    def _():
        # mlp3 with the 1088->512 concat matmul rewritten as split-K:
        #   [h, g] @ W5 == h @ W5[:64] + (gmax @ W5[64:] + b5)  (2nd term precomputed above)
        z = jnp.maximum(
            jnp.dot(h_bf, w5l_ref[...],
                    preferred_element_type=jnp.float32) + gbias_sc[...], 0.0)
        z = jnp.maximum(
            jnp.dot(z.astype(bf16), w6_ref[...],
                    preferred_element_type=jnp.float32) + b6_ref[...], 0.0)
        z = jnp.maximum(
            jnp.dot(z.astype(bf16), w7_ref[...],
                    preferred_element_type=jnp.float32) + b7_ref[...], 0.0)
        out_ref[0] = (
            jnp.dot(z.astype(bf16), w8_ref[...],
                    preferred_element_type=jnp.float32) + b8_ref[...])


@jax.jit
def seg_forward(points, params):
    """points: (B, N, 3) float32 -> (B, N, NUM_CLASSES) float32."""
    B, N, _ = points.shape
    TN = _choose_tile(N)
    N_pad = _round_up(N, TN)
    nt = N_pad // TN
    if N_pad != N:
        points = jnp.pad(points, ((0, 0), (0, N_pad - N), (0, 0)))

    (w1, b1, w2, b2, w3, b3, w4, b4,
     w5l, w5g, b5, w6, b6, w7, b7, w8p, b8p) = params

    def rep(arr):  # whole-array block, replicated across the grid (fetched once)
        return pl.BlockSpec(arr.shape, lambda b, p, j: (0,) * arr.ndim)

    kernel = functools.partial(seg_kernel, n_valid=N, tile_n=TN,
                               need_mask=(N_pad != N))

    out_full = pl.pallas_call(
        kernel,
        out_shape=jax.ShapeDtypeStruct((B, N_pad, OUT_PAD), jnp.float32),
        grid_spec=pltpu.PrefetchScalarGridSpec(
            num_scalar_prefetch=0,
            grid=(B, 2, nt),
            in_specs=[
                pl.BlockSpec((1, TN, 3), lambda b, p, j: (b, j, 0)),
                rep(w1), rep(b1), rep(w2), rep(b2),
                rep(w3), rep(b3), rep(w4), rep(b4),
                rep(w5l), rep(w5g), rep(b5),
                rep(w6), rep(b6), rep(w7), rep(b7),
                rep(w8p), rep(b8p),
            ],
            # During p==0 the output block index is frozen at (b, 0): nothing is
            # flushed to HBM until pass 1 has written the real values.
            out_specs=pl.BlockSpec((1, TN, OUT_PAD), lambda b, p, j: (b, j * p, 0)),
            scratch_shapes=[
                pltpu.VMEM((1, 1024), jnp.float32),  # per-batch global max
                pltpu.VMEM((1, 512), jnp.float32),   # hoisted gmax @ w5g + b5
            ],
        ),
        compiler_params=pltpu.CompilerParams(
            dimension_semantics=("parallel", "arbitrary", "arbitrary"),
            vmem_limit_bytes=32 * 1024 * 1024,
        ),
    )(points, w1, b1, w2, b2, w3, b3, w4, b4,
      w5l, w5g, b5, w6, b6, w7, b7, w8p, b8p)

    return out_full[:, :N, :NUM_CLASSES]


# ----------------------------------------------------------------------------
# Deterministic parameter construction + BN folding (plain-JAX glue).
# ----------------------------------------------------------------------------
def _make_layer(key, cin, cout, with_bn):
    kw, kb, kg, kbeta, km, kv = jax.random.split(key, 6)
    w = 0.1 * jax.random.normal(kw, (cin, cout), jnp.float32)   # conv weight (Cin, Cout)
    b = 0.05 * jax.random.normal(kb, (cout,), jnp.float32)      # conv bias
    if with_bn:  # fold eval-mode BN into the conv
        eps = 1e-5
        gamma = 1.0 + 0.1 * jax.random.normal(kg, (cout,), jnp.float32)
        beta = 0.05 * jax.random.normal(kbeta, (cout,), jnp.float32)
        mean = 0.05 * jax.random.normal(km, (cout,), jnp.float32)
        var = 1.0 + 0.1 * jnp.abs(jax.random.normal(kv, (cout,), jnp.float32))
        scale = gamma / jnp.sqrt(var + eps)
        w = w * scale[None, :]
        b = (b - mean) * scale + beta
    return w, b.reshape(1, cout)


def make_params(key):
    keys = jax.random.split(key, 8)
    w1, b1 = _make_layer(keys[0], 3, 64, True)
    w2, b2 = _make_layer(keys[1], 64, 64, True)
    w3, b3 = _make_layer(keys[2], 64, 128, True)
    w4, b4 = _make_layer(keys[3], 128, 1024, True)
    w5, b5 = _make_layer(keys[4], 1088, 512, True)
    w6, b6 = _make_layer(keys[5], 512, 256, True)
    w7, b7 = _make_layer(keys[6], 256, 128, True)
    w8, b8 = _make_layer(keys[7], 128, NUM_CLASSES, False)     # final conv: no BN
    # split the 1088-wide concat weight into local (64) / global (1024) halves
    w5l, w5g = w5[:64, :], w5[64:, :]
    # lane-dense output: pad the final layer to 128 output channels
    w8p = jnp.zeros((128, OUT_PAD), jnp.float32).at[:, :NUM_CLASSES].set(w8)
    b8p = jnp.zeros((1, OUT_PAD), jnp.float32).at[:, :NUM_CLASSES].set(b8)
    bf = lambda t: t.astype(jnp.bfloat16)  # weights feed the MXU in bf16
    return (bf(w1), b1, bf(w2), b2, bf(w3), b3, bf(w4), b4,
            bf(w5l), bf(w5g), b5, bf(w6), b6, bf(w7), b7, bf(w8p), b8p)


def ref_forward(points, params):
    """Plain-JAX reference mirroring the kernel arithmetic (bf16 matmul inputs, f32 acc)."""
    (w1, b1, w2, b2, w3, b3, w4, b4,
     w5l, w5g, b5, w6, b6, w7, b7, w8p, b8p) = params
    bf16 = jnp.bfloat16
    relu = lambda t: jnp.maximum(t, 0.0)

    def lin(a, w, b):
        return jnp.dot(a.astype(bf16), w, preferred_element_type=jnp.float32) + b

    h = relu(lin(points, w1, b1))
    h = relu(lin(h, w2, b2))                       # local feats (B, N, 64)
    g = relu(lin(h, w3, b3))
    g = relu(lin(g, w4, b4))                       # (B, N, 1024)
    gmax = jnp.max(g, axis=1, keepdims=True)       # (B, 1, 1024)
    gbias = lin(gmax, w5g, b5)                     # (B, 1, 512) hoisted global branch
    z = relu(jnp.dot(h.astype(bf16), w5l, preferred_element_type=jnp.float32) + gbias)
    z = relu(lin(z, w6, b6))
    z = relu(lin(z, w7, b7))
    out = lin(z, w8p, b8p)                         # (B, N, 128)
    return out[..., :NUM_CLASSES]


if __name__ == "__main__":
    key = jax.random.PRNGKey(0)
    kpts, kparams = jax.random.split(key)
    params = make_params(kparams)

    # (divisible N), (non-divisible N -> padding + in-kernel mask), (multi-tile N)
    for (B, N) in ((2, 256), (2, 250), (1, 1024)):
        pts = jax.random.normal(jax.random.fold_in(kpts, N), (B, N, 3), jnp.float32)
        out = jax.block_until_ready(seg_forward(pts, params))
        ref = jax.block_until_ready(ref_forward(pts, params))
        assert out.shape == (B, N, NUM_CLASSES), out.shape
        np.testing.assert_allclose(np.asarray(out), np.asarray(ref), rtol=1e-2, atol=1e-2)

    print("KERNEL_OK")
</pallas_src>

<mosaic_0001>
module attributes {stable_mosaic.version = 11 : i64} {
  func.func @seg_kernel(%arg0: i32, %arg1: i32, %arg2: i32, %arg3: memref<1x256x3xf32, #tpu.memory_space<vmem>>, %arg4: memref<3x64xbf16, #tpu.memory_space<vmem>>, %arg5: memref<1x64xf32, #tpu.memory_space<vmem>>, %arg6: memref<64x64xbf16, #tpu.memory_space<vmem>>, %arg7: memref<1x64xf32, #tpu.memory_space<vmem>>, %arg8: memref<64x128xbf16, #tpu.memory_space<vmem>>, %arg9: memref<1x128xf32, #tpu.memory_space<vmem>>, %arg10: memref<128x1024xbf16, #tpu.memory_space<vmem>>, %arg11: memref<1x1024xf32, #tpu.memory_space<vmem>>, %arg12: memref<64x512xbf16, #tpu.memory_space<vmem>>, %arg13: memref<1024x512xbf16, #tpu.memory_space<vmem>>, %arg14: memref<1x512xf32, #tpu.memory_space<vmem>>, %arg15: memref<512x256xbf16, #tpu.memory_space<vmem>>, %arg16: memref<1x256xf32, #tpu.memory_space<vmem>>, %arg17: memref<256x128xbf16, #tpu.memory_space<vmem>>, %arg18: memref<1x128xf32, #tpu.memory_space<vmem>>, %arg19: memref<128x128xbf16, #tpu.memory_space<vmem>>, %arg20: memref<1x128xf32, #tpu.memory_space<vmem>>, %arg21: memref<1x256x128xf32, #tpu.memory_space<vmem>>, %arg22: memref<1x1024xf32, #tpu.memory_space<vmem>>, %arg23: memref<1x512xf32, #tpu.memory_space<vmem>>) attributes {dimension_semantics = [#tpu.dimension_semantics<parallel>, #tpu.dimension_semantics<arbitrary>, #tpu.dimension_semantics<arbitrary>], iteration_bounds = array<i64: 2, 2, 1>, scalar_prefetch = 0 : i64, scratch_operands = 2 : i64, tpu.core_type = #tpu.core_type<tc>, window_params = [{transform_indices = @transform_0, window_bounds = array<i64: 1, 256, 3>}, {pipeline_mode = #tpu.pipeline_mode<synchronous>, transform_indices = @transform_1, window_bounds = array<i64: 3, 64>}, {pipeline_mode = #tpu.pipeline_mode<synchronous>, transform_indices = @transform_2, window_bounds = array<i64: 1, 64>}, {pipeline_mode = #tpu.pipeline_mode<synchronous>, transform_indices = @transform_3, window_bounds = array<i64: 64, 64>}, {pipeline_mode = #tpu.pipeline_mode<synchronous>, transform_indices = @transform_4, window_bounds = array<i64: 1, 64>}, {pipeline_mode = #tpu.pipeline_mode<synchronous>, transform_indices = @transform_5, window_bounds = array<i64: 64, 128>}, {pipeline_mode = #tpu.pipeline_mode<synchronous>, transform_indices = @transform_6, window_bounds = array<i64: 1, 128>}, {pipeline_mode = #tpu.pipeline_mode<synchronous>, transform_indices = @transform_7, window_bounds = array<i64: 128, 1024>}, {pipeline_mode = #tpu.pipeline_mode<synchronous>, transform_indices = @transform_8, window_bounds = array<i64: 1, 1024>}, {pipeline_mode = #tpu.pipeline_mode<synchronous>, transform_indices = @transform_9, window_bounds = array<i64: 64, 512>}, {pipeline_mode = #tpu.pipeline_mode<synchronous>, transform_indices = @transform_10, window_bounds = array<i64: 1024, 512>}, {pipeline_mode = #tpu.pipeline_mode<synchronous>, transform_indices = @transform_11, window_bounds = array<i64: 1, 512>}, {pipeline_mode = #tpu.pipeline_mode<synchronous>, transform_indices = @transform_12, window_bounds = array<i64: 512, 256>}, {pipeline_mode = #tpu.pipeline_mode<synchronous>, transform_indices = @transform_13, window_bounds = array<i64: 1, 256>}, {pipeline_mode = #tpu.pipeline_mode<synchronous>, transform_indices = @transform_14, window_bounds = array<i64: 256, 128>}, {pipeline_mode = #tpu.pipeline_mode<synchronous>, transform_indices = @transform_15, window_bounds = array<i64: 1, 128>}, {pipeline_mode = #tpu.pipeline_mode<synchronous>, transform_indices = @transform_16, window_bounds = array<i64: 128, 128>}, {pipeline_mode = #tpu.pipeline_mode<synchronous>, transform_indices = @transform_17, window_bounds = array<i64: 1, 128>}, {transform_indices = @transform_18, window_bounds = array<i64: 1, 256, 128>}]} {
    %c0 = arith.constant 0 : index
    %c0_0 = arith.constant 0 : index
    %c0_1 = arith.constant 0 : index
    %0 = vector.load %arg3[%c0, %c0_0, %c0_1] : memref<1x256x3xf32, #tpu.memory_space<vmem>>, vector<1x256x3xf32>
    %1 = vector.shape_cast %0 : vector<1x256x3xf32> to vector<256x3xf32>
    %2 = arith.truncf %1 : vector<256x3xf32> to vector<256x3xbf16>
    %c0_2 = arith.constant 0 : index
    %c0_3 = arith.constant 0 : index
    %3 = vector.load %arg4[%c0_2, %c0_3] : memref<3x64xbf16, #tpu.memory_space<vmem>>, vector<3x64xbf16>
    %cst = arith.constant dense<0.000000e+00> : vector<256x64xf32>
    %4 = tpu.matmul %2, %3, %cst {dimension_numbers = #tpu.dot_dimension_numbers<[1], [0], [0], [1], [0, 0, 1, 1], [], []>} : vector<256x3xbf16>, vector<3x64xbf16>, vector<256x64xf32> -> vector<256x64xf32>
    %c0_4 = arith.constant 0 : index
    %c0_5 = arith.constant 0 : index
    %5 = vector.load %arg5[%c0_4, %c0_5] : memref<1x64xf32, #tpu.memory_space<vmem>>, vector<1x64xf32>
    %6 = vector.broadcast %5 : vector<1x64xf32> to vector<256x64xf32>
    %7 = arith.addf %4, %6 : vector<256x64xf32>
    %cst_6 = arith.constant 0.000000e+00 : f32
    %8 = vector.broadcast %cst_6 : f32 to vector<256x64xf32>
    %9 = arith.maximumf %7, %8 : vector<256x64xf32>
    %10 = arith.truncf %9 : vector<256x64xf32> to vector<256x64xbf16>
    %c0_7 = arith.constant 0 : index
    %c0_8 = arith.constant 0 : index
    %11 = vector.load %arg6[%c0_7, %c0_8] : memref<64x64xbf16, #tpu.memory_space<vmem>>, vector<64x64xbf16>
    %cst_9 = arith.constant dense<0.000000e+00> : vector<256x64xf32>
    %12 = tpu.matmul %10, %11, %cst_9 {dimension_numbers = #tpu.dot_dimension_numbers<[1], [0], [0], [1], [0, 0, 1, 1], [], []>} : vector<256x64xbf16>, vector<64x64xbf16>, vector<256x64xf32> -> vector<256x64xf32>
    %c0_10 = arith.constant 0 : index
    %c0_11 = arith.constant 0 : index
    %13 = vector.load %arg7[%c0_10, %c0_11] : memref<1x64xf32, #tpu.memory_space<vmem>>, vector<1x64xf32>
    %14 = vector.broadcast %13 : vector<1x64xf32> to vector<256x64xf32>
    %15 = arith.addf %12, %14 : vector<256x64xf32>
    %cst_12 = arith.constant 0.000000e+00 : f32
    %16 = vector.broadcast %cst_12 : f32 to vector<256x64xf32>
    %17 = arith.maximumf %15, %16 : vector<256x64xf32>
    %18 = arith.truncf %17 : vector<256x64xf32> to vector<256x64xbf16>
    %c0_i32 = arith.constant 0 : i32
    %19 = arith.cmpi eq, %arg1, %c0_i32 : i32
    %c0_i32_13 = arith.constant 0 : i32
    %20 = arith.cmpi eq, %arg2, %c0_i32_13 : i32
    %21 = arith.andi %19, %20 : i1
    %22 = arith.extui %21 : i1 to i32
    %c0_i32_14 = arith.constant 0 : i32
    %23 = arith.cmpi ne, %22, %c0_i32_14 : i32
    scf.if %23 {
      %cst_21 = arith.constant 0.000000e+00 : f32
      %35 = vector.broadcast %cst_21 : f32 to vector<1x1024xf32>
      %c0_22 = arith.constant 0 : index
      %c0_23 = arith.constant 0 : index
      %36 = vector.load %arg22[%c0_22, %c0_23] : memref<1x1024xf32, #tpu.memory_space<vmem>>, vector<1x1024xf32>
      tpu.vector_store %arg22[%c0_22, %c0_23], %35 {strides = array<i32>} : memref<1x1024xf32, #tpu.memory_space<vmem>>, vector<1x1024xf32>,
    } else {
    }
    %c0_i32_15 = arith.constant 0 : i32
    %24 = arith.cmpi eq, %arg1, %c0_i32_15 : i32
    %25 = arith.extui %24 : i1 to i32
    %c0_i32_16 = arith.constant 0 : i32
    %26 = arith.cmpi ne, %25, %c0_i32_16 : i32
    scf.if %26 {
      %c0_21 = arith.constant 0 : index
      %c0_22 = arith.constant 0 : index
      %35 = vector.load %arg8[%c0_21, %c0_22] : memref<64x128xbf16, #tpu.memory_space<vmem>>, vector<64x128xbf16>
      %cst_23 = arith.constant dense<0.000000e+00> : vector<256x128xf32>
      %36 = tpu.matmul %18, %35, %cst_23 {dimension_numbers = #tpu.dot_dimension_numbers<[1], [0], [0], [1], [0, 0, 1, 1], [], []>} : vector<256x64xbf16>, vector<64x128xbf16>, vector<256x128xf32> -> vector<256x128xf32>
      %c0_24 = arith.constant 0 : index
      %c0_25 = arith.constant 0 : index
      %37 = vector.load %arg9[%c0_24, %c0_25] : memref<1x128xf32, #tpu.memory_space<vmem>>, vector<1x128xf32>
      %38 = vector.broadcast %37 : vector<1x128xf32> to vector<256x128xf32>
      %39 = arith.addf %36, %38 : vector<256x128xf32>
      %cst_26 = arith.constant 0.000000e+00 : f32
      %40 = vector.broadcast %cst_26 : f32 to vector<256x128xf32>
      %41 = arith.maximumf %39, %40 : vector<256x128xf32>
      %42 = arith.truncf %41 : vector<256x128xf32> to vector<256x128xbf16>
      %c0_27 = arith.constant 0 : index
      %c0_28 = arith.constant 0 : index
      %43 = vector.load %arg10[%c0_27, %c0_28] : memref<128x1024xbf16, #tpu.memory_space<vmem>>, vector<128x1024xbf16>
      %cst_29 = arith.constant dense<0.000000e+00> : vector<256x1024xf32>
      %44 = tpu.matmul %42, %43, %cst_29 {dimension_numbers = #tpu.dot_dimension_numbers<[1], [0], [0], [1], [0, 0, 1, 1], [], []>} : vector<256x128xbf16>, vector<128x1024xbf16>, vector<256x1024xf32> -> vector<256x1024xf32>
      %c0_30 = arith.constant 0 : index
      %c0_31 = arith.constant 0 : index
      %45 = vector.load %arg11[%c0_30, %c0_31] : memref<1x1024xf32, #tpu.memory_space<vmem>>, vector<1x1024xf32>
      %46 = vector.broadcast %45 : vector<1x1024xf32> to vector<256x1024xf32>
      %47 = arith.addf %44, %46 : vector<256x1024xf32>
      %cst_32 = arith.constant 0.000000e+00 : f32
      %48 = vector.broadcast %cst_32 : f32 to vector<256x1024xf32>
      %49 = arith.maximumf %47, %48 : vector<256x1024xf32>
      %c0_33 = arith.constant 0 : index
      %c0_34 = arith.constant 0 : index
      %50 = vector.load %arg22[%c0_33, %c0_34] : memref<1x1024xf32, #tpu.memory_space<vmem>>, vector<1x1024xf32>
      %cst_35 = arith.constant dense<0xFF800000> : vector<1024xf32>
      %51 = vector.multi_reduction <maximumf>, %49, %cst_35 [0] : vector<256x1024xf32> to vector<1024xf32>
      %52 = vector.shape_cast %51 : vector<1024xf32> to vector<1x1024xf32>
      %53 = arith.maximumf %50, %52 : vector<1x1024xf32>
      %c0_36 = arith.constant 0 : index
      %c0_37 = arith.constant 0 : index
      %54 = vector.load %arg22[%c0_36, %c0_37] : memref<1x1024xf32, #tpu.memory_space<vmem>>, vector<1x1024xf32>
      tpu.vector_store %arg22[%c0_36, %c0_37], %53 {strides = array<i32>} : memref<1x1024xf32, #tpu.memory_space<vmem>>, vector<1x1024xf32>,
    } else {
    }
    %c1_i32 = arith.constant 1 : i32
    %27 = arith.cmpi eq, %arg1, %c1_i32 : i32
    %c0_i32_17 = arith.constant 0 : i32
    %28 = arith.cmpi eq, %arg2, %c0_i32_17 : i32
    %29 = arith.andi %27, %28 : i1
    %30 = arith.extui %29 : i1 to i32
    %c0_i32_18 = arith.constant 0 : i32
    %31 = arith.cmpi ne, %30, %c0_i32_18 : i32
    scf.if %31 {
      %c0_21 = arith.constant 0 : index
      %c0_22 = arith.constant 0 : index
      %35 = vector.load %arg22[%c0_21, %c0_22] : memref<1x1024xf32, #tpu.memory_space<vmem>>, vector<1x1024xf32>
      %36 = arith.truncf %35 : vector<1x1024xf32> to vector<1x1024xbf16>
      %c0_23 = arith.constant 0 : index
      %c0_24 = arith.constant 0 : index
      %37 = vector.load %arg13[%c0_23, %c0_24] : memref<1024x512xbf16, #tpu.memory_space<vmem>>, vector<1024x512xbf16>
      %cst_25 = arith.constant dense<0.000000e+00> : vector<1x512xf32>
      %38 = tpu.matmul %36, %37, %cst_25 {dimension_numbers = #tpu.dot_dimension_numbers<[1], [0], [0], [1], [0, 0, 1, 1], [], []>} : vector<1x1024xbf16>, vector<1024x512xbf16>, vector<1x512xf32> -> vector<1x512xf32>
      %c0_26 = arith.constant 0 : index
      %c0_27 = arith.constant 0 : index
      %39 = vector.load %arg14[%c0_26, %c0_27] : memref<1x512xf32, #tpu.memory_space<vmem>>, vector<1x512xf32>
      %40 = arith.addf %38, %39 : vector<1x512xf32>
      %c0_28 = arith.constant 0 : index
      %c0_29 = arith.constant 0 : index
      %41 = vector.load %arg23[%c0_28, %c0_29] : memref<1x512xf32, #tpu.memory_space<vmem>>, vector<1x512xf32>
      tpu.vector_store %arg23[%c0_28, %c0_29], %40 {strides = array<i32>} : memref<1x512xf32, #tpu.memory_space<vmem>>, vector<1x512xf32>,
    } else {
    }
    %c1_i32_19 = arith.constant 1 : i32
    %32 = arith.cmpi eq, %arg1, %c1_i32_19 : i32
    %33 = arith.extui %32 : i1 to i32
    %c0_i32_20 = arith.constant 0 : i32
    %34 = arith.cmpi ne, %33, %c0_i32_20 : i32
    scf.if %34 {
      %c0_21 = arith.constant 0 : index
      %c0_22 = arith.constant 0 : index
      %35 = vector.load %arg12[%c0_21, %c0_22] : memref<64x512xbf16, #tpu.memory_space<vmem>>, vector<64x512xbf16>
      %cst_23 = arith.constant dense<0.000000e+00> : vector<256x512xf32>
      %36 = tpu.matmul %18, %35, %cst_23 {dimension_numbers = #tpu.dot_dimension_numbers<[1], [0], [0], [1], [0, 0, 1, 1], [], []>} : vector<256x64xbf16>, vector<64x512xbf16>, vector<256x512xf32> -> vector<256x512xf32>
      %c0_24 = arith.constant 0 : index
      %c0_25 = arith.constant 0 : index
      %37 = vector.load %arg23[%c0_24, %c0_25] : memref<1x512xf32, #tpu.memory_space<vmem>>, vector<1x512xf32>
      %38 = vector.broadcast %37 : vector<1x512xf32> to vector<256x512xf32>
      %39 = arith.addf %36, %38 : vector<256x512xf32>
      %cst_26 = arith.constant 0.000000e+00 : f32
      %40 = vector.broadcast %cst_26 : f32 to vector<256x512xf32>
      %41 = arith.maximumf %39, %40 : vector<256x512xf32>
      %42 = arith.truncf %41 : vector<256x512xf32> to vector<256x512xbf16>
      %c0_27 = arith.constant 0 : index
      %c0_28 = arith.constant 0 : index
      %43 = vector.load %arg15[%c0_27, %c0_28] : memref<512x256xbf16, #tpu.memory_space<vmem>>, vector<512x256xbf16>
      %cst_29 = arith.constant dense<0.000000e+00> : vector<256x256xf32>
      %44 = tpu.matmul %42, %43, %cst_29 {dimension_numbers = #tpu.dot_dimension_numbers<[1], [0], [0], [1], [0, 0, 1, 1], [], []>} : vector<256x512xbf16>, vector<512x256xbf16>, vector<256x256xf32> -> vector<256x256xf32>
      %c0_30 = arith.constant 0 : index
      %c0_31 = arith.constant 0 : index
      %45 = vector.load %arg16[%c0_30, %c0_31] : memref<1x256xf32, #tpu.memory_space<vmem>>, vector<1x256xf32>
      %46 = vector.broadcast %45 : vector<1x256xf32> to vector<256x256xf32>
      %47 = arith.addf %44, %46 : vector<256x256xf32>
      %cst_32 = arith.constant 0.000000e+00 : f32
      %48 = vector.broadcast %cst_32 : f32 to vector<256x256xf32>
      %49 = arith.maximumf %47, %48 : vector<256x256xf32>
      %50 = arith.truncf %49 : vector<256x256xf32> to vector<256x256xbf16>
      %c0_33 = arith.constant 0 : index
      %c0_34 = arith.constant 0 : index
      %51 = vector.load %arg17[%c0_33, %c0_34] : memref<256x128xbf16, #tpu.memory_space<vmem>>, vector<256x128xbf16>
      %cst_35 = arith.constant dense<0.000000e+00> : vector<256x128xf32>
      %52 = tpu.matmul %50, %51, %cst_35 {dimension_numbers = #tpu.dot_dimension_numbers<[1], [0], [0], [1], [0, 0, 1, 1], [], []>} : vector<256x256xbf16>, vector<256x128xbf16>, vector<256x128xf32> -> vector<256x128xf32>
      %c0_36 = arith.constant 0 : index
      %c0_37 = arith.constant 0 : index
      %53 = vector.load %arg18[%c0_36, %c0_37] : memref<1x128xf32, #tpu.memory_space<vmem>>, vector<1x128xf32>
      %54 = vector.broadcast %53 : vector<1x128xf32> to vector<256x128xf32>
      %55 = arith.addf %52, %54 : vector<256x128xf32>
      %cst_38 = arith.constant 0.000000e+00 : f32
      %56 = vector.broadcast %cst_38 : f32 to vector<256x128xf32>
      %57 = arith.maximumf %55, %56 : vector<256x128xf32>
      %58 = arith.truncf %57 : vector<256x128xf32> to vector<256x128xbf16>
      %c0_39 = arith.constant 0 : index
      %c0_40 = arith.constant 0 : index
      %59 = vector.load %arg19[%c0_39, %c0_40] : memref<128x128xbf16, #tpu.memory_space<vmem>>, vector<128x128xbf16>
      %cst_41 = arith.constant dense<0.000000e+00> : vector<256x128xf32>
      %60 = tpu.matmul %58, %59, %cst_41 {dimension_numbers = #tpu.dot_dimension_numbers<[1], [0], [0], [1], [0, 0, 1, 1], [], []>} : vector<256x128xbf16>, vector<128x128xbf16>, vector<256x128xf32> -> vector<256x128xf32>
      %c0_42 = arith.constant 0 : index
      %c0_43 = arith.constant 0 : index
      %61 = vector.load %arg20[%c0_42, %c0_43] : memref<1x128xf32, #tpu.memory_space<vmem>>, vector<1x128xf32>
      %62 = vector.broadcast %61 : vector<1x128xf32> to vector<256x128xf32>
      %63 = arith.addf %60, %62 : vector<256x128xf32>
      %c0_44 = arith.constant 0 : index
      %c0_45 = arith.constant 0 : index
      %c0_46 = arith.constant 0 : index
      %64 = vector.load %arg21[%c0_44, %c0_45, %c0_46] : memref<1x256x128xf32, #tpu.memory_space<vmem>>, vector<1x256x128xf32>
      %65 = vector.shape_cast %64 : vector<1x256x128xf32> to vector<256x128xf32>
      %66 = vector.shape_cast %63 : vector<256x128xf32> to vector<1x256x128xf32>
      tpu.vector_store %arg21[%c0_44, %c0_45, %c0_46], %66 {strides = array<i32>} : memref<1x256x128xf32, #tpu.memory_space<vmem>>, vector<1x256x128xf32>,
    } else {
    }
    return
  }
  func.func @transform_0(%arg0: i32, %arg1: i32, %arg2: i32) -> (i32, i32, i32) {
    %c0_i32 = arith.constant 0 : i32
    %c0_i32_0 = arith.constant 0 : i32
    return %arg0, %arg2, %c0_i32 : i32, i32, i32
  }
  func.func @transform_1(%arg0: i32, %arg1: i32, %arg2: i32) -> (i32, i32) {
    %c0_i32 = arith.constant 0 : i32
    %c0_i32_0 = arith.constant 0 : i32
    %c0_i32_1 = arith.constant 0 : i32
    return %c0_i32, %c0_i32_0 : i32, i32
  }
  func.func @transform_2(%arg0: i32, %arg1: i32, %arg2: i32) -> (i32, i32) {
    %c0_i32 = arith.constant 0 : i32
    %c0_i32_0 = arith.constant 0 : i32
    %c0_i32_1 = arith.constant 0 : i32
    return %c0_i32, %c0_i32_0 : i32, i32
  }
  func.func @transform_3(%arg0: i32, %arg1: i32, %arg2: i32) -> (i32, i32) {
    %c0_i32 = arith.constant 0 : i32
    %c0_i32_0 = arith.constant 0 : i32
    %c0_i32_1 = arith.constant 0 : i32
    return %c0_i32, %c0_i32_0 : i32, i32
  }
  func.func @transform_4(%arg0: i32, %arg1: i32, %arg2: i32) -> (i32, i32) {
    %c0_i32 = arith.constant 0 : i32
    %c0_i32_0 = arith.constant 0 : i32
    %c0_i32_1 = arith.constant 0 : i32
    return %c0_i32, %c0_i32_0 : i32, i32
  }
  func.func @transform_5(%arg0: i32, %arg1: i32, %arg2: i32) -> (i32, i32) {
    %c0_i32 = arith.constant 0 : i32
    %c0_i32_0 = arith.constant 0 : i32
    %c0_i32_1 = arith.constant 0 : i32
    return %c0_i32, %c0_i32_0 : i32, i32
  }
  func.func @transform_6(%arg0: i32, %arg1: i32, %arg2: i32) -> (i32, i32) {
    %c0_i32 = arith.constant 0 : i32
    %c0_i32_0 = arith.constant 0 : i32
    %c0_i32_1 = arith.constant 0 : i32
    return %c0_i32, %c0_i32_0 : i32, i32
  }
  func.func @transform_7(%arg0: i32, %arg1: i32, %arg2: i32) -> (i32, i32) {
    %c0_i32 = arith.constant 0 : i32
    %c0_i32_0 = arith.constant 0 : i32
    %c0_i32_1 = arith.constant 0 : i32
    return %c0_i32, %c0_i32_0 : i32, i32
  }
  func.func @transform_8(%arg0: i32, %arg1: i32, %arg2: i32) -> (i32, i32) {
    %c0_i32 = arith.constant 0 : i32
    %c0_i32_0 = arith.constant 0 : i32
    %c0_i32_1 = arith.constant 0 : i32
    return %c0_i32, %c0_i32_0 : i32, i32
  }
  func.func @transform_9(%arg0: i32, %arg1: i32, %arg2: i32) -> (i32, i32) {
    %c0_i32 = arith.constant 0 : i32
    %c0_i32_0 = arith.constant 0 : i32
    %c0_i32_1 = arith.constant 0 : i32
    return %c0_i32, %c0_i32_0 : i32, i32
  }
  func.func @transform_10(%arg0: i32, %arg1: i32, %arg2: i32) -> (i32, i32) {
    %c0_i32 = arith.constant 0 : i32
    %c0_i32_0 = arith.constant 0 : i32
    %c0_i32_1 = arith.constant 0 : i32
    return %c0_i32, %c0_i32_0 : i32, i32
  }
  func.func @transform_11(%arg0: i32, %arg1: i32, %arg2: i32) -> (i32, i32) {
    %c0_i32 = arith.constant 0 : i32
    %c0_i32_0 = arith.constant 0 : i32
    %c0_i32_1 = arith.constant 0 : i32
    return %c0_i32, %c0_i32_0 : i32, i32
  }
  func.func @transform_12(%arg0: i32, %arg1: i32, %arg2: i32) -> (i32, i32) {
    %c0_i32 = arith.constant 0 : i32
    %c0_i32_0 = arith.constant 0 : i32
    %c0_i32_1 = arith.constant 0 : i32
    return %c0_i32, %c0_i32_0 : i32, i32
  }
  func.func @transform_13(%arg0: i32, %arg1: i32, %arg2: i32) -> (i32, i32) {
    %c0_i32 = arith.constant 0 : i32
    %c0_i32_0 = arith.constant 0 : i32
    %c0_i32_1 = arith.constant 0 : i32
    return %c0_i32, %c0_i32_0 : i32, i32
  }
  func.func @transform_14(%arg0: i32, %arg1: i32, %arg2: i32) -> (i32, i32) {
    %c0_i32 = arith.constant 0 : i32
    %c0_i32_0 = arith.constant 0 : i32
    %c0_i32_1 = arith.constant 0 : i32
    return %c0_i32, %c0_i32_0 : i32, i32
  }
  func.func @transform_15(%arg0: i32, %arg1: i32, %arg2: i32) -> (i32, i32) {
    %c0_i32 = arith.constant 0 : i32
    %c0_i32_0 = arith.constant 0 : i32
    %c0_i32_1 = arith.constant 0 : i32
    return %c0_i32, %c0_i32_0 : i32, i32
  }
  func.func @transform_16(%arg0: i32, %arg1: i32, %arg2: i32) -> (i32, i32) {
    %c0_i32 = arith.constant 0 : i32
    %c0_i32_0 = arith.constant 0 : i32
    %c0_i32_1 = arith.constant 0 : i32
    return %c0_i32, %c0_i32_0 : i32, i32
  }
  func.func @transform_17(%arg0: i32, %arg1: i32, %arg2: i32) -> (i32, i32) {
    %c0_i32 = arith.constant 0 : i32
    %c0_i32_0 = arith.constant 0 : i32
    %c0_i32_1 = arith.constant 0 : i32
    return %c0_i32, %c0_i32_0 : i32, i32
  }
  func.func @transform_18(%arg0: i32, %arg1: i32, %arg2: i32) -> (i32, i32, i32) {
    %0 = arith.muli %arg2, %arg1 : i32
    %c0_i32 = arith.constant 0 : i32
    %c0_i32_0 = arith.constant 0 : i32
    return %arg0, %0, %c0_i32 : i32, i32, i32
  }
}

</mosaic_0001>

<llo_original>
// kernel: seg_forward.1
$region0: #{seg_forward.1}
  #allocation0 [shape = 'u32[]', space=smem, size = 0x4, offset = 0x4, fixed_abs, tag = 'smem constant byte address 0x4 - core index']
  #allocation1 [shape = 'u32[72,128]{1,0:T(1,128)}', space=vmem, size = 0x9000, scoped, tag = 'internal scratch']
  #allocation2 [shape = 'f32[1,1024]{1,0:T(1,128)}', space=vmem, size = 0x1000, scoped, tag = 'scratch operand']
  #allocation3 [shape = 'f32[1,512]{1,0:T(1,128)}', space=vmem, size = 0x800, scoped, tag = 'scratch operand']
  %s0 = inlined_call_operand.vmem [shape: f32[2,256,3], index: 0, kind: input, shape index: {}]
  %s1 = inlined_call_operand.vmem [shape: bf16[3,64], index: 1, kind: input, shape index: {}]
  %s2 = inlined_call_operand.vmem [shape: f32[1,64], index: 2, kind: input, shape index: {}]
  %s3 = inlined_call_operand.hbm [shape: bf16[64,64], index: 3, kind: input, shape index: {}]
  %s4 = inlined_call_operand.vmem [shape: f32[1,64], index: 4, kind: input, shape index: {}]
  %s5 = inlined_call_operand.hbm [shape: bf16[64,128], index: 5, kind: input, shape index: {}]
  %s6 = inlined_call_operand.hbm [shape: f32[1,128], index: 6, kind: input, shape index: {}]
  %s7 = inlined_call_operand.vmem [shape: bf16[128,1024], index: 7, kind: input, shape index: {}]
  %s8 = inlined_call_operand.vmem [shape: f32[1,1024], index: 8, kind: input, shape index: {}]
  %s9 = inlined_call_operand.hbm [shape: bf16[64,512], index: 9, kind: input, shape index: {}]
  %s10 = inlined_call_operand.hbm [shape: bf16[1024,512], index: 10, kind: input, shape index: {}]
  %s11 = inlined_call_operand.vmem [shape: f32[1,512], index: 11, kind: input, shape index: {}]
  %s12 = inlined_call_operand.hbm [shape: bf16[512,256], index: 12, kind: input, shape index: {}]
  %s13 = inlined_call_operand.vmem [shape: f32[1,256], index: 13, kind: input, shape index: {}]
  %s14 = inlined_call_operand.hbm [shape: bf16[256,128], index: 14, kind: input, shape index: {}]
  %s15 = inlined_call_operand.vmem [shape: f32[1,128], index: 15, kind: input, shape index: {}]
  %s16 = inlined_call_operand.hbm [shape: bf16[128,128], index: 16, kind: input, shape index: {}]
  %s17 = inlined_call_operand.vmem [shape: f32[1,128], index: 17, kind: input, shape index: {}]
  %s18 = inlined_call_operand.vmem [shape: f32[2,256,128], index: 18, kind: output, shape index: {}]
  %s19 = sld [smem:[#allocation0]]
  $region153: #{seg_forward.1} parent=0
    _
  %s21 = ssub.s32 1, %s19
  %s22 = scalar_select 0, %s21, %s19
  $region1: #{seg_forward.1} parent=0
    #allocation4 [shape = 'u8[16384]{0}', space=vmem, size = 0x4000, scoped, tag = 'input window, operand 3, single buffered']
    #allocation5 [shape = 's32[2]{0}', space=sflag, size = 0x8, scoped, tag = 'scoped memory for seg_forward.1']
    #allocation6 [shape = 'u8[16384]{0}', space=vmem, size = 0x4000, scoped, tag = 'input window, operand 5, single buffered']
    #allocation7 [shape = 's32[1]{0}', space=sflag, size = 0x4, scoped, tag = 'scoped memory for seg_forward.1']
    #allocation8 [shape = 'u8[512]{0}', space=vmem, size = 0x400, scoped, tag = 'input window, operand 6, single buffered']
    #allocation9 [shape = 'u8[65536]{0}', space=vmem, size = 0x10000, scoped, tag = 'input window, operand 9, single buffered']
    #allocation10 [shape = 's32[1]{0}', space=sflag, size = 0x4, scoped, tag = 'scoped memory for seg_forward.1']
    #allocation11 [shape = 'u8[1048576]{0}', space=vmem, size = 0x100000, scoped, tag = 'input window, operand 10, single buffered']
    #allocation12 [shape = 'u8[262144]{0}', space=vmem, size = 0x40000, scoped, tag = 'input window, operand 12, single buffered']
    #allocation13 [shape = 's32[1]{0}', space=sflag, size = 0x4, scoped, tag = 'scoped memory for seg_forward.1']
    #allocation14 [shape = 'u8[65536]{0}', space=vmem, size = 0x10000, scoped, tag = 'input window, operand 14, single buffered']
    #allocation15 [shape = 'u8[32768]{0}', space=vmem, size = 0x8000, scoped, tag = 'input window, operand 16, single buffered']
    #allocation16 [shape = 's32[1]{0}', space=sflag, size = 0x4, scoped, tag = 'scoped memory for seg_forward.1']
    %23 = vsyncpa [#allocation5], 0
    %24 = vsyncpa [#allocation7], 0
    %25 = vsyncpa [#allocation10], 0
    %26 = vsyncpa [#allocation13], 0
    %27 = vsyncpa [#allocation16], 0
    loop: start=0, step=1, limit=6
    $region2: #{seg_forward.1} parent=1 // loop_pre_header
      _
    $region3: #{seg_forward.1} parent=1 // loop_header
      %s29 = sphi 0, %s33
      %p30 = scmp.ge.s32.totalorder %s29, 6
      %s36 = sphi 0, %s55
      %s37 = sphi 0, %s51
      %s38 = sphi 0, %s47
      %s39 = sphi 0, %s36
      %s40 = sphi 0, %s37
      %s41 = sphi 0, %s38
      %s42 = sphi 0, %s39
      %s43 = sphi 0, %s40
      %s44 = sphi 0, %s41
      %s60 = sphi 0, %s62
      %s63 = sphi 0, %s60
      %s64 = sphi 0, %s63
      %s80 = sphi 0, %s64
      %s84 = sphi 0, %s84
      %s86 = sphi 0, %s84
      %s87 = sphi 0, %s86
      %s101 = sphi 0, %s87
      %s105 = sphi 0, %s105
      %s107 = sphi 0, %s105
      %s108 = sphi 0, %s107
      %s122 = sphi 0, %s108
      %s126 = sphi 0, %s126
      %s128 = sphi 0, %s126
      %s129 = sphi 0, %s128
      %s143 = sphi 0, %s129
      %s147 = sphi 0, %s147
      %s149 = sphi 0, %s147
      %s150 = sphi 0, %s149
      %s164 = sphi 0, %s150
      %s168 = sphi 0, %s168
      %s170 = sphi 0, %s168
      %s171 = sphi 0, %s170
      %s185 = sphi 0, %s171
      %s189 = sphi 0, %s189
      %s191 = sphi 0, %s189
      %s192 = sphi 0, %s191
      %s206 = sphi 0, %s192
      %s210 = sphi 0, %s210
      %s212 = sphi 0, %s210
      %s213 = sphi 0, %s212
      %s227 = sphi 0, %s213
      %s231 = sphi 0, %s231
      %s233 = sphi 0, %s231
      %s234 = sphi 0, %s233
      %s248 = sphi 0, %s234
      %s252 = sphi 0, %s252
      %s254 = sphi 0, %s252
      %s255 = sphi 0, %s254
      %s269 = sphi 0, %s255
      %s273 = sphi 0, %s273
      %s275 = sphi 0, %s273
      %s276 = sphi 0, %s275
      %s290 = sphi 0, %s276
      %s294 = sphi 0, %s294
      %s296 = sphi 0, %s294
      %s297 = sphi 0, %s296
      %s311 = sphi 0, %s297
      %s315 = sphi 0, %s315
      %s317 = sphi 0, %s315
      %s318 = sphi 0, %s317
      %s332 = sphi 0, %s318
      %s336 = sphi 0, %s336
      %s338 = sphi 0, %s336
      %s339 = sphi 0, %s338
      %s353 = sphi 0, %s339
      %s357 = sphi 0, %s357
      %s359 = sphi 0, %s357
      %s360 = sphi 0, %s359
      %s374 = sphi 0, %s360
      %s378 = sphi 0, %s378
      %s380 = sphi 0, %s378
      %s381 = sphi 0, %s380
      %s395 = sphi 0, %s381
      %s399 = sphi 0, %s399
      %s401 = sphi 0, %s399
      %s402 = sphi 0, %s401
      %s416 = sphi 0, %s402
      %s420 = sphi 0, %s420
      %s422 = sphi 0, %s420
      %s423 = sphi 0, %s422
      %s437 = sphi 0, %s423
      %s447 = sphi 0, %s449
      %s450 = sphi 0, %s447
      %s451 = sphi 0, %s450
      %s467 = sphi 0, %s451
    $region4: #{seg_forward.1} parent=1 // loop_header_branch
      %32 = sbr.rel (%p30) target = $region8
    $region5: #{seg_forward.1} parent=1 // loop_body
      %s34 = ssub.s32 %s29, 1
      %s35 = ssub.s32 %s29, 2
      %s45 = sadd.s32 1, %s38
      %p46 = scmp.ge.s32.totalorder %s45, 1
      %s47 = scalar_select %p46, 0, %s45
      %s48 = sadd.s32 1, %s37
      %s49 = scalar_select %p46, %s48, %s37
      %p50 = scmp.ge.s32.totalorder %s49, 2
      %s51 = scalar_select %p50, 0, %s49
      %s52 = sadd.s32 1, %s36
      %s53 = scalar_select %p50, %s52, %s36
      %p54 = scmp.ge.s32.totalorder %s53, 2
      %s55 = scalar_select %p54, 0, %s53
      %s56 = ssub.s32 %s36, %s55
      %s57 = ssub.s32 %s38, %s47
      %s58 = sor.u32 %s56, %s57
      %p59 = scmp.eq.s32.totalorder %s58, 0
      %s61 = sadd.s32 %s60, 1
      %s62 = scalar_select %p59, %s60, %s61
      %p65 = pneg %p59
      %p66 = scmp.eq.s32.totalorder %s29, 3
      %p67 = por %p65, %p66
      %p68 = scmp.ne.s32.totalorder %s60, %s63
      %p69 = scmp.eq.s32.totalorder %s29, 0
      %p70 = por %p68, %p69
      %p71 = scmp.ne.s32.totalorder %s60, %s63
      %p72 = scmp.eq.s32.totalorder %s34, 3
      %p73 = por %p71, %p72
      %p74 = scmp.ne.s32.totalorder %s63, %s64
      %p75 = scmp.eq.s32.totalorder %s34, 0
      %p76 = por %p74, %p75
      %p77 = scmp.ne.s32.totalorder %s63, %s64
      %p78 = scmp.eq.s32.totalorder %s35, 3
      %p79 = por %p77, %p78
      %p81 = scmp.ne.s32.totalorder %s64, %s80
      %p82 = scmp.eq.s32.totalorder %s35, 0
      %p83 = por %p81, %p82
      %s85 = sadd.s32 %s84, 1
      %p88 = scmp.eq.s32.totalorder %s29, 3
      %p89 = scmp.ne.s32.totalorder %s84, %s86
      %p90 = scmp.eq.s32.totalorder %s29, 0
      %p91 = por %p89, %p90
      %p92 = scmp.ne.s32.totalorder %s84, %s86
      %p93 = scmp.eq.s32.totalorder %s34, 3
      %p94 = por %p92, %p93
      %p95 = scmp.ne.s32.totalorder %s86, %s87
      %p96 = scmp.eq.s32.totalorder %s34, 0
      %p97 = por %p95, %p96
      %p98 = scmp.ne.s32.totalorder %s86, %s87
      %p99 = scmp.eq.s32.totalorder %s35, 3
      %p100 = por %p98, %p99
      %p102 = scmp.ne.s32.totalorder %s87, %s101
      %p103 = scmp.eq.s32.totalorder %s35, 0
      %p104 = por %p102, %p103
      %s106 = sadd.s32 %s105, 1
      %p109 = scmp.eq.s32.totalorder %s29, 3
      %p110 = scmp.ne.s32.totalorder %s105, %s107
      %p111 = scmp.eq.s32.totalorder %s29, 0
      %p112 = por %p110, %p111
      %p113 = scmp.ne.s32.totalorder %s105, %s107
      %p114 = scmp.eq.s32.totalorder %s34, 3
      %p115 = por %p113, %p114
      %p116 = scmp.ne.s32.totalorder %s107, %s108
      %p117 = scmp.eq.s32.totalorder %s34, 0
      %p118 = por %p116, %p117
      %p119 = scmp.ne.s32.totalorder %s107, %s108
      %p120 = scmp.eq.s32.totalorder %s35, 3
      %p121 = por %p119, %p120
      %p123 = scmp.ne.s32.totalorder %s108, %s122
      %p124 = scmp.eq.s32.totalorder %s35, 0
      %p125 = por %p123, %p124
      %s127 = sadd.s32 %s126, 1
      %p130 = scmp.eq.s32.totalorder %s29, 3
      %p131 = scmp.ne.s32.totalorder %s126, %s128
      %p132 = scmp.eq.s32.totalorder %s29, 0
      %p133 = por %p131, %p132
      %p134 = scmp.ne.s32.totalorder %s126, %s128
      %p135 = scmp.eq.s32.totalorder %s34, 3
      %p136 = por %p134, %p135
      %p137 = scmp.ne.s32.totalorder %s128, %s129
      %p138 = scmp.eq.s32.totalorder %s34, 0
      %p139 = por %p137, %p138
      %p140 = scmp.ne.s32.totalorder %s128, %s129
      %p141 = scmp.eq.s32.totalorder %s35, 3
      %p142 = por %p140, %p141
      %p144 = scmp.ne.s32.totalorder %s129, %s143
      %p145 = scmp.eq.s32.totalorder %s35, 0
      %p146 = por %p144, %p145
      %s148 = sadd.s32 %s147, 1
      %p151 = scmp.eq.s32.totalorder %s29, 3
      %p152 = scmp.ne.s32.totalorder %s147, %s149
      %p153 = scmp.eq.s32.totalorder %s29, 0
      %p154 = por %p152, %p153
      %p155 = scmp.ne.s32.totalorder %s147, %s149
      %p156 = scmp.eq.s32.totalorder %s34, 3
      %p157 = por %p155, %p156
      %p158 = scmp.ne.s32.totalorder %s149, %s150
      %p159 = scmp.eq.s32.totalorder %s34, 0
      %p160 = por %p158, %p159
      %p161 = scmp.ne.s32.totalorder %s149, %s150
      %p162 = scmp.eq.s32.totalorder %s35, 3
      %p163 = por %p161, %p162
      %p165 = scmp.ne.s32.totalorder %s150, %s164
      %p166 = scmp.eq.s32.totalorder %s35, 0
      %p167 = por %p165, %p166
      %s169 = sadd.s32 %s168, 1
      %p172 = scmp.eq.s32.totalorder %s29, 3
      %p173 = scmp.ne.s32.totalorder %s168, %s170
      %p174 = scmp.eq.s32.totalorder %s29, 0
      %p175 = por %p173, %p174
      %p176 = scmp.ne.s32.totalorder %s168, %s170
      %p177 = scmp.eq.s32.totalorder %s34, 3
      %p178 = por %p176, %p177
      %p179 = scmp.ne.s32.totalorder %s170, %s171
      %p180 = scmp.eq.s32.totalorder %s34, 0
      %p181 = por %p179, %p180
      %p182 = scmp.ne.s32.totalorder %s170, %s171
      %p183 = scmp.eq.s32.totalorder %s35, 3
      %p184 = por %p182, %p183
      %p186 = scmp.ne.s32.totalorder %s171, %s185
      %p187 = scmp.eq.s32.totalorder %s35, 0
      %p188 = por %p186, %p187
      %s190 = sadd.s32 %s189, 1
      %p193 = scmp.eq.s32.totalorder %s29, 3
      %p194 = scmp.ne.s32.totalorder %s189, %s191
      %p195 = scmp.eq.s32.totalorder %s29, 0
      %p196 = por %p194, %p195
      %p197 = scmp.ne.s32.totalorder %s189, %s191
      %p198 = scmp.eq.s32.totalorder %s34, 3
      %p199 = por %p197, %p198
      %p200 = scmp.ne.s32.totalorder %s191, %s192
      %p201 = scmp.eq.s32.totalorder %s34, 0
      %p202 = por %p200, %p201
      %p203 = scmp.ne.s32.totalorder %s191, %s192
      %p204 = scmp.eq.s32.totalorder %s35, 3
      %p205 = por %p203, %p204
      %p207 = scmp.ne.s32.totalorder %s192, %s206
      %p208 = scmp.eq.s32.totalorder %s35, 0
      %p209 = por %p207, %p208
      %s211 = sadd.s32 %s210, 1
      %p214 = scmp.eq.s32.totalorder %s29, 3
      %p215 = scmp.ne.s32.totalorder %s210, %s212
      %p216 = scmp.eq.s32.totalorder %s29, 0
      %p217 = por %p215, %p216
      %p218 = scmp.ne.s32.totalorder %s210, %s212
      %p219 = scmp.eq.s32.totalorder %s34, 3
      %p220 = por %p218, %p219
      %p221 = scmp.ne.s32.totalorder %s212, %s213
      %p222 = scmp.eq.s32.totalorder %s34, 0
      %p223 = por %p221, %p222
      %p224 = scmp.ne.s32.totalorder %s212, %s213
      %p225 = scmp.eq.s32.totalorder %s35, 3
      %p226 = por %p224, %p225
      %p228 = scmp.ne.s32.totalorder %s213, %s227
      %p229 = scmp.eq.s32.totalorder %s35, 0
      %p230 = por %p228, %p229
      %s232 = sadd.s32 %s231, 1
      %p235 = scmp.eq.s32.totalorder %s29, 3
      %p236 = scmp.ne.s32.totalorder %s231, %s233
      %p237 = scmp.eq.s32.totalorder %s29, 0
      %p238 = por %p236, %p237
      %p239 = scmp.ne.s32.totalorder %s231, %s233
      %p240 = scmp.eq.s32.totalorder %s34, 3
      %p241 = por %p239, %p240
      %p242 = scmp.ne.s32.totalorder %s233, %s234
      %p243 = scmp.eq.s32.totalorder %s34, 0
      %p244 = por %p242, %p243
      %p245 = scmp.ne.s32.totalorder %s233, %s234
      %p246 = scmp.eq.s32.totalorder %s35, 3
      %p247 = por %p245, %p246
      %p249 = scmp.ne.s32.totalorder %s234, %s248
      %p250 = scmp.eq.s32.totalorder %s35, 0
      %p251 = por %p249, %p250
      %s253 = sadd.s32 %s252, 1
      %p256 = scmp.eq.s32.totalorder %s29, 3
      %p257 = scmp.ne.s32.totalorder %s252, %s254
      %p258 = scmp.eq.s32.totalorder %s29, 0
      %p259 = por %p257, %p258
      %p260 = scmp.ne.s32.totalorder %s252, %s254
      %p261 = scmp.eq.s32.totalorder %s34, 3
      %p262 = por %p260, %p261
      %p263 = scmp.ne.s32.totalorder %s254, %s255
      %p264 = scmp.eq.s32.totalorder %s34, 0
      %p265 = por %p263, %p264
      %p266 = scmp.ne.s32.totalorder %s254, %s255
      %p267 = scmp.eq.s32.totalorder %s35, 3
      %p268 = por %p266, %p267
      %p270 = scmp.ne.s32.totalorder %s255, %s269
      %p271 = scmp.eq.s32.totalorder %s35, 0
      %p272 = por %p270, %p271
      %s274 = sadd.s32 %s273, 1
      %p277 = scmp.eq.s32.totalorder %s29, 3
      %p278 = scmp.ne.s32.totalorder %s273, %s275
      %p279 = scmp.eq.s32.totalorder %s29, 0
      %p280 = por %p278, %p279
      %p281 = scmp.ne.s32.totalorder %s273, %s275
      %p282 = scmp.eq.s32.totalorder %s34, 3
      %p283 = por %p281, %p282
      %p284 = scmp.ne.s32.totalorder %s275, %s276
      %p285 = scmp.eq.s32.totalorder %s34, 0
      %p286 = por %p284, %p285
      %p287 = scmp.ne.s32.totalorder %s275, %s276
      %p288 = scmp.eq.s32.totalorder %s35, 3
      %p289 = por %p287, %p288
      %p291 = scmp.ne.s32.totalorder %s276, %s290
      %p292 = scmp.eq.s32.totalorder %s35, 0
      %p293 = por %p291, %p292
      %s295 = sadd.s32 %s294, 1
      %p298 = scmp.eq.s32.totalorder %s29, 3
      %p299 = scmp.ne.s32.totalorder %s294, %s296
      %p300 = scmp.eq.s32.totalorder %s29, 0
      %p301 = por %p299, %p300
      %p302 = scmp.ne.s32.totalorder %s294, %s296
      %p303 = scmp.eq.s32.totalorder %s34, 3
      %p304 = por %p302, %p303
      %p305 = scmp.ne.s32.totalorder %s296, %s297
      %p306 = scmp.eq.s32.totalorder %s34, 0
      %p307 = por %p305, %p306
      %p308 = scmp.ne.s32.totalorder %s296, %s297
      %p309 = scmp.eq.s32.totalorder %s35, 3
      %p310 = por %p308, %p309
      %p312 = scmp.ne.s32.totalorder %s297, %s311
      %p313 = scmp.eq.s32.totalorder %s35, 0
      %p314 = por %p312, %p313
      %s316 = sadd.s32 %s315, 1
      %p319 = scmp.eq.s32.totalorder %s29, 3
      %p320 = scmp.ne.s32.totalorder %s315, %s317
      %p321 = scmp.eq.s32.totalorder %s29, 0
      %p322 = por %p320, %p321
      %p323 = scmp.ne.s32.totalorder %s315, %s317
      %p324 = scmp.eq.s32.totalorder %s34, 3
      %p325 = por %p323, %p324
      %p326 = scmp.ne.s32.totalorder %s317, %s318
      %p327 = scmp.eq.s32.totalorder %s34, 0
      %p328 = por %p326, %p327
      %p329 = scmp.ne.s32.totalorder %s317, %s318
      %p330 = scmp.eq.s32.totalorder %s35, 3
      %p331 = por %p329, %p330
      %p333 = scmp.ne.s32.totalorder %s318, %s332
      %p334 = scmp.eq.s32.totalorder %s35, 0
      %p335 = por %p333, %p334
      %s337 = sadd.s32 %s336, 1
      %p340 = scmp.eq.s32.totalorder %s29, 3
      %p341 = scmp.ne.s32.totalorder %s336, %s338
      %p342 = scmp.eq.s32.totalorder %s29, 0
      %p343 = por %p341, %p342
      %p344 = scmp.ne.s32.totalorder %s336, %s338
      %p345 = scmp.eq.s32.totalorder %s34, 3
      %p346 = por %p344, %p345
      %p347 = scmp.ne.s32.totalorder %s338, %s339
      %p348 = scmp.eq.s32.totalorder %s34, 0
      %p349 = por %p347, %p348
      %p350 = scmp.ne.s32.totalorder %s338, %s339
      %p351 = scmp.eq.s32.totalorder %s35, 3
      %p352 = por %p350, %p351
      %p354 = scmp.ne.s32.totalorder %s339, %s353
      %p355 = scmp.eq.s32.totalorder %s35, 0
      %p356 = por %p354, %p355
      %s358 = sadd.s32 %s357, 1
      %p361 = scmp.eq.s32.totalorder %s29, 3
      %p362 = scmp.ne.s32.totalorder %s357, %s359
      %p363 = scmp.eq.s32.totalorder %s29, 0
      %p364 = por %p362, %p363
      %p365 = scmp.ne.s32.totalorder %s357, %s359
      %p366 = scmp.eq.s32.totalorder %s34, 3
      %p367 = por %p365, %p366
      %p368 = scmp.ne.s32.totalorder %s359, %s360
      %p369 = scmp.eq.s32.totalorder %s34, 0
      %p370 = por %p368, %p369
      %p371 = scmp.ne.s32.totalorder %s359, %s360
      %p372 = scmp.eq.s32.totalorder %s35, 3
      %p373 = por %p371, %p372
      %p375 = scmp.ne.s32.totalorder %s360, %s374
      %p376 = scmp.eq.s32.totalorder %s35, 0
      %p377 = por %p375, %p376
      %s379 = sadd.s32 %s378, 1
      %p382 = scmp.eq.s32.totalorder %s29, 3
      %p383 = scmp.ne.s32.totalorder %s378, %s380
      %p384 = scmp.eq.s32.totalorder %s29, 0
      %p385 = por %p383, %p384
      %p386 = scmp.ne.s32.totalorder %s378, %s380
      %p387 = scmp.eq.s32.totalorder %s34, 3
      %p388 = por %p386, %p387
      %p389 = scmp.ne.s32.totalorder %s380, %s381
      %p390 = scmp.eq.s32.totalorder %s34, 0
      %p391 = por %p389, %p390
      %p392 = scmp.ne.s32.totalorder %s380, %s381
      %p393 = scmp.eq.s32.totalorder %s35, 3
      %p394 = por %p392, %p393
      %p396 = scmp.ne.s32.totalorder %s381, %s395
      %p397 = scmp.eq.s32.totalorder %s35, 0
      %p398 = por %p396, %p397
      %s400 = sadd.s32 %s399, 1
      %p403 = scmp.eq.s32.totalorder %s29, 3
      %p404 = scmp.ne.s32.totalorder %s399, %s401
      %p405 = scmp.eq.s32.totalorder %s29, 0
      %p406 = por %p404, %p405
      %p407 = scmp.ne.s32.totalorder %s399, %s401
      %p408 = scmp.eq.s32.totalorder %s34, 3
      %p409 = por %p407, %p408
      %p410 = scmp.ne.s32.totalorder %s401, %s402
      %p411 = scmp.eq.s32.totalorder %s34, 0
      %p412 = por %p410, %p411
      %p413 = scmp.ne.s32.totalorder %s401, %s402
      %p414 = scmp.eq.s32.totalorder %s35, 3
      %p415 = por %p413, %p414
      %p417 = scmp.ne.s32.totalorder %s402, %s416
      %p418 = scmp.eq.s32.totalorder %s35, 0
      %p419 = por %p417, %p418
      %s421 = sadd.s32 %s420, 1
      %p424 = scmp.eq.s32.totalorder %s29, 3
      %p425 = scmp.ne.s32.totalorder %s420, %s422
      %p426 = scmp.eq.s32.totalorder %s29, 0
      %p427 = por %p425, %p426
      %p428 = scmp.ne.s32.totalorder %s420, %s422
      %p429 = scmp.eq.s32.totalorder %s34, 3
      %p430 = por %p428, %p429
      %p431 = scmp.ne.s32.totalorder %s422, %s423
      %p432 = scmp.eq.s32.totalorder %s34, 0
      %p433 = por %p431, %p432
      %p434 = scmp.ne.s32.totalorder %s422, %s423
      %p435 = scmp.eq.s32.totalorder %s35, 3
      %p436 = por %p434, %p435
      %p438 = scmp.ne.s32.totalorder %s423, %s437
      %p439 = scmp.eq.s32.totalorder %s35, 0
      %p440 = por %p438, %p439
      %s441 = smul.u32 %s38, %s37
      %s442 = smul.u32 %s47, %s51
      %s443 = ssub.s32 %s36, %s55
      %s444 = ssub.s32 %s441, %s442
      %s445 = sor.u32 %s443, %s444
      %p446 = scmp.eq.s32.totalorder %s445, 0
      %s448 = sadd.s32 %s447, 1
      %s449 = scalar_select %p446, %s447, %s448
      %p452 = pneg %p446
      %p453 = scmp.eq.s32.totalorder %s29, 3
      %p454 = por %p452, %p453
      %p455 = scmp.ne.s32.totalorder %s447, %s450
      %p456 = scmp.eq.s32.totalorder %s29, 0
      %p457 = por %p455, %p456
      %p458 = scmp.ne.s32.totalorder %s447, %s450
      %p459 = scmp.eq.s32.totalorder %s34, 3
      %p460 = por %p458, %p459
      %p461 = scmp.ne.s32.totalorder %s450, %s451
      %p462 = scmp.eq.s32.totalorder %s34, 0
      %p463 = por %p461, %p462
      %p464 = scmp.ne.s32.totalorder %s450, %s451
      %p465 = scmp.eq.s32.totalorder %s35, 3
      %p466 = por %p464, %p465
      %p468 = scmp.ne.s32.totalorder %s451, %s467
      %p469 = scmp.eq.s32.totalorder %s35, 0
      %p470 = por %p468, %p469
      %p471 = scmp.le.s32.totalorder 1, %s29
      %p472 = scmp.lt.s32.totalorder %s29, 5
      %p473 = pnand %p471, %p472
      %p474 = pneg %p473
      // Predicated region
      $region9: #{seg_forward.1} parent=5 // pred_check
        _
      $region10: #{seg_forward.1} parent=5 // pred_check_branch
        %476 = sbr.rel (%p473) target = $region12
      $region11: #{seg_forward.1} parent=5 // pred_region
        %s477 = ssub.s32 %s29, 1
        // Predicated region
        $region13: #{seg_forward.1} parent=11 // pred_check
          %p478 = pneg %p97
        $region14: #{seg_forward.1} parent=11 // pred_check_branch
          %480 = sbr.rel (%p478) target = $region16
        $region15: #{seg_forward.1} parent=11 // pred_region
          _
        $region16: #{seg_forward.1} parent=11 // pred_fallthru
          _
        // Predicated region
        $region17: #{seg_forward.1} parent=11 // pred_check
          %p481 = pneg %p118
        $region18: #{seg_forward.1} parent=11 // pred_check_branch
          %483 = sbr.rel (%p481) target = $region20
        $region19: #{seg_forward.1} parent=11 // pred_region
          _
        $region20: #{seg_forward.1} parent=11 // pred_fallthru
          _
        // Predicated region
        $region21: #{seg_forward.1} parent=11 // pred_check
          %p484 = pneg %p139
        $region22: #{seg_forward.1} parent=11 // pred_check_branch
          %486 = sbr.rel (%p484) target = $region24
        $region23: #{seg_forward.1} parent=11 // pred_region
          %488 = vsyncadd [#allocation5], 0
          %s489 = sshll.u32 %s3, 4
          %s490 = int_to_ptr.hbm [resolvable:$true] %s489
          %s491 = sshll.u32 [#allocation4], 4
          %s492 = int_to_ptr.vmem [resolvable:$true] %s491
          %497 = dma.hbm_to_vmem [thread:$0]  %s490, 512, %s492, [#allocation5], 64, 64, 4
        $region24: #{seg_forward.1} parent=11 // pred_fallthru
          _
        // Predicated region
        $region25: #{seg_forward.1} parent=11 // pred_check
          %p498 = pneg %p160
        $region26: #{seg_forward.1} parent=11 // pred_check_branch
          %500 = sbr.rel (%p498) target = $region28
        $region27: #{seg_forward.1} parent=11 // pred_region
          _
        $region28: #{seg_forward.1} parent=11 // pred_fallthru
          _
        // Predicated region
        $region29: #{seg_forward.1} parent=11 // pred_check
          %p501 = pneg %p181
        $region30: #{seg_forward.1} parent=11 // pred_check_branch
          %503 = sbr.rel (%p501) target = $region32
        $region31: #{seg_forward.1} parent=11 // pred_region
          %505 = vsyncadd [#allocation7], 0
          %s506 = sshll.u32 %s5, 4
          %s507 = int_to_ptr.hbm [resolvable:$true] %s506
          %s508 = sshll.u32 [#allocation6], 4
          %s509 = int_to_ptr.vmem [resolvable:$true] %s508
          %514 = dma.hbm_to_vmem [thread:$0]  %s507, 512, %s509, [#allocation7], 64, 64, 4
        $region32: #{seg_forward.1} parent=11 // pred_fallthru
          _
        // Predicated region
        $region33: #{seg_forward.1} parent=11 // pred_check
          %p515 = pneg %p202
        $region34: #{seg_forward.1} parent=11 // pred_check_branch
          %517 = sbr.rel (%p515) target = $region36
        $region35: #{seg_forward.1} parent=11 // pred_region
          %519 = vsyncadd [#allocation7], 0
          %s521 = sshll.u32 %s6, 4
          %s522 = int_to_ptr.hbm [resolvable:$true] %s521
          %s523 = sshll.u32 [#allocation8], 4
          %s524 = int_to_ptr.vmem [resolvable:$true] %s523
          %526 = dma.hbm_to_vmem [thread:$0]  %s522, 16, %s524, [#allocation7]
        $region36: #{seg_forward.1} parent=11 // pred_fallthru
          _
        // Predicated region
        $region37: #{seg_forward.1} parent=11 // pred_check
          %p527 = pneg %p223
        $region38: #{seg_forward.1} parent=11 // pred_check_branch
          %529 = sbr.rel (%p527) target = $region40
        $region39: #{seg_forward.1} parent=11 // pred_region
          _
        $region40: #{seg_forward.1} parent=11 // pred_fallthru
          _
        // Predicated region
        $region41: #{seg_forward.1} parent=11 // pred_check
          %p530 = pneg %p244
        $region42: #{seg_forward.1} parent=11 // pred_check_branch
          %532 = sbr.rel (%p530) target = $region44
        $region43: #{seg_forward.1} parent=11 // pred_region
          _
        $region44: #{seg_forward.1} parent=11 // pred_fallthru
          _
        // Predicated region
        $region45: #{seg_forward.1} parent=11 // pred_check
          %p533 = pneg %p265
        $region46: #{seg_forward.1} parent=11 // pred_check_branch
          %535 = sbr.rel (%p533) target = $region48
        $region47: #{seg_forward.1} parent=11 // pred_region
          %537 = vsyncadd [#allocation10], 0
          %s538 = sshll.u32 %s9, 4
          %s539 = int_to_ptr.hbm [resolvable:$true] %s538
          %s540 = sshll.u32 [#allocation9], 4
          %s541 = int_to_ptr.vmem [resolvable:$true] %s540
          %546 = dma.hbm_to_vmem [thread:$0]  %s539, 2048, %s541, [#allocation10], 256, 256, 16
        $region48: #{seg_forward.1} parent=11 // pred_fallthru
          _
        // Predicated region
        $region49: #{seg_forward.1} parent=11 // pred_check
          %p547 = pneg %p286
        $region50: #{seg_forward.1} parent=11 // pred_check_branch
          %549 = sbr.rel (%p547) target = $region52
        $region51: #{seg_forward.1} parent=11 // pred_region
          %551 = vsyncadd [#allocation10], 0
          %s552 = sshll.u32 %s10, 4
          %s553 = int_to_ptr.hbm [resolvable:$true] %s552
          %s554 = sshll.u32 [#allocation11], 4
          %s555 = int_to_ptr.vmem [resolvable:$true] %s554
          %560 = dma.hbm_to_vmem [thread:$0]  %s553, 32768, %s555, [#allocation10], 256, 256, 16
        $region52: #{seg_forward.1} parent=11 // pred_fallthru
          _
        // Predicated region
        $region53: #{seg_forward.1} parent=11 // pred_check
          %p561 = pneg %p307
        $region54: #{seg_forward.1} parent=11 // pred_check_branch
          %563 = sbr.rel (%p561) target = $region56
        $region55: #{seg_forward.1} parent=11 // pred_region
          _
        $region56: #{seg_forward.1} parent=11 // pred_fallthru
          _
        // Predicated region
        $region57: #{seg_forward.1} parent=11 // pred_check
          %p564 = pneg %p328
        $region58: #{seg_forward.1} parent=11 // pred_check_branch
          %566 = sbr.rel (%p564) target = $region60
        $region59: #{seg_forward.1} parent=11 // pred_region
          %568 = vsyncadd [#allocation13], 0
          %s569 = sshll.u32 %s12, 4
          %s570 = int_to_ptr.hbm [resolvable:$true] %s569
          %s571 = sshll.u32 [#allocation12], 4
          %s572 = int_to_ptr.vmem [resolvable:$true] %s571
          %577 = dma.hbm_to_vmem [thread:$0]  %s570, 8192, %s572, [#allocation13], 128, 128, 8
        $region60: #{seg_forward.1} parent=11 // pred_fallthru
          _
        // Predicated region
        $region61: #{seg_forward.1} parent=11 // pred_check
          %p578 = pneg %p349
        $region62: #{seg_forward.1} parent=11 // pred_check_branch
          %580 = sbr.rel (%p578) target = $region64
        $region63: #{seg_forward.1} parent=11 // pred_region
          _
        $region64: #{seg_forward.1} parent=11 // pred_fallthru
          _
        // Predicated region
        $region65: #{seg_forward.1} parent=11 // pred_check
          %p581 = pneg %p370
        $region66: #{seg_forward.1} parent=11 // pred_check_branch
          %583 = sbr.rel (%p581) target = $region68
        $region67: #{seg_forward.1} parent=11 // pred_region
          %585 = vsyncadd [#allocation13], 0
          %s586 = sshll.u32 %s14, 4
          %s587 = int_to_ptr.hbm [resolvable:$true] %s586
          %s588 = sshll.u32 [#allocation14], 4
          %s589 = int_to_ptr.vmem [resolvable:$true] %s588
          %594 = dma.hbm_to_vmem [thread:$0]  %s587, 2048, %s589, [#allocation13], 64, 64, 4
        $region68: #{seg_forward.1} parent=11 // pred_fallthru
          _
        // Predicated region
        $region69: #{seg_forward.1} parent=11 // pred_check
          %p595 = pneg %p391
        $region70: #{seg_forward.1} parent=11 // pred_check_branch
          %597 = sbr.rel (%p595) target = $region72
        $region71: #{seg_forward.1} parent=11 // pred_region
          _
        $region72: #{seg_forward.1} parent=11 // pred_fallthru
          _
        // Predicated region
        $region73: #{seg_forward.1} parent=11 // pred_check
          %p598 = pneg %p412
        $region74: #{seg_forward.1} parent=11 // pred_check_branch
          %600 = sbr.rel (%p598) target = $region76
        $region75: #{seg_forward.1} parent=11 // pred_region
          %602 = vsyncadd [#allocation16], 0
          %s603 = sshll.u32 %s16, 4
          %s604 = int_to_ptr.hbm [resolvable:$true] %s603
          %s605 = sshll.u32 [#allocation15], 4
          %s606 = int_to_ptr.vmem [resolvable:$true] %s605
          %611 = dma.hbm_to_vmem [thread:$0]  %s604, 1024, %s606, [#allocation16], 64, 64, 4
        $region76: #{seg_forward.1} parent=11 // pred_fallthru
          _
        // Predicated region
        $region77: #{seg_forward.1} parent=11 // pred_check
          %p612 = pneg %p433
        $region78: #{seg_forward.1} parent=11 // pred_check_branch
          %614 = sbr.rel (%p612) target = $region80
        $region79: #{seg_forward.1} parent=11 // pred_region
          _
        $region80: #{seg_forward.1} parent=11 // pred_fallthru
          _
      $region12: #{seg_forward.1} parent=5 // pred_fallthru
        _
      %p615 = scmp.lt.s32.totalorder %s29, 4
      // Predicated region
      $region81: #{seg_forward.1} parent=5 // pred_check
        %p616 = pneg %p615
      $region82: #{seg_forward.1} parent=5 // pred_check_branch
        %618 = sbr.rel (%p616) target = $region84
      $region83: #{seg_forward.1} parent=5 // pred_region
        // Predicated region
        $region85: #{seg_forward.1} parent=83 // pred_check
          %p619 = pneg %p70
        $region86: #{seg_forward.1} parent=83 // pred_check_branch
          %621 = sbr.rel (%p619) target = $region88
        $region87: #{seg_forward.1} parent=83 // pred_region
          %s622 = smul.u32 32, %s38
          %p623 = scmp.lt.s32.totalorder %s36, 1
          %s624 = scalar_select %p623, %s36, 1
          %p625 = scmp.lt.s32.totalorder %s622, 31
          %s626 = scalar_select %p625, %s622, 31
          %s627 = smul.addr %s624, 32
          %s628 = sadd.s32 %s626, %s627
          %s629 = smul.addr %s628, 8
          %s630 = scalar_lea.vmem %s0, %s629
          %s631 = smul.u32 32, %s38
        $region88: #{seg_forward.1} parent=83 // pred_fallthru
          _
      $region84: #{seg_forward.1} parent=5 // pred_fallthru
        _
      %p632 = scmp.le.s32.totalorder 1, %s29
      %p633 = scmp.lt.s32.totalorder %s29, 5
      %p634 = pnand %p632, %p633
      %p635 = pneg %p634
      // Predicated region
      $region89: #{seg_forward.1} parent=5 // pred_check
        _
      $region90: #{seg_forward.1} parent=5 // pred_check_branch
        %637 = sbr.rel (%p634) target = $region92
      $region91: #{seg_forward.1} parent=5 // pred_region
        %s638 = ssub.s32 %s29, 1
        // Predicated region
        $region93: #{seg_forward.1} parent=91 // pred_check
          %p639 = pneg %p139
        $region94: #{seg_forward.1} parent=91 // pred_check_branch
          %641 = sbr.rel (%p639) target = $region96
        $region95: #{seg_forward.1} parent=91 // pred_region
          %643 = dma.done [#allocation5], 512
        $region96: #{seg_forward.1} parent=91 // pred_fallthru
          _
        // Predicated region
        $region97: #{seg_forward.1} parent=91 // pred_check
          %p644 = pneg %p181
        $region98: #{seg_forward.1} parent=91 // pred_check_branch
          %646 = sbr.rel (%p644) target = $region100
        $region99: #{seg_forward.1} parent=91 // pred_region
          %648 = dma.done [#allocation7], 512
        $region100: #{seg_forward.1} parent=91 // pred_fallthru
          _
        // Predicated region
        $region101: #{seg_forward.1} parent=91 // pred_check
          %p649 = pneg %p202
        $region102: #{seg_forward.1} parent=91 // pred_check_branch
          %651 = sbr.rel (%p649) target = $region104
        $region103: #{seg_forward.1} parent=91 // pred_region
          %653 = dma.done [#allocation7], 16
        $region104: #{seg_forward.1} parent=91 // pred_fallthru
          _
        // Predicated region
        $region105: #{seg_forward.1} parent=91 // pred_check
          %p654 = pneg %p265
        $region106: #{seg_forward.1} parent=91 // pred_check_branch
          %656 = sbr.rel (%p654) target = $region108
        $region107: #{seg_forward.1} parent=91 // pred_region
          %658 = dma.done [#allocation10], 2048
        $region108: #{seg_forward.1} parent=91 // pred_fallthru
          _
        // Predicated region
        $region109: #{seg_forward.1} parent=91 // pred_check
          %p659 = pneg %p286
        $region110: #{seg_forward.1} parent=91 // pred_check_branch
          %661 = sbr.rel (%p659) target = $region112
        $region111: #{seg_forward.1} parent=91 // pred_region
          %663 = dma.done [#allocation10], 32768
        $region112: #{seg_forward.1} parent=91 // pred_fallthru
          _
        // Predicated region
        $region113: #{seg_forward.1} parent=91 // pred_check
          %p664 = pneg %p328
        $region114: #{seg_forward.1} parent=91 // pred_check_branch
          %666 = sbr.rel (%p664) target = $region116
        $region115: #{seg_forward.1} parent=91 // pred_region
          %668 = dma.done [#allocation13], 8192
        $region116: #{seg_forward.1} parent=91 // pred_fallthru
          _
        // Predicated region
        $region117: #{seg_forward.1} parent=91 // pred_check
          %p669 = pneg %p370
        $region118: #{seg_forward.1} parent=91 // pred_check_branch
          %671 = sbr.rel (%p669) target = $region120
        $region119: #{seg_forward.1} parent=91 // pred_region
          %673 = dma.done [#allocation13], 2048
        $region120: #{seg_forward.1} parent=91 // pred_fallthru
          _
        // Predicated region
        $region121: #{seg_forward.1} parent=91 // pred_check
          %p674 = pneg %p412
        $region122: #{seg_forward.1} parent=91 // pred_check_branch
          %676 = sbr.rel (%p674) target = $region124
        $region123: #{seg_forward.1} parent=91 // pred_region
          %678 = dma.done [#allocation16], 1024
        $region124: #{seg_forward.1} parent=91 // pred_fallthru
          _
        %s679 = smul.u32 32, %s41
        %p680 = scmp.lt.s32.totalorder %s39, 1
        %s681 = scalar_select %p680, %s39, 1
        %p682 = scmp.lt.s32.totalorder %s679, 31
        %s683 = scalar_select %p682, %s679, 31
        %s684 = smul.addr %s681, 32
        %s685 = sadd.s32 %s683, %s684
        %s686 = smul.addr %s685, 8
        %s687 = scalar_lea.vmem %s0, %s686
        %p688 = pneg %p76
        %p689 = pneg %p73
        %p690 = pneg %p97
        %p691 = pneg %p94
        %p692 = pneg %p118
        %p693 = pneg %p115
        %p694 = pneg %p139
        %p695 = pneg %p136
        %p696 = pneg %p160
        %p697 = pneg %p157
        %p698 = pneg %p181
        %p699 = pneg %p178
        %p700 = pneg %p202
        %p701 = pneg %p199
        %p702 = pneg %p223
        %p703 = pneg %p220
        %p704 = pneg %p244
        %p705 = pneg %p241
        %p706 = pneg %p265
        %p707 = pneg %p262
        %p708 = pneg %p286
        %p709 = pneg %p283
        %p710 = pneg %p307
        %p711 = pneg %p304
        %p712 = pneg %p328
        %p713 = pneg %p325
        %p714 = pneg %p349
        %p715 = pneg %p346
        %p716 = pneg %p370
        %p717 = pneg %p367
        %p718 = pneg %p391
        %p719 = pneg %p388
        %p720 = pneg %p412
        %p721 = pneg %p409
        %p722 = pneg %p433
        %p723 = pneg %p430
        %p724 = pneg %p463
        %p725 = pneg %p460
        %s726 = smul.u32 %s41, %s40
        %s727 = smul.u32 32, %s726
        %p728 = scmp.lt.s32.totalorder %s39, 1
        %s729 = scalar_select %p728, %s39, 1
        %p730 = scmp.lt.s32.totalorder %s727, 31
        %s731 = scalar_select %p730, %s727, 31
        %s732 = smul.addr %s729, 32
        %s733 = sadd.s32 %s731, %s732
        %s734 = smul.addr %s733, 8
        %s735 = scalar_lea.vmem %s18, %s734
        %s736 = smul.u32 32, %s41
        %p737 = scmp.lt.s32.totalorder %s39, 1
        %s738 = scalar_select %p737, %s39, 1
        %p739 = scmp.lt.s32.totalorder %s736, 31
        %s740 = scalar_select %p739, %s736, 31
        %s741 = smul.addr %s738, 32
        %s742 = sadd.s32 %s740, %s741
        %s743 = smul.addr %s742, 8
        %s744 = scalar_lea.vmem %s0, %s743
        %s745 = smul.u32 32, %s41
        %s746 = smul.u32 %s41, %s40
        %s747 = smul.u32 32, %s746
        %p748 = scmp.lt.s32.totalorder %s39, 1
        %s749 = scalar_select %p748, %s39, 1
        %p750 = scmp.lt.s32.totalorder %s747, 31
        %s751 = scalar_select %p750, %s747, 31
        %s752 = smul.addr %s749, 32
        %s753 = sadd.s32 %s751, %s752
        %s754 = smul.addr %s753, 8
        %s755 = scalar_lea.vmem %s18, %s754
        %s756 = smul.u32 %s41, %s40
        %s757 = smul.u32 32, %s756
        %v759 = vld [vmem:[%s744] sm:$0xff]
        %v760 = vld [vmem:[%s744 + $0x8] sm:$0xff]
        %v761 = vld [vmem:[%s744 + $0x10] sm:$0xff]
        %v762 = vld [vmem:[%s744 + $0x18] sm:$0xff]
        %v763 = vld [vmem:[%s744 + $0x20] sm:$0xff]
        %v764 = vld [vmem:[%s744 + $0x28] sm:$0xff]
        %v765 = vld [vmem:[%s744 + $0x30] sm:$0xff]
        %v766 = vld [vmem:[%s744 + $0x38] sm:$0xff]
        %v767 = vld [vmem:[%s744 + $0x40] sm:$0xff]
        %v768 = vld [vmem:[%s744 + $0x48] sm:$0xff]
        %v769 = vld [vmem:[%s744 + $0x50] sm:$0xff]
        %v770 = vld [vmem:[%s744 + $0x58] sm:$0xff]
        %v771 = vld [vmem:[%s744 + $0x60] sm:$0xff]
        %v772 = vld [vmem:[%s744 + $0x68] sm:$0xff]
        %v773 = vld [vmem:[%s744 + $0x70] sm:$0xff]
        %v774 = vld [vmem:[%s744 + $0x78] sm:$0xff]
        %v775 = vld [vmem:[%s744 + $0x80] sm:$0xff]
        %v776 = vld [vmem:[%s744 + $0x88] sm:$0xff]
        %v777 = vld [vmem:[%s744 + $0x90] sm:$0xff]
        %v778 = vld [vmem:[%s744 + $0x98] sm:$0xff]
        %v779 = vld [vmem:[%s744 + $0xa0] sm:$0xff]
        %v780 = vld [vmem:[%s744 + $0xa8] sm:$0xff]
        %v781 = vld [vmem:[%s744 + $0xb0] sm:$0xff]
        %v782 = vld [vmem:[%s744 + $0xb8] sm:$0xff]
        %v783 = vld [vmem:[%s744 + $0xc0] sm:$0xff]
        %v784 = vld [vmem:[%s744 + $0xc8] sm:$0xff]
        %v785 = vld [vmem:[%s744 + $0xd0] sm:$0xff]
        %v786 = vld [vmem:[%s744 + $0xd8] sm:$0xff]
        %v787 = vld [vmem:[%s744 + $0xe0] sm:$0xff]
        %v788 = vld [vmem:[%s744 + $0xe8] sm:$0xff]
        %v789 = vld [vmem:[%s744 + $0xf0] sm:$0xff]
        %v790 = vld [vmem:[%s744 + $0xf8] sm:$0xff]
        %v791 = vpack.c.bf16 %v760, %v759
        %v792 = vpack.c.bf16 %v762, %v761
        %v793 = vpack.c.bf16 %v764, %v763
        %v794 = vpack.c.bf16 %v766, %v765
        %v795 = vpack.c.bf16 %v768, %v767
        %v796 = vpack.c.bf16 %v770, %v769
        %v797 = vpack.c.bf16 %v772, %v771
        %v798 = vpack.c.bf16 %v774, %v773
        %v799 = vpack.c.bf16 %v776, %v775
        %v800 = vpack.c.bf16 %v778, %v777
        %v801 = vpack.c.bf16 %v780, %v779
        %v802 = vpack.c.bf16 %v782, %v781
        %v803 = vpack.c.bf16 %v784, %v783
        %v804 = vpack.c.bf16 %v786, %v785
        %v805 = vpack.c.bf16 %v788, %v787
        %v806 = vpack.c.bf16 %v790, %v789
        %v807 = vld [vmem:[%s1] sm:$0x3]
        %v808 = vld [vmem:[%s2] sm:$0x1]
        %v810 = vperm.slane %v808, 0
        %vm812 = vcmask 23552
        %v814 = vsel %vm812, %v791, 0
        %v817 = vsel %vm812, %v792, 0
        %v820 = vsel %vm812, %v793, 0
        %v823 = vsel %vm812, %v794, 0
        %v826 = vsel %vm812, %v795, 0
        %v829 = vsel %vm812, %v796, 0
        %v832 = vsel %vm812, %v797, 0
        %v835 = vsel %vm812, %v798, 0
        %v838 = vsel %vm812, %v799, 0
        %v841 = vsel %vm812, %v800, 0
        %v844 = vsel %vm812, %v801, 0
        %v847 = vsel %vm812, %v802, 0
        %v850 = vsel %vm812, %v803, 0
        %v853 = vsel %vm812, %v804, 0
        %v856 = vsel %vm812, %v805, 0
        %v859 = vsel %vm812, %v806, 0
        %vm861 = vcmask 1040384
        %vm862 = vcmask 1041408
        %v863 = vsel %vm861, 4294967295, 65535
        %v864 = vsel %vm862, %v863, 0
        %v866 = vand.u32 %v807, %v864
        %868 = vmatpush.bf16.msra.mxu0 0
        %869 = vmatpush.bf16.msra.mxu0 0
        %870 = vmatpush.bf16.msra.mxu0 0
        %871 = vmatpush.bf16.msra.mxu0 0
        %872 = vmatpush.bf16.msra.mxu0 0
        %873 = vmatpush.bf16.msra.mxu0 0
        %874 = vmatpush.bf16.msra.mxu0 0
        %875 = vmatpush.bf16.msra.mxu0 %v866
        %876 = vmatmul.bf16.gmra.mxu0 %v814
        %v877 = vpop.f32.mrf.mxu0
        %v878 = vadd.f32 %v810, %v877
        %v879 = vpop.f32.mrf.mxu0
        %v880 = vadd.f32 %v810, %v879
        %881 = vmatmul.bf16.gmra.mxu0 %v817
        %v882 = vpop.f32.mrf.mxu0
        %v883 = vadd.f32 %v810, %v882
        %v884 = vpop.f32.mrf.mxu0
        %v885 = vadd.f32 %v810, %v884
        %886 = vmatmul.bf16.gmra.mxu0 %v820
        %v887 = vpop.f32.mrf.mxu0
        %v888 = vadd.f32 %v810, %v887
        %v889 = vpop.f32.mrf.mxu0
        %v890 = vadd.f32 %v810, %v889
        %891 = vmatmul.bf16.gmra.mxu0 %v823
        %v892 = vpop.f32.mrf.mxu0
        %v893 = vadd.f32 %v810, %v892
        %v894 = vpop.f32.mrf.mxu0
        %v895 = vadd.f32 %v810, %v894
        %896 = vmatmul.bf16.gmra.mxu0 %v826
        %v897 = vpop.f32.mrf.mxu0
        %v898 = vadd.f32 %v810, %v897
        %v899 = vpop.f32.mrf.mxu0
        %v900 = vadd.f32 %v810, %v899
        %901 = vmatmul.bf16.gmra.mxu0 %v829
        %v902 = vpop.f32.mrf.mxu0
        %v903 = vadd.f32 %v810, %v902
        %v904 = vpop.f32.mrf.mxu0
        %v905 = vadd.f32 %v810, %v904
        %906 = vmatmul.bf16.gmra.mxu0 %v832
        %v907 = vpop.f32.mrf.mxu0
        %v908 = vadd.f32 %v810, %v907
        %v909 = vpop.f32.mrf.mxu0
        %v910 = vadd.f32 %v810, %v909
        %911 = vmatmul.bf16.gmra.mxu0 %v835
        %v912 = vpop.f32.mrf.mxu0
        %v913 = vadd.f32 %v810, %v912
        %v914 = vpop.f32.mrf.mxu0
        %v915 = vadd.f32 %v810, %v914
        %916 = vmatmul.bf16.gmra.mxu0 %v838
        %v917 = vpop.f32.mrf.mxu0
        %v918 = vadd.f32 %v810, %v917
        %v919 = vpop.f32.mrf.mxu0
        %v920 = vadd.f32 %v810, %v919
        %921 = vmatmul.bf16.gmra.mxu0 %v841
        %v922 = vpop.f32.mrf.mxu0
        %v923 = vadd.f32 %v810, %v922
        %v924 = vpop.f32.mrf.mxu0
        %v925 = vadd.f32 %v810, %v924
        %926 = vmatmul.bf16.gmra.mxu0 %v844
        %v927 = vpop.f32.mrf.mxu0
        %v928 = vadd.f32 %v810, %v927
        %v929 = vpop.f32.mrf.mxu0
        %v930 = vadd.f32 %v810, %v929
        %931 = vmatmul.bf16.gmra.mxu0 %v847
        %v932 = vpop.f32.mrf.mxu0
        %v933 = vadd.f32 %v810, %v932
        %v934 = vpop.f32.mrf.mxu0
        %v935 = vadd.f32 %v810, %v934
        %936 = vmatmul.bf16.gmra.mxu0 %v850
        %v937 = vpop.f32.mrf.mxu0
        %v938 = vadd.f32 %v810, %v937
        %v939 = vpop.f32.mrf.mxu0
        %v940 = vadd.f32 %v810, %v939
        %941 = vmatmul.bf16.gmra.mxu0 %v853
        %v942 = vpop.f32.mrf.mxu0
        %v943 = vadd.f32 %v810, %v942
        %v944 = vpop.f32.mrf.mxu0
        %v945 = vadd.f32 %v810, %v944
        %946 = vmatmul.bf16.gmra.mxu0 %v856
        %v947 = vpop.f32.mrf.mxu0
        %v948 = vadd.f32 %v810, %v947
        %v949 = vpop.f32.mrf.mxu0
        %v950 = vadd.f32 %v810, %v949
        %951 = vmatmul.bf16.gmra.mxu0 %v859
        %v952 = vpop.f32.mrf.mxu0
        %v953 = vadd.f32 %v810, %v952
        %v954 = vpop.f32.mrf.mxu0
        %v955 = vadd.f32 %v810, %v954
        %956 = vdwg.mxu0
        %v957 = vmax.f32 %v878, 0.0
        %v958 = vmax.f32 %v880, 0.0
        %v959 = vmax.f32 %v883, 0.0
        %v960 = vmax.f32 %v885, 0.0
        %v961 = vmax.f32 %v888, 0.0
        %v962 = vmax.f32 %v890, 0.0
        %v963 = vmax.f32 %v893, 0.0
        %v964 = vmax.f32 %v895, 0.0
        %v965 = vmax.f32 %v898, 0.0
        %v966 = vmax.f32 %v900, 0.0
        %v967 = vmax.f32 %v903, 0.0
        %v968 = vmax.f32 %v905, 0.0
        %v969 = vmax.f32 %v908, 0.0
        %v970 = vmax.f32 %v910, 0.0
        %v971 = vmax.f32 %v913, 0.0
        %v972 = vmax.f32 %v915, 0.0
        %v973 = vmax.f32 %v918, 0.0
        %v974 = vmax.f32 %v920, 0.0
        %v975 = vmax.f32 %v923, 0.0
        %v976 = vmax.f32 %v925, 0.0
        %v977 = vmax.f32 %v928, 0.0
        %v978 = vmax.f32 %v930, 0.0
        %v979 = vmax.f32 %v933, 0.0
        %v980 = vmax.f32 %v935, 0.0
        %v981 = vmax.f32 %v938, 0.0
        %v982 = vmax.f32 %v940, 0.0
        %v983 = vmax.f32 %v943, 0.0
        %v984 = vmax.f32 %v945, 0.0
        %v985 = vmax.f32 %v948, 0.0
        %v986 = vmax.f32 %v950, 0.0
        %v987 = vmax.f32 %v953, 0.0
        %v988 = vmax.f32 %v955, 0.0
        %v989 = vpack.c.bf16 %v958, %v957
        %v990 = vpack.c.bf16 %v960, %v959
        %v991 = vpack.c.bf16 %v962, %v961
        %v992 = vpack.c.bf16 %v964, %v963
        %v993 = vpack.c.bf16 %v966, %v965
        %v994 = vpack.c.bf16 %v968, %v967
        %v995 = vpack.c.bf16 %v970, %v969
        %v996 = vpack.c.bf16 %v972, %v971
        %v997 = vpack.c.bf16 %v974, %v973
        %v998 = vpack.c.bf16 %v976, %v975
        %v999 = vpack.c.bf16 %v978, %v977
        %v1000 = vpack.c.bf16 %v980, %v979
        %v1001 = vpack.c.bf16 %v982, %v981
        %v1002 = vpack.c.bf16 %v984, %v983
        %v1003 = vpack.c.bf16 %v986, %v985
        %v1004 = vpack.c.bf16 %v988, %v987
        %v1005 = vld [vmem:[#allocation4] sm:$0xf]
        %v1006 = vld [vmem:[#allocation4 + $0x4] sm:$0xf]
        %v1007 = vld [vmem:[#allocation4 + $0x8] sm:$0xf]
        %v1008 = vld [vmem:[#allocation4 + $0xc] sm:$0xf]
        %v1009 = vld [vmem:[#allocation4 + $0x10] sm:$0xf]
        %v1010 = vld [vmem:[#allocation4 + $0x14] sm:$0xf]
        %v1011 = vld [vmem:[#allocation4 + $0x18] sm:$0xf]
        %v1012 = vld [vmem:[#allocation4 + $0x1c] sm:$0xf]
        %v1013 = vld [vmem:[%s4] sm:$0x1]
        %v1015 = vperm.slane %v1013, 0
        %v1025 = vunpack.c.l.b16 %v1005
        %v1026 = vunpack.c.l.b16 %v1006
        %v1027 = vunpack.c.l.b16 %v1007
        %v1028 = vunpack.c.l.b16 %v1008
        %v1029 = vunpack.c.l.b16 %v1009
        %v1030 = vunpack.c.l.b16 %v1010
        %v1031 = vunpack.c.l.b16 %v1011
        %v1032 = vunpack.c.l.b16 %v1012
        %v1033 = vpack.c.b16 %v1026, %v1025
        %v1034 = vpack.c.b16 %v1028, %v1027
        %v1035 = vpack.c.b16 %v1030, %v1029
        %v1036 = vpack.c.b16 %v1032, %v1031
        %vm1041 = vcmask 523264
        %v1043 = vsel %vm1041, %v989, 0
        %v1046 = vsel %vm1041, %v990, 0
        %v1049 = vsel %vm1041, %v991, 0
        %v1052 = vsel %vm1041, %v992, 0
        %v1055 = vsel %vm1041, %v993, 0
        %v1058 = vsel %vm1041, %v994, 0
        %v1061 = vsel %vm1041, %v995, 0
        %v1064 = vsel %vm1041, %v996, 0
        %v1067 = vsel %vm1041, %v997, 0
        %v1070 = vsel %vm1041, %v998, 0
        %v1073 = vsel %vm1041, %v999, 0
        %v1076 = vsel %vm1041, %v1000, 0
        %v1079 = vsel %vm1041, %v1001, 0
        %v1082 = vsel %vm1041, %v1002, 0
        %v1085 = vsel %vm1041, %v1003, 0
        %v1088 = vsel %vm1041, %v1004, 0
        %1090 = vmatpush.bf16.msra.mxu0 0
        %1091 = vmatpush.bf16.msra.mxu0 0
        %1092 = vmatpush.bf16.msra.mxu0 0
        %1093 = vmatpush.bf16.msra.mxu0 0
        %1094 = vmatpush.bf16.msra.mxu0 %v1036
        %1095 = vmatpush.bf16.msra.mxu0 %v1035
        %1096 = vmatpush.bf16.msra.mxu0 %v1034
        %1097 = vmatpush.bf16.msra.mxu0 %v1033
        %1098 = vmatmul.bf16.gmra.mxu0 %v1043
        %v1099 = vpop.f32.mrf.mxu0
        %v1100 = vadd.f32 %v1015, %v1099
        %v1101 = vpop.f32.mrf.mxu0
        %v1102 = vadd.f32 %v1015, %v1101
        %1103 = vmatmul.bf16.gmra.mxu0 %v1046
        %v1104 = vpop.f32.mrf.mxu0
        %v1105 = vadd.f32 %v1015, %v1104
        %v1106 = vpop.f32.mrf.mxu0
        %v1107 = vadd.f32 %v1015, %v1106
        %1108 = vmatmul.bf16.gmra.mxu0 %v1049
        %v1109 = vpop.f32.mrf.mxu0
        %v1110 = vadd.f32 %v1015, %v1109
        %v1111 = vpop.f32.mrf.mxu0
        %v1112 = vadd.f32 %v1015, %v1111
        %1113 = vmatmul.bf16.gmra.mxu0 %v1052
        %v1114 = vpop.f32.mrf.mxu0
        %v1115 = vadd.f32 %v1015, %v1114
        %v1116 = vpop.f32.mrf.mxu0
        %v1117 = vadd.f32 %v1015, %v1116
        %1118 = vmatmul.bf16.gmra.mxu0 %v1055
        %v1119 = vpop.f32.mrf.mxu0
        %v1120 = vadd.f32 %v1015, %v1119
        %v1121 = vpop.f32.mrf.mxu0
        %v1122 = vadd.f32 %v1015, %v1121
        %1123 = vmatmul.bf16.gmra.mxu0 %v1058
        %v1124 = vpop.f32.mrf.mxu0
        %v1125 = vadd.f32 %v1015, %v1124
        %v1126 = vpop.f32.mrf.mxu0
        %v1127 = vadd.f32 %v1015, %v1126
        %1128 = vmatmul.bf16.gmra.mxu0 %v1061
        %v1129 = vpop.f32.mrf.mxu0
        %v1130 = vadd.f32 %v1015, %v1129
        %v1131 = vpop.f32.mrf.mxu0
        %v1132 = vadd.f32 %v1015, %v1131
        %1133 = vmatmul.bf16.gmra.mxu0 %v1064
        %v1134 = vpop.f32.mrf.mxu0
        %v1135 = vadd.f32 %v1015, %v1134
        %v1136 = vpop.f32.mrf.mxu0
        %v1137 = vadd.f32 %v1015, %v1136
        %1138 = vmatmul.bf16.gmra.mxu0 %v1067
        %v1139 = vpop.f32.mrf.mxu0
        %v1140 = vadd.f32 %v1015, %v1139
        %v1141 = vpop.f32.mrf.mxu0
        %v1142 = vadd.f32 %v1015, %v1141
        %1143 = vmatmul.bf16.gmra.mxu0 %v1070
        %v1144 = vpop.f32.mrf.mxu0
        %v1145 = vadd.f32 %v1015, %v1144
        %v1146 = vpop.f32.mrf.mxu0
        %v1147 = vadd.f32 %v1015, %v1146
        %1148 = vmatmul.bf16.gmra.mxu0 %v1073
        %v1149 = vpop.f32.mrf.mxu0
        %v1150 = vadd.f32 %v1015, %v1149
        %v1151 = vpop.f32.mrf.mxu0
        %v1152 = vadd.f32 %v1015, %v1151
        %1153 = vmatmul.bf16.gmra.mxu0 %v1076
        %v1154 = vpop.f32.mrf.mxu0
        %v1155 = vadd.f32 %v1015, %v1154
        %v1156 = vpop.f32.mrf.mxu0
        %v1157 = vadd.f32 %v1015, %v1156
        %1158 = vmatmul.bf16.gmra.mxu0 %v1079
        %v1159 = vpop.f32.mrf.mxu0
        %v1160 = vadd.f32 %v1015, %v1159
        %v1161 = vpop.f32.mrf.mxu0
        %v1162 = vadd.f32 %v1015, %v1161
        %1163 = vmatmul.bf16.gmra.mxu0 %v1082
        %v1164 = vpop.f32.mrf.mxu0
        %v1165 = vadd.f32 %v1015, %v1164
        %v1166 = vpop.f32.mrf.mxu0
        %v1167 = vadd.f32 %v1015, %v1166
        %1168 = vmatmul.bf16.gmra.mxu0 %v1085
        %v1169 = vpop.f32.mrf.mxu0
        %v1170 = vadd.f32 %v1015, %v1169
        %v1171 = vpop.f32.mrf.mxu0
        %v1172 = vadd.f32 %v1015, %v1171
        %1173 = vmatmul.bf16.gmra.mxu0 %v1088
        %v1174 = vpop.f32.mrf.mxu0
        %v1175 = vadd.f32 %v1015, %v1174
        %v1176 = vpop.f32.mrf.mxu0
        %v1177 = vadd.f32 %v1015, %v1176
        %1178 = vdwg.mxu0
        %v1179 = vmax.f32 %v1100, 0.0
        %v1180 = vmax.f32 %v1102, 0.0
        %v1181 = vmax.f32 %v1105, 0.0
        %v1182 = vmax.f32 %v1107, 0.0
        %v1183 = vmax.f32 %v1110, 0.0
        %v1184 = vmax.f32 %v1112, 0.0
        %v1185 = vmax.f32 %v1115, 0.0
        %v1186 = vmax.f32 %v1117, 0.0
        %v1187 = vmax.f32 %v1120, 0.0
        %v1188 = vmax.f32 %v1122, 0.0
        %v1189 = vmax.f32 %v1125, 0.0
        %v1190 = vmax.f32 %v1127, 0.0
        %v1191 = vmax.f32 %v1130, 0.0
        %v1192 = vmax.f32 %v1132, 0.0
        %v1193 = vmax.f32 %v1135, 0.0
        %v1194 = vmax.f32 %v1137, 0.0
        %v1195 = vmax.f32 %v1140, 0.0
        %v1196 = vmax.f32 %v1142, 0.0
        %v1197 = vmax.f32 %v1145, 0.0
        %v1198 = vmax.f32 %v1147, 0.0
        %v1199 = vmax.f32 %v1150, 0.0
        %v1200 = vmax.f32 %v1152, 0.0
        %v1201 = vmax.f32 %v1155, 0.0
        %v1202 = vmax.f32 %v1157, 0.0
        %v1203 = vmax.f32 %v1160, 0.0
        %v1204 = vmax.f32 %v1162, 0.0
        %v1205 = vmax.f32 %v1165, 0.0
        %v1206 = vmax.f32 %v1167, 0.0
        %v1207 = vmax.f32 %v1170, 0.0
        %v1208 = vmax.f32 %v1172, 0.0
        %v1209 = vmax.f32 %v1175, 0.0
        %v1210 = vmax.f32 %v1177, 0.0
        %v1211 = vpack.c.bf16 %v1180, %v1179
        %v1212 = vpack.c.bf16 %v1182, %v1181
        %v1213 = vpack.c.bf16 %v1184, %v1183
        %v1214 = vpack.c.bf16 %v1186, %v1185
        %v1215 = vpack.c.bf16 %v1188, %v1187
        %v1216 = vpack.c.bf16 %v1190, %v1189
        %v1217 = vpack.c.bf16 %v1192, %v1191
        %v1218 = vpack.c.bf16 %v1194, %v1193
        %v1219 = vpack.c.bf16 %v1196, %v1195
        %v1220 = vpack.c.bf16 %v1198, %v1197
        %v1221 = vpack.c.bf16 %v1200, %v1199
        %v1222 = vpack.c.bf16 %v1202, %v1201
        %v1223 = vpack.c.bf16 %v1204, %v1203
        %v1224 = vpack.c.bf16 %v1206, %v1205
        %v1225 = vpack.c.bf16 %v1208, %v1207
        %v1226 = vpack.c.bf16 %v1210, %v1209
        %p1227 = scmp.eq.s32.totalorder %s40, 0
        %p1228 = scmp.eq.s32.totalorder %s41, 0
        %p1229 = pnand %p1227, %p1228
        %p1230 = pneg %p1229
        // Predicated region
        $region125: #{seg_forward.1} parent=91 // pred_check
          _
        $region126: #{seg_forward.1} parent=91 // pred_check_branch
          %1232 = sbr.rel (%p1229) target = $region128
        $region127: #{seg_forward.1} parent=91 // pred_region
          %1233 = vst [vmem:[#allocation2] sm:$0xff] 0.0
        $region128: #{seg_forward.1} parent=91 // pred_fallthru
          _
        // Predicated region
        $region129: #{seg_forward.1} parent=91 // pred_check
          %p1234 = pneg %p1227
        $region130: #{seg_forward.1} parent=91 // pred_check_branch
          %1236 = sbr.rel (%p1234) target = $region132
        $region131: #{seg_forward.1} parent=91 // pred_region
          %v1237 = vld [vmem:[#allocation6] sm:$0xf]
          %v1238 = vld [vmem:[#allocation6 + $0x4] sm:$0xf]
          %v1239 = vld [vmem:[#allocation6 + $0x8] sm:$0xf]
          %v1240 = vld [vmem:[#allocation6 + $0xc] sm:$0xf]
          %v1241 = vld [vmem:[#allocation6 + $0x10] sm:$0xf]
          %v1242 = vld [vmem:[#allocation6 + $0x14] sm:$0xf]
          %v1243 = vld [vmem:[#allocation6 + $0x18] sm:$0xf]
          %v1244 = vld [vmem:[#allocation6 + $0x1c] sm:$0xf]
          %v1245 = vld [vmem:[#allocation8] sm:$0x1]
          %v1247 = vperm.slane %v1245, 0
          %v1257 = vunpack.c.l.b16 %v1237
          %v1258 = vunpack.c.l.b16 %v1238
          %v1259 = vunpack.c.l.b16 %v1239
          %v1260 = vunpack.c.l.b16 %v1240
          %v1261 = vunpack.c.l.b16 %v1241
          %v1262 = vunpack.c.l.b16 %v1242
          %v1263 = vunpack.c.l.b16 %v1243
          %v1264 = vunpack.c.l.b16 %v1244
          %v1265 = vpack.c.b16 %v1258, %v1257
          %v1266 = vpack.c.b16 %v1260, %v1259
          %v1267 = vpack.c.b16 %v1262, %v1261
          %v1268 = vpack.c.b16 %v1264, %v1263
          %v1274 = vsel %vm1041, %v1211, 0
          %v1277 = vsel %vm1041, %v1212, 0
          %v1280 = vsel %vm1041, %v1213, 0
          %v1283 = vsel %vm1041, %v1214, 0
          %v1286 = vsel %vm1041, %v1215, 0
          %v1289 = vsel %vm1041, %v1216, 0
          %v1292 = vsel %vm1041, %v1217, 0
          %v1295 = vsel %vm1041, %v1218, 0
          %v1298 = vsel %vm1041, %v1219, 0
          %v1301 = vsel %vm1041, %v1220, 0
          %v1304 = vsel %vm1041, %v1221, 0
          %v1307 = vsel %vm1041, %v1222, 0
          %v1310 = vsel %vm1041, %v1223, 0
          %v1313 = vsel %vm1041, %v1224, 0
          %v1316 = vsel %vm1041, %v1225, 0
          %v1319 = vsel %vm1041, %v1226, 0
          %1321 = vmatpush.bf16.msra.mxu0 0
          %1322 = vmatpush.bf16.msra.mxu0 0
          %1323 = vmatpush.bf16.msra.mxu0 0
          %1324 = vmatpush.bf16.msra.mxu0 0
          %1325 = vmatpush.bf16.msra.mxu0 %v1268
          %1326 = vmatpush.bf16.msra.mxu0 %v1267
          %1327 = vmatpush.bf16.msra.mxu0 %v1266
          %1328 = vmatpush.bf16.msra.mxu0 %v1265
          %1329 = vmatmul.bf16.gmra.mxu0 %v1274
          %v1330 = vpop.f32.mrf.mxu0
          %v1331 = vadd.f32 %v1247, %v1330
          %v1332 = vpop.f32.mrf.mxu0
          %v1333 = vadd.f32 %v1247, %v1332
          %1334 = vmatmul.bf16.gmra.mxu0 %v1277
          %v1335 = vpop.f32.mrf.mxu0
          %v1336 = vadd.f32 %v1247, %v1335
          %v1337 = vpop.f32.mrf.mxu0
          %v1338 = vadd.f32 %v1247, %v1337
          %1339 = vmatmul.bf16.gmra.mxu0 %v1280
          %v1340 = vpop.f32.mrf.mxu0
          %v1341 = vadd.f32 %v1247, %v1340
          %v1342 = vpop.f32.mrf.mxu0
          %v1343 = vadd.f32 %v1247, %v1342
          %1344 = vmatmul.bf16.gmra.mxu0 %v1283
          %v1345 = vpop.f32.mrf.mxu0
          %v1346 = vadd.f32 %v1247, %v1345
          %v1347 = vpop.f32.mrf.mxu0
          %v1348 = vadd.f32 %v1247, %v1347
          %1349 = vmatmul.bf16.gmra.mxu0 %v1286
          %v1350 = vpop.f32.mrf.mxu0
          %v1351 = vadd.f32 %v1247, %v1350
          %v1352 = vpop.f32.mrf.mxu0
          %v1353 = vadd.f32 %v1247, %v1352
          %1354 = vmatmul.bf16.gmra.mxu0 %v1289
          %v1355 = vpop.f32.mrf.mxu0
          %v1356 = vadd.f32 %v1247, %v1355
          %v1357 = vpop.f32.mrf.mxu0
          %v1358 = vadd.f32 %v1247, %v1357
          %1359 = vmatmul.bf16.gmra.mxu0 %v1292
          %v1360 = vpop.f32.mrf.mxu0
          %v1361 = vadd.f32 %v1247, %v1360
          %v1362 = vpop.f32.mrf.mxu0
          %v1363 = vadd.f32 %v1247, %v1362
          %1364 = vmatmul.bf16.gmra.mxu0 %v1295
          %v1365 = vpop.f32.mrf.mxu0
          %v1366 = vadd.f32 %v1247, %v1365
          %v1367 = vpop.f32.mrf.mxu0
          %v1368 = vadd.f32 %v1247, %v1367
          %1369 = vmatmul.bf16.gmra.mxu0 %v1298
          %v1370 = vpop.f32.mrf.mxu0
          %v1371 = vadd.f32 %v1247, %v1370
          %v1372 = vpop.f32.mrf.mxu0
          %v1373 = vadd.f32 %v1247, %v1372
          %1374 = vmatmul.bf16.gmra.mxu0 %v1301
          %v1375 = vpop.f32.mrf.mxu0
          %v1376 = vadd.f32 %v1247, %v1375
          %v1377 = vpop.f32.mrf.mxu0
          %v1378 = vadd.f32 %v1247, %v1377
          %1379 = vmatmul.bf16.gmra.mxu0 %v1304
          %v1380 = vpop.f32.mrf.mxu0
          %v1381 = vadd.f32 %v1247, %v1380
          %v1382 = vpop.f32.mrf.mxu0
          %v1383 = vadd.f32 %v1247, %v1382
          %1384 = vmatmul.bf16.gmra.mxu0 %v1307
          %v1385 = vpop.f32.mrf.mxu0
          %v1386 = vadd.f32 %v1247, %v1385
          %v1387 = vpop.f32.mrf.mxu0
          %v1388 = vadd.f32 %v1247, %v1387
          %1389 = vmatmul.bf16.gmra.mxu0 %v1310
          %v1390 = vpop.f32.mrf.mxu0
          %v1391 = vadd.f32 %v1247, %v1390
          %v1392 = vpop.f32.mrf.mxu0
          %v1393 = vadd.f32 %v1247, %v1392
          %1394 = vmatmul.bf16.gmra.mxu0 %v1313
          %v1395 = vpop.f32.mrf.mxu0
          %v1396 = vadd.f32 %v1247, %v1395
          %v1397 = vpop.f32.mrf.mxu0
          %v1398 = vadd.f32 %v1247, %v1397
          %1399 = vmatmul.bf16.gmra.mxu0 %v1316
          %v1400 = vpop.f32.mrf.mxu0
          %v1401 = vadd.f32 %v1247, %v1400
          %v1402 = vpop.f32.mrf.mxu0
          %v1403 = vadd.f32 %v1247, %v1402
          %1404 = vmatmul.bf16.gmra.mxu0 %v1319
          %v1405 = vpop.f32.mrf.mxu0
          %v1406 = vadd.f32 %v1247, %v1405
          %v1407 = vpop.f32.mrf.mxu0
          %v1408 = vadd.f32 %v1247, %v1407
          %1409 = vdwg.mxu0
          %v1410 = vmax.f32 %v1331, 0.0
          %v1411 = vmax.f32 %v1333, 0.0
          %v1412 = vmax.f32 %v1336, 0.0
          %v1413 = vmax.f32 %v1338, 0.0
          %v1414 = vmax.f32 %v1341, 0.0
          %v1415 = vmax.f32 %v1343, 0.0
          %v1416 = vmax.f32 %v1346, 0.0
          %v1417 = vmax.f32 %v1348, 0.0
          %v1418 = vmax.f32 %v1351, 0.0
          %v1419 = vmax.f32 %v1353, 0.0
          %v1420 = vmax.f32 %v1356, 0.0
          %v1421 = vmax.f32 %v1358, 0.0
          %v1422 = vmax.f32 %v1361, 0.0
          %v1423 = vmax.f32 %v1363, 0.0
          %v1424 = vmax.f32 %v1366, 0.0
          %v1425 = vmax.f32 %v1368, 0.0
          %v1426 = vmax.f32 %v1371, 0.0
          %v1427 = vmax.f32 %v1373, 0.0
          %v1428 = vmax.f32 %v1376, 0.0
          %v1429 = vmax.f32 %v1378, 0.0
          %v1430 = vmax.f32 %v1381, 0.0
          %v1431 = vmax.f32 %v1383, 0.0
          %v1432 = vmax.f32 %v1386, 0.0
          %v1433 = vmax.f32 %v1388, 0.0
          %v1434 = vmax.f32 %v1391, 0.0
          %v1435 = vmax.f32 %v1393, 0.0
          %v1436 = vmax.f32 %v1396, 0.0
          %v1437 = vmax.f32 %v1398, 0.0
          %v1438 = vmax.f32 %v1401, 0.0
          %v1439 = vmax.f32 %v1403, 0.0
          %v1440 = vmax.f32 %v1406, 0.0
          %v1441 = vmax.f32 %v1408, 0.0
          %v1442 = vpack.c.bf16 %v1411, %v1410
          %v1443 = vpack.c.bf16 %v1413, %v1412
          %v1444 = vpack.c.bf16 %v1415, %v1414
          %v1445 = vpack.c.bf16 %v1417, %v1416
          %v1446 = vpack.c.bf16 %v1419, %v1418
          %v1447 = vpack.c.bf16 %v1421, %v1420
          %v1448 = vpack.c.bf16 %v1423, %v1422
          %v1449 = vpack.c.bf16 %v1425, %v1424
          %v1450 = vpack.c.bf16 %v1427, %v1426
          %v1451 = vpack.c.bf16 %v1429, %v1428
          %v1452 = vpack.c.bf16 %v1431, %v1430
          %v1453 = vpack.c.bf16 %v1433, %v1432
          %v1454 = vpack.c.bf16 %v1435, %v1434
          %v1455 = vpack.c.bf16 %v1437, %v1436
          %v1456 = vpack.c.bf16 %v1439, %v1438
          %v1457 = vpack.c.bf16 %v1441, %v1440
          %v1458 = vld [vmem:[%s7] sm:$0xff]
          %v1459 = vld [vmem:[%s7 + $0x8] sm:$0xff]
          %v1460 = vld [vmem:[%s7 + $0x10] sm:$0xff]
          %v1461 = vld [vmem:[%s7 + $0x18] sm:$0xff]
          %v1462 = vld [vmem:[%s7 + $0x20] sm:$0xff]
          %v1463 = vld [vmem:[%s7 + $0x28] sm:$0xff]
          %v1464 = vld [vmem:[%s7 + $0x30] sm:$0xff]
          %v1465 = vld [vmem:[%s7 + $0x38] sm:$0xff]
          %v1466 = vld [vmem:[%s7 + $0x40] sm:$0xff]
          %v1467 = vld [vmem:[%s7 + $0x48] sm:$0xff]
          %v1468 = vld [vmem:[%s7 + $0x50] sm:$0xff]
          %v1469 = vld [vmem:[%s7 + $0x58] sm:$0xff]
          %v1470 = vld [vmem:[%s7 + $0x60] sm:$0xff]
          %v1471 = vld [vmem:[%s7 + $0x68] sm:$0xff]
          %v1472 = vld [vmem:[%s7 + $0x70] sm:$0xff]
          %v1473 = vld [vmem:[%s7 + $0x78] sm:$0xff]
          %v1474 = vld [vmem:[%s7 + $0x80] sm:$0xff]
          %v1475 = vld [vmem:[%s7 + $0x88] sm:$0xff]
          %v1476 = vld [vmem:[%s7 + $0x90] sm:$0xff]
          %v1477 = vld [vmem:[%s7 + $0x98] sm:$0xff]
          %v1478 = vld [vmem:[%s7 + $0xa0] sm:$0xff]
          %v1479 = vld [vmem:[%s7 + $0xa8] sm:$0xff]
          %v1480 = vld [vmem:[%s7 + $0xb0] sm:$0xff]
          %v1481 = vld [vmem:[%s7 + $0xb8] sm:$0xff]
          %v1482 = vld [vmem:[%s7 + $0xc0] sm:$0xff]
          %v1483 = vld [vmem:[%s7 + $0xc8] sm:$0xff]
          %v1484 = vld [vmem:[%s7 + $0xd0] sm:$0xff]
          %v1485 = vld [vmem:[%s7 + $0xd8] sm:$0xff]
          %v1486 = vld [vmem:[%s7 + $0xe0] sm:$0xff]
          %v1487 = vld [vmem:[%s7 + $0xe8] sm:$0xff]
          %v1488 = vld [vmem:[%s7 + $0xf0] sm:$0xff]
          %v1489 = vld [vmem:[%s7 + $0xf8] sm:$0xff]
          %v1490 = vld [vmem:[%s7 + $0x100] sm:$0xff]
          %v1491 = vld [vmem:[%s7 + $0x108] sm:$0xff]
          %v1492 = vld [vmem:[%s7 + $0x110] sm:$0xff]
          %v1493 = vld [vmem:[%s7 + $0x118] sm:$0xff]
          %v1494 = vld [vmem:[%s7 + $0x120] sm:$0xff]
          %v1495 = vld [vmem:[%s7 + $0x128] sm:$0xff]
          %v1496 = vld [vmem:[%s7 + $0x130] sm:$0xff]
          %v1497 = vld [vmem:[%s7 + $0x138] sm:$0xff]
          %v1498 = vld [vmem:[%s7 + $0x140] sm:$0xff]
          %v1499 = vld [vmem:[%s7 + $0x148] sm:$0xff]
          %v1500 = vld [vmem:[%s7 + $0x150] sm:$0xff]
          %v1501 = vld [vmem:[%s7 + $0x158] sm:$0xff]
          %v1502 = vld [vmem:[%s7 + $0x160] sm:$0xff]
          %v1503 = vld [vmem:[%s7 + $0x168] sm:$0xff]
          %v1504 = vld [vmem:[%s7 + $0x170] sm:$0xff]
          %v1505 = vld [vmem:[%s7 + $0x178] sm:$0xff]
          %v1506 = vld [vmem:[%s7 + $0x180] sm:$0xff]
          %v1507 = vld [vmem:[%s7 + $0x188] sm:$0xff]
          %v1508 = vld [vmem:[%s7 + $0x190] sm:$0xff]
          %v1509 = vld [vmem:[%s7 + $0x198] sm:$0xff]
          %v1510 = vld [vmem:[%s7 + $0x1a0] sm:$0xff]
          %v1511 = vld [vmem:[%s7 + $0x1a8] sm:$0xff]
          %v1512 = vld [vmem:[%s7 + $0x1b0] sm:$0xff]
          %v1513 = vld [vmem:[%s7 + $0x1b8] sm:$0xff]
          %v1514 = vld [vmem:[%s7 + $0x1c0] sm:$0xff]
          %v1515 = vld [vmem:[%s7 + $0x1c8] sm:$0xff]
          %v1516 = vld [vmem:[%s7 + $0x1d0] sm:$0xff]
          %v1517 = vld [vmem:[%s7 + $0x1d8] sm:$0xff]
          %v1518 = vld [vmem:[%s7 + $0x1e0] sm:$0xff]
          %v1519 = vld [vmem:[%s7 + $0x1e8] sm:$0xff]
          %v1520 = vld [vmem:[%s7 + $0x1f0] sm:$0xff]
          %v1521 = vld [vmem:[%s7 + $0x1f8] sm:$0xff]
          %v1522 = vld [vmem:[%s8] sm:$0xff]
          %v1524 = vperm.slane %v1522, 0
          %v1525 = vperm.slane %v1522, 1
          %v1526 = vperm.slane %v1522, 2
          %v1527 = vperm.slane %v1522, 3
          %v1528 = vperm.slane %v1522, 4
          %v1529 = vperm.slane %v1522, 5
          %v1530 = vperm.slane %v1522, 6
          %v1531 = vperm.slane %v1522, 7
          %v1604 = vunpack.c.l.b16 %v1458
          %v1605 = vunpack.c.h.b16 %v1458
          %v1606 = vunpack.c.l.b16 %v1459
          %v1607 = vunpack.c.h.b16 %v1459
          %v1608 = vunpack.c.l.b16 %v1460
          %v1609 = vunpack.c.h.b16 %v1460
          %v1610 = vunpack.c.l.b16 %v1461
          %v1611 = vunpack.c.h.b16 %v1461
          %v1612 = vunpack.c.l.b16 %v1462
          %v1613 = vunpack.c.h.b16 %v1462
          %v1614 = vunpack.c.l.b16 %v1463
          %v1615 = vunpack.c.h.b16 %v1463
          %v1616 = vunpack.c.l.b16 %v1464
          %v1617 = vunpack.c.h.b16 %v1464
          %v1618 = vunpack.c.l.b16 %v1465
          %v1619 = vunpack.c.h.b16 %v1465
          %v1620 = vunpack.c.l.b16 %v1466
          %v1621 = vunpack.c.h.b16 %v1466
          %v1622 = vunpack.c.l.b16 %v1467
          %v1623 = vunpack.c.h.b16 %v1467
          %v1624 = vunpack.c.l.b16 %v1468
          %v1625 = vunpack.c.h.b16 %v1468
          %v1626 = vunpack.c.l.b16 %v1469
          %v1627 = vunpack.c.h.b16 %v1469
          %v1628 = vunpack.c.l.b16 %v1470
          %v1629 = vunpack.c.h.b16 %v1470
          %v1630 = vunpack.c.l.b16 %v1471
          %v1631 = vunpack.c.h.b16 %v1471
          %v1632 = vunpack.c.l.b16 %v1472
          %v1633 = vunpack.c.h.b16 %v1472
          %v1634 = vunpack.c.l.b16 %v1473
          %v1635 = vunpack.c.h.b16 %v1473
          %v1636 = vunpack.c.l.b16 %v1474
          %v1637 = vunpack.c.h.b16 %v1474
          %v1638 = vunpack.c.l.b16 %v1475
          %v1639 = vunpack.c.h.b16 %v1475
          %v1640 = vunpack.c.l.b16 %v1476
          %v1641 = vunpack.c.h.b16 %v1476
          %v1642 = vunpack.c.l.b16 %v1477
          %v1643 = vunpack.c.h.b16 %v1477
          %v1644 = vunpack.c.l.b16 %v1478
          %v1645 = vunpack.c.h.b16 %v1478
          %v1646 = vunpack.c.l.b16 %v1479
          %v1647 = vunpack.c.h.b16 %v1479
          %v1648 = vunpack.c.l.b16 %v1480
          %v1649 = vunpack.c.h.b16 %v1480
          %v1650 = vunpack.c.l.b16 %v1481
          %v1651 = vunpack.c.h.b16 %v1481
          %v1652 = vunpack.c.l.b16 %v1482
          %v1653 = vunpack.c.h.b16 %v1482
          %v1654 = vunpack.c.l.b16 %v1483
          %v1655 = vunpack.c.h.b16 %v1483
          %v1656 = vunpack.c.l.b16 %v1484
          %v1657 = vunpack.c.h.b16 %v1484
          %v1658 = vunpack.c.l.b16 %v1485
          %v1659 = vunpack.c.h.b16 %v1485
          %v1660 = vunpack.c.l.b16 %v1486
          %v1661 = vunpack.c.h.b16 %v1486
          %v1662 = vunpack.c.l.b16 %v1487
          %v1663 = vunpack.c.h.b16 %v1487
          %v1664 = vunpack.c.l.b16 %v1488
          %v1665 = vunpack.c.h.b16 %v1488
          %v1666 = vunpack.c.l.b16 %v1489
          %v1667 = vunpack.c.h.b16 %v1489
          %v1668 = vunpack.c.l.b16 %v1490
          %v1669 = vunpack.c.h.b16 %v1490
          %v1670 = vunpack.c.l.b16 %v1491
          %v1671 = vunpack.c.h.b16 %v1491
          %v1672 = vunpack.c.l.b16 %v1492
          %v1673 = vunpack.c.h.b16 %v1492
          %v1674 = vunpack.c.l.b16 %v1493
          %v1675 = vunpack.c.h.b16 %v1493
          %v1676 = vunpack.c.l.b16 %v1494
          %v1677 = vunpack.c.h.b16 %v1494
          %v1678 = vunpack.c.l.b16 %v1495
          %v1679 = vunpack.c.h.b16 %v1495
          %v1680 = vunpack.c.l.b16 %v1496
          %v1681 = vunpack.c.h.b16 %v1496
          %v1682 = vunpack.c.l.b16 %v1497
          %v1683 = vunpack.c.h.b16 %v1497
          %v1684 = vunpack.c.l.b16 %v1498
          %v1685 = vunpack.c.h.b16 %v1498
          %v1686 = vunpack.c.l.b16 %v1499
          %v1687 = vunpack.c.h.b16 %v1499
          %v1688 = vunpack.c.l.b16 %v1500
          %v1689 = vunpack.c.h.b16 %v1500
          %v1690 = vunpack.c.l.b16 %v1501
          %v1691 = vunpack.c.h.b16 %v1501
          %v1692 = vunpack.c.l.b16 %v1502
          %v1693 = vunpack.c.h.b16 %v1502
          %v1694 = vunpack.c.l.b16 %v1503
          %v1695 = vunpack.c.h.b16 %v1503
          %v1696 = vunpack.c.l.b16 %v1504
          %v1697 = vunpack.c.h.b16 %v1504
          %v1698 = vunpack.c.l.b16 %v1505
          %v1699 = vunpack.c.h.b16 %v1505
          %v1700 = vunpack.c.l.b16 %v1506
          %v1701 = vunpack.c.h.b16 %v1506
          %v1702 = vunpack.c.l.b16 %v1507
          %v1703 = vunpack.c.h.b16 %v1507
          %v1704 = vunpack.c.l.b16 %v1508
          %v1705 = vunpack.c.h.b16 %v1508
          %v1706 = vunpack.c.l.b16 %v1509
          %v1707 = vunpack.c.h.b16 %v1509
          %v1708 = vunpack.c.l.b16 %v1510
          %v1709 = vunpack.c.h.b16 %v1510
          %v1710 = vunpack.c.l.b16 %v1511
          %v1711 = vunpack.c.h.b16 %v1511
          %v1712 = vunpack.c.l.b16 %v1512
          %v1713 = vunpack.c.h.b16 %v1512
          %v1714 = vunpack.c.l.b16 %v1513
          %v1715 = vunpack.c.h.b16 %v1513
          %v1716 = vunpack.c.l.b16 %v1514
          %v1717 = vunpack.c.h.b16 %v1514
          %v1718 = vunpack.c.l.b16 %v1515
          %v1719 = vunpack.c.h.b16 %v1515
          %v1720 = vunpack.c.l.b16 %v1516
          %v1721 = vunpack.c.h.b16 %v1516
          %v1722 = vunpack.c.l.b16 %v1517
          %v1723 = vunpack.c.h.b16 %v1517
          %v1724 = vunpack.c.l.b16 %v1518
          %v1725 = vunpack.c.h.b16 %v1518
          %v1726 = vunpack.c.l.b16 %v1519
          %v1727 = vunpack.c.h.b16 %v1519
          %v1728 = vunpack.c.l.b16 %v1520
          %v1729 = vunpack.c.h.b16 %v1520
          %v1730 = vunpack.c.l.b16 %v1521
          %v1731 = vunpack.c.h.b16 %v1521
          %v1732 = vpack.c.b16 %v1612, %v1604
          %v1733 = vpack.c.b16 %v1613, %v1605
          %v1734 = vpack.c.b16 %v1614, %v1606
          %v1735 = vpack.c.b16 %v1615, %v1607
          %v1736 = vpack.c.b16 %v1616, %v1608
          %v1737 = vpack.c.b16 %v1617, %v1609
          %v1738 = vpack.c.b16 %v1618, %v1610
          %v1739 = vpack.c.b16 %v1619, %v1611
          %v1740 = vpack.c.b16 %v1628, %v1620
          %v1741 = vpack.c.b16 %v1629, %v1621
          %v1742 = vpack.c.b16 %v1630, %v1622
          %v1743 = vpack.c.b16 %v1631, %v1623
          %v1744 = vpack.c.b16 %v1632, %v1624
          %v1745 = vpack.c.b16 %v1633, %v1625
          %v1746 = vpack.c.b16 %v1634, %v1626
          %v1747 = vpack.c.b16 %v1635, %v1627
          %v1748 = vpack.c.b16 %v1644, %v1636
          %v1749 = vpack.c.b16 %v1645, %v1637
          %v1750 = vpack.c.b16 %v1646, %v1638
          %v1751 = vpack.c.b16 %v1647, %v1639
          %v1752 = vpack.c.b16 %v1648, %v1640
          %v1753 = vpack.c.b16 %v1649, %v1641
          %v1754 = vpack.c.b16 %v1650, %v1642
          %v1755 = vpack.c.b16 %v1651, %v1643
          %v1756 = vpack.c.b16 %v1660, %v1652
          %v1757 = vpack.c.b16 %v1661, %v1653
          %v1758 = vpack.c.b16 %v1662, %v1654
          %v1759 = vpack.c.b16 %v1663, %v1655
          %v1760 = vpack.c.b16 %v1664, %v1656
          %v1761 = vpack.c.b16 %v1665, %v1657
          %v1762 = vpack.c.b16 %v1666, %v1658
          %v1763 = vpack.c.b16 %v1667, %v1659
          %v1764 = vpack.c.b16 %v1676, %v1668
          %v1765 = vpack.c.b16 %v1677, %v1669
          %v1766 = vpack.c.b16 %v1678, %v1670
          %v1767 = vpack.c.b16 %v1679, %v1671
          %v1768 = vpack.c.b16 %v1680, %v1672
          %v1769 = vpack.c.b16 %v1681, %v1673
          %v1770 = vpack.c.b16 %v1682, %v1674
          %v1771 = vpack.c.b16 %v1683, %v1675
          %v1772 = vpack.c.b16 %v1692, %v1684
          %v1773 = vpack.c.b16 %v1693, %v1685
          %v1774 = vpack.c.b16 %v1694, %v1686
          %v1775 = vpack.c.b16 %v1695, %v1687
          %v1776 = vpack.c.b16 %v1696, %v1688
          %v1777 = vpack.c.b16 %v1697, %v1689
          %v1778 = vpack.c.b16 %v1698, %v1690
          %v1779 = vpack.c.b16 %v1699, %v1691
          %v1780 = vpack.c.b16 %v1708, %v1700
          %v1781 = vpack.c.b16 %v1709, %v1701
          %v1782 = vpack.c.b16 %v1710, %v1702
          %v1783 = vpack.c.b16 %v1711, %v1703
          %v1784 = vpack.c.b16 %v1712, %v1704
          %v1785 = vpack.c.b16 %v1713, %v1705
          %v1786 = vpack.c.b16 %v1714, %v1706
          %v1787 = vpack.c.b16 %v1715, %v1707
          %v1788 = vpack.c.b16 %v1724, %v1716
          %v1789 = vpack.c.b16 %v1725, %v1717
          %v1790 = vpack.c.b16 %v1726, %v1718
          %v1791 = vpack.c.b16 %v1727, %v1719
          %v1792 = vpack.c.b16 %v1728, %v1720
          %v1793 = vpack.c.b16 %v1729, %v1721
          %v1794 = vpack.c.b16 %v1730, %v1722
          %v1795 = vpack.c.b16 %v1731, %v1723
          %1860 = vmatpush.bf16.msra.mxu0 %v1788
          %1861 = vmatpush.bf16.msra.mxu0 %v1780
          %1862 = vmatpush.bf16.msra.mxu0 %v1772
          %1863 = vmatpush.bf16.msra.mxu0 %v1764
          %1864 = vmatpush.bf16.msra.mxu0 %v1756
          %1865 = vmatpush.bf16.msra.mxu0 %v1748
          %1866 = vmatpush.bf16.msra.mxu0 %v1740
          %1867 = vmatpush.bf16.msra.mxu0 %v1732
          %1868 = vmatmul.bf16.gmra.mxu0 %v1442
          %v1869 = vpop.f32.mrf.mxu0
          %v1870 = vadd.f32 %v1524, %v1869
          %v1871 = vpop.f32.mrf.mxu0
          %v1872 = vadd.f32 %v1524, %v1871
          %1873 = vmatmul.bf16.gmra.mxu0 %v1443
          %v1874 = vpop.f32.mrf.mxu0
          %v1875 = vadd.f32 %v1524, %v1874
          %v1876 = vpop.f32.mrf.mxu0
          %v1877 = vadd.f32 %v1524, %v1876
          %1878 = vmatmul.bf16.gmra.mxu0 %v1444
          %v1879 = vpop.f32.mrf.mxu0
          %v1880 = vadd.f32 %v1524, %v1879
          %v1881 = vpop.f32.mrf.mxu0
          %v1882 = vadd.f32 %v1524, %v1881
          %1883 = vmatmul.bf16.gmra.mxu0 %v1445
          %v1884 = vpop.f32.mrf.mxu0
          %v1885 = vadd.f32 %v1524, %v1884
          %v1886 = vpop.f32.mrf.mxu0
          %v1887 = vadd.f32 %v1524, %v1886
          %1888 = vmatmul.bf16.gmra.mxu0 %v1446
          %v1889 = vpop.f32.mrf.mxu0
          %v1890 = vadd.f32 %v1524, %v1889
          %v1891 = vpop.f32.mrf.mxu0
          %v1892 = vadd.f32 %v1524, %v1891
          %1893 = vmatmul.bf16.gmra.mxu0 %v1447
          %v1894 = vpop.f32.mrf.mxu0
          %v1895 = vadd.f32 %v1524, %v1894
          %v1896 = vpop.f32.mrf.mxu0
          %v1897 = vadd.f32 %v1524, %v1896
          %1898 = vmatmul.bf16.gmra.mxu0 %v1448
          %v1899 = vpop.f32.mrf.mxu0
          %v1900 = vadd.f32 %v1524, %v1899
          %v1901 = vpop.f32.mrf.mxu0
          %v1902 = vadd.f32 %v1524, %v1901
          %1903 = vmatmul.bf16.gmra.mxu0 %v1449
          %v1904 = vpop.f32.mrf.mxu0
          %v1905 = vadd.f32 %v1524, %v1904
          %v1906 = vpop.f32.mrf.mxu0
          %v1907 = vadd.f32 %v1524, %v1906
          %1908 = vmatmul.bf16.gmra.mxu0 %v1450
          %v1909 = vpop.f32.mrf.mxu0
          %v1910 = vadd.f32 %v1524, %v1909
          %v1911 = vpop.f32.mrf.mxu0
          %v1912 = vadd.f32 %v1524, %v1911
          %1913 = vmatmul.bf16.gmra.mxu0 %v1451
          %v1914 = vpop.f32.mrf.mxu0
          %v1915 = vadd.f32 %v1524, %v1914
          %v1916 = vpop.f32.mrf.mxu0
          %v1917 = vadd.f32 %v1524, %v1916
          %1918 = vmatmul.bf16.gmra.mxu0 %v1452
          %v1919 = vpop.f32.mrf.mxu0
          %v1920 = vadd.f32 %v1524, %v1919
          %v1921 = vpop.f32.mrf.mxu0
          %v1922 = vadd.f32 %v1524, %v1921
          %1923 = vmatmul.bf16.gmra.mxu0 %v1453
          %v1924 = vpop.f32.mrf.mxu0
          %v1925 = vadd.f32 %v1524, %v1924
          %v1926 = vpop.f32.mrf.mxu0
          %v1927 = vadd.f32 %v1524, %v1926
          %1928 = vmatmul.bf16.gmra.mxu0 %v1454
          %v1929 = vpop.f32.mrf.mxu0
          %v1930 = vadd.f32 %v1524, %v1929
          %v1931 = vpop.f32.mrf.mxu0
          %v1932 = vadd.f32 %v1524, %v1931
          %1933 = vmatmul.bf16.gmra.mxu0 %v1455
          %v1934 = vpop.f32.mrf.mxu0
          %v1935 = vadd.f32 %v1524, %v1934
          %v1936 = vpop.f32.mrf.mxu0
          %v1937 = vadd.f32 %v1524, %v1936
          %1938 = vmatmul.bf16.gmra.mxu0 %v1456
          %v1939 = vpop.f32.mrf.mxu0
          %v1940 = vadd.f32 %v1524, %v1939
          %v1941 = vpop.f32.mrf.mxu0
          %v1942 = vadd.f32 %v1524, %v1941
          %1943 = vmatmul.bf16.gmra.mxu0 %v1457
          %v1944 = vpop.f32.mrf.mxu0
          %v1945 = vadd.f32 %v1524, %v1944
          %v1946 = vpop.f32.mrf.mxu0
          %v1947 = vadd.f32 %v1524, %v1946
          %1948 = vdwg.mxu0
          %1949 = vmatpush.bf16.msra.mxu0 %v1789
          %1950 = vmatpush.bf16.msra.mxu0 %v1781
          %1951 = vmatpush.bf16.msra.mxu0 %v1773
          %1952 = vmatpush.bf16.msra.mxu0 %v1765
          %1953 = vmatpush.bf16.msra.mxu0 %v1757
          %1954 = vmatpush.bf16.msra.mxu0 %v1749
          %1955 = vmatpush.bf16.msra.mxu0 %v1741
          %1956 = vmatpush.bf16.msra.mxu0 %v1733
          %1957 = vmatmul.bf16.gmra.mxu0 %v1442
          %v1958 = vpop.f32.mrf.mxu0
          %v1959 = vadd.f32 %v1525, %v1958
          %v1960 = vpop.f32.mrf.mxu0
          %v1961 = vadd.f32 %v1525, %v1960
          %1962 = vmatmul.bf16.gmra.mxu0 %v1443
          %v1963 = vpop.f32.mrf.mxu0
          %v1964 = vadd.f32 %v1525, %v1963
          %v1965 = vpop.f32.mrf.mxu0
          %v1966 = vadd.f32 %v1525, %v1965
          %1967 = vmatmul.bf16.gmra.mxu0 %v1444
          %v1968 = vpop.f32.mrf.mxu0
          %v1969 = vadd.f32 %v1525, %v1968
          %v1970 = vpop.f32.mrf.mxu0
          %v1971 = vadd.f32 %v1525, %v1970
          %1972 = vmatmul.bf16.gmra.mxu0 %v1445
          %v1973 = vpop.f32.mrf.mxu0
          %v1974 = vadd.f32 %v1525, %v1973
          %v1975 = vpop.f32.mrf.mxu0
          %v1976 = vadd.f32 %v1525, %v1975
          %1977 = vmatmul.bf16.gmra.mxu0 %v1446
          %v1978 = vpop.f32.mrf.mxu0
          %v1979 = vadd.f32 %v1525, %v1978
          %v1980 = vpop.f32.mrf.mxu0
          %v1981 = vadd.f32 %v1525, %v1980
          %1982 = vmatmul.bf16.gmra.mxu0 %v1447
          %v1983 = vpop.f32.mrf.mxu0
          %v1984 = vadd.f32 %v1525, %v1983
          %v1985 = vpop.f32.mrf.mxu0
          %v1986 = vadd.f32 %v1525, %v1985
          %1987 = vmatmul.bf16.gmra.mxu0 %v1448
          %v1988 = vpop.f32.mrf.mxu0
          %v1989 = vadd.f32 %v1525, %v1988
          %v1990 = vpop.f32.mrf.mxu0
          %v1991 = vadd.f32 %v1525, %v1990
          %1992 = vmatmul.bf16.gmra.mxu0 %v1449
          %v1993 = vpop.f32.mrf.mxu0
          %v1994 = vadd.f32 %v1525, %v1993
          %v1995 = vpop.f32.mrf.mxu0
          %v1996 = vadd.f32 %v1525, %v1995
          %1997 = vmatmul.bf16.gmra.mxu0 %v1450
          %v1998 = vpop.f32.mrf.mxu0
          %v1999 = vadd.f32 %v1525, %v1998
          %v2000 = vpop.f32.mrf.mxu0
          %v2001 = vadd.f32 %v1525, %v2000
          %2002 = vmatmul.bf16.gmra.mxu0 %v1451
          %v2003 = vpop.f32.mrf.mxu0
          %v2004 = vadd.f32 %v1525, %v2003
          %v2005 = vpop.f32.mrf.mxu0
          %v2006 = vadd.f32 %v1525, %v2005
          %2007 = vmatmul.bf16.gmra.mxu0 %v1452
          %v2008 = vpop.f32.mrf.mxu0
          %v2009 = vadd.f32 %v1525, %v2008
          %v2010 = vpop.f32.mrf.mxu0
          %v2011 = vadd.f32 %v1525, %v2010
          %2012 = vmatmul.bf16.gmra.mxu0 %v1453
          %v2013 = vpop.f32.mrf.mxu0
          %v2014 = vadd.f32 %v1525, %v2013
          %v2015 = vpop.f32.mrf.mxu0
          %v2016 = vadd.f32 %v1525, %v2015
          %2017 = vmatmul.bf16.gmra.mxu0 %v1454
          %v2018 = vpop.f32.mrf.mxu0
          %v2019 = vadd.f32 %v1525, %v2018
          %v2020 = vpop.f32.mrf.mxu0
          %v2021 = vadd.f32 %v1525, %v2020
          %2022 = vmatmul.bf16.gmra.mxu0 %v1455
          %v2023 = vpop.f32.mrf.mxu0
          %v2024 = vadd.f32 %v1525, %v2023
          %v2025 = vpop.f32.mrf.mxu0
          %v2026 = vadd.f32 %v1525, %v2025
          %2027 = vmatmul.bf16.gmra.mxu0 %v1456
          %v2028 = vpop.f32.mrf.mxu0
          %v2029 = vadd.f32 %v1525, %v2028
          %v2030 = vpop.f32.mrf.mxu0
          %v2031 = vadd.f32 %v1525, %v2030
          %2032 = vmatmul.bf16.gmra.mxu0 %v1457
          %v2033 = vpop.f32.mrf.mxu0
          %v2034 = vadd.f32 %v1525, %v2033
          %v2035 = vpop.f32.mrf.mxu0
          %v2036 = vadd.f32 %v1525, %v2035
          %2037 = vdwg.mxu0
          %2038 = vmatpush.bf16.msra.mxu0 %v1790
          %2039 = vmatpush.bf16.msra.mxu0 %v1782
          %2040 = vmatpush.bf16.msra.mxu0 %v1774
          %2041 = vmatpush.bf16.msra.mxu0 %v1766
          %2042 = vmatpush.bf16.msra.mxu0 %v1758
          %2043 = vmatpush.bf16.msra.mxu0 %v1750
          %2044 = vmatpush.bf16.msra.mxu0 %v1742
          %2045 = vmatpush.bf16.msra.mxu0 %v1734
          %2046 = vmatmul.bf16.gmra.mxu0 %v1442
          %v2047 = vpop.f32.mrf.mxu0
          %v2048 = vadd.f32 %v1526, %v2047
          %v2049 = vpop.f32.mrf.mxu0
          %v2050 = vadd.f32 %v1526, %v2049
          %2051 = vmatmul.bf16.gmra.mxu0 %v1443
          %v2052 = vpop.f32.mrf.mxu0
          %v2053 = vadd.f32 %v1526, %v2052
          %v2054 = vpop.f32.mrf.mxu0
          %v2055 = vadd.f32 %v1526, %v2054
          %2056 = vmatmul.bf16.gmra.mxu0 %v1444
          %v2057 = vpop.f32.mrf.mxu0
          %v2058 = vadd.f32 %v1526, %v2057
          %v2059 = vpop.f32.mrf.mxu0
          %v2060 = vadd.f32 %v1526, %v2059
          %2061 = vmatmul.bf16.gmra.mxu0 %v1445
          %v2062 = vpop.f32.mrf.mxu0
          %v2063 = vadd.f32 %v1526, %v2062
          %v2064 = vpop.f32.mrf.mxu0
          %v2065 = vadd.f32 %v1526, %v2064
          %2066 = vmatmul.bf16.gmra.mxu0 %v1446
          %v2067 = vpop.f32.mrf.mxu0
          %v2068 = vadd.f32 %v1526, %v2067
          %v2069 = vpop.f32.mrf.mxu0
          %v2070 = vadd.f32 %v1526, %v2069
          %2071 = vmatmul.bf16.gmra.mxu0 %v1447
          %v2072 = vpop.f32.mrf.mxu0
          %v2073 = vadd.f32 %v1526, %v2072
          %v2074 = vpop.f32.mrf.mxu0
          %v2075 = vadd.f32 %v1526, %v2074
          %2076 = vmatmul.bf16.gmra.mxu0 %v1448
          %v2077 = vpop.f32.mrf.mxu0
          %v2078 = vadd.f32 %v1526, %v2077
          %v2079 = vpop.f32.mrf.mxu0
          %v2080 = vadd.f32 %v1526, %v2079
          %2081 = vmatmul.bf16.gmra.mxu0 %v1449
          %v2082 = vpop.f32.mrf.mxu0
          %v2083 = vadd.f32 %v1526, %v2082
          %v2084 = vpop.f32.mrf.mxu0
          %v2085 = vadd.f32 %v1526, %v2084
          %2086 = vmatmul.bf16.gmra.mxu0 %v1450
          %v2087 = vpop.f32.mrf.mxu0
          %v2088 = vadd.f32 %v1526, %v2087
          %v2089 = vpop.f32.mrf.mxu0
          %v2090 = vadd.f32 %v1526, %v2089
          %2091 = vmatmul.bf16.gmra.mxu0 %v1451
          %v2092 = vpop.f32.mrf.mxu0
          %v2093 = vadd.f32 %v1526, %v2092
          %v2094 = vpop.f32.mrf.mxu0
          %v2095 = vadd.f32 %v1526, %v2094
          %2096 = vmatmul.bf16.gmra.mxu0 %v1452
          %v2097 = vpop.f32.mrf.mxu0
          %v2098 = vadd.f32 %v1526, %v2097
          %v2099 = vpop.f32.mrf.mxu0
          %v2100 = vadd.f32 %v1526, %v2099
          %2101 = vmatmul.bf16.gmra.mxu0 %v1453
          %v2102 = vpop.f32.mrf.mxu0
          %v2103 = vadd.f32 %v1526, %v2102
          %v2104 = vpop.f32.mrf.mxu0
          %v2105 = vadd.f32 %v1526, %v2104
          %2106 = vmatmul.bf16.gmra.mxu0 %v1454
          %v2107 = vpop.f32.mrf.mxu0
          %v2108 = vadd.f32 %v1526, %v2107
          %v2109 = vpop.f32.mrf.mxu0
          %v2110 = vadd.f32 %v1526, %v2109
          %2111 = vmatmul.bf16.gmra.mxu0 %v1455
          %v2112 = vpop.f32.mrf.mxu0
          %v2113 = vadd.f32 %v1526, %v2112
          %v2114 = vpop.f32.mrf.mxu0
          %v2115 = vadd.f32 %v1526, %v2114
          %2116 = vmatmul.bf16.gmra.mxu0 %v1456
          %v2117 = vpop.f32.mrf.mxu0
          %v2118 = vadd.f32 %v1526, %v2117
          %v2119 = vpop.f32.mrf.mxu0
          %v2120 = vadd.f32 %v1526, %v2119
          %2121 = vmatmul.bf16.gmra.mxu0 %v1457
          %v2122 = vpop.f32.mrf.mxu0
          %v2123 = vadd.f32 %v1526, %v2122
          %v2124 = vpop.f32.mrf.mxu0
          %v2125 = vadd.f32 %v1526, %v2124
          %2126 = vdwg.mxu0
          %2127 = vmatpush.bf16.msra.mxu0 %v1791
          %2128 = vmatpush.bf16.msra.mxu0 %v1783
          %2129 = vmatpush.bf16.msra.mxu0 %v1775
          %2130 = vmatpush.bf16.msra.mxu0 %v1767
          %2131 = vmatpush.bf16.msra.mxu0 %v1759
          %2132 = vmatpush.bf16.msra.mxu0 %v1751
          %2133 = vmatpush.bf16.msra.mxu0 %v1743
          %2134 = vmatpush.bf16.msra.mxu0 %v1735
          %2135 = vmatmul.bf16.gmra.mxu0 %v1442
          %v2136 = vpop.f32.mrf.mxu0
          %v2137 = vadd.f32 %v1527, %v2136
          %v2138 = vpop.f32.mrf.mxu0
          %v2139 = vadd.f32 %v1527, %v2138
          %2140 = vmatmul.bf16.gmra.mxu0 %v1443
          %v2141 = vpop.f32.mrf.mxu0
          %v2142 = vadd.f32 %v1527, %v2141
          %v2143 = vpop.f32.mrf.mxu0
          %v2144 = vadd.f32 %v1527, %v2143
          %2145 = vmatmul.bf16.gmra.mxu0 %v1444
          %v2146 = vpop.f32.mrf.mxu0
          %v2147 = vadd.f32 %v1527, %v2146
          %v2148 = vpop.f32.mrf.mxu0
          %v2149 = vadd.f32 %v1527, %v2148
          %2150 = vmatmul.bf16.gmra.mxu0 %v1445
          %v2151 = vpop.f32.mrf.mxu0
          %v2152 = vadd.f32 %v1527, %v2151
          %v2153 = vpop.f32.mrf.mxu0
          %v2154 = vadd.f32 %v1527, %v2153
          %2155 = vmatmul.bf16.gmra.mxu0 %v1446
          %v2156 = vpop.f32.mrf.mxu0
          %v2157 = vadd.f32 %v1527, %v2156
          %v2158 = vpop.f32.mrf.mxu0
          %v2159 = vadd.f32 %v1527, %v2158
          %2160 = vmatmul.bf16.gmra.mxu0 %v1447
          %v2161 = vpop.f32.mrf.mxu0
          %v2162 = vadd.f32 %v1527, %v2161
          %v2163 = vpop.f32.mrf.mxu0
          %v2164 = vadd.f32 %v1527, %v2163
          %2165 = vmatmul.bf16.gmra.mxu0 %v1448
          %v2166 = vpop.f32.mrf.mxu0
          %v2167 = vadd.f32 %v1527, %v2166
          %v2168 = vpop.f32.mrf.mxu0
          %v2169 = vadd.f32 %v1527, %v2168
          %2170 = vmatmul.bf16.gmra.mxu0 %v1449
          %v2171 = vpop.f32.mrf.mxu0
          %v2172 = vadd.f32 %v1527, %v2171
          %v2173 = vpop.f32.mrf.mxu0
          %v2174 = vadd.f32 %v1527, %v2173
          %2175 = vmatmul.bf16.gmra.mxu0 %v1450
          %v2176 = vpop.f32.mrf.mxu0
          %v2177 = vadd.f32 %v1527, %v2176
          %v2178 = vpop.f32.mrf.mxu0
          %v2179 = vadd.f32 %v1527, %v2178
          %2180 = vmatmul.bf16.gmra.mxu0 %v1451
          %v2181 = vpop.f32.mrf.mxu0
          %v2182 = vadd.f32 %v1527, %v2181
          %v2183 = vpop.f32.mrf.mxu0
          %v2184 = vadd.f32 %v1527, %v2183
          %2185 = vmatmul.bf16.gmra.mxu0 %v1452
          %v2186 = vpop.f32.mrf.mxu0
          %v2187 = vadd.f32 %v1527, %v2186
          %v2188 = vpop.f32.mrf.mxu0
          %v2189 = vadd.f32 %v1527, %v2188
          %2190 = vmatmul.bf16.gmra.mxu0 %v1453
          %v2191 = vpop.f32.mrf.mxu0
          %v2192 = vadd.f32 %v1527, %v2191
          %v2193 = vpop.f32.mrf.mxu0
          %v2194 = vadd.f32 %v1527, %v2193
          %2195 = vmatmul.bf16.gmra.mxu0 %v1454
          %v2196 = vpop.f32.mrf.mxu0
          %v2197 = vadd.f32 %v1527, %v2196
          %v2198 = vpop.f32.mrf.mxu0
          %v2199 = vadd.f32 %v1527, %v2198
          %2200 = vmatmul.bf16.gmra.mxu0 %v1455
          %v2201 = vpop.f32.mrf.mxu0
          %v2202 = vadd.f32 %v1527, %v2201
          %v2203 = vpop.f32.mrf.mxu0
          %v2204 = vadd.f32 %v1527, %v2203
          %2205 = vmatmul.bf16.gmra.mxu0 %v1456
          %v2206 = vpop.f32.mrf.mxu0
          %v2207 = vadd.f32 %v1527, %v2206
          %v2208 = vpop.f32.mrf.mxu0
          %v2209 = vadd.f32 %v1527, %v2208
          %2210 = vmatmul.bf16.gmra.mxu0 %v1457
          %v2211 = vpop.f32.mrf.mxu0
          %v2212 = vadd.f32 %v1527, %v2211
          %v2213 = vpop.f32.mrf.mxu0
          %v2214 = vadd.f32 %v1527, %v2213
          %2215 = vdwg.mxu0
          %2216 = vmatpush.bf16.msra.mxu0 %v1792
          %2217 = vmatpush.bf16.msra.mxu0 %v1784
          %2218 = vmatpush.bf16.msra.mxu0 %v1776
          %2219 = vmatpush.bf16.msra.mxu0 %v1768
          %2220 = vmatpush.bf16.msra.mxu0 %v1760
          %2221 = vmatpush.bf16.msra.mxu0 %v1752
          %2222 = vmatpush.bf16.msra.mxu0 %v1744
          %2223 = vmatpush.bf16.msra.mxu0 %v1736
          %2224 = vmatmul.bf16.gmra.mxu0 %v1442
          %v2225 = vpop.f32.mrf.mxu0
          %v2226 = vadd.f32 %v1528, %v2225
          %v2227 = vpop.f32.mrf.mxu0
          %v2228 = vadd.f32 %v1528, %v2227
          %2229 = vmatmul.bf16.gmra.mxu0 %v1443
          %v2230 = vpop.f32.mrf.mxu0
          %v2231 = vadd.f32 %v1528, %v2230
          %v2232 = vpop.f32.mrf.mxu0
          %v2233 = vadd.f32 %v1528, %v2232
          %2234 = vmatmul.bf16.gmra.mxu0 %v1444
          %v2235 = vpop.f32.mrf.mxu0
          %v2236 = vadd.f32 %v1528, %v2235
          %v2237 = vpop.f32.mrf.mxu0
          %v2238 = vadd.f32 %v1528, %v2237
          %2239 = vmatmul.bf16.gmra.mxu0 %v1445
          %v2240 = vpop.f32.mrf.mxu0
          %v2241 = vadd.f32 %v1528, %v2240
          %v2242 = vpop.f32.mrf.mxu0
          %v2243 = vadd.f32 %v1528, %v2242
          %2244 = vmatmul.bf16.gmra.mxu0 %v1446
          %v2245 = vpop.f32.mrf.mxu0
          %v2246 = vadd.f32 %v1528, %v2245
          %v2247 = vpop.f32.mrf.mxu0
          %v2248 = vadd.f32 %v1528, %v2247
          %2249 = vmatmul.bf16.gmra.mxu0 %v1447
          %v2250 = vpop.f32.mrf.mxu0
          %v2251 = vadd.f32 %v1528, %v2250
          %v2252 = vpop.f32.mrf.mxu0
          %v2253 = vadd.f32 %v1528, %v2252
          %2254 = vmatmul.bf16.gmra.mxu0 %v1448
          %v2255 = vpop.f32.mrf.mxu0
          %v2256 = vadd.f32 %v1528, %v2255
          %v2257 = vpop.f32.mrf.mxu0
          %v2258 = vadd.f32 %v1528, %v2257
          %2259 = vmatmul.bf16.gmra.mxu0 %v1449
          %v2260 = vpop.f32.mrf.mxu0
          %v2261 = vadd.f32 %v1528, %v2260
          %v2262 = vpop.f32.mrf.mxu0
          %v2263 = vadd.f32 %v1528, %v2262
          %2264 = vmatmul.bf16.gmra.mxu0 %v1450
          %v2265 = vpop.f32.mrf.mxu0
          %v2266 = vadd.f32 %v1528, %v2265
          %v2267 = vpop.f32.mrf.mxu0
          %v2268 = vadd.f32 %v1528, %v2267
          %2269 = vmatmul.bf16.gmra.mxu0 %v1451
          %v2270 = vpop.f32.mrf.mxu0
          %v2271 = vadd.f32 %v1528, %v2270
          %v2272 = vpop.f32.mrf.mxu0
          %v2273 = vadd.f32 %v1528, %v2272
          %2274 = vmatmul.bf16.gmra.mxu0 %v1452
          %v2275 = vpop.f32.mrf.mxu0
          %v2276 = vadd.f32 %v1528, %v2275
          %v2277 = vpop.f32.mrf.mxu0
          %v2278 = vadd.f32 %v1528, %v2277
          %2279 = vmatmul.bf16.gmra.mxu0 %v1453
          %v2280 = vpop.f32.mrf.mxu0
          %v2281 = vadd.f32 %v1528, %v2280
          %v2282 = vpop.f32.mrf.mxu0
          %v2283 = vadd.f32 %v1528, %v2282
          %2284 = vmatmul.bf16.gmra.mxu0 %v1454
          %v2285 = vpop.f32.mrf.mxu0
          %v2286 = vadd.f32 %v1528, %v2285
          %v2287 = vpop.f32.mrf.mxu0
          %v2288 = vadd.f32 %v1528, %v2287
          %2289 = vmatmul.bf16.gmra.mxu0 %v1455
          %v2290 = vpop.f32.mrf.mxu0
          %v2291 = vadd.f32 %v1528, %v2290
          %v2292 = vpop.f32.mrf.mxu0
          %v2293 = vadd.f32 %v1528, %v2292
          %2294 = vmatmul.bf16.gmra.mxu0 %v1456
          %v2295 = vpop.f32.mrf.mxu0
          %v2296 = vadd.f32 %v1528, %v2295
          %v2297 = vpop.f32.mrf.mxu0
          %v2298 = vadd.f32 %v1528, %v2297
          %2299 = vmatmul.bf16.gmra.mxu0 %v1457
          %v2300 = vpop.f32.mrf.mxu0
          %v2301 = vadd.f32 %v1528, %v2300
          %v2302 = vpop.f32.mrf.mxu0
          %v2303 = vadd.f32 %v1528, %v2302
          %2304 = vdwg.mxu0
          %2305 = vmatpush.bf16.msra.mxu0 %v1793
          %2306 = vmatpush.bf16.msra.mxu0 %v1785
          %2307 = vmatpush.bf16.msra.mxu0 %v1777
          %2308 = vmatpush.bf16.msra.mxu0 %v1769
          %2309 = vmatpush.bf16.msra.mxu0 %v1761
          %2310 = vmatpush.bf16.msra.mxu0 %v1753
          %2311 = vmatpush.bf16.msra.mxu0 %v1745
          %2312 = vmatpush.bf16.msra.mxu0 %v1737
          %2313 = vmatmul.bf16.gmra.mxu0 %v1442
          %v2314 = vpop.f32.mrf.mxu0
          %v2315 = vadd.f32 %v1529, %v2314
          %v2316 = vpop.f32.mrf.mxu0
          %v2317 = vadd.f32 %v1529, %v2316
          %2318 = vmatmul.bf16.gmra.mxu0 %v1443
          %v2319 = vpop.f32.mrf.mxu0
          %v2320 = vadd.f32 %v1529, %v2319
          %v2321 = vpop.f32.mrf.mxu0
          %v2322 = vadd.f32 %v1529, %v2321
          %2323 = vmatmul.bf16.gmra.mxu0 %v1444
          %v2324 = vpop.f32.mrf.mxu0
          %v2325 = vadd.f32 %v1529, %v2324
          %v2326 = vpop.f32.mrf.mxu0
          %v2327 = vadd.f32 %v1529, %v2326
          %2328 = vmatmul.bf16.gmra.mxu0 %v1445
          %v2329 = vpop.f32.mrf.mxu0
          %v2330 = vadd.f32 %v1529, %v2329
          %v2331 = vpop.f32.mrf.mxu0
          %v2332 = vadd.f32 %v1529, %v2331
          %2333 = vmatmul.bf16.gmra.mxu0 %v1446
          %v2334 = vpop.f32.mrf.mxu0
          %v2335 = vadd.f32 %v1529, %v2334
          %v2336 = vpop.f32.mrf.mxu0
          %v2337 = vadd.f32 %v1529, %v2336
          %2338 = vmatmul.bf16.gmra.mxu0 %v1447
          %v2339 = vpop.f32.mrf.mxu0
          %v2340 = vadd.f32 %v1529, %v2339
          %v2341 = vpop.f32.mrf.mxu0
          %v2342 = vadd.f32 %v1529, %v2341
          %2343 = vmatmul.bf16.gmra.mxu0 %v1448
          %v2344 = vpop.f32.mrf.mxu0
          %v2345 = vadd.f32 %v1529, %v2344
          %v2346 = vpop.f32.mrf.mxu0
          %v2347 = vadd.f32 %v1529, %v2346
          %2348 = vmatmul.bf16.gmra.mxu0 %v1449
          %v2349 = vpop.f32.mrf.mxu0
          %v2350 = vadd.f32 %v1529, %v2349
          %v2351 = vpop.f32.mrf.mxu0
          %v2352 = vadd.f32 %v1529, %v2351
          %2353 = vmatmul.bf16.gmra.mxu0 %v1450
          %v2354 = vpop.f32.mrf.mxu0
          %v2355 = vadd.f32 %v1529, %v2354
          %v2356 = vpop.f32.mrf.mxu0
          %v2357 = vadd.f32 %v1529, %v2356
          %2358 = vmatmul.bf16.gmra.mxu0 %v1451
          %v2359 = vpop.f32.mrf.mxu0
          %v2360 = vadd.f32 %v1529, %v2359
          %v2361 = vpop.f32.mrf.mxu0
          %v2362 = vadd.f32 %v1529, %v2361
          %2363 = vmatmul.bf16.gmra.mxu0 %v1452
          %v2364 = vpop.f32.mrf.mxu0
          %v2365 = vadd.f32 %v1529, %v2364
          %v2366 = vpop.f32.mrf.mxu0
          %v2367 = vadd.f32 %v1529, %v2366
          %2368 = vmatmul.bf16.gmra.mxu0 %v1453
          %v2369 = vpop.f32.mrf.mxu0
          %v2370 = vadd.f32 %v1529, %v2369
          %v2371 = vpop.f32.mrf.mxu0
          %v2372 = vadd.f32 %v1529, %v2371
          %2373 = vmatmul.bf16.gmra.mxu0 %v1454
          %v2374 = vpop.f32.mrf.mxu0
          %v2375 = vadd.f32 %v1529, %v2374
          %v2376 = vpop.f32.mrf.mxu0
          %v2377 = vadd.f32 %v1529, %v2376
          %2378 = vmatmul.bf16.gmra.mxu0 %v1455
          %v2379 = vpop.f32.mrf.mxu0
          %v2380 = vadd.f32 %v1529, %v2379
          %v2381 = vpop.f32.mrf.mxu0
          %v2382 = vadd.f32 %v1529, %v2381
          %2383 = vmatmul.bf16.gmra.mxu0 %v1456
          %v2384 = vpop.f32.mrf.mxu0
          %v2385 = vadd.f32 %v1529, %v2384
          %v2386 = vpop.f32.mrf.mxu0
          %v2387 = vadd.f32 %v1529, %v2386
          %2388 = vmatmul.bf16.gmra.mxu0 %v1457
          %v2389 = vpop.f32.mrf.mxu0
          %v2390 = vadd.f32 %v1529, %v2389
          %v2391 = vpop.f32.mrf.mxu0
          %v2392 = vadd.f32 %v1529, %v2391
          %2393 = vdwg.mxu0
          %2394 = vmatpush.bf16.msra.mxu0 %v1794
          %2395 = vmatpush.bf16.msra.mxu0 %v1786
          %2396 = vmatpush.bf16.msra.mxu0 %v1778
          %2397 = vmatpush.bf16.msra.mxu0 %v1770
          %2398 = vmatpush.bf16.msra.mxu0 %v1762
          %2399 = vmatpush.bf16.msra.mxu0 %v1754
          %2400 = vmatpush.bf16.msra.mxu0 %v1746
          %2401 = vmatpush.bf16.msra.mxu0 %v1738
          %2402 = vmatmul.bf16.gmra.mxu0 %v1442
          %v2403 = vpop.f32.mrf.mxu0
          %v2404 = vadd.f32 %v1530, %v2403
          %v2405 = vpop.f32.mrf.mxu0
          %v2406 = vadd.f32 %v1530, %v2405
          %2407 = vmatmul.bf16.gmra.mxu0 %v1443
          %v2408 = vpop.f32.mrf.mxu0
          %v2409 = vadd.f32 %v1530, %v2408
          %v2410 = vpop.f32.mrf.mxu0
          %v2411 = vadd.f32 %v1530, %v2410
          %2412 = vmatmul.bf16.gmra.mxu0 %v1444
          %v2413 = vpop.f32.mrf.mxu0
          %v2414 = vadd.f32 %v1530, %v2413
          %v2415 = vpop.f32.mrf.mxu0
          %v2416 = vadd.f32 %v1530, %v2415
          %2417 = vmatmul.bf16.gmra.mxu0 %v1445
          %v2418 = vpop.f32.mrf.mxu0
          %v2419 = vadd.f32 %v1530, %v2418
          %v2420 = vpop.f32.mrf.mxu0
          %v2421 = vadd.f32 %v1530, %v2420
          %2422 = vmatmul.bf16.gmra.mxu0 %v1446
          %v2423 = vpop.f32.mrf.mxu0
          %v2424 = vadd.f32 %v1530, %v2423
          %v2425 = vpop.f32.mrf.mxu0
          %v2426 = vadd.f32 %v1530, %v2425
          %2427 = vmatmul.bf16.gmra.mxu0 %v1447
          %v2428 = vpop.f32.mrf.mxu0
          %v2429 = vadd.f32 %v1530, %v2428
          %v2430 = vpop.f32.mrf.mxu0
          %v2431 = vadd.f32 %v1530, %v2430
          %2432 = vmatmul.bf16.gmra.mxu0 %v1448
          %v2433 = vpop.f32.mrf.mxu0
          %v2434 = vadd.f32 %v1530, %v2433
          %v2435 = vpop.f32.mrf.mxu0
          %v2436 = vadd.f32 %v1530, %v2435
          %2437 = vmatmul.bf16.gmra.mxu0 %v1449
          %v2438 = vpop.f32.mrf.mxu0
          %v2439 = vadd.f32 %v1530, %v2438
          %v2440 = vpop.f32.mrf.mxu0
          %v2441 = vadd.f32 %v1530, %v2440
          %2442 = vmatmul.bf16.gmra.mxu0 %v1450
          %v2443 = vpop.f32.mrf.mxu0
          %v2444 = vadd.f32 %v1530, %v2443
          %v2445 = vpop.f32.mrf.mxu0
          %v2446 = vadd.f32 %v1530, %v2445
          %2447 = vmatmul.bf16.gmra.mxu0 %v1451
          %v2448 = vpop.f32.mrf.mxu0
          %v2449 = vadd.f32 %v1530, %v2448
          %v2450 = vpop.f32.mrf.mxu0
          %v2451 = vadd.f32 %v1530, %v2450
          %2452 = vmatmul.bf16.gmra.mxu0 %v1452
          %v2453 = vpop.f32.mrf.mxu0
          %v2454 = vadd.f32 %v1530, %v2453
          %v2455 = vpop.f32.mrf.mxu0
          %v2456 = vadd.f32 %v1530, %v2455
          %2457 = vmatmul.bf16.gmra.mxu0 %v1453
          %v2458 = vpop.f32.mrf.mxu0
          %v2459 = vadd.f32 %v1530, %v2458
          %v2460 = vpop.f32.mrf.mxu0
          %v2461 = vadd.f32 %v1530, %v2460
          %2462 = vmatmul.bf16.gmra.mxu0 %v1454
          %v2463 = vpop.f32.mrf.mxu0
          %v2464 = vadd.f32 %v1530, %v2463
          %v2465 = vpop.f32.mrf.mxu0
          %v2466 = vadd.f32 %v1530, %v2465
          %2467 = vmatmul.bf16.gmra.mxu0 %v1455
          %v2468 = vpop.f32.mrf.mxu0
          %v2469 = vadd.f32 %v1530, %v2468
          %v2470 = vpop.f32.mrf.mxu0
          %v2471 = vadd.f32 %v1530, %v2470
          %2472 = vmatmul.bf16.gmra.mxu0 %v1456
          %v2473 = vpop.f32.mrf.mxu0
          %v2474 = vadd.f32 %v1530, %v2473
          %v2475 = vpop.f32.mrf.mxu0
          %v2476 = vadd.f32 %v1530, %v2475
          %2477 = vmatmul.bf16.gmra.mxu0 %v1457
          %v2478 = vpop.f32.mrf.mxu0
          %v2479 = vadd.f32 %v1530, %v2478
          %v2480 = vpop.f32.mrf.mxu0
          %v2481 = vadd.f32 %v1530, %v2480
          %2482 = vdwg.mxu0
          %2483 = vmatpush.bf16.msra.mxu0 %v1795
          %2484 = vmatpush.bf16.msra.mxu0 %v1787
          %2485 = vmatpush.bf16.msra.mxu0 %v1779
          %2486 = vmatpush.bf16.msra.mxu0 %v1771
          %2487 = vmatpush.bf16.msra.mxu0 %v1763
          %2488 = vmatpush.bf16.msra.mxu0 %v1755
          %2489 = vmatpush.bf16.msra.mxu0 %v1747
          %2490 = vmatpush.bf16.msra.mxu0 %v1739
          %2491 = vmatmul.bf16.gmra.mxu0 %v1442
          %v2492 = vpop.f32.mrf.mxu0
          %v2493 = vadd.f32 %v1531, %v2492
          %v2494 = vpop.f32.mrf.mxu0
          %v2495 = vadd.f32 %v1531, %v2494
          %2496 = vmatmul.bf16.gmra.mxu0 %v1443
          %v2497 = vpop.f32.mrf.mxu0
          %v2498 = vadd.f32 %v1531, %v2497
          %v2499 = vpop.f32.mrf.mxu0
          %v2500 = vadd.f32 %v1531, %v2499
          %2501 = vmatmul.bf16.gmra.mxu0 %v1444
          %v2502 = vpop.f32.mrf.mxu0
          %v2503 = vadd.f32 %v1531, %v2502
          %v2504 = vpop.f32.mrf.mxu0
          %v2505 = vadd.f32 %v1531, %v2504
          %2506 = vmatmul.bf16.gmra.mxu0 %v1445
          %v2507 = vpop.f32.mrf.mxu0
          %v2508 = vadd.f32 %v1531, %v2507
          %v2509 = vpop.f32.mrf.mxu0
          %v2510 = vadd.f32 %v1531, %v2509
          %2511 = vmatmul.bf16.gmra.mxu0 %v1446
          %v2512 = vpop.f32.mrf.mxu0
          %v2513 = vadd.f32 %v1531, %v2512
          %v2514 = vpop.f32.mrf.mxu0
          %v2515 = vadd.f32 %v1531, %v2514
          %2516 = vmatmul.bf16.gmra.mxu0 %v1447
          %v2517 = vpop.f32.mrf.mxu0
          %v2518 = vadd.f32 %v1531, %v2517
          %v2519 = vpop.f32.mrf.mxu0
          %v2520 = vadd.f32 %v1531, %v2519
          %2521 = vmatmul.bf16.gmra.mxu0 %v1448
          %v2522 = vpop.f32.mrf.mxu0
          %v2523 = vadd.f32 %v1531, %v2522
          %v2524 = vpop.f32.mrf.mxu0
          %v2525 = vadd.f32 %v1531, %v2524
          %2526 = vmatmul.bf16.gmra.mxu0 %v1449
          %v2527 = vpop.f32.mrf.mxu0
          %v2528 = vadd.f32 %v1531, %v2527
          %v2529 = vpop.f32.mrf.mxu0
          %v2530 = vadd.f32 %v1531, %v2529
          %2531 = vmatmul.bf16.gmra.mxu0 %v1450
          %v2532 = vpop.f32.mrf.mxu0
          %v2533 = vadd.f32 %v1531, %v2532
          %v2534 = vpop.f32.mrf.mxu0
          %v2535 = vadd.f32 %v1531, %v2534
          %2536 = vmatmul.bf16.gmra.mxu0 %v1451
          %v2537 = vpop.f32.mrf.mxu0
          %v2538 = vadd.f32 %v1531, %v2537
          %v2539 = vpop.f32.mrf.mxu0
          %v2540 = vadd.f32 %v1531, %v2539
          %2541 = vmatmul.bf16.gmra.mxu0 %v1452
          %v2542 = vpop.f32.mrf.mxu0
          %v2543 = vadd.f32 %v1531, %v2542
          %v2544 = vpop.f32.mrf.mxu0
          %v2545 = vadd.f32 %v1531, %v2544
          %2546 = vmatmul.bf16.gmra.mxu0 %v1453
          %v2547 = vpop.f32.mrf.mxu0
          %v2548 = vadd.f32 %v1531, %v2547
          %v2549 = vpop.f32.mrf.mxu0
          %v2550 = vadd.f32 %v1531, %v2549
          %2551 = vmatmul.bf16.gmra.mxu0 %v1454
          %v2552 = vpop.f32.mrf.mxu0
          %v2553 = vadd.f32 %v1531, %v2552
          %v2554 = vpop.f32.mrf.mxu0
          %v2555 = vadd.f32 %v1531, %v2554
          %2556 = vmatmul.bf16.gmra.mxu0 %v1455
          %v2557 = vpop.f32.mrf.mxu0
          %v2558 = vadd.f32 %v1531, %v2557
          %v2559 = vpop.f32.mrf.mxu0
          %v2560 = vadd.f32 %v1531, %v2559
          %2561 = vmatmul.bf16.gmra.mxu0 %v1456
          %v2562 = vpop.f32.mrf.mxu0
          %v2563 = vadd.f32 %v1531, %v2562
          %v2564 = vpop.f32.mrf.mxu0
          %v2565 = vadd.f32 %v1531, %v2564
          %2566 = vmatmul.bf16.gmra.mxu0 %v1457
          %v2567 = vpop.f32.mrf.mxu0
          %v2568 = vadd.f32 %v1531, %v2567
          %v2569 = vpop.f32.mrf.mxu0
          %v2570 = vadd.f32 %v1531, %v2569
          %2571 = vdwg.mxu0
          %v2572 = vmax.f32 %v1870, 0.0
          %v2573 = vmax.f32 %v1959, 0.0
          %v2574 = vmax.f32 %v2048, 0.0
          %v2575 = vmax.f32 %v2137, 0.0
          %v2576 = vmax.f32 %v2226, 0.0
          %v2577 = vmax.f32 %v2315, 0.0
          %v2578 = vmax.f32 %v2404, 0.0
          %v2579 = vmax.f32 %v2493, 0.0
          %v2580 = vmax.f32 %v1872, 0.0
          %v2581 = vmax.f32 %v1961, 0.0
          %v2582 = vmax.f32 %v2050, 0.0
          %v2583 = vmax.f32 %v2139, 0.0
          %v2584 = vmax.f32 %v2228, 0.0
          %v2585 = vmax.f32 %v2317, 0.0
          %v2586 = vmax.f32 %v2406, 0.0
          %v2587 = vmax.f32 %v2495, 0.0
          %v2588 = vmax.f32 %v1875, 0.0
          %v2589 = vmax.f32 %v1964, 0.0
          %v2590 = vmax.f32 %v2053, 0.0
          %v2591 = vmax.f32 %v2142, 0.0
          %v2592 = vmax.f32 %v2231, 0.0
          %v2593 = vmax.f32 %v2320, 0.0
          %v2594 = vmax.f32 %v2409, 0.0
          %v2595 = vmax.f32 %v2498, 0.0
          %v2596 = vmax.f32 %v1877, 0.0
          %v2597 = vmax.f32 %v1966, 0.0
          %v2598 = vmax.f32 %v2055, 0.0
          %v2599 = vmax.f32 %v2144, 0.0
          %v2600 = vmax.f32 %v2233, 0.0
          %v2601 = vmax.f32 %v2322, 0.0
          %v2602 = vmax.f32 %v2411, 0.0
          %v2603 = vmax.f32 %v2500, 0.0
          %v2604 = vmax.f32 %v1880, 0.0
          %v2605 = vmax.f32 %v1969, 0.0
          %v2606 = vmax.f32 %v2058, 0.0
          %v2607 = vmax.f32 %v2147, 0.0
          %v2608 = vmax.f32 %v2236, 0.0
          %v2609 = vmax.f32 %v2325, 0.0
          %v2610 = vmax.f32 %v2414, 0.0
          %v2611 = vmax.f32 %v2503, 0.0
          %v2612 = vmax.f32 %v1882, 0.0
          %v2613 = vmax.f32 %v1971, 0.0
          %v2614 = vmax.f32 %v2060, 0.0
          %v2615 = vmax.f32 %v2149, 0.0
          %v2616 = vmax.f32 %v2238, 0.0
          %v2617 = vmax.f32 %v2327, 0.0
          %v2618 = vmax.f32 %v2416, 0.0
          %v2619 = vmax.f32 %v2505, 0.0
          %v2620 = vmax.f32 %v1885, 0.0
          %v2621 = vmax.f32 %v1974, 0.0
          %v2622 = vmax.f32 %v2063, 0.0
          %v2623 = vmax.f32 %v2152, 0.0
          %v2624 = vmax.f32 %v2241, 0.0
          %v2625 = vmax.f32 %v2330, 0.0
          %v2626 = vmax.f32 %v2419, 0.0
          %v2627 = vmax.f32 %v2508, 0.0
          %v2628 = vmax.f32 %v1887, 0.0
          %v2629 = vmax.f32 %v1976, 0.0
          %v2630 = vmax.f32 %v2065, 0.0
          %v2631 = vmax.f32 %v2154, 0.0
          %v2632 = vmax.f32 %v2243, 0.0
          %v2633 = vmax.f32 %v2332, 0.0
          %v2634 = vmax.f32 %v2421, 0.0
          %v2635 = vmax.f32 %v2510, 0.0
          %v2636 = vmax.f32 %v1890, 0.0
          %v2637 = vmax.f32 %v1979, 0.0
          %v2638 = vmax.f32 %v2068, 0.0
          %v2639 = vmax.f32 %v2157, 0.0
          %v2640 = vmax.f32 %v2246, 0.0
          %v2641 = vmax.f32 %v2335, 0.0
          %v2642 = vmax.f32 %v2424, 0.0
          %v2643 = vmax.f32 %v2513, 0.0
          %v2644 = vmax.f32 %v1892, 0.0
          %v2645 = vmax.f32 %v1981, 0.0
          %v2646 = vmax.f32 %v2070, 0.0
          %v2647 = vmax.f32 %v2159, 0.0
          %v2648 = vmax.f32 %v2248, 0.0
          %v2649 = vmax.f32 %v2337, 0.0
          %v2650 = vmax.f32 %v2426, 0.0
          %v2651 = vmax.f32 %v2515, 0.0
          %v2652 = vmax.f32 %v1895, 0.0
          %v2653 = vmax.f32 %v1984, 0.0
          %v2654 = vmax.f32 %v2073, 0.0
          %v2655 = vmax.f32 %v2162, 0.0
          %v2656 = vmax.f32 %v2251, 0.0
          %v2657 = vmax.f32 %v2340, 0.0
          %v2658 = vmax.f32 %v2429, 0.0
          %v2659 = vmax.f32 %v2518, 0.0
          %v2660 = vmax.f32 %v1897, 0.0
          %v2661 = vmax.f32 %v1986, 0.0
          %v2662 = vmax.f32 %v2075, 0.0
          %v2663 = vmax.f32 %v2164, 0.0
          %v2664 = vmax.f32 %v2253, 0.0
          %v2665 = vmax.f32 %v2342, 0.0
          %v2666 = vmax.f32 %v2431, 0.0
          %v2667 = vmax.f32 %v2520, 0.0
          %v2668 = vmax.f32 %v1900, 0.0
          %v2669 = vmax.f32 %v1989, 0.0
          %v2670 = vmax.f32 %v2078, 0.0
          %v2671 = vmax.f32 %v2167, 0.0
          %v2672 = vmax.f32 %v2256, 0.0
          %v2673 = vmax.f32 %v2345, 0.0
          %v2674 = vmax.f32 %v2434, 0.0
          %v2675 = vmax.f32 %v2523, 0.0
          %v2676 = vmax.f32 %v1902, 0.0
          %v2677 = vmax.f32 %v1991, 0.0
          %v2678 = vmax.f32 %v2080, 0.0
          %v2679 = vmax.f32 %v2169, 0.0
          %v2680 = vmax.f32 %v2258, 0.0
          %v2681 = vmax.f32 %v2347, 0.0
          %v2682 = vmax.f32 %v2436, 0.0
          %v2683 = vmax.f32 %v2525, 0.0
          %v2684 = vmax.f32 %v1905, 0.0
          %v2685 = vmax.f32 %v1994, 0.0
          %v2686 = vmax.f32 %v2083, 0.0
          %v2687 = vmax.f32 %v2172, 0.0
          %v2688 = vmax.f32 %v2261, 0.0
          %v2689 = vmax.f32 %v2350, 0.0
          %v2690 = vmax.f32 %v2439, 0.0
          %v2691 = vmax.f32 %v2528, 0.0
          %v2692 = vmax.f32 %v1907, 0.0
          %v2693 = vmax.f32 %v1996, 0.0
          %v2694 = vmax.f32 %v2085, 0.0
          %v2695 = vmax.f32 %v2174, 0.0
          %v2696 = vmax.f32 %v2263, 0.0
          %v2697 = vmax.f32 %v2352, 0.0
          %v2698 = vmax.f32 %v2441, 0.0
          %v2699 = vmax.f32 %v2530, 0.0
          %v2700 = vmax.f32 %v1910, 0.0
          %v2701 = vmax.f32 %v1999, 0.0
          %v2702 = vmax.f32 %v2088, 0.0
          %v2703 = vmax.f32 %v2177, 0.0
          %v2704 = vmax.f32 %v2266, 0.0
          %v2705 = vmax.f32 %v2355, 0.0
          %v2706 = vmax.f32 %v2444, 0.0
          %v2707 = vmax.f32 %v2533, 0.0
          %v2708 = vmax.f32 %v1912, 0.0
          %v2709 = vmax.f32 %v2001, 0.0
          %v2710 = vmax.f32 %v2090, 0.0
          %v2711 = vmax.f32 %v2179, 0.0
          %v2712 = vmax.f32 %v2268, 0.0
          %v2713 = vmax.f32 %v2357, 0.0
          %v2714 = vmax.f32 %v2446, 0.0
          %v2715 = vmax.f32 %v2535, 0.0
          %v2716 = vmax.f32 %v1915, 0.0
          %v2717 = vmax.f32 %v2004, 0.0
          %v2718 = vmax.f32 %v2093, 0.0
          %v2719 = vmax.f32 %v2182, 0.0
          %v2720 = vmax.f32 %v2271, 0.0
          %v2721 = vmax.f32 %v2360, 0.0
          %v2722 = vmax.f32 %v2449, 0.0
          %v2723 = vmax.f32 %v2538, 0.0
          %v2724 = vmax.f32 %v1917, 0.0
          %v2725 = vmax.f32 %v2006, 0.0
          %v2726 = vmax.f32 %v2095, 0.0
          %v2727 = vmax.f32 %v2184, 0.0
          %v2728 = vmax.f32 %v2273, 0.0
          %v2729 = vmax.f32 %v2362, 0.0
          %v2730 = vmax.f32 %v2451, 0.0
          %v2731 = vmax.f32 %v2540, 0.0
          %v2732 = vmax.f32 %v1920, 0.0
          %v2733 = vmax.f32 %v2009, 0.0
          %v2734 = vmax.f32 %v2098, 0.0
          %v2735 = vmax.f32 %v2187, 0.0
          %v2736 = vmax.f32 %v2276, 0.0
          %v2737 = vmax.f32 %v2365, 0.0
          %v2738 = vmax.f32 %v2454, 0.0
          %v2739 = vmax.f32 %v2543, 0.0
          %v2740 = vmax.f32 %v1922, 0.0
          %v2741 = vmax.f32 %v2011, 0.0
          %v2742 = vmax.f32 %v2100, 0.0
          %v2743 = vmax.f32 %v2189, 0.0
          %v2744 = vmax.f32 %v2278, 0.0
          %v2745 = vmax.f32 %v2367, 0.0
          %v2746 = vmax.f32 %v2456, 0.0
          %v2747 = vmax.f32 %v2545, 0.0
          %v2748 = vmax.f32 %v1925, 0.0
          %v2749 = vmax.f32 %v2014, 0.0
          %v2750 = vmax.f32 %v2103, 0.0
          %v2751 = vmax.f32 %v2192, 0.0
          %v2752 = vmax.f32 %v2281, 0.0
          %v2753 = vmax.f32 %v2370, 0.0
          %v2754 = vmax.f32 %v2459, 0.0
          %v2755 = vmax.f32 %v2548, 0.0
          %v2756 = vmax.f32 %v1927, 0.0
          %v2757 = vmax.f32 %v2016, 0.0
          %v2758 = vmax.f32 %v2105, 0.0
          %v2759 = vmax.f32 %v2194, 0.0
          %v2760 = vmax.f32 %v2283, 0.0
          %v2761 = vmax.f32 %v2372, 0.0
          %v2762 = vmax.f32 %v2461, 0.0
          %v2763 = vmax.f32 %v2550, 0.0
          %v2764 = vmax.f32 %v1930, 0.0
          %v2765 = vmax.f32 %v2019, 0.0
          %v2766 = vmax.f32 %v2108, 0.0
          %v2767 = vmax.f32 %v2197, 0.0
          %v2768 = vmax.f32 %v2286, 0.0
          %v2769 = vmax.f32 %v2375, 0.0
          %v2770 = vmax.f32 %v2464, 0.0
          %v2771 = vmax.f32 %v2553, 0.0
          %v2772 = vmax.f32 %v1932, 0.0
          %v2773 = vmax.f32 %v2021, 0.0
          %v2774 = vmax.f32 %v2110, 0.0
          %v2775 = vmax.f32 %v2199, 0.0
          %v2776 = vmax.f32 %v2288, 0.0
          %v2777 = vmax.f32 %v2377, 0.0
          %v2778 = vmax.f32 %v2466, 0.0
          %v2779 = vmax.f32 %v2555, 0.0
          %v2780 = vmax.f32 %v1935, 0.0
          %v2781 = vmax.f32 %v2024, 0.0
          %v2782 = vmax.f32 %v2113, 0.0
          %v2783 = vmax.f32 %v2202, 0.0
          %v2784 = vmax.f32 %v2291, 0.0
          %v2785 = vmax.f32 %v2380, 0.0
          %v2786 = vmax.f32 %v2469, 0.0
          %v2787 = vmax.f32 %v2558, 0.0
          %v2788 = vmax.f32 %v1937, 0.0
          %v2789 = vmax.f32 %v2026, 0.0
          %v2790 = vmax.f32 %v2115, 0.0
          %v2791 = vmax.f32 %v2204, 0.0
          %v2792 = vmax.f32 %v2293, 0.0
          %v2793 = vmax.f32 %v2382, 0.0
          %v2794 = vmax.f32 %v2471, 0.0
          %v2795 = vmax.f32 %v2560, 0.0
          %v2796 = vmax.f32 %v1940, 0.0
          %v2797 = vmax.f32 %v2029, 0.0
          %v2798 = vmax.f32 %v2118, 0.0
          %v2799 = vmax.f32 %v2207, 0.0
          %v2800 = vmax.f32 %v2296, 0.0
          %v2801 = vmax.f32 %v2385, 0.0
          %v2802 = vmax.f32 %v2474, 0.0
          %v2803 = vmax.f32 %v2563, 0.0
          %v2804 = vmax.f32 %v1942, 0.0
          %v2805 = vmax.f32 %v2031, 0.0
          %v2806 = vmax.f32 %v2120, 0.0
          %v2807 = vmax.f32 %v2209, 0.0
          %v2808 = vmax.f32 %v2298, 0.0
          %v2809 = vmax.f32 %v2387, 0.0
          %v2810 = vmax.f32 %v2476, 0.0
          %v2811 = vmax.f32 %v2565, 0.0
          %v2812 = vmax.f32 %v1945, 0.0
          %v2813 = vmax.f32 %v2034, 0.0
          %v2814 = vmax.f32 %v2123, 0.0
          %v2815 = vmax.f32 %v2212, 0.0
          %v2816 = vmax.f32 %v2301, 0.0
          %v2817 = vmax.f32 %v2390, 0.0
          %v2818 = vmax.f32 %v2479, 0.0
          %v2819 = vmax.f32 %v2568, 0.0
          %v2820 = vmax.f32 %v1947, 0.0
          %v2821 = vmax.f32 %v2036, 0.0
          %v2822 = vmax.f32 %v2125, 0.0
          %v2823 = vmax.f32 %v2214, 0.0
          %v2824 = vmax.f32 %v2303, 0.0
          %v2825 = vmax.f32 %v2392, 0.0
          %v2826 = vmax.f32 %v2481, 0.0
          %v2827 = vmax.f32 %v2570, 0.0
          %v2828 = vld [vmem:[#allocation2] sm:$0xff]
          %v2829 = vmax.f32 %v2572, %v2580
          %v2830 = vmax.f32 %v2829, %v2588
          %v2831 = vmax.f32 %v2830, %v2596
          %v2832 = vmax.f32 %v2831, %v2604
          %v2833 = vmax.f32 %v2832, %v2612
          %v2834 = vmax.f32 %v2833, %v2620
          %v2835 = vmax.f32 %v2834, %v2628
          %v2836 = vmax.f32 %v2835, %v2636
          %v2837 = vmax.f32 %v2836, %v2644
          %v2838 = vmax.f32 %v2837, %v2652
          %v2839 = vmax.f32 %v2838, %v2660
          %v2840 = vmax.f32 %v2839, %v2668
          %v2841 = vmax.f32 %v2840, %v2676
          %v2842 = vmax.f32 %v2841, %v2684
          %v2843 = vmax.f32 %v2842, %v2692
          %v2844 = vmax.f32 %v2843, %v2700
          %v2845 = vmax.f32 %v2844, %v2708
          %v2846 = vmax.f32 %v2845, %v2716
          %v2847 = vmax.f32 %v2846, %v2724
          %v2848 = vmax.f32 %v2847, %v2732
          %v2849 = vmax.f32 %v2848, %v2740
          %v2850 = vmax.f32 %v2849, %v2748
          %v2851 = vmax.f32 %v2850, %v2756
          %v2852 = vmax.f32 %v2851, %v2764
          %v2853 = vmax.f32 %v2852, %v2772
          %v2854 = vmax.f32 %v2853, %v2780
          %v2855 = vmax.f32 %v2854, %v2788
          %v2856 = vmax.f32 %v2855, %v2796
          %v2857 = vmax.f32 %v2856, %v2804
          %v2858 = vmax.f32 %v2857, %v2812
          %v2859 = vmax.f32 %v2858, %v2820
          %v2860 = vrot.slane %v2859, 4
          %v2861 = vmax.f32 %v2859, %v2860
          %v2862 = vrot.slane %v2861, 2
          %v2863 = vmax.f32 %v2861, %v2862
          %v2864 = vrot.slane %v2863, 1
          %v2865 = vmax.f32 %v2863, %v2864
          %v2866 = vmax.f32 %v2573, %v2581
          %v2867 = vmax.f32 %v2866, %v2589
          %v2868 = vmax.f32 %v2867, %v2597
          %v2869 = vmax.f32 %v2868, %v2605
          %v2870 = vmax.f32 %v2869, %v2613
          %v2871 = vmax.f32 %v2870, %v2621
          %v2872 = vmax.f32 %v2871, %v2629
          %v2873 = vmax.f32 %v2872, %v2637
          %v2874 = vmax.f32 %v2873, %v2645
          %v2875 = vmax.f32 %v2874, %v2653
          %v2876 = vmax.f32 %v2875, %v2661
          %v2877 = vmax.f32 %v2876, %v2669
          %v2878 = vmax.f32 %v2877, %v2677
          %v2879 = vmax.f32 %v2878, %v2685
          %v2880 = vmax.f32 %v2879, %v2693
          %v2881 = vmax.f32 %v2880, %v2701
          %v2882 = vmax.f32 %v2881, %v2709
          %v2883 = vmax.f32 %v2882, %v2717
          %v2884 = vmax.f32 %v2883, %v2725
          %v2885 = vmax.f32 %v2884, %v2733
          %v2886 = vmax.f32 %v2885, %v2741
          %v2887 = vmax.f32 %v2886, %v2749
          %v2888 = vmax.f32 %v2887, %v2757
          %v2889 = vmax.f32 %v2888, %v2765
          %v2890 = vmax.f32 %v2889, %v2773
          %v2891 = vmax.f32 %v2890, %v2781
          %v2892 = vmax.f32 %v2891, %v2789
          %v2893 = vmax.f32 %v2892, %v2797
          %v2894 = vmax.f32 %v2893, %v2805
          %v2895 = vmax.f32 %v2894, %v2813
          %v2896 = vmax.f32 %v2895, %v2821
          %v2897 = vrot.slane %v2896, 4
          %v2898 = vmax.f32 %v2896, %v2897
          %v2899 = vrot.slane %v2898, 2
          %v2900 = vmax.f32 %v2898, %v2899
          %v2901 = vrot.slane %v2900, 1
          %v2902 = vmax.f32 %v2900, %v2901
          %v2903 = vmax.f32 %v2574, %v2582
          %v2904 = vmax.f32 %v2903, %v2590
          %v2905 = vmax.f32 %v2904, %v2598
          %v2906 = vmax.f32 %v2905, %v2606
          %v2907 = vmax.f32 %v2906, %v2614
          %v2908 = vmax.f32 %v2907, %v2622
          %v2909 = vmax.f32 %v2908, %v2630
          %v2910 = vmax.f32 %v2909, %v2638
          %v2911 = vmax.f32 %v2910, %v2646
          %v2912 = vmax.f32 %v2911, %v2654
          %v2913 = vmax.f32 %v2912, %v2662
          %v2914 = vmax.f32 %v2913, %v2670
          %v2915 = vmax.f32 %v2914, %v2678
          %v2916 = vmax.f32 %v2915, %v2686
          %v2917 = vmax.f32 %v2916, %v2694
          %v2918 = vmax.f32 %v2917, %v2702
          %v2919 = vmax.f32 %v2918, %v2710
          %v2920 = vmax.f32 %v2919, %v2718
          %v2921 = vmax.f32 %v2920, %v2726
          %v2922 = vmax.f32 %v2921, %v2734
          %v2923 = vmax.f32 %v2922, %v2742
          %v2924 = vmax.f32 %v2923, %v2750
          %v2925 = vmax.f32 %v2924, %v2758
          %v2926 = vmax.f32 %v2925, %v2766
          %v2927 = vmax.f32 %v2926, %v2774
          %v2928 = vmax.f32 %v2927, %v2782
          %v2929 = vmax.f32 %v2928, %v2790
          %v2930 = vmax.f32 %v2929, %v2798
          %v2931 = vmax.f32 %v2930, %v2806
          %v2932 = vmax.f32 %v2931, %v2814
          %v2933 = vmax.f32 %v2932, %v2822
          %v2934 = vrot.slane %v2933, 4
          %v2935 = vmax.f32 %v2933, %v2934
          %v2936 = vrot.slane %v2935, 2
          %v2937 = vmax.f32 %v2935, %v2936
          %v2938 = vrot.slane %v2937, 1
          %v2939 = vmax.f32 %v2937, %v2938
          %v2940 = vmax.f32 %v2575, %v2583
          %v2941 = vmax.f32 %v2940, %v2591
          %v2942 = vmax.f32 %v2941, %v2599
          %v2943 = vmax.f32 %v2942, %v2607
          %v2944 = vmax.f32 %v2943, %v2615
          %v2945 = vmax.f32 %v2944, %v2623
          %v2946 = vmax.f32 %v2945, %v2631
          %v2947 = vmax.f32 %v2946, %v2639
          %v2948 = vmax.f32 %v2947, %v2647
          %v2949 = vmax.f32 %v2948, %v2655
          %v2950 = vmax.f32 %v2949, %v2663
          %v2951 = vmax.f32 %v2950, %v2671
          %v2952 = vmax.f32 %v2951, %v2679
          %v2953 = vmax.f32 %v2952, %v2687
          %v2954 = vmax.f32 %v2953, %v2695
          %v2955 = vmax.f32 %v2954, %v2703
          %v2956 = vmax.f32 %v2955, %v2711
          %v2957 = vmax.f32 %v2956, %v2719
          %v2958 = vmax.f32 %v2957, %v2727
          %v2959 = vmax.f32 %v2958, %v2735
          %v2960 = vmax.f32 %v2959, %v2743
          %v2961 = vmax.f32 %v2960, %v2751
          %v2962 = vmax.f32 %v2961, %v2759
          %v2963 = vmax.f32 %v2962, %v2767
          %v2964 = vmax.f32 %v2963, %v2775
          %v2965 = vmax.f32 %v2964, %v2783
          %v2966 = vmax.f32 %v2965, %v2791
          %v2967 = vmax.f32 %v2966, %v2799
          %v2968 = vmax.f32 %v2967, %v2807
          %v2969 = vmax.f32 %v2968, %v2815
          %v2970 = vmax.f32 %v2969, %v2823
          %v2971 = vrot.slane %v2970, 4
          %v2972 = vmax.f32 %v2970, %v2971
          %v2973 = vrot.slane %v2972, 2
          %v2974 = vmax.f32 %v2972, %v2973
          %v2975 = vrot.slane %v2974, 1
          %v2976 = vmax.f32 %v2974, %v2975
          %v2977 = vmax.f32 %v2576, %v2584
          %v2978 = vmax.f32 %v2977, %v2592
          %v2979 = vmax.f32 %v2978, %v2600
          %v2980 = vmax.f32 %v2979, %v2608
          %v2981 = vmax.f32 %v2980, %v2616
          %v2982 = vmax.f32 %v2981, %v2624
          %v2983 = vmax.f32 %v2982, %v2632
          %v2984 = vmax.f32 %v2983, %v2640
          %v2985 = vmax.f32 %v2984, %v2648
          %v2986 = vmax.f32 %v2985, %v2656
          %v2987 = vmax.f32 %v2986, %v2664
          %v2988 = vmax.f32 %v2987, %v2672
          %v2989 = vmax.f32 %v2988, %v2680
          %v2990 = vmax.f32 %v2989, %v2688
          %v2991 = vmax.f32 %v2990, %v2696
          %v2992 = vmax.f32 %v2991, %v2704
          %v2993 = vmax.f32 %v2992, %v2712
          %v2994 = vmax.f32 %v2993, %v2720
          %v2995 = vmax.f32 %v2994, %v2728
          %v2996 = vmax.f32 %v2995, %v2736
          %v2997 = vmax.f32 %v2996, %v2744
          %v2998 = vmax.f32 %v2997, %v2752
          %v2999 = vmax.f32 %v2998, %v2760
          %v3000 = vmax.f32 %v2999, %v2768
          %v3001 = vmax.f32 %v3000, %v2776
          %v3002 = vmax.f32 %v3001, %v2784
          %v3003 = vmax.f32 %v3002, %v2792
          %v3004 = vmax.f32 %v3003, %v2800
          %v3005 = vmax.f32 %v3004, %v2808
          %v3006 = vmax.f32 %v3005, %v2816
          %v3007 = vmax.f32 %v3006, %v2824
          %v3008 = vrot.slane %v3007, 4
          %v3009 = vmax.f32 %v3007, %v3008
          %v3010 = vrot.slane %v3009, 2
          %v3011 = vmax.f32 %v3009, %v3010
          %v3012 = vrot.slane %v3011, 1
          %v3013 = vmax.f32 %v3011, %v3012
          %v3014 = vmax.f32 %v2577, %v2585
          %v3015 = vmax.f32 %v3014, %v2593
          %v3016 = vmax.f32 %v3015, %v2601
          %v3017 = vmax.f32 %v3016, %v2609
          %v3018 = vmax.f32 %v3017, %v2617
          %v3019 = vmax.f32 %v3018, %v2625
          %v3020 = vmax.f32 %v3019, %v2633
          %v3021 = vmax.f32 %v3020, %v2641
          %v3022 = vmax.f32 %v3021, %v2649
          %v3023 = vmax.f32 %v3022, %v2657
          %v3024 = vmax.f32 %v3023, %v2665
          %v3025 = vmax.f32 %v3024, %v2673
          %v3026 = vmax.f32 %v3025, %v2681
          %v3027 = vmax.f32 %v3026, %v2689
          %v3028 = vmax.f32 %v3027, %v2697
          %v3029 = vmax.f32 %v3028, %v2705
          %v3030 = vmax.f32 %v3029, %v2713
          %v3031 = vmax.f32 %v3030, %v2721
          %v3032 = vmax.f32 %v3031, %v2729
          %v3033 = vmax.f32 %v3032, %v2737
          %v3034 = vmax.f32 %v3033, %v2745
          %v3035 = vmax.f32 %v3034, %v2753
          %v3036 = vmax.f32 %v3035, %v2761
          %v3037 = vmax.f32 %v3036, %v2769
          %v3038 = vmax.f32 %v3037, %v2777
          %v3039 = vmax.f32 %v3038, %v2785
          %v3040 = vmax.f32 %v3039, %v2793
          %v3041 = vmax.f32 %v3040, %v2801
          %v3042 = vmax.f32 %v3041, %v2809
          %v3043 = vmax.f32 %v3042, %v2817
          %v3044 = vmax.f32 %v3043, %v2825
          %v3045 = vrot.slane %v3044, 4
          %v3046 = vmax.f32 %v3044, %v3045
          %v3047 = vrot.slane %v3046, 2
          %v3048 = vmax.f32 %v3046, %v3047
          %v3049 = vrot.slane %v3048, 1
          %v3050 = vmax.f32 %v3048, %v3049
          %v3051 = vmax.f32 %v2578, %v2586
          %v3052 = vmax.f32 %v3051, %v2594
          %v3053 = vmax.f32 %v3052, %v2602
          %v3054 = vmax.f32 %v3053, %v2610
          %v3055 = vmax.f32 %v3054, %v2618
          %v3056 = vmax.f32 %v3055, %v2626
          %v3057 = vmax.f32 %v3056, %v2634
          %v3058 = vmax.f32 %v3057, %v2642
          %v3059 = vmax.f32 %v3058, %v2650
          %v3060 = vmax.f32 %v3059, %v2658
          %v3061 = vmax.f32 %v3060, %v2666
          %v3062 = vmax.f32 %v3061, %v2674
          %v3063 = vmax.f32 %v3062, %v2682
          %v3064 = vmax.f32 %v3063, %v2690
          %v3065 = vmax.f32 %v3064, %v2698
          %v3066 = vmax.f32 %v3065, %v2706
          %v3067 = vmax.f32 %v3066, %v2714
          %v3068 = vmax.f32 %v3067, %v2722
          %v3069 = vmax.f32 %v3068, %v2730
          %v3070 = vmax.f32 %v3069, %v2738
          %v3071 = vmax.f32 %v3070, %v2746
          %v3072 = vmax.f32 %v3071, %v2754
          %v3073 = vmax.f32 %v3072, %v2762
          %v3074 = vmax.f32 %v3073, %v2770
          %v3075 = vmax.f32 %v3074, %v2778
          %v3076 = vmax.f32 %v3075, %v2786
          %v3077 = vmax.f32 %v3076, %v2794
          %v3078 = vmax.f32 %v3077, %v2802
          %v3079 = vmax.f32 %v3078, %v2810
          %v3080 = vmax.f32 %v3079, %v2818
          %v3081 = vmax.f32 %v3080, %v2826
          %v3082 = vrot.slane %v3081, 4
          %v3083 = vmax.f32 %v3081, %v3082
          %v3084 = vrot.slane %v3083, 2
          %v3085 = vmax.f32 %v3083, %v3084
          %v3086 = vrot.slane %v3085, 1
          %v3087 = vmax.f32 %v3085, %v3086
          %v3088 = vmax.f32 %v2579, %v2587
          %v3089 = vmax.f32 %v3088, %v2595
          %v3090 = vmax.f32 %v3089, %v2603
          %v3091 = vmax.f32 %v3090, %v2611
          %v3092 = vmax.f32 %v3091, %v2619
          %v3093 = vmax.f32 %v3092, %v2627
          %v3094 = vmax.f32 %v3093, %v2635
          %v3095 = vmax.f32 %v3094, %v2643
          %v3096 = vmax.f32 %v3095, %v2651
          %v3097 = vmax.f32 %v3096, %v2659
          %v3098 = vmax.f32 %v3097, %v2667
          %v3099 = vmax.f32 %v3098, %v2675
          %v3100 = vmax.f32 %v3099, %v2683
          %v3101 = vmax.f32 %v3100, %v2691
          %v3102 = vmax.f32 %v3101, %v2699
          %v3103 = vmax.f32 %v3102, %v2707
          %v3104 = vmax.f32 %v3103, %v2715
          %v3105 = vmax.f32 %v3104, %v2723
          %v3106 = vmax.f32 %v3105, %v2731
          %v3107 = vmax.f32 %v3106, %v2739
          %v3108 = vmax.f32 %v3107, %v2747
          %v3109 = vmax.f32 %v3108, %v2755
          %v3110 = vmax.f32 %v3109, %v2763
          %v3111 = vmax.f32 %v3110, %v2771
          %v3112 = vmax.f32 %v3111, %v2779
          %v3113 = vmax.f32 %v3112, %v2787
          %v3114 = vmax.f32 %v3113, %v2795
          %v3115 = vmax.f32 %v3114, %v2803
          %v3116 = vmax.f32 %v3115, %v2811
          %v3117 = vmax.f32 %v3116, %v2819
          %v3118 = vmax.f32 %v3117, %v2827
          %v3119 = vrot.slane %v3118, 4
          %v3120 = vmax.f32 %v3118, %v3119
          %v3121 = vrot.slane %v3120, 2
          %v3122 = vmax.f32 %v3120, %v3121
          %v3123 = vrot.slane %v3122, 1
          %v3124 = vmax.f32 %v3122, %v3123
          %v3133 = vrot.slane %v2902, 7
          %v3134 = vrot.slane %v2939, 6
          %v3135 = vrot.slane %v2976, 5
          %v3136 = vrot.slane %v3013, 4
          %v3137 = vrot.slane %v3050, 3
          %v3138 = vrot.slane %v3087, 2
          %v3139 = vrot.slane %v3124, 1
          %v3140 = vsel %vm861, %v2865, %v3133
          %vm3141 = vcmask 1042434
          %v3142 = vsel %vm3141, %v3134, %v3135
          %v3143 = vsel %vm862, %v3140, %v3142
          %vm3144 = vcmask 1044484
          %v3145 = vsel %vm3144, %v3136, %v3137
          %vm3146 = vcmask 1046534
          %v3147 = vsel %vm3146, %v3138, %v3139
          %vm3148 = vcmask 1045508
          %v3149 = vsel %vm3148, %v3145, %v3147
          %vm3150 = vcmask 1043456
          %v3151 = vsel %vm3150, %v3143, %v3149
          %v3153 = vmax.f32 %v2828, %v3151
          %3154 = vst [vmem:[#allocation2] sm:$0xff] %v3153
        $region132: #{seg_forward.1} parent=91 // pred_fallthru
          _
        %p3155 = scmp.eq.s32.totalorder %s40, 1
        %p3156 = pnand %p3155, %p1228
        %p3157 = pneg %p3156
        // Predicated region
        $region133: #{seg_forward.1} parent=91 // pred_check
          _
        $region134: #{seg_forward.1} parent=91 // pred_check_branch
          %3159 = sbr.rel (%p3156) target = $region136
        $region135: #{seg_forward.1} parent=91 // pred_region
          %v3160 = vld [vmem:[#allocation2] sm:$0xff]
          %v3162 = vperm.slane %v3160, 0
          %v3163 = vperm.slane %v3160, 1
          %v3164 = vperm.slane %v3160, 2
          %v3165 = vperm.slane %v3160, 3
          %v3166 = vperm.slane %v3160, 4
          %v3167 = vperm.slane %v3160, 5
          %v3168 = vperm.slane %v3160, 6
          %v3169 = vperm.slane %v3160, 7
          %v3178 = vpack.c.bf16 %v3162, %v3162
          %v3179 = vpack.c.bf16 %v3163, %v3163
          %v3180 = vpack.c.bf16 %v3164, %v3164
          %v3181 = vpack.c.bf16 %v3165, %v3165
          %v3182 = vpack.c.bf16 %v3166, %v3166
          %v3183 = vpack.c.bf16 %v3167, %v3167
          %v3184 = vpack.c.bf16 %v3168, %v3168
          %v3185 = vpack.c.bf16 %v3169, %v3169
          %v3186 = vld [vmem:[#allocation11] sm:$0xff]
          %v3187 = vld [vmem:[#allocation11 + $0x8] sm:$0xff]
          %v3188 = vld [vmem:[#allocation11 + $0x10] sm:$0xff]
          %v3189 = vld [vmem:[#allocation11 + $0x18] sm:$0xff]
          %v3190 = vld [vmem:[#allocation11 + $0x20] sm:$0xff]
          %v3191 = vld [vmem:[#allocation11 + $0x28] sm:$0xff]
          %v3192 = vld [vmem:[#allocation11 + $0x30] sm:$0xff]
          %v3193 = vld [vmem:[#allocation11 + $0x38] sm:$0xff]
          %v3194 = vld [vmem:[#allocation11 + $0x40] sm:$0xff]
          %v3195 = vld [vmem:[#allocation11 + $0x48] sm:$0xff]
          %v3196 = vld [vmem:[#allocation11 + $0x50] sm:$0xff]
          %v3197 = vld [vmem:[#allocation11 + $0x58] sm:$0xff]
          %v3198 = vld [vmem:[#allocation11 + $0x60] sm:$0xff]
          %v3199 = vld [vmem:[#allocation11 + $0x68] sm:$0xff]
          %v3200 = vld [vmem:[#allocation11 + $0x70] sm:$0xff]
          %v3201 = vld [vmem:[#allocation11 + $0x78] sm:$0xff]
          %v3202 = vld [vmem:[#allocation11 + $0x80] sm:$0xff]
          %v3203 = vld [vmem:[#allocation11 + $0x88] sm:$0xff]
          %v3204 = vld [vmem:[#allocation11 + $0x90] sm:$0xff]
          %v3205 = vld [vmem:[#allocation11 + $0x98] sm:$0xff]
          %v3206 = vld [vmem:[#allocation11 + $0xa0] sm:$0xff]
          %v3207 = vld [vmem:[#allocation11 + $0xa8] sm:$0xff]
          %v3208 = vld [vmem:[#allocation11 + $0xb0] sm:$0xff]
          %v3209 = vld [vmem:[#allocation11 + $0xb8] sm:$0xff]
          %v3210 = vld [vmem:[#allocation11 + $0xc0] sm:$0xff]
          %v3211 = vld [vmem:[#allocation11 + $0xc8] sm:$0xff]
          %v3212 = vld [vmem:[#allocation11 + $0xd0] sm:$0xff]
          %v3213 = vld [vmem:[#allocation11 + $0xd8] sm:$0xff]
          %v3214 = vld [vmem:[#allocation11 + $0xe0] sm:$0xff]
          %v3215 = vld [vmem:[#allocation11 + $0xe8] sm:$0xff]
          %v3216 = vld [vmem:[#allocation11 + $0xf0] sm:$0xff]
          %v3217 = vld [vmem:[#allocation11 + $0xf8] sm:$0xff]
          %v3218 = vld [vmem:[#allocation11 + $0x100] sm:$0xff]
          %v3219 = vld [vmem:[#allocation11 + $0x108] sm:$0xff]
          %v3220 = vld [vmem:[#allocation11 + $0x110] sm:$0xff]
          %v3221 = vld [vmem:[#allocation11 + $0x118] sm:$0xff]
          %v3222 = vld [vmem:[#allocation11 + $0x120] sm:$0xff]
          %v3223 = vld [vmem:[#allocation11 + $0x128] sm:$0xff]
          %v3224 = vld [vmem:[#allocation11 + $0x130] sm:$0xff]
          %v3225 = vld [vmem:[#allocation11 + $0x138] sm:$0xff]
          %v3226 = vld [vmem:[#allocation11 + $0x140] sm:$0xff]
          %v3227 = vld [vmem:[#allocation11 + $0x148] sm:$0xff]
          %v3228 = vld [vmem:[#allocation11 + $0x150] sm:$0xff]
          %v3229 = vld [vmem:[#allocation11 + $0x158] sm:$0xff]
          %v3230 = vld [vmem:[#allocation11 + $0x160] sm:$0xff]
          %v3231 = vld [vmem:[#allocation11 + $0x168] sm:$0xff]
          %v3232 = vld [vmem:[#allocation11 + $0x170] sm:$0xff]
          %v3233 = vld [vmem:[#allocation11 + $0x178] sm:$0xff]
          %v3234 = vld [vmem:[#allocation11 + $0x180] sm:$0xff]
          %v3235 = vld [vmem:[#allocation11 + $0x188] sm:$0xff]
          %v3236 = vld [vmem:[#allocation11 + $0x190] sm:$0xff]
          %v3237 = vld [vmem:[#allocation11 + $0x198] sm:$0xff]
          %v3238 = vld [vmem:[#allocation11 + $0x1a0] sm:$0xff]
          %v3239 = vld [vmem:[#allocation11 + $0x1a8] sm:$0xff]
          %v3240 = vld [vmem:[#allocation11 + $0x1b0] sm:$0xff]
          %v3241 = vld [vmem:[#allocation11 + $0x1b8] sm:$0xff]
          %v3242 = vld [vmem:[#allocation11 + $0x1c0] sm:$0xff]
          %v3243 = vld [vmem:[#allocation11 + $0x1c8] sm:$0xff]
          %v3244 = vld [vmem:[#allocation11 + $0x1d0] sm:$0xff]
          %v3245 = vld [vmem:[#allocation11 + $0x1d8] sm:$0xff]
          %v3246 = vld [vmem:[#allocation11 + $0x1e0] sm:$0xff]
          %v3247 = vld [vmem:[#allocation11 + $0x1e8] sm:$0xff]
          %v3248 = vld [vmem:[#allocation11 + $0x1f0] sm:$0xff]
          %v3249 = vld [vmem:[#allocation11 + $0x1f8] sm:$0xff]
          %v3250 = vld [vmem:[#allocation11 + $0x200] sm:$0xff]
          %v3251 = vld [vmem:[#allocation11 + $0x208] sm:$0xff]
          %v3252 = vld [vmem:[#allocation11 + $0x210] sm:$0xff]
          %v3253 = vld [vmem:[#allocation11 + $0x218] sm:$0xff]
          %v3254 = vld [vmem:[#allocation11 + $0x220] sm:$0xff]
          %v3255 = vld [vmem:[#allocation11 + $0x228] sm:$0xff]
          %v3256 = vld [vmem:[#allocation11 + $0x230] sm:$0xff]
          %v3257 = vld [vmem:[#allocation11 + $0x238] sm:$0xff]
          %v3258 = vld [vmem:[#allocation11 + $0x240] sm:$0xff]
          %v3259 = vld [vmem:[#allocation11 + $0x248] sm:$0xff]
          %v3260 = vld [vmem:[#allocation11 + $0x250] sm:$0xff]
          %v3261 = vld [vmem:[#allocation11 + $0x258] sm:$0xff]
          %v3262 = vld [vmem:[#allocation11 + $0x260] sm:$0xff]
          %v3263 = vld [vmem:[#allocation11 + $0x268] sm:$0xff]
          %v3264 = vld [vmem:[#allocation11 + $0x270] sm:$0xff]
          %v3265 = vld [vmem:[#allocation11 + $0x278] sm:$0xff]
          %v3266 = vld [vmem:[#allocation11 + $0x280] sm:$0xff]
          %v3267 = vld [vmem:[#allocation11 + $0x288] sm:$0xff]
          %v3268 = vld [vmem:[#allocation11 + $0x290] sm:$0xff]
          %v3269 = vld [vmem:[#allocation11 + $0x298] sm:$0xff]
          %v3270 = vld [vmem:[#allocation11 + $0x2a0] sm:$0xff]
          %v3271 = vld [vmem:[#allocation11 + $0x2a8] sm:$0xff]
          %v3272 = vld [vmem:[#allocation11 + $0x2b0] sm:$0xff]
          %v3273 = vld [vmem:[#allocation11 + $0x2b8] sm:$0xff]
          %v3274 = vld [vmem:[#allocation11 + $0x2c0] sm:$0xff]
          %v3275 = vld [vmem:[#allocation11 + $0x2c8] sm:$0xff]
          %v3276 = vld [vmem:[#allocation11 + $0x2d0] sm:$0xff]
          %v3277 = vld [vmem:[#allocation11 + $0x2d8] sm:$0xff]
          %v3278 = vld [vmem:[#allocation11 + $0x2e0] sm:$0xff]
          %v3279 = vld [vmem:[#allocation11 + $0x2e8] sm:$0xff]
          %v3280 = vld [vmem:[#allocation11 + $0x2f0] sm:$0xff]
          %v3281 = vld [vmem:[#allocation11 + $0x2f8] sm:$0xff]
          %v3282 = vld [vmem:[#allocation11 + $0x300] sm:$0xff]
          %v3283 = vld [vmem:[#allocation11 + $0x308] sm:$0xff]
          %v3284 = vld [vmem:[#allocation11 + $0x310] sm:$0xff]
          %v3285 = vld [vmem:[#allocation11 + $0x318] sm:$0xff]
          %v3286 = vld [vmem:[#allocation11 + $0x320] sm:$0xff]
          %v3287 = vld [vmem:[#allocation11 + $0x328] sm:$0xff]
          %v3288 = vld [vmem:[#allocation11 + $0x330] sm:$0xff]
          %v3289 = vld [vmem:[#allocation11 + $0x338] sm:$0xff]
          %v3290 = vld [vmem:[#allocation11 + $0x340] sm:$0xff]
          %v3291 = vld [vmem:[#allocation11 + $0x348] sm:$0xff]
          %v3292 = vld [vmem:[#allocation11 + $0x350] sm:$0xff]
          %v3293 = vld [vmem:[#allocation11 + $0x358] sm:$0xff]
          %v3294 = vld [vmem:[#allocation11 + $0x360] sm:$0xff]
          %v3295 = vld [vmem:[#allocation11 + $0x368] sm:$0xff]
          %v3296 = vld [vmem:[#allocation11 + $0x370] sm:$0xff]
          %v3297 = vld [vmem:[#allocation11 + $0x378] sm:$0xff]
          %v3298 = vld [vmem:[#allocation11 + $0x380] sm:$0xff]
          %v3299 = vld [vmem:[#allocation11 + $0x388] sm:$0xff]
          %v3300 = vld [vmem:[#allocation11 + $0x390] sm:$0xff]
          %v3301 = vld [vmem:[#allocation11 + $0x398] sm:$0xff]
          %v3302 = vld [vmem:[#allocation11 + $0x3a0] sm:$0xff]
          %v3303 = vld [vmem:[#allocation11 + $0x3a8] sm:$0xff]
          %v3304 = vld [vmem:[#allocation11 + $0x3b0] sm:$0xff]
          %v3305 = vld [vmem:[#allocation11 + $0x3b8] sm:$0xff]
          %v3306 = vld [vmem:[#allocation11 + $0x3c0] sm:$0xff]
          %v3307 = vld [vmem:[#allocation11 + $0x3c8] sm:$0xff]
          %v3308 = vld [vmem:[#allocation11 + $0x3d0] sm:$0xff]
          %v3309 = vld [vmem:[#allocation11 + $0x3d8] sm:$0xff]
          %v3310 = vld [vmem:[#allocation11 + $0x3e0] sm:$0xff]
          %v3311 = vld [vmem:[#allocation11 + $0x3e8] sm:$0xff]
          %v3312 = vld [vmem:[#allocation11 + $0x3f0] sm:$0xff]
          %v3313 = vld [vmem:[#allocation11 + $0x3f8] sm:$0xff]
          %v3314 = vld [vmem:[#allocation11 + $0x400] sm:$0xff]
          %v3315 = vld [vmem:[#allocation11 + $0x408] sm:$0xff]
          %v3316 = vld [vmem:[#allocation11 + $0x410] sm:$0xff]
          %v3317 = vld [vmem:[#allocation11 + $0x418] sm:$0xff]
          %v3318 = vld [vmem:[#allocation11 + $0x420] sm:$0xff]
          %v3319 = vld [vmem:[#allocation11 + $0x428] sm:$0xff]
          %v3320 = vld [vmem:[#allocation11 + $0x430] sm:$0xff]
          %v3321 = vld [vmem:[#allocation11 + $0x438] sm:$0xff]
          %v3322 = vld [vmem:[#allocation11 + $0x440] sm:$0xff]
          %v3323 = vld [vmem:[#allocation11 + $0x448] sm:$0xff]
          %v3324 = vld [vmem:[#allocation11 + $0x450] sm:$0xff]
          %v3325 = vld [vmem:[#allocation11 + $0x458] sm:$0xff]
          %v3326 = vld [vmem:[#allocation11 + $0x460] sm:$0xff]
          %v3327 = vld [vmem:[#allocation11 + $0x468] sm:$0xff]
          %v3328 = vld [vmem:[#allocation11 + $0x470] sm:$0xff]
          %v3329 = vld [vmem:[#allocation11 + $0x478] sm:$0xff]
          %v3330 = vld [vmem:[#allocation11 + $0x480] sm:$0xff]
          %v3331 = vld [vmem:[#allocation11 + $0x488] sm:$0xff]
          %v3332 = vld [vmem:[#allocation11 + $0x490] sm:$0xff]
          %v3333 = vld [vmem:[#allocation11 + $0x498] sm:$0xff]
          %v3334 = vld [vmem:[#allocation11 + $0x4a0] sm:$0xff]
          %v3335 = vld [vmem:[#allocation11 + $0x4a8] sm:$0xff]
          %v3336 = vld [vmem:[#allocation11 + $0x4b0] sm:$0xff]
          %v3337 = vld [vmem:[#allocation11 + $0x4b8] sm:$0xff]
          %v3338 = vld [vmem:[#allocation11 + $0x4c0] sm:$0xff]
          %v3339 = vld [vmem:[#allocation11 + $0x4c8] sm:$0xff]
          %v3340 = vld [vmem:[#allocation11 + $0x4d0] sm:$0xff]
          %v3341 = vld [vmem:[#allocation11 + $0x4d8] sm:$0xff]
          %v3342 = vld [vmem:[#allocation11 + $0x4e0] sm:$0xff]
          %v3343 = vld [vmem:[#allocation11 + $0x4e8] sm:$0xff]
          %v3344 = vld [vmem:[#allocation11 + $0x4f0] sm:$0xff]
          %v3345 = vld [vmem:[#allocation11 + $0x4f8] sm:$0xff]
          %v3346 = vld [vmem:[#allocation11 + $0x500] sm:$0xff]
          %v3347 = vld [vmem:[#allocation11 + $0x508] sm:$0xff]
          %v3348 = vld [vmem:[#allocation11 + $0x510] sm:$0xff]
          %v3349 = vld [vmem:[#allocation11 + $0x518] sm:$0xff]
          %v3350 = vld [vmem:[#allocation11 + $0x520] sm:$0xff]
          %v3351 = vld [vmem:[#allocation11 + $0x528] sm:$0xff]
          %v3352 = vld [vmem:[#allocation11 + $0x530] sm:$0xff]
          %v3353 = vld [vmem:[#allocation11 + $0x538] sm:$0xff]
          %v3354 = vld [vmem:[#allocation11 + $0x540] sm:$0xff]
          %v3355 = vld [vmem:[#allocation11 + $0x548] sm:$0xff]
          %v3356 = vld [vmem:[#allocation11 + $0x550] sm:$0xff]
          %v3357 = vld [vmem:[#allocation11 + $0x558] sm:$0xff]
          %v3358 = vld [vmem:[#allocation11 + $0x560] sm:$0xff]
          %v3359 = vld [vmem:[#allocation11 + $0x568] sm:$0xff]
          %v3360 = vld [vmem:[#allocation11 + $0x570] sm:$0xff]
          %v3361 = vld [vmem:[#allocation11 + $0x578] sm:$0xff]
          %v3362 = vld [vmem:[#allocation11 + $0x580] sm:$0xff]
          %v3363 = vld [vmem:[#allocation11 + $0x588] sm:$0xff]
          %v3364 = vld [vmem:[#allocation11 + $0x590] sm:$0xff]
          %v3365 = vld [vmem:[#allocation11 + $0x598] sm:$0xff]
          %v3366 = vld [vmem:[#allocation11 + $0x5a0] sm:$0xff]
          %v3367 = vld [vmem:[#allocation11 + $0x5a8] sm:$0xff]
          %v3368 = vld [vmem:[#allocation11 + $0x5b0] sm:$0xff]
          %v3369 = vld [vmem:[#allocation11 + $0x5b8] sm:$0xff]
          %v3370 = vld [vmem:[#allocation11 + $0x5c0] sm:$0xff]
          %v3371 = vld [vmem:[#allocation11 + $0x5c8] sm:$0xff]
          %v3372 = vld [vmem:[#allocation11 + $0x5d0] sm:$0xff]
          %v3373 = vld [vmem:[#allocation11 + $0x5d8] sm:$0xff]
          %v3374 = vld [vmem:[#allocation11 + $0x5e0] sm:$0xff]
          %v3375 = vld [vmem:[#allocation11 + $0x5e8] sm:$0xff]
          %v3376 = vld [vmem:[#allocation11 + $0x5f0] sm:$0xff]
          %v3377 = vld [vmem:[#allocation11 + $0x5f8] sm:$0xff]
          %v3378 = vld [vmem:[#allocation11 + $0x600] sm:$0xff]
          %v3379 = vld [vmem:[#allocation11 + $0x608] sm:$0xff]
          %v3380 = vld [vmem:[#allocation11 + $0x610] sm:$0xff]
          %v3381 = vld [vmem:[#allocation11 + $0x618] sm:$0xff]
          %v3382 = vld [vmem:[#allocation11 + $0x620] sm:$0xff]
          %v3383 = vld [vmem:[#allocation11 + $0x628] sm:$0xff]
          %v3384 = vld [vmem:[#allocation11 + $0x630] sm:$0xff]
          %v3385 = vld [vmem:[#allocation11 + $0x638] sm:$0xff]
          %v3386 = vld [vmem:[#allocation11 + $0x640] sm:$0xff]
          %v3387 = vld [vmem:[#allocation11 + $0x648] sm:$0xff]
          %v3388 = vld [vmem:[#allocation11 + $0x650] sm:$0xff]
          %v3389 = vld [vmem:[#allocation11 + $0x658] sm:$0xff]
          %v3390 = vld [vmem:[#allocation11 + $0x660] sm:$0xff]
          %v3391 = vld [vmem:[#allocation11 + $0x668] sm:$0xff]
          %v3392 = vld [vmem:[#allocation11 + $0x670] sm:$0xff]
          %v3393 = vld [vmem:[#allocation11 + $0x678] sm:$0xff]
          %v3394 = vld [vmem:[#allocation11 + $0x680] sm:$0xff]
          %v3395 = vld [vmem:[#allocation11 + $0x688] sm:$0xff]
          %v3396 = vld [vmem:[#allocation11 + $0x690] sm:$0xff]
          %v3397 = vld [vmem:[#allocation11 + $0x698] sm:$0xff]
          %v3398 = vld [vmem:[#allocation11 + $0x6a0] sm:$0xff]
          %v3399 = vld [vmem:[#allocation11 + $0x6a8] sm:$0xff]
          %v3400 = vld [vmem:[#allocation11 + $0x6b0] sm:$0xff]
          %v3401 = vld [vmem:[#allocation11 + $0x6b8] sm:$0xff]
          %v3402 = vld [vmem:[#allocation11 + $0x6c0] sm:$0xff]
          %v3403 = vld [vmem:[#allocation11 + $0x6c8] sm:$0xff]
          %v3404 = vld [vmem:[#allocation11 + $0x6d0] sm:$0xff]
          %v3405 = vld [vmem:[#allocation11 + $0x6d8] sm:$0xff]
          %v3406 = vld [vmem:[#allocation11 + $0x6e0] sm:$0xff]
          %v3407 = vld [vmem:[#allocation11 + $0x6e8] sm:$0xff]
          %v3408 = vld [vmem:[#allocation11 + $0x6f0] sm:$0xff]
          %v3409 = vld [vmem:[#allocation11 + $0x6f8] sm:$0xff]
          %v3410 = vld [vmem:[#allocation11 + $0x700] sm:$0xff]
          %v3411 = vld [vmem:[#allocation11 + $0x708] sm:$0xff]
          %v3412 = vld [vmem:[#allocation11 + $0x710] sm:$0xff]
          %v3413 = vld [vmem:[#allocation11 + $0x718] sm:$0xff]
          %v3414 = vld [vmem:[#allocation11 + $0x720] sm:$0xff]
          %v3415 = vld [vmem:[#allocation11 + $0x728] sm:$0xff]
          %v3416 = vld [vmem:[#allocation11 + $0x730] sm:$0xff]
          %v3417 = vld [vmem:[#allocation11 + $0x738] sm:$0xff]
          %v3418 = vld [vmem:[#allocation11 + $0x740] sm:$0xff]
          %v3419 = vld [vmem:[#allocation11 + $0x748] sm:$0xff]
          %v3420 = vld [vmem:[#allocation11 + $0x750] sm:$0xff]
          %v3421 = vld [vmem:[#allocation11 + $0x758] sm:$0xff]
          %v3422 = vld [vmem:[#allocation11 + $0x760] sm:$0xff]
          %v3423 = vld [vmem:[#allocation11 + $0x768] sm:$0xff]
          %v3424 = vld [vmem:[#allocation11 + $0x770] sm:$0xff]
          %v3425 = vld [vmem:[#allocation11 + $0x778] sm:$0xff]
          %v3426 = vld [vmem:[#allocation11 + $0x780] sm:$0xff]
          %v3427 = vld [vmem:[#allocation11 + $0x788] sm:$0xff]
          %v3428 = vld [vmem:[#allocation11 + $0x790] sm:$0xff]
          %v3429 = vld [vmem:[#allocation11 + $0x798] sm:$0xff]
          %v3430 = vld [vmem:[#allocation11 + $0x7a0] sm:$0xff]
          %v3431 = vld [vmem:[#allocation11 + $0x7a8] sm:$0xff]
          %v3432 = vld [vmem:[#allocation11 + $0x7b0] sm:$0xff]
          %v3433 = vld [vmem:[#allocation11 + $0x7b8] sm:$0xff]
          %v3434 = vld [vmem:[#allocation11 + $0x7c0] sm:$0xff]
          %v3435 = vld [vmem:[#allocation11 + $0x7c8] sm:$0xff]
          %v3436 = vld [vmem:[#allocation11 + $0x7d0] sm:$0xff]
          %v3437 = vld [vmem:[#allocation11 + $0x7d8] sm:$0xff]
          %v3438 = vld [vmem:[#allocation11 + $0x7e0] sm:$0xff]
          %v3439 = vld [vmem:[#allocation11 + $0x7e8] sm:$0xff]
          %v3440 = vld [vmem:[#allocation11 + $0x7f0] sm:$0xff]
          %v3441 = vld [vmem:[#allocation11 + $0x7f8] sm:$0xff]
          %v3442 = vld [vmem:[%s11] sm:$0xf]
          %v3699 = vunpack.c.l.b16 %v3186
          %v3700 = vunpack.c.h.b16 %v3186
          %v3701 = vunpack.c.l.b16 %v3187
          %v3702 = vunpack.c.h.b16 %v3187
          %v3703 = vunpack.c.l.b16 %v3188
          %v3704 = vunpack.c.h.b16 %v3188
          %v3705 = vunpack.c.l.b16 %v3189
          %v3706 = vunpack.c.h.b16 %v3189
          %v3707 = vunpack.c.l.b16 %v3190
          %v3708 = vunpack.c.h.b16 %v3190
          %v3709 = vunpack.c.l.b16 %v3191
          %v3710 = vunpack.c.h.b16 %v3191
          %v3711 = vunpack.c.l.b16 %v3192
          %v3712 = vunpack.c.h.b16 %v3192
          %v3713 = vunpack.c.l.b16 %v3193
          %v3714 = vunpack.c.h.b16 %v3193
          %v3715 = vunpack.c.l.b16 %v3194
          %v3716 = vunpack.c.h.b16 %v3194
          %v3717 = vunpack.c.l.b16 %v3195
          %v3718 = vunpack.c.h.b16 %v3195
          %v3719 = vunpack.c.l.b16 %v3196
          %v3720 = vunpack.c.h.b16 %v3196
          %v3721 = vunpack.c.l.b16 %v3197
          %v3722 = vunpack.c.h.b16 %v3197
          %v3723 = vunpack.c.l.b16 %v3198
          %v3724 = vunpack.c.h.b16 %v3198
          %v3725 = vunpack.c.l.b16 %v3199
          %v3726 = vunpack.c.h.b16 %v3199
          %v3727 = vunpack.c.l.b16 %v3200
          %v3728 = vunpack.c.h.b16 %v3200
          %v3729 = vunpack.c.l.b16 %v3201
          %v3730 = vunpack.c.h.b16 %v3201
          %v3731 = vunpack.c.l.b16 %v3202
          %v3732 = vunpack.c.h.b16 %v3202
          %v3733 = vunpack.c.l.b16 %v3203
          %v3734 = vunpack.c.h.b16 %v3203
          %v3735 = vunpack.c.l.b16 %v3204
          %v3736 = vunpack.c.h.b16 %v3204
          %v3737 = vunpack.c.l.b16 %v3205
          %v3738 = vunpack.c.h.b16 %v3205
          %v3739 = vunpack.c.l.b16 %v3206
          %v3740 = vunpack.c.h.b16 %v3206
          %v3741 = vunpack.c.l.b16 %v3207
          %v3742 = vunpack.c.h.b16 %v3207
          %v3743 = vunpack.c.l.b16 %v3208
          %v3744 = vunpack.c.h.b16 %v3208
          %v3745 = vunpack.c.l.b16 %v3209
          %v3746 = vunpack.c.h.b16 %v3209
          %v3747 = vunpack.c.l.b16 %v3210
          %v3748 = vunpack.c.h.b16 %v3210
          %v3749 = vunpack.c.l.b16 %v3211
          %v3750 = vunpack.c.h.b16 %v3211
          %v3751 = vunpack.c.l.b16 %v3212
          %v3752 = vunpack.c.h.b16 %v3212
          %v3753 = vunpack.c.l.b16 %v3213
          %v3754 = vunpack.c.h.b16 %v3213
          %v3755 = vunpack.c.l.b16 %v3214
          %v3756 = vunpack.c.h.b16 %v3214
          %v3757 = vunpack.c.l.b16 %v3215
          %v3758 = vunpack.c.h.b16 %v3215
          %v3759 = vunpack.c.l.b16 %v3216
          %v3760 = vunpack.c.h.b16 %v3216
          %v3761 = vunpack.c.l.b16 %v3217
          %v3762 = vunpack.c.h.b16 %v3217
          %v3763 = vunpack.c.l.b16 %v3218
          %v3764 = vunpack.c.h.b16 %v3218
          %v3765 = vunpack.c.l.b16 %v3219
          %v3766 = vunpack.c.h.b16 %v3219
          %v3767 = vunpack.c.l.b16 %v3220
          %v3768 = vunpack.c.h.b16 %v3220
          %v3769 = vunpack.c.l.b16 %v3221
          %v3770 = vunpack.c.h.b16 %v3221
          %v3771 = vunpack.c.l.b16 %v3222
          %v3772 = vunpack.c.h.b16 %v3222
          %v3773 = vunpack.c.l.b16 %v3223
          %v3774 = vunpack.c.h.b16 %v3223
          %v3775 = vunpack.c.l.b16 %v3224
          %v3776 = vunpack.c.h.b16 %v3224
          %v3777 = vunpack.c.l.b16 %v3225
          %v3778 = vunpack.c.h.b16 %v3225
          %v3779 = vunpack.c.l.b16 %v3226
          %v3780 = vunpack.c.h.b16 %v3226
          %v3781 = vunpack.c.l.b16 %v3227
          %v3782 = vunpack.c.h.b16 %v3227
          %v3783 = vunpack.c.l.b16 %v3228
          %v3784 = vunpack.c.h.b16 %v3228
          %v3785 = vunpack.c.l.b16 %v3229
          %v3786 = vunpack.c.h.b16 %v3229
          %v3787 = vunpack.c.l.b16 %v3230
          %v3788 = vunpack.c.h.b16 %v3230
          %v3789 = vunpack.c.l.b16 %v3231
          %v3790 = vunpack.c.h.b16 %v3231
          %v3791 = vunpack.c.l.b16 %v3232
          %v3792 = vunpack.c.h.b16 %v3232
          %v3793 = vunpack.c.l.b16 %v3233
          %v3794 = vunpack.c.h.b16 %v3233
          %v3795 = vunpack.c.l.b16 %v3234
          %v3796 = vunpack.c.h.b16 %v3234
          %v3797 = vunpack.c.l.b16 %v3235
          %v3798 = vunpack.c.h.b16 %v3235
          %v3799 = vunpack.c.l.b16 %v3236
          %v3800 = vunpack.c.h.b16 %v3236
          %v3801 = vunpack.c.l.b16 %v3237
          %v3802 = vunpack.c.h.b16 %v3237
          %v3803 = vunpack.c.l.b16 %v3238
          %v3804 = vunpack.c.h.b16 %v3238
          %v3805 = vunpack.c.l.b16 %v3239
          %v3806 = vunpack.c.h.b16 %v3239
          %v3807 = vunpack.c.l.b16 %v3240
          %v3808 = vunpack.c.h.b16 %v3240
          %v3809 = vunpack.c.l.b16 %v3241
          %v3810 = vunpack.c.h.b16 %v3241
          %v3811 = vunpack.c.l.b16 %v3242
          %v3812 = vunpack.c.h.b16 %v3242
          %v3813 = vunpack.c.l.b16 %v3243
          %v3814 = vunpack.c.h.b16 %v3243
          %v3815 = vunpack.c.l.b16 %v3244
          %v3816 = vunpack.c.h.b16 %v3244
          %v3817 = vunpack.c.l.b16 %v3245
          %v3818 = vunpack.c.h.b16 %v3245
          %v3819 = vunpack.c.l.b16 %v3246
          %v3820 = vunpack.c.h.b16 %v3246
          %v3821 = vunpack.c.l.b16 %v3247
          %v3822 = vunpack.c.h.b16 %v3247
          %v3823 = vunpack.c.l.b16 %v3248
          %v3824 = vunpack.c.h.b16 %v3248
          %v3825 = vunpack.c.l.b16 %v3249
          %v3826 = vunpack.c.h.b16 %v3249
          %v3827 = vunpack.c.l.b16 %v3250
          %v3828 = vunpack.c.h.b16 %v3250
          %v3829 = vunpack.c.l.b16 %v3251
          %v3830 = vunpack.c.h.b16 %v3251
          %v3831 = vunpack.c.l.b16 %v3252
          %v3832 = vunpack.c.h.b16 %v3252
          %v3833 = vunpack.c.l.b16 %v3253
          %v3834 = vunpack.c.h.b16 %v3253
          %v3835 = vunpack.c.l.b16 %v3254
          %v3836 = vunpack.c.h.b16 %v3254
          %v3837 = vunpack.c.l.b16 %v3255
          %v3838 = vunpack.c.h.b16 %v3255
          %v3839 = vunpack.c.l.b16 %v3256
          %v3840 = vunpack.c.h.b16 %v3256
          %v3841 = vunpack.c.l.b16 %v3257
          %v3842 = vunpack.c.h.b16 %v3257
          %v3843 = vunpack.c.l.b16 %v3258
          %v3844 = vunpack.c.h.b16 %v3258
          %v3845 = vunpack.c.l.b16 %v3259
          %v3846 = vunpack.c.h.b16 %v3259
          %v3847 = vunpack.c.l.b16 %v3260
          %v3848 = vunpack.c.h.b16 %v3260
          %v3849 = vunpack.c.l.b16 %v3261
          %v3850 = vunpack.c.h.b16 %v3261
          %v3851 = vunpack.c.l.b16 %v3262
          %v3852 = vunpack.c.h.b16 %v3262
          %v3853 = vunpack.c.l.b16 %v3263
          %v3854 = vunpack.c.h.b16 %v3263
          %v3855 = vunpack.c.l.b16 %v3264
          %v3856 = vunpack.c.h.b16 %v3264
          %v3857 = vunpack.c.l.b16 %v3265
          %v3858 = vunpack.c.h.b16 %v3265
          %v3859 = vunpack.c.l.b16 %v3266
          %v3860 = vunpack.c.h.b16 %v3266
          %v3861 = vunpack.c.l.b16 %v3267
          %v3862 = vunpack.c.h.b16 %v3267
          %v3863 = vunpack.c.l.b16 %v3268
          %v3864 = vunpack.c.h.b16 %v3268
          %v3865 = vunpack.c.l.b16 %v3269
          %v3866 = vunpack.c.h.b16 %v3269
          %v3867 = vunpack.c.l.b16 %v3270
          %v3868 = vunpack.c.h.b16 %v3270
          %v3869 = vunpack.c.l.b16 %v3271
          %v3870 = vunpack.c.h.b16 %v3271
          %v3871 = vunpack.c.l.b16 %v3272
          %v3872 = vunpack.c.h.b16 %v3272
          %v3873 = vunpack.c.l.b16 %v3273
          %v3874 = vunpack.c.h.b16 %v3273
          %v3875 = vunpack.c.l.b16 %v3274
          %v3876 = vunpack.c.h.b16 %v3274
          %v3877 = vunpack.c.l.b16 %v3275
          %v3878 = vunpack.c.h.b16 %v3275
          %v3879 = vunpack.c.l.b16 %v3276
          %v3880 = vunpack.c.h.b16 %v3276
          %v3881 = vunpack.c.l.b16 %v3277
          %v3882 = vunpack.c.h.b16 %v3277
          %v3883 = vunpack.c.l.b16 %v3278
          %v3884 = vunpack.c.h.b16 %v3278
          %v3885 = vunpack.c.l.b16 %v3279
          %v3886 = vunpack.c.h.b16 %v3279
          %v3887 = vunpack.c.l.b16 %v3280
          %v3888 = vunpack.c.h.b16 %v3280
          %v3889 = vunpack.c.l.b16 %v3281
          %v3890 = vunpack.c.h.b16 %v3281
          %v3891 = vunpack.c.l.b16 %v3282
          %v3892 = vunpack.c.h.b16 %v3282
          %v3893 = vunpack.c.l.b16 %v3283
          %v3894 = vunpack.c.h.b16 %v3283
          %v3895 = vunpack.c.l.b16 %v3284
          %v3896 = vunpack.c.h.b16 %v3284
          %v3897 = vunpack.c.l.b16 %v3285
          %v3898 = vunpack.c.h.b16 %v3285
          %v3899 = vunpack.c.l.b16 %v3286
          %v3900 = vunpack.c.h.b16 %v3286
          %v3901 = vunpack.c.l.b16 %v3287
          %v3902 = vunpack.c.h.b16 %v3287
          %v3903 = vunpack.c.l.b16 %v3288
          %v3904 = vunpack.c.h.b16 %v3288
          %v3905 = vunpack.c.l.b16 %v3289
          %v3906 = vunpack.c.h.b16 %v3289
          %v3907 = vunpack.c.l.b16 %v3290
          %v3908 = vunpack.c.h.b16 %v3290
          %v3909 = vunpack.c.l.b16 %v3291
          %v3910 = vunpack.c.h.b16 %v3291
          %v3911 = vunpack.c.l.b16 %v3292
          %v3912 = vunpack.c.h.b16 %v3292
          %v3913 = vunpack.c.l.b16 %v3293
          %v3914 = vunpack.c.h.b16 %v3293
          %v3915 = vunpack.c.l.b16 %v3294
          %v3916 = vunpack.c.h.b16 %v3294
          %v3917 = vunpack.c.l.b16 %v3295
          %v3918 = vunpack.c.h.b16 %v3295
          %v3919 = vunpack.c.l.b16 %v3296
          %v3920 = vunpack.c.h.b16 %v3296
          %v3921 = vunpack.c.l.b16 %v3297
          %v3922 = vunpack.c.h.b16 %v3297
          %v3923 = vunpack.c.l.b16 %v3298
          %v3924 = vunpack.c.h.b16 %v3298
          %v3925 = vunpack.c.l.b16 %v3299
          %v3926 = vunpack.c.h.b16 %v3299
          %v3927 = vunpack.c.l.b16 %v3300
          %v3928 = vunpack.c.h.b16 %v3300
          %v3929 = vunpack.c.l.b16 %v3301
          %v3930 = vunpack.c.h.b16 %v3301
          %v3931 = vunpack.c.l.b16 %v3302
          %v3932 = vunpack.c.h.b16 %v3302
          %v3933 = vunpack.c.l.b16 %v3303
          %v3934 = vunpack.c.h.b16 %v3303
          %v3935 = vunpack.c.l.b16 %v3304
          %v3936 = vunpack.c.h.b16 %v3304
          %v3937 = vunpack.c.l.b16 %v3305
          %v3938 = vunpack.c.h.b16 %v3305
          %v3939 = vunpack.c.l.b16 %v3306
          %v3940 = vunpack.c.h.b16 %v3306
          %v3941 = vunpack.c.l.b16 %v3307
          %v3942 = vunpack.c.h.b16 %v3307
          %v3943 = vunpack.c.l.b16 %v3308
          %v3944 = vunpack.c.h.b16 %v3308
          %v3945 = vunpack.c.l.b16 %v3309
          %v3946 = vunpack.c.h.b16 %v3309
          %v3947 = vunpack.c.l.b16 %v3310
          %v3948 = vunpack.c.h.b16 %v3310
          %v3949 = vunpack.c.l.b16 %v3311
          %v3950 = vunpack.c.h.b16 %v3311
          %v3951 = vunpack.c.l.b16 %v3312
          %v3952 = vunpack.c.h.b16 %v3312
          %v3953 = vunpack.c.l.b16 %v3313
          %v3954 = vunpack.c.h.b16 %v3313
          %v3955 = vunpack.c.l.b16 %v3314
          %v3956 = vunpack.c.h.b16 %v3314
          %v3957 = vunpack.c.l.b16 %v3315
          %v3958 = vunpack.c.h.b16 %v3315
          %v3959 = vunpack.c.l.b16 %v3316
          %v3960 = vunpack.c.h.b16 %v3316
          %v3961 = vunpack.c.l.b16 %v3317
          %v3962 = vunpack.c.h.b16 %v3317
          %v3963 = vunpack.c.l.b16 %v3318
          %v3964 = vunpack.c.h.b16 %v3318
          %v3965 = vunpack.c.l.b16 %v3319
          %v3966 = vunpack.c.h.b16 %v3319
          %v3967 = vunpack.c.l.b16 %v3320
          %v3968 = vunpack.c.h.b16 %v3320
          %v3969 = vunpack.c.l.b16 %v3321
          %v3970 = vunpack.c.h.b16 %v3321
          %v3971 = vunpack.c.l.b16 %v3322
          %v3972 = vunpack.c.h.b16 %v3322
          %v3973 = vunpack.c.l.b16 %v3323
          %v3974 = vunpack.c.h.b16 %v3323
          %v3975 = vunpack.c.l.b16 %v3324
          %v3976 = vunpack.c.h.b16 %v3324
          %v3977 = vunpack.c.l.b16 %v3325
          %v3978 = vunpack.c.h.b16 %v3325
          %v3979 = vunpack.c.l.b16 %v3326
          %v3980 = vunpack.c.h.b16 %v3326
          %v3981 = vunpack.c.l.b16 %v3327
          %v3982 = vunpack.c.h.b16 %v3327
          %v3983 = vunpack.c.l.b16 %v3328
          %v3984 = vunpack.c.h.b16 %v3328
          %v3985 = vunpack.c.l.b16 %v3329
          %v3986 = vunpack.c.h.b16 %v3329
          %v3987 = vunpack.c.l.b16 %v3330
          %v3988 = vunpack.c.h.b16 %v3330
          %v3989 = vunpack.c.l.b16 %v3331
          %v3990 = vunpack.c.h.b16 %v3331
          %v3991 = vunpack.c.l.b16 %v3332
          %v3992 = vunpack.c.h.b16 %v3332
          %v3993 = vunpack.c.l.b16 %v3333
          %v3994 = vunpack.c.h.b16 %v3333
          %v3995 = vunpack.c.l.b16 %v3334
          %v3996 = vunpack.c.h.b16 %v3334
          %v3997 = vunpack.c.l.b16 %v3335
          %v3998 = vunpack.c.h.b16 %v3335
          %v3999 = vunpack.c.l.b16 %v3336
          %v4000 = vunpack.c.h.b16 %v3336
          %v4001 = vunpack.c.l.b16 %v3337
          %v4002 = vunpack.c.h.b16 %v3337
          %v4003 = vunpack.c.l.b16 %v3338
          %v4004 = vunpack.c.h.b16 %v3338
          %v4005 = vunpack.c.l.b16 %v3339
          %v4006 = vunpack.c.h.b16 %v3339
          %v4007 = vunpack.c.l.b16 %v3340
          %v4008 = vunpack.c.h.b16 %v3340
          %v4009 = vunpack.c.l.b16 %v3341
          %v4010 = vunpack.c.h.b16 %v3341
          %v4011 = vunpack.c.l.b16 %v3342
          %v4012 = vunpack.c.h.b16 %v3342
          %v4013 = vunpack.c.l.b16 %v3343
          %v4014 = vunpack.c.h.b16 %v3343
          %v4015 = vunpack.c.l.b16 %v3344
          %v4016 = vunpack.c.h.b16 %v3344
          %v4017 = vunpack.c.l.b16 %v3345
          %v4018 = vunpack.c.h.b16 %v3345
          %v4019 = vunpack.c.l.b16 %v3346
          %v4020 = vunpack.c.h.b16 %v3346
          %v4021 = vunpack.c.l.b16 %v3347
          %v4022 = vunpack.c.h.b16 %v3347
          %v4023 = vunpack.c.l.b16 %v3348
          %v4024 = vunpack.c.h.b16 %v3348
          %v4025 = vunpack.c.l.b16 %v3349
          %v4026 = vunpack.c.h.b16 %v3349
          %v4027 = vunpack.c.l.b16 %v3350
          %v4028 = vunpack.c.h.b16 %v3350
          %v4029 = vunpack.c.l.b16 %v3351
          %v4030 = vunpack.c.h.b16 %v3351
          %v4031 = vunpack.c.l.b16 %v3352
          %v4032 = vunpack.c.h.b16 %v3352
          %v4033 = vunpack.c.l.b16 %v3353
          %v4034 = vunpack.c.h.b16 %v3353
          %v4035 = vunpack.c.l.b16 %v3354
          %v4036 = vunpack.c.h.b16 %v3354
          %v4037 = vunpack.c.l.b16 %v3355
          %v4038 = vunpack.c.h.b16 %v3355
          %v4039 = vunpack.c.l.b16 %v3356
          %v4040 = vunpack.c.h.b16 %v3356
          %v4041 = vunpack.c.l.b16 %v3357
          %v4042 = vunpack.c.h.b16 %v3357
          %v4043 = vunpack.c.l.b16 %v3358
          %v4044 = vunpack.c.h.b16 %v3358
          %v4045 = vunpack.c.l.b16 %v3359
          %v4046 = vunpack.c.h.b16 %v3359
          %v4047 = vunpack.c.l.b16 %v3360
          %v4048 = vunpack.c.h.b16 %v3360
          %v4049 = vunpack.c.l.b16 %v3361
          %v4050 = vunpack.c.h.b16 %v3361
          %v4051 = vunpack.c.l.b16 %v3362
          %v4052 = vunpack.c.h.b16 %v3362
          %v4053 = vunpack.c.l.b16 %v3363
          %v4054 = vunpack.c.h.b16 %v3363
          %v4055 = vunpack.c.l.b16 %v3364
          %v4056 = vunpack.c.h.b16 %v3364
          %v4057 = vunpack.c.l.b16 %v3365
          %v4058 = vunpack.c.h.b16 %v3365
          %v4059 = vunpack.c.l.b16 %v3366
          %v4060 = vunpack.c.h.b16 %v3366
          %v4061 = vunpack.c.l.b16 %v3367
          %v4062 = vunpack.c.h.b16 %v3367
          %v4063 = vunpack.c.l.b16 %v3368
          %v4064 = vunpack.c.h.b16 %v3368
          %v4065 = vunpack.c.l.b16 %v3369
          %v4066 = vunpack.c.h.b16 %v3369
          %v4067 = vunpack.c.l.b16 %v3370
          %v4068 = vunpack.c.h.b16 %v3370
          %v4069 = vunpack.c.l.b16 %v3371
          %v4070 = vunpack.c.h.b16 %v3371
          %v4071 = vunpack.c.l.b16 %v3372
          %v4072 = vunpack.c.h.b16 %v3372
          %v4073 = vunpack.c.l.b16 %v3373
          %v4074 = vunpack.c.h.b16 %v3373
          %v4075 = vunpack.c.l.b16 %v3374
          %v4076 = vunpack.c.h.b16 %v3374
          %v4077 = vunpack.c.l.b16 %v3375
          %v4078 = vunpack.c.h.b16 %v3375
          %v4079 = vunpack.c.l.b16 %v3376
          %v4080 = vunpack.c.h.b16 %v3376
          %v4081 = vunpack.c.l.b16 %v3377
          %v4082 = vunpack.c.h.b16 %v3377
          %v4083 = vunpack.c.l.b16 %v3378
          %v4084 = vunpack.c.h.b16 %v3378
          %v4085 = vunpack.c.l.b16 %v3379
          %v4086 = vunpack.c.h.b16 %v3379
          %v4087 = vunpack.c.l.b16 %v3380
          %v4088 = vunpack.c.h.b16 %v3380
          %v4089 = vunpack.c.l.b16 %v3381
          %v4090 = vunpack.c.h.b16 %v3381
          %v4091 = vunpack.c.l.b16 %v3382
          %v4092 = vunpack.c.h.b16 %v3382
          %v4093 = vunpack.c.l.b16 %v3383
          %v4094 = vunpack.c.h.b16 %v3383
          %v4095 = vunpack.c.l.b16 %v3384
          %v4096 = vunpack.c.h.b16 %v3384
          %v4097 = vunpack.c.l.b16 %v3385
          %v4098 = vunpack.c.h.b16 %v3385
          %v4099 = vunpack.c.l.b16 %v3386
          %v4100 = vunpack.c.h.b16 %v3386
          %v4101 = vunpack.c.l.b16 %v3387
          %v4102 = vunpack.c.h.b16 %v3387
          %v4103 = vunpack.c.l.b16 %v3388
          %v4104 = vunpack.c.h.b16 %v3388
          %v4105 = vunpack.c.l.b16 %v3389
          %v4106 = vunpack.c.h.b16 %v3389
          %v4107 = vunpack.c.l.b16 %v3390
          %v4108 = vunpack.c.h.b16 %v3390
          %v4109 = vunpack.c.l.b16 %v3391
          %v4110 = vunpack.c.h.b16 %v3391
          %v4111 = vunpack.c.l.b16 %v3392
          %v4112 = vunpack.c.h.b16 %v3392
          %v4113 = vunpack.c.l.b16 %v3393
          %v4114 = vunpack.c.h.b16 %v3393
          %v4115 = vunpack.c.l.b16 %v3394
          %v4116 = vunpack.c.h.b16 %v3394
          %v4117 = vunpack.c.l.b16 %v3395
          %v4118 = vunpack.c.h.b16 %v3395
          %v4119 = vunpack.c.l.b16 %v3396
          %v4120 = vunpack.c.h.b16 %v3396
          %v4121 = vunpack.c.l.b16 %v3397
          %v4122 = vunpack.c.h.b16 %v3397
          %v4123 = vunpack.c.l.b16 %v3398
          %v4124 = vunpack.c.h.b16 %v3398
          %v4125 = vunpack.c.l.b16 %v3399
          %v4126 = vunpack.c.h.b16 %v3399
          %v4127 = vunpack.c.l.b16 %v3400
          %v4128 = vunpack.c.h.b16 %v3400
          %v4129 = vunpack.c.l.b16 %v3401
          %v4130 = vunpack.c.h.b16 %v3401
          %v4131 = vunpack.c.l.b16 %v3402
          %v4132 = vunpack.c.h.b16 %v3402
          %v4133 = vunpack.c.l.b16 %v3403
          %v4134 = vunpack.c.h.b16 %v3403
          %v4135 = vunpack.c.l.b16 %v3404
          %v4136 = vunpack.c.h.b16 %v3404
          %v4137 = vunpack.c.l.b16 %v3405
          %v4138 = vunpack.c.h.b16 %v3405
          %v4139 = vunpack.c.l.b16 %v3406
          %v4140 = vunpack.c.h.b16 %v3406
          %v4141 = vunpack.c.l.b16 %v3407
          %v4142 = vunpack.c.h.b16 %v3407
          %v4143 = vunpack.c.l.b16 %v3408
          %v4144 = vunpack.c.h.b16 %v3408
          %v4145 = vunpack.c.l.b16 %v3409
          %v4146 = vunpack.c.h.b16 %v3409
          %v4147 = vunpack.c.l.b16 %v3410
          %v4148 = vunpack.c.h.b16 %v3410
          %v4149 = vunpack.c.l.b16 %v3411
          %v4150 = vunpack.c.h.b16 %v3411
          %v4151 = vunpack.c.l.b16 %v3412
          %v4152 = vunpack.c.h.b16 %v3412
          %v4153 = vunpack.c.l.b16 %v3413
          %v4154 = vunpack.c.h.b16 %v3413
          %v4155 = vunpack.c.l.b16 %v3414
          %v4156 = vunpack.c.h.b16 %v3414
          %v4157 = vunpack.c.l.b16 %v3415
          %v4158 = vunpack.c.h.b16 %v3415
          %v4159 = vunpack.c.l.b16 %v3416
          %v4160 = vunpack.c.h.b16 %v3416
          %v4161 = vunpack.c.l.b16 %v3417
          %v4162 = vunpack.c.h.b16 %v3417
          %v4163 = vunpack.c.l.b16 %v3418
          %v4164 = vunpack.c.h.b16 %v3418
          %v4165 = vunpack.c.l.b16 %v3419
          %v4166 = vunpack.c.h.b16 %v3419
          %v4167 = vunpack.c.l.b16 %v3420
          %v4168 = vunpack.c.h.b16 %v3420
          %v4169 = vunpack.c.l.b16 %v3421
          %v4170 = vunpack.c.h.b16 %v3421
          %v4171 = vunpack.c.l.b16 %v3422
          %v4172 = vunpack.c.h.b16 %v3422
          %v4173 = vunpack.c.l.b16 %v3423
          %v4174 = vunpack.c.h.b16 %v3423
          %v4175 = vunpack.c.l.b16 %v3424
          %v4176 = vunpack.c.h.b16 %v3424
          %v4177 = vunpack.c.l.b16 %v3425
          %v4178 = vunpack.c.h.b16 %v3425
          %v4179 = vunpack.c.l.b16 %v3426
          %v4180 = vunpack.c.h.b16 %v3426
          %v4181 = vunpack.c.l.b16 %v3427
          %v4182 = vunpack.c.h.b16 %v3427
          %v4183 = vunpack.c.l.b16 %v3428
          %v4184 = vunpack.c.h.b16 %v3428
          %v4185 = vunpack.c.l.b16 %v3429
          %v4186 = vunpack.c.h.b16 %v3429
          %v4187 = vunpack.c.l.b16 %v3430
          %v4188 = vunpack.c.h.b16 %v3430
          %v4189 = vunpack.c.l.b16 %v3431
          %v4190 = vunpack.c.h.b16 %v3431
          %v4191 = vunpack.c.l.b16 %v3432
          %v4192 = vunpack.c.h.b16 %v3432
          %v4193 = vunpack.c.l.b16 %v3433
          %v4194 = vunpack.c.h.b16 %v3433
          %v4195 = vunpack.c.l.b16 %v3434
          %v4196 = vunpack.c.h.b16 %v3434
          %v4197 = vunpack.c.l.b16 %v3435
          %v4198 = vunpack.c.h.b16 %v3435
          %v4199 = vunpack.c.l.b16 %v3436
          %v4200 = vunpack.c.h.b16 %v3436
          %v4201 = vunpack.c.l.b16 %v3437
          %v4202 = vunpack.c.h.b16 %v3437
          %v4203 = vunpack.c.l.b16 %v3438
          %v4204 = vunpack.c.h.b16 %v3438
          %v4205 = vunpack.c.l.b16 %v3439
          %v4206 = vunpack.c.h.b16 %v3439
          %v4207 = vunpack.c.l.b16 %v3440
          %v4208 = vunpack.c.h.b16 %v3440
          %v4209 = vunpack.c.l.b16 %v3441
          %v4210 = vunpack.c.h.b16 %v3441
          %v4211 = vpack.c.b16 %v3703, %v3699
          %v4212 = vpack.c.b16 %v3704, %v3700
          %v4213 = vpack.c.b16 %v3705, %v3701
          %v4214 = vpack.c.b16 %v3706, %v3702
          %v4215 = vpack.c.b16 %v3711, %v3707
          %v4216 = vpack.c.b16 %v3712, %v3708
          %v4217 = vpack.c.b16 %v3713, %v3709
          %v4218 = vpack.c.b16 %v3714, %v3710
          %v4219 = vpack.c.b16 %v3719, %v3715
          %v4220 = vpack.c.b16 %v3720, %v3716
          %v4221 = vpack.c.b16 %v3721, %v3717
          %v4222 = vpack.c.b16 %v3722, %v3718
          %v4223 = vpack.c.b16 %v3727, %v3723
          %v4224 = vpack.c.b16 %v3728, %v3724
          %v4225 = vpack.c.b16 %v3729, %v3725
          %v4226 = vpack.c.b16 %v3730, %v3726
          %v4227 = vpack.c.b16 %v3735, %v3731
          %v4228 = vpack.c.b16 %v3736, %v3732
          %v4229 = vpack.c.b16 %v3737, %v3733
          %v4230 = vpack.c.b16 %v3738, %v3734
          %v4231 = vpack.c.b16 %v3743, %v3739
          %v4232 = vpack.c.b16 %v3744, %v3740
          %v4233 = vpack.c.b16 %v3745, %v3741
          %v4234 = vpack.c.b16 %v3746, %v3742
          %v4235 = vpack.c.b16 %v3751, %v3747
          %v4236 = vpack.c.b16 %v3752, %v3748
          %v4237 = vpack.c.b16 %v3753, %v3749
          %v4238 = vpack.c.b16 %v3754, %v3750
          %v4239 = vpack.c.b16 %v3759, %v3755
          %v4240 = vpack.c.b16 %v3760, %v3756
          %v4241 = vpack.c.b16 %v3761, %v3757
          %v4242 = vpack.c.b16 %v3762, %v3758
          %v4243 = vpack.c.b16 %v3767, %v3763
          %v4244 = vpack.c.b16 %v3768, %v3764
          %v4245 = vpack.c.b16 %v3769, %v3765
          %v4246 = vpack.c.b16 %v3770, %v3766
          %v4247 = vpack.c.b16 %v3775, %v3771
          %v4248 = vpack.c.b16 %v3776, %v3772
          %v4249 = vpack.c.b16 %v3777, %v3773
          %v4250 = vpack.c.b16 %v3778, %v3774
          %v4251 = vpack.c.b16 %v3783, %v3779
          %v4252 = vpack.c.b16 %v3784, %v3780
          %v4253 = vpack.c.b16 %v3785, %v3781
          %v4254 = vpack.c.b16 %v3786, %v3782
          %v4255 = vpack.c.b16 %v3791, %v3787
          %v4256 = vpack.c.b16 %v3792, %v3788
          %v4257 = vpack.c.b16 %v3793, %v3789
          %v4258 = vpack.c.b16 %v3794, %v3790
          %v4259 = vpack.c.b16 %v3799, %v3795
          %v4260 = vpack.c.b16 %v3800, %v3796
          %v4261 = vpack.c.b16 %v3801, %v3797
          %v4262 = vpack.c.b16 %v3802, %v3798
          %v4263 = vpack.c.b16 %v3807, %v3803
          %v4264 = vpack.c.b16 %v3808, %v3804
          %v4265 = vpack.c.b16 %v3809, %v3805
          %v4266 = vpack.c.b16 %v3810, %v3806
          %v4267 = vpack.c.b16 %v3815, %v3811
          %v4268 = vpack.c.b16 %v3816, %v3812
          %v4269 = vpack.c.b16 %v3817, %v3813
          %v4270 = vpack.c.b16 %v3818, %v3814
          %v4271 = vpack.c.b16 %v3823, %v3819
          %v4272 = vpack.c.b16 %v3824, %v3820
          %v4273 = vpack.c.b16 %v3825, %v3821
          %v4274 = vpack.c.b16 %v3826, %v3822
          %v4275 = vpack.c.b16 %v3831, %v3827
          %v4276 = vpack.c.b16 %v3832, %v3828
          %v4277 = vpack.c.b16 %v3833, %v3829
          %v4278 = vpack.c.b16 %v3834, %v3830
          %v4279 = vpack.c.b16 %v3839, %v3835
          %v4280 = vpack.c.b16 %v3840, %v3836
          %v4281 = vpack.c.b16 %v3841, %v3837
          %v4282 = vpack.c.b16 %v3842, %v3838
          %v4283 = vpack.c.b16 %v3847, %v3843
          %v4284 = vpack.c.b16 %v3848, %v3844
          %v4285 = vpack.c.b16 %v3849, %v3845
          %v4286 = vpack.c.b16 %v3850, %v3846
          %v4287 = vpack.c.b16 %v3855, %v3851
          %v4288 = vpack.c.b16 %v3856, %v3852
          %v4289 = vpack.c.b16 %v3857, %v3853
          %v4290 = vpack.c.b16 %v3858, %v3854
          %v4291 = vpack.c.b16 %v3863, %v3859
          %v4292 = vpack.c.b16 %v3864, %v3860
          %v4293 = vpack.c.b16 %v3865, %v3861
          %v4294 = vpack.c.b16 %v3866, %v3862
          %v4295 = vpack.c.b16 %v3871, %v3867
          %v4296 = vpack.c.b16 %v3872, %v3868
          %v4297 = vpack.c.b16 %v3873, %v3869
          %v4298 = vpack.c.b16 %v3874, %v3870
          %v4299 = vpack.c.b16 %v3879, %v3875
          %v4300 = vpack.c.b16 %v3880, %v3876
          %v4301 = vpack.c.b16 %v3881, %v3877
          %v4302 = vpack.c.b16 %v3882, %v3878
          %v4303 = vpack.c.b16 %v3887, %v3883
          %v4304 = vpack.c.b16 %v3888, %v3884
          %v4305 = vpack.c.b16 %v3889, %v3885
          %v4306 = vpack.c.b16 %v3890, %v3886
          %v4307 = vpack.c.b16 %v3895, %v3891
          %v4308 = vpack.c.b16 %v3896, %v3892
          %v4309 = vpack.c.b16 %v3897, %v3893
          %v4310 = vpack.c.b16 %v3898, %v3894
          %v4311 = vpack.c.b16 %v3903, %v3899
          %v4312 = vpack.c.b16 %v3904, %v3900
          %v4313 = vpack.c.b16 %v3905, %v3901
          %v4314 = vpack.c.b16 %v3906, %v3902
          %v4315 = vpack.c.b16 %v3911, %v3907
          %v4316 = vpack.c.b16 %v3912, %v3908
          %v4317 = vpack.c.b16 %v3913, %v3909
          %v4318 = vpack.c.b16 %v3914, %v3910
          %v4319 = vpack.c.b16 %v3919, %v3915
          %v4320 = vpack.c.b16 %v3920, %v3916
          %v4321 = vpack.c.b16 %v3921, %v3917
          %v4322 = vpack.c.b16 %v3922, %v3918
          %v4323 = vpack.c.b16 %v3927, %v3923
          %v4324 = vpack.c.b16 %v3928, %v3924
          %v4325 = vpack.c.b16 %v3929, %v3925
          %v4326 = vpack.c.b16 %v3930, %v3926
          %v4327 = vpack.c.b16 %v3935, %v3931
          %v4328 = vpack.c.b16 %v3936, %v3932
          %v4329 = vpack.c.b16 %v3937, %v3933
          %v4330 = vpack.c.b16 %v3938, %v3934
          %v4331 = vpack.c.b16 %v3943, %v3939
          %v4332 = vpack.c.b16 %v3944, %v3940
          %v4333 = vpack.c.b16 %v3945, %v3941
          %v4334 = vpack.c.b16 %v3946, %v3942
          %v4335 = vpack.c.b16 %v3951, %v3947
          %v4336 = vpack.c.b16 %v3952, %v3948
          %v4337 = vpack.c.b16 %v3953, %v3949
          %v4338 = vpack.c.b16 %v3954, %v3950
          %v4339 = vpack.c.b16 %v3959, %v3955
          %v4340 = vpack.c.b16 %v3960, %v3956
          %v4341 = vpack.c.b16 %v3961, %v3957
          %v4342 = vpack.c.b16 %v3962, %v3958
          %v4343 = vpack.c.b16 %v3967, %v3963
          %v4344 = vpack.c.b16 %v3968, %v3964
          %v4345 = vpack.c.b16 %v3969, %v3965
          %v4346 = vpack.c.b16 %v3970, %v3966
          %v4347 = vpack.c.b16 %v3975, %v3971
          %v4348 = vpack.c.b16 %v3976, %v3972
          %v4349 = vpack.c.b16 %v3977, %v3973
          %v4350 = vpack.c.b16 %v3978, %v3974
          %v4351 = vpack.c.b16 %v3983, %v3979
          %v4352 = vpack.c.b16 %v3984, %v3980
          %v4353 = vpack.c.b16 %v3985, %v3981
          %v4354 = vpack.c.b16 %v3986, %v3982
          %v4355 = vpack.c.b16 %v3991, %v3987
          %v4356 = vpack.c.b16 %v3992, %v3988
          %v4357 = vpack.c.b16 %v3993, %v3989
          %v4358 = vpack.c.b16 %v3994, %v3990
          %v4359 = vpack.c.b16 %v3999, %v3995
          %v4360 = vpack.c.b16 %v4000, %v3996
          %v4361 = vpack.c.b16 %v4001, %v3997
          %v4362 = vpack.c.b16 %v4002, %v3998
          %v4363 = vpack.c.b16 %v4007, %v4003
          %v4364 = vpack.c.b16 %v4008, %v4004
          %v4365 = vpack.c.b16 %v4009, %v4005
          %v4366 = vpack.c.b16 %v4010, %v4006
          %v4367 = vpack.c.b16 %v4015, %v4011
          %v4368 = vpack.c.b16 %v4016, %v4012
          %v4369 = vpack.c.b16 %v4017, %v4013
          %v4370 = vpack.c.b16 %v4018, %v4014
          %v4371 = vpack.c.b16 %v4023, %v4019
          %v4372 = vpack.c.b16 %v4024, %v4020
          %v4373 = vpack.c.b16 %v4025, %v4021
          %v4374 = vpack.c.b16 %v4026, %v4022
          %v4375 = vpack.c.b16 %v4031, %v4027
          %v4376 = vpack.c.b16 %v4032, %v4028
          %v4377 = vpack.c.b16 %v4033, %v4029
          %v4378 = vpack.c.b16 %v4034, %v4030
          %v4379 = vpack.c.b16 %v4039, %v4035
          %v4380 = vpack.c.b16 %v4040, %v4036
          %v4381 = vpack.c.b16 %v4041, %v4037
          %v4382 = vpack.c.b16 %v4042, %v4038
          %v4383 = vpack.c.b16 %v4047, %v4043
          %v4384 = vpack.c.b16 %v4048, %v4044
          %v4385 = vpack.c.b16 %v4049, %v4045
          %v4386 = vpack.c.b16 %v4050, %v4046
          %v4387 = vpack.c.b16 %v4055, %v4051
          %v4388 = vpack.c.b16 %v4056, %v4052
          %v4389 = vpack.c.b16 %v4057, %v4053
          %v4390 = vpack.c.b16 %v4058, %v4054
          %v4391 = vpack.c.b16 %v4063, %v4059
          %v4392 = vpack.c.b16 %v4064, %v4060
          %v4393 = vpack.c.b16 %v4065, %v4061
          %v4394 = vpack.c.b16 %v4066, %v4062
          %v4395 = vpack.c.b16 %v4071, %v4067
          %v4396 = vpack.c.b16 %v4072, %v4068
          %v4397 = vpack.c.b16 %v4073, %v4069
          %v4398 = vpack.c.b16 %v4074, %v4070
          %v4399 = vpack.c.b16 %v4079, %v4075
          %v4400 = vpack.c.b16 %v4080, %v4076
          %v4401 = vpack.c.b16 %v4081, %v4077
          %v4402 = vpack.c.b16 %v4082, %v4078
          %v4403 = vpack.c.b16 %v4087, %v4083
          %v4404 = vpack.c.b16 %v4088, %v4084
          %v4405 = vpack.c.b16 %v4089, %v4085
          %v4406 = vpack.c.b16 %v4090, %v4086
          %v4407 = vpack.c.b16 %v4095, %v4091
          %v4408 = vpack.c.b16 %v4096, %v4092
          %v4409 = vpack.c.b16 %v4097, %v4093
          %v4410 = vpack.c.b16 %v4098, %v4094
          %v4411 = vpack.c.b16 %v4103, %v4099
          %v4412 = vpack.c.b16 %v4104, %v4100
          %v4413 = vpack.c.b16 %v4105, %v4101
          %v4414 = vpack.c.b16 %v4106, %v4102
          %v4415 = vpack.c.b16 %v4111, %v4107
          %v4416 = vpack.c.b16 %v4112, %v4108
          %v4417 = vpack.c.b16 %v4113, %v4109
          %v4418 = vpack.c.b16 %v4114, %v4110
          %v4419 = vpack.c.b16 %v4119, %v4115
          %v4420 = vpack.c.b16 %v4120, %v4116
          %v4421 = vpack.c.b16 %v4121, %v4117
          %v4422 = vpack.c.b16 %v4122, %v4118
          %v4423 = vpack.c.b16 %v4127, %v4123
          %v4424 = vpack.c.b16 %v4128, %v4124
          %v4425 = vpack.c.b16 %v4129, %v4125
          %v4426 = vpack.c.b16 %v4130, %v4126
          %v4427 = vpack.c.b16 %v4135, %v4131
          %v4428 = vpack.c.b16 %v4136, %v4132
          %v4429 = vpack.c.b16 %v4137, %v4133
          %v4430 = vpack.c.b16 %v4138, %v4134
          %v4431 = vpack.c.b16 %v4143, %v4139
          %v4432 = vpack.c.b16 %v4144, %v4140
          %v4433 = vpack.c.b16 %v4145, %v4141
          %v4434 = vpack.c.b16 %v4146, %v4142
          %v4435 = vpack.c.b16 %v4151, %v4147
          %v4436 = vpack.c.b16 %v4152, %v4148
          %v4437 = vpack.c.b16 %v4153, %v4149
          %v4438 = vpack.c.b16 %v4154, %v4150
          %v4439 = vpack.c.b16 %v4159, %v4155
          %v4440 = vpack.c.b16 %v4160, %v4156
          %v4441 = vpack.c.b16 %v4161, %v4157
          %v4442 = vpack.c.b16 %v4162, %v4158
          %v4443 = vpack.c.b16 %v4167, %v4163
          %v4444 = vpack.c.b16 %v4168, %v4164
          %v4445 = vpack.c.b16 %v4169, %v4165
          %v4446 = vpack.c.b16 %v4170, %v4166
          %v4447 = vpack.c.b16 %v4175, %v4171
          %v4448 = vpack.c.b16 %v4176, %v4172
          %v4449 = vpack.c.b16 %v4177, %v4173
          %v4450 = vpack.c.b16 %v4178, %v4174
          %v4451 = vpack.c.b16 %v4183, %v4179
          %v4452 = vpack.c.b16 %v4184, %v4180
          %v4453 = vpack.c.b16 %v4185, %v4181
          %v4454 = vpack.c.b16 %v4186, %v4182
          %v4455 = vpack.c.b16 %v4191, %v4187
          %v4456 = vpack.c.b16 %v4192, %v4188
          %v4457 = vpack.c.b16 %v4193, %v4189
          %v4458 = vpack.c.b16 %v4194, %v4190
          %v4459 = vpack.c.b16 %v4199, %v4195
          %v4460 = vpack.c.b16 %v4200, %v4196
          %v4461 = vpack.c.b16 %v4201, %v4197
          %v4462 = vpack.c.b16 %v4202, %v4198
          %v4463 = vpack.c.b16 %v4207, %v4203
          %v4464 = vpack.c.b16 %v4208, %v4204
          %v4465 = vpack.c.b16 %v4209, %v4205
          %v4466 = vpack.c.b16 %v4210, %v4206
          %v4724 = vperm.slane %v3442, 0
          %v4725 = vperm.slane %v3442, 1
          %v4726 = vperm.slane %v3442, 2
          %v4727 = vperm.slane %v3442, 3
          %4732 = vmatpush.bf16.msra.mxu0 %v4239
          %4733 = vmatpush.bf16.msra.mxu0 %v4235
          %4734 = vmatpush.bf16.msra.mxu0 %v4231
          %4735 = vmatpush.bf16.msra.mxu0 %v4227
          %4736 = vmatpush.bf16.msra.mxu0 %v4223
          %4737 = vmatpush.bf16.msra.mxu0 %v4219
          %4738 = vmatpush.bf16.msra.mxu0 %v4215
          %4739 = vmatpush.bf16.msra.mxu0 %v4211
          %4740 = vmatmul.bf16.gmra.mxu0 %v3178
          %v4741 = vpop.f32.mrf.mxu0
          %v4742 = vadd.f32 %v4724, %v4741
          %v4743 = vpop.f32.mrf.mxu0
          %4744 = vdwg.mxu0
          %4745 = vmatpush.bf16.msra.mxu0 %v4271
          %4746 = vmatpush.bf16.msra.mxu0 %v4267
          %4747 = vmatpush.bf16.msra.mxu0 %v4263
          %4748 = vmatpush.bf16.msra.mxu0 %v4259
          %4749 = vmatpush.bf16.msra.mxu0 %v4255
          %4750 = vmatpush.bf16.msra.mxu0 %v4251
          %4751 = vmatpush.bf16.msra.mxu0 %v4247
          %4752 = vmatpush.bf16.msra.mxu0 %v4243
          %4753 = vmatmul.bf16.gmra.mxu0 %v3179
          %v4754 = vpop.f32.mrf.mxu0
          %v4755 = vadd.f32 %v4742, %v4754
          %v4756 = vpop.f32.mrf.mxu0
          %4757 = vdwg.mxu0
          %4758 = vmatpush.bf16.msra.mxu0 %v4303
          %4759 = vmatpush.bf16.msra.mxu0 %v4299
          %4760 = vmatpush.bf16.msra.mxu0 %v4295
          %4761 = vmatpush.bf16.msra.mxu0 %v4291
          %4762 = vmatpush.bf16.msra.mxu0 %v4287
          %4763 = vmatpush.bf16.msra.mxu0 %v4283
          %4764 = vmatpush.bf16.msra.mxu0 %v4279
          %4765 = vmatpush.bf16.msra.mxu0 %v4275
          %4766 = vmatmul.bf16.gmra.mxu0 %v3180
          %v4767 = vpop.f32.mrf.mxu0
          %v4768 = vadd.f32 %v4755, %v4767
          %v4769 = vpop.f32.mrf.mxu0
          %4770 = vdwg.mxu0
          %4771 = vmatpush.bf16.msra.mxu0 %v4335
          %4772 = vmatpush.bf16.msra.mxu0 %v4331
          %4773 = vmatpush.bf16.msra.mxu0 %v4327
          %4774 = vmatpush.bf16.msra.mxu0 %v4323
          %4775 = vmatpush.bf16.msra.mxu0 %v4319
          %4776 = vmatpush.bf16.msra.mxu0 %v4315
          %4777 = vmatpush.bf16.msra.mxu0 %v4311
          %4778 = vmatpush.bf16.msra.mxu0 %v4307
          %4779 = vmatmul.bf16.gmra.mxu0 %v3181
          %v4780 = vpop.f32.mrf.mxu0
          %v4781 = vadd.f32 %v4768, %v4780
          %v4782 = vpop.f32.mrf.mxu0
          %4783 = vdwg.mxu0
          %4784 = vmatpush.bf16.msra.mxu0 %v4367
          %4785 = vmatpush.bf16.msra.mxu0 %v4363
          %4786 = vmatpush.bf16.msra.mxu0 %v4359
          %4787 = vmatpush.bf16.msra.mxu0 %v4355
          %4788 = vmatpush.bf16.msra.mxu0 %v4351
          %4789 = vmatpush.bf16.msra.mxu0 %v4347
          %4790 = vmatpush.bf16.msra.mxu0 %v4343
          %4791 = vmatpush.bf16.msra.mxu0 %v4339
          %4792 = vmatmul.bf16.gmra.mxu0 %v3182
          %v4793 = vpop.f32.mrf.mxu0
          %v4794 = vadd.f32 %v4781, %v4793
          %v4795 = vpop.f32.mrf.mxu0
          %4796 = vdwg.mxu0
          %4797 = vmatpush.bf16.msra.mxu0 %v4399
          %4798 = vmatpush.bf16.msra.mxu0 %v4395
          %4799 = vmatpush.bf16.msra.mxu0 %v4391
          %4800 = vmatpush.bf16.msra.mxu0 %v4387
          %4801 = vmatpush.bf16.msra.mxu0 %v4383
          %4802 = vmatpush.bf16.msra.mxu0 %v4379
          %4803 = vmatpush.bf16.msra.mxu0 %v4375
          %4804 = vmatpush.bf16.msra.mxu0 %v4371
          %4805 = vmatmul.bf16.gmra.mxu0 %v3183
          %v4806 = vpop.f32.mrf.mxu0
          %v4807 = vadd.f32 %v4794, %v4806
          %v4808 = vpop.f32.mrf.mxu0
          %4809 = vdwg.mxu0
          %4810 = vmatpush.bf16.msra.mxu0 %v4431
          %4811 = vmatpush.bf16.msra.mxu0 %v4427
          %4812 = vmatpush.bf16.msra.mxu0 %v4423
          %4813 = vmatpush.bf16.msra.mxu0 %v4419
          %4814 = vmatpush.bf16.msra.mxu0 %v4415
          %4815 = vmatpush.bf16.msra.mxu0 %v4411
          %4816 = vmatpush.bf16.msra.mxu0 %v4407
          %4817 = vmatpush.bf16.msra.mxu0 %v4403
          %4818 = vmatmul.bf16.gmra.mxu0 %v3184
          %v4819 = vpop.f32.mrf.mxu0
          %v4820 = vadd.f32 %v4807, %v4819
          %v4821 = vpop.f32.mrf.mxu0
          %4822 = vdwg.mxu0
          %4823 = vmatpush.bf16.msra.mxu0 %v4463
          %4824 = vmatpush.bf16.msra.mxu0 %v4459
          %4825 = vmatpush.bf16.msra.mxu0 %v4455
          %4826 = vmatpush.bf16.msra.mxu0 %v4451
          %4827 = vmatpush.bf16.msra.mxu0 %v4447
          %4828 = vmatpush.bf16.msra.mxu0 %v4443
          %4829 = vmatpush.bf16.msra.mxu0 %v4439
          %4830 = vmatpush.bf16.msra.mxu0 %v4435
          %4831 = vmatmul.bf16.gmra.mxu0 %v3185
          %v4832 = vpop.f32.mrf.mxu0
          %v4833 = vadd.f32 %v4820, %v4832
          %v4834 = vpop.f32.mrf.mxu0
          %4835 = vdwg.mxu0
          %4836 = vmatpush.bf16.msra.mxu0 %v4240
          %4837 = vmatpush.bf16.msra.mxu0 %v4236
          %4838 = vmatpush.bf16.msra.mxu0 %v4232
          %4839 = vmatpush.bf16.msra.mxu0 %v4228
          %4840 = vmatpush.bf16.msra.mxu0 %v4224
          %4841 = vmatpush.bf16.msra.mxu0 %v4220
          %4842 = vmatpush.bf16.msra.mxu0 %v4216
          %4843 = vmatpush.bf16.msra.mxu0 %v4212
          %4844 = vmatmul.bf16.gmra.mxu0 %v3178
          %v4845 = vpop.f32.mrf.mxu0
          %v4846 = vadd.f32 %v4725, %v4845
          %v4847 = vpop.f32.mrf.mxu0
          %4848 = vdwg.mxu0
          %4849 = vmatpush.bf16.msra.mxu0 %v4272
          %4850 = vmatpush.bf16.msra.mxu0 %v4268
          %4851 = vmatpush.bf16.msra.mxu0 %v4264
          %4852 = vmatpush.bf16.msra.mxu0 %v4260
          %4853 = vmatpush.bf16.msra.mxu0 %v4256
          %4854 = vmatpush.bf16.msra.mxu0 %v4252
          %4855 = vmatpush.bf16.msra.mxu0 %v4248
          %4856 = vmatpush.bf16.msra.mxu0 %v4244
          %4857 = vmatmul.bf16.gmra.mxu0 %v3179
          %v4858 = vpop.f32.mrf.mxu0
          %v4859 = vadd.f32 %v4846, %v4858
          %v4860 = vpop.f32.mrf.mxu0
          %4861 = vdwg.mxu0
          %4862 = vmatpush.bf16.msra.mxu0 %v4304
          %4863 = vmatpush.bf16.msra.mxu0 %v4300
          %4864 = vmatpush.bf16.msra.mxu0 %v4296
          %4865 = vmatpush.bf16.msra.mxu0 %v4292
          %4866 = vmatpush.bf16.msra.mxu0 %v4288
          %4867 = vmatpush.bf16.msra.mxu0 %v4284
          %4868 = vmatpush.bf16.msra.mxu0 %v4280
          %4869 = vmatpush.bf16.msra.mxu0 %v4276
          %4870 = vmatmul.bf16.gmra.mxu0 %v3180
          %v4871 = vpop.f32.mrf.mxu0
          %v4872 = vadd.f32 %v4859, %v4871
          %v4873 = vpop.f32.mrf.mxu0
          %4874 = vdwg.mxu0
          %4875 = vmatpush.bf16.msra.mxu0 %v4336
          %4876 = vmatpush.bf16.msra.mxu0 %v4332
          %4877 = vmatpush.bf16.msra.mxu0 %v4328
          %4878 = vmatpush.bf16.msra.mxu0 %v4324
          %4879 = vmatpush.bf16.msra.mxu0 %v4320
          %4880 = vmatpush.bf16.msra.mxu0 %v4316
          %4881 = vmatpush.bf16.msra.mxu0 %v4312
          %4882 = vmatpush.bf16.msra.mxu0 %v4308
          %4883 = vmatmul.bf16.gmra.mxu0 %v3181
          %v4884 = vpop.f32.mrf.mxu0
          %v4885 = vadd.f32 %v4872, %v4884
          %v4886 = vpop.f32.mrf.mxu0
          %4887 = vdwg.mxu0
          %4888 = vmatpush.bf16.msra.mxu0 %v4368
          %4889 = vmatpush.bf16.msra.mxu0 %v4364
          %4890 = vmatpush.bf16.msra.mxu0 %v4360
          %4891 = vmatpush.bf16.msra.mxu0 %v4356
          %4892 = vmatpush.bf16.msra.mxu0 %v4352
          %4893 = vmatpush.bf16.msra.mxu0 %v4348
          %4894 = vmatpush.bf16.msra.mxu0 %v4344
          %4895 = vmatpush.bf16.msra.mxu0 %v4340
          %4896 = vmatmul.bf16.gmra.mxu0 %v3182
          %v4897 = vpop.f32.mrf.mxu0
          %v4898 = vadd.f32 %v4885, %v4897
          %v4899 = vpop.f32.mrf.mxu0
          %4900 = vdwg.mxu0
          %4901 = vmatpush.bf16.msra.mxu0 %v4400
          %4902 = vmatpush.bf16.msra.mxu0 %v4396
          %4903 = vmatpush.bf16.msra.mxu0 %v4392
          %4904 = vmatpush.bf16.msra.mxu0 %v4388
          %4905 = vmatpush.bf16.msra.mxu0 %v4384
          %4906 = vmatpush.bf16.msra.mxu0 %v4380
          %4907 = vmatpush.bf16.msra.mxu0 %v4376
          %4908 = vmatpush.bf16.msra.mxu0 %v4372
          %4909 = vmatmul.bf16.gmra.mxu0 %v3183
          %v4910 = vpop.f32.mrf.mxu0
          %v4911 = vadd.f32 %v4898, %v4910
          %v4912 = vpop.f32.mrf.mxu0
          %4913 = vdwg.mxu0
          %4914 = vmatpush.bf16.msra.mxu0 %v4432
          %4915 = vmatpush.bf16.msra.mxu0 %v4428
          %4916 = vmatpush.bf16.msra.mxu0 %v4424
          %4917 = vmatpush.bf16.msra.mxu0 %v4420
          %4918 = vmatpush.bf16.msra.mxu0 %v4416
          %4919 = vmatpush.bf16.msra.mxu0 %v4412
          %4920 = vmatpush.bf16.msra.mxu0 %v4408
          %4921 = vmatpush.bf16.msra.mxu0 %v4404
          %4922 = vmatmul.bf16.gmra.mxu0 %v3184
          %v4923 = vpop.f32.mrf.mxu0
          %v4924 = vadd.f32 %v4911, %v4923
          %v4925 = vpop.f32.mrf.mxu0
          %4926 = vdwg.mxu0
          %4927 = vmatpush.bf16.msra.mxu0 %v4464
          %4928 = vmatpush.bf16.msra.mxu0 %v4460
          %4929 = vmatpush.bf16.msra.mxu0 %v4456
          %4930 = vmatpush.bf16.msra.mxu0 %v4452
          %4931 = vmatpush.bf16.msra.mxu0 %v4448
          %4932 = vmatpush.bf16.msra.mxu0 %v4444
          %4933 = vmatpush.bf16.msra.mxu0 %v4440
          %4934 = vmatpush.bf16.msra.mxu0 %v4436
          %4935 = vmatmul.bf16.gmra.mxu0 %v3185
          %v4936 = vpop.f32.mrf.mxu0
          %v4937 = vadd.f32 %v4924, %v4936
          %v4938 = vpop.f32.mrf.mxu0
          %4939 = vdwg.mxu0
          %4940 = vmatpush.bf16.msra.mxu0 %v4241
          %4941 = vmatpush.bf16.msra.mxu0 %v4237
          %4942 = vmatpush.bf16.msra.mxu0 %v4233
          %4943 = vmatpush.bf16.msra.mxu0 %v4229
          %4944 = vmatpush.bf16.msra.mxu0 %v4225
          %4945 = vmatpush.bf16.msra.mxu0 %v4221
          %4946 = vmatpush.bf16.msra.mxu0 %v4217
          %4947 = vmatpush.bf16.msra.mxu0 %v4213
          %4948 = vmatmul.bf16.gmra.mxu0 %v3178
          %v4949 = vpop.f32.mrf.mxu0
          %v4950 = vadd.f32 %v4726, %v4949
          %v4951 = vpop.f32.mrf.mxu0
          %4952 = vdwg.mxu0
          %4953 = vmatpush.bf16.msra.mxu0 %v4273
          %4954 = vmatpush.bf16.msra.mxu0 %v4269
          %4955 = vmatpush.bf16.msra.mxu0 %v4265
          %4956 = vmatpush.bf16.msra.mxu0 %v4261
          %4957 = vmatpush.bf16.msra.mxu0 %v4257
          %4958 = vmatpush.bf16.msra.mxu0 %v4253
          %4959 = vmatpush.bf16.msra.mxu0 %v4249
          %4960 = vmatpush.bf16.msra.mxu0 %v4245
          %4961 = vmatmul.bf16.gmra.mxu0 %v3179
          %v4962 = vpop.f32.mrf.mxu0
          %v4963 = vadd.f32 %v4950, %v4962
          %v4964 = vpop.f32.mrf.mxu0
          %4965 = vdwg.mxu0
          %4966 = vmatpush.bf16.msra.mxu0 %v4305
          %4967 = vmatpush.bf16.msra.mxu0 %v4301
          %4968 = vmatpush.bf16.msra.mxu0 %v4297
          %4969 = vmatpush.bf16.msra.mxu0 %v4293
          %4970 = vmatpush.bf16.msra.mxu0 %v4289
          %4971 = vmatpush.bf16.msra.mxu0 %v4285
          %4972 = vmatpush.bf16.msra.mxu0 %v4281
          %4973 = vmatpush.bf16.msra.mxu0 %v4277
          %4974 = vmatmul.bf16.gmra.mxu0 %v3180
          %v4975 = vpop.f32.mrf.mxu0
          %v4976 = vadd.f32 %v4963, %v4975
          %v4977 = vpop.f32.mrf.mxu0
          %4978 = vdwg.mxu0
          %4979 = vmatpush.bf16.msra.mxu0 %v4337
          %4980 = vmatpush.bf16.msra.mxu0 %v4333
          %4981 = vmatpush.bf16.msra.mxu0 %v4329
          %4982 = vmatpush.bf16.msra.mxu0 %v4325
          %4983 = vmatpush.bf16.msra.mxu0 %v4321
          %4984 = vmatpush.bf16.msra.mxu0 %v4317
          %4985 = vmatpush.bf16.msra.mxu0 %v4313
          %4986 = vmatpush.bf16.msra.mxu0 %v4309
          %4987 = vmatmul.bf16.gmra.mxu0 %v3181
          %v4988 = vpop.f32.mrf.mxu0
          %v4989 = vadd.f32 %v4976, %v4988
          %v4990 = vpop.f32.mrf.mxu0
          %4991 = vdwg.mxu0
          %4992 = vmatpush.bf16.msra.mxu0 %v4369
          %4993 = vmatpush.bf16.msra.mxu0 %v4365
          %4994 = vmatpush.bf16.msra.mxu0 %v4361
          %4995 = vmatpush.bf16.msra.mxu0 %v4357
          %4996 = vmatpush.bf16.msra.mxu0 %v4353
          %4997 = vmatpush.bf16.msra.mxu0 %v4349
          %4998 = vmatpush.bf16.msra.mxu0 %v4345
          %4999 = vmatpush.bf16.msra.mxu0 %v4341
          %5000 = vmatmul.bf16.gmra.mxu0 %v3182
          %v5001 = vpop.f32.mrf.mxu0
          %v5002 = vadd.f32 %v4989, %v5001
          %v5003 = vpop.f32.mrf.mxu0
          %5004 = vdwg.mxu0
          %5005 = vmatpush.bf16.msra.mxu0 %v4401
          %5006 = vmatpush.bf16.msra.mxu0 %v4397
          %5007 = vmatpush.bf16.msra.mxu0 %v4393
          %5008 = vmatpush.bf16.msra.mxu0 %v4389
          %5009 = vmatpush.bf16.msra.mxu0 %v4385
          %5010 = vmatpush.bf16.msra.mxu0 %v4381
          %5011 = vmatpush.bf16.msra.mxu0 %v4377
          %5012 = vmatpush.bf16.msra.mxu0 %v4373
          %5013 = vmatmul.bf16.gmra.mxu0 %v3183
          %v5014 = vpop.f32.mrf.mxu0
          %v5015 = vadd.f32 %v5002, %v5014
          %v5016 = vpop.f32.mrf.mxu0
          %5017 = vdwg.mxu0
          %5018 = vmatpush.bf16.msra.mxu0 %v4433
          %5019 = vmatpush.bf16.msra.mxu0 %v4429
          %5020 = vmatpush.bf16.msra.mxu0 %v4425
          %5021 = vmatpush.bf16.msra.mxu0 %v4421
          %5022 = vmatpush.bf16.msra.mxu0 %v4417
          %5023 = vmatpush.bf16.msra.mxu0 %v4413
          %5024 = vmatpush.bf16.msra.mxu0 %v4409
          %5025 = vmatpush.bf16.msra.mxu0 %v4405
          %5026 = vmatmul.bf16.gmra.mxu0 %v3184
          %v5027 = vpop.f32.mrf.mxu0
          %v5028 = vadd.f32 %v5015, %v5027
          %v5029 = vpop.f32.mrf.mxu0
          %5030 = vdwg.mxu0
          %5031 = vmatpush.bf16.msra.mxu0 %v4465
          %5032 = vmatpush.bf16.msra.mxu0 %v4461
          %5033 = vmatpush.bf16.msra.mxu0 %v4457
          %5034 = vmatpush.bf16.msra.mxu0 %v4453
          %5035 = vmatpush.bf16.msra.mxu0 %v4449
          %5036 = vmatpush.bf16.msra.mxu0 %v4445
          %5037 = vmatpush.bf16.msra.mxu0 %v4441
          %5038 = vmatpush.bf16.msra.mxu0 %v4437
          %5039 = vmatmul.bf16.gmra.mxu0 %v3185
          %v5040 = vpop.f32.mrf.mxu0
          %v5041 = vadd.f32 %v5028, %v5040
          %v5042 = vpop.f32.mrf.mxu0
          %5043 = vdwg.mxu0
          %5044 = vmatpush.bf16.msra.mxu0 %v4242
          %5045 = vmatpush.bf16.msra.mxu0 %v4238
          %5046 = vmatpush.bf16.msra.mxu0 %v4234
          %5047 = vmatpush.bf16.msra.mxu0 %v4230
          %5048 = vmatpush.bf16.msra.mxu0 %v4226
          %5049 = vmatpush.bf16.msra.mxu0 %v4222
          %5050 = vmatpush.bf16.msra.mxu0 %v4218
          %5051 = vmatpush.bf16.msra.mxu0 %v4214
          %5052 = vmatmul.bf16.gmra.mxu0 %v3178
          %v5053 = vpop.f32.mrf.mxu0
          %v5054 = vadd.f32 %v4727, %v5053
          %v5055 = vpop.f32.mrf.mxu0
          %5056 = vdwg.mxu0
          %5057 = vmatpush.bf16.msra.mxu0 %v4274
          %5058 = vmatpush.bf16.msra.mxu0 %v4270
          %5059 = vmatpush.bf16.msra.mxu0 %v4266
          %5060 = vmatpush.bf16.msra.mxu0 %v4262
          %5061 = vmatpush.bf16.msra.mxu0 %v4258
          %5062 = vmatpush.bf16.msra.mxu0 %v4254
          %5063 = vmatpush.bf16.msra.mxu0 %v4250
          %5064 = vmatpush.bf16.msra.mxu0 %v4246
          %5065 = vmatmul.bf16.gmra.mxu0 %v3179
          %v5066 = vpop.f32.mrf.mxu0
          %v5067 = vadd.f32 %v5054, %v5066
          %v5068 = vpop.f32.mrf.mxu0
          %5069 = vdwg.mxu0
          %5070 = vmatpush.bf16.msra.mxu0 %v4306
          %5071 = vmatpush.bf16.msra.mxu0 %v4302
          %5072 = vmatpush.bf16.msra.mxu0 %v4298
          %5073 = vmatpush.bf16.msra.mxu0 %v4294
          %5074 = vmatpush.bf16.msra.mxu0 %v4290
          %5075 = vmatpush.bf16.msra.mxu0 %v4286
          %5076 = vmatpush.bf16.msra.mxu0 %v4282
          %5077 = vmatpush.bf16.msra.mxu0 %v4278
          %5078 = vmatmul.bf16.gmra.mxu0 %v3180
          %v5079 = vpop.f32.mrf.mxu0
          %v5080 = vadd.f32 %v5067, %v5079
          %v5081 = vpop.f32.mrf.mxu0
          %5082 = vdwg.mxu0
          %5083 = vmatpush.bf16.msra.mxu0 %v4338
          %5084 = vmatpush.bf16.msra.mxu0 %v4334
          %5085 = vmatpush.bf16.msra.mxu0 %v4330
          %5086 = vmatpush.bf16.msra.mxu0 %v4326
          %5087 = vmatpush.bf16.msra.mxu0 %v4322
          %5088 = vmatpush.bf16.msra.mxu0 %v4318
          %5089 = vmatpush.bf16.msra.mxu0 %v4314
          %5090 = vmatpush.bf16.msra.mxu0 %v4310
          %5091 = vmatmul.bf16.gmra.mxu0 %v3181
          %v5092 = vpop.f32.mrf.mxu0
          %v5093 = vadd.f32 %v5080, %v5092
          %v5094 = vpop.f32.mrf.mxu0
          %5095 = vdwg.mxu0
          %5096 = vmatpush.bf16.msra.mxu0 %v4370
          %5097 = vmatpush.bf16.msra.mxu0 %v4366
          %5098 = vmatpush.bf16.msra.mxu0 %v4362
          %5099 = vmatpush.bf16.msra.mxu0 %v4358
          %5100 = vmatpush.bf16.msra.mxu0 %v4354
          %5101 = vmatpush.bf16.msra.mxu0 %v4350
          %5102 = vmatpush.bf16.msra.mxu0 %v4346
          %5103 = vmatpush.bf16.msra.mxu0 %v4342
          %5104 = vmatmul.bf16.gmra.mxu0 %v3182
          %v5105 = vpop.f32.mrf.mxu0
          %v5106 = vadd.f32 %v5093, %v5105
          %v5107 = vpop.f32.mrf.mxu0
          %5108 = vdwg.mxu0
          %5109 = vmatpush.bf16.msra.mxu0 %v4402
          %5110 = vmatpush.bf16.msra.mxu0 %v4398
          %5111 = vmatpush.bf16.msra.mxu0 %v4394
          %5112 = vmatpush.bf16.msra.mxu0 %v4390
          %5113 = vmatpush.bf16.msra.mxu0 %v4386
          %5114 = vmatpush.bf16.msra.mxu0 %v4382
          %5115 = vmatpush.bf16.msra.mxu0 %v4378
          %5116 = vmatpush.bf16.msra.mxu0 %v4374
          %5117 = vmatmul.bf16.gmra.mxu0 %v3183
          %v5118 = vpop.f32.mrf.mxu0
          %v5119 = vadd.f32 %v5106, %v5118
          %v5120 = vpop.f32.mrf.mxu0
          %5121 = vdwg.mxu0
          %5122 = vmatpush.bf16.msra.mxu0 %v4434
          %5123 = vmatpush.bf16.msra.mxu0 %v4430
          %5124 = vmatpush.bf16.msra.mxu0 %v4426
          %5125 = vmatpush.bf16.msra.mxu0 %v4422
          %5126 = vmatpush.bf16.msra.mxu0 %v4418
          %5127 = vmatpush.bf16.msra.mxu0 %v4414
          %5128 = vmatpush.bf16.msra.mxu0 %v4410
          %5129 = vmatpush.bf16.msra.mxu0 %v4406
          %5130 = vmatmul.bf16.gmra.mxu0 %v3184
          %v5131 = vpop.f32.mrf.mxu0
          %v5132 = vadd.f32 %v5119, %v5131
          %v5133 = vpop.f32.mrf.mxu0
          %5134 = vdwg.mxu0
          %5135 = vmatpush.bf16.msra.mxu0 %v4466
          %5136 = vmatpush.bf16.msra.mxu0 %v4462
          %5137 = vmatpush.bf16.msra.mxu0 %v4458
          %5138 = vmatpush.bf16.msra.mxu0 %v4454
          %5139 = vmatpush.bf16.msra.mxu0 %v4450
          %5140 = vmatpush.bf16.msra.mxu0 %v4446
          %5141 = vmatpush.bf16.msra.mxu0 %v4442
          %5142 = vmatpush.bf16.msra.mxu0 %v4438
          %5143 = vmatmul.bf16.gmra.mxu0 %v3185
          %v5144 = vpop.f32.mrf.mxu0
          %v5145 = vadd.f32 %v5132, %v5144
          %v5146 = vpop.f32.mrf.mxu0
          %5147 = vdwg.mxu0
          %v5152 = vrot.slane %v4937, 7
          %v5153 = vrot.slane %v5041, 6
          %v5154 = vrot.slane %v5145, 5
          %v5155 = vsel %vm861, %v4833, %v5152
          %vm5156 = vcmask 1042434
          %v5157 = vsel %vm5156, %v5153, %v5154
          %v5158 = vsel %vm862, %v5155, %v5157
          %v5160 = vlaneseq
          %vm5161 = vcmp.ge.s32.totalorder %v5160, 0
          %vm5162 = vcmp.lt.s32.totalorder %v5160, 512
          %vm5163 = vmand %vm5161, %vm5162
          %5164 = vst.msk [vmem:[#allocation3] sm:$0xf] %vm5163, %v5158
        $region136: #{seg_forward.1} parent=91 // pred_fallthru
          _
        // Predicated region
        $region137: #{seg_forward.1} parent=91 // pred_check
          %p5165 = pneg %p3155
        $region138: #{seg_forward.1} parent=91 // pred_check_branch
          %5167 = sbr.rel (%p5165) target = $region140
        $region139: #{seg_forward.1} parent=91 // pred_region
          %v5168 = vld [vmem:[#allocation9] sm:$0xff]
          %v5169 = vld [vmem:[#allocation9 + $0x8] sm:$0xff]
          %v5170 = vld [vmem:[#allocation9 + $0x10] sm:$0xff]
          %v5171 = vld [vmem:[#allocation9 + $0x18] sm:$0xff]
          %v5172 = vld [vmem:[#allocation9 + $0x20] sm:$0xff]
          %v5173 = vld [vmem:[#allocation9 + $0x28] sm:$0xff]
          %v5174 = vld [vmem:[#allocation9 + $0x30] sm:$0xff]
          %v5175 = vld [vmem:[#allocation9 + $0x38] sm:$0xff]
          %v5176 = vld [vmem:[#allocation9 + $0x40] sm:$0xff]
          %v5177 = vld [vmem:[#allocation9 + $0x48] sm:$0xff]
          %v5178 = vld [vmem:[#allocation9 + $0x50] sm:$0xff]
          %v5179 = vld [vmem:[#allocation9 + $0x58] sm:$0xff]
          %v5180 = vld [vmem:[#allocation9 + $0x60] sm:$0xff]
          %v5181 = vld [vmem:[#allocation9 + $0x68] sm:$0xff]
          %v5182 = vld [vmem:[#allocation9 + $0x70] sm:$0xff]
          %v5183 = vld [vmem:[#allocation9 + $0x78] sm:$0xff]
          %v5184 = vld [vmem:[#allocation3] sm:$0xf]
          %v5186 = vperm.slane %v5184, 0
          %v5187 = vperm.slane %v5184, 1
          %v5188 = vperm.slane %v5184, 2
          %v5189 = vperm.slane %v5184, 3
          %v5210 = vunpack.c.l.b16 %v5168
          %v5211 = vunpack.c.h.b16 %v5168
          %v5212 = vunpack.c.l.b16 %v5169
          %v5213 = vunpack.c.h.b16 %v5169
          %v5214 = vunpack.c.l.b16 %v5170
          %v5215 = vunpack.c.h.b16 %v5170
          %v5216 = vunpack.c.l.b16 %v5171
          %v5217 = vunpack.c.h.b16 %v5171
          %v5218 = vunpack.c.l.b16 %v5172
          %v5219 = vunpack.c.h.b16 %v5172
          %v5220 = vunpack.c.l.b16 %v5173
          %v5221 = vunpack.c.h.b16 %v5173
          %v5222 = vunpack.c.l.b16 %v5174
          %v5223 = vunpack.c.h.b16 %v5174
          %v5224 = vunpack.c.l.b16 %v5175
          %v5225 = vunpack.c.h.b16 %v5175
          %v5226 = vunpack.c.l.b16 %v5176
          %v5227 = vunpack.c.h.b16 %v5176
          %v5228 = vunpack.c.l.b16 %v5177
          %v5229 = vunpack.c.h.b16 %v5177
          %v5230 = vunpack.c.l.b16 %v5178
          %v5231 = vunpack.c.h.b16 %v5178
          %v5232 = vunpack.c.l.b16 %v5179
          %v5233 = vunpack.c.h.b16 %v5179
          %v5234 = vunpack.c.l.b16 %v5180
          %v5235 = vunpack.c.h.b16 %v5180
          %v5236 = vunpack.c.l.b16 %v5181
          %v5237 = vunpack.c.h.b16 %v5181
          %v5238 = vunpack.c.l.b16 %v5182
          %v5239 = vunpack.c.h.b16 %v5182
          %v5240 = vunpack.c.l.b16 %v5183
          %v5241 = vunpack.c.h.b16 %v5183
          %v5242 = vpack.c.b16 %v5214, %v5210
          %v5243 = vpack.c.b16 %v5215, %v5211
          %v5244 = vpack.c.b16 %v5216, %v5212
          %v5245 = vpack.c.b16 %v5217, %v5213
          %v5246 = vpack.c.b16 %v5222, %v5218
          %v5247 = vpack.c.b16 %v5223, %v5219
          %v5248 = vpack.c.b16 %v5224, %v5220
          %v5249 = vpack.c.b16 %v5225, %v5221
          %v5250 = vpack.c.b16 %v5230, %v5226
          %v5251 = vpack.c.b16 %v5231, %v5227
          %v5252 = vpack.c.b16 %v5232, %v5228
          %v5253 = vpack.c.b16 %v5233, %v5229
          %v5254 = vpack.c.b16 %v5238, %v5234
          %v5255 = vpack.c.b16 %v5239, %v5235
          %v5256 = vpack.c.b16 %v5240, %v5236
          %v5257 = vpack.c.b16 %v5241, %v5237
          %v5275 = vsel %vm1041, %v1211, 0
          %v5278 = vsel %vm1041, %v1212, 0
          %v5281 = vsel %vm1041, %v1213, 0
          %v5284 = vsel %vm1041, %v1214, 0
          %v5287 = vsel %vm1041, %v1215, 0
          %v5290 = vsel %vm1041, %v1216, 0
          %v5293 = vsel %vm1041, %v1217, 0
          %v5296 = vsel %vm1041, %v1218, 0
          %v5299 = vsel %vm1041, %v1219, 0
          %v5302 = vsel %vm1041, %v1220, 0
          %v5305 = vsel %vm1041, %v1221, 0
          %v5308 = vsel %vm1041, %v1222, 0
          %v5311 = vsel %vm1041, %v1223, 0
          %v5314 = vsel %vm1041, %v1224, 0
          %v5317 = vsel %vm1041, %v1225, 0
          %v5320 = vsel %vm1041, %v1226, 0
          %5322 = vmatpush.bf16.msra.mxu0 0
          %5323 = vmatpush.bf16.msra.mxu0 0
          %5324 = vmatpush.bf16.msra.mxu0 0
          %5325 = vmatpush.bf16.msra.mxu0 0
          %5326 = vmatpush.bf16.msra.mxu0 %v5254
          %5327 = vmatpush.bf16.msra.mxu0 %v5250
          %5328 = vmatpush.bf16.msra.mxu0 %v5246
          %5329 = vmatpush.bf16.msra.mxu0 %v5242
          %5330 = vmatmul.bf16.gmra.mxu0 %v5275
          %v5331 = vpop.f32.mrf.mxu0
          %v5332 = vadd.f32 %v5186, %v5331
          %v5333 = vpop.f32.mrf.mxu0
          %v5334 = vadd.f32 %v5186, %v5333
          %5335 = vmatmul.bf16.gmra.mxu0 %v5278
          %v5336 = vpop.f32.mrf.mxu0
          %v5337 = vadd.f32 %v5186, %v5336
          %v5338 = vpop.f32.mrf.mxu0
          %v5339 = vadd.f32 %v5186, %v5338
          %5340 = vmatmul.bf16.gmra.mxu0 %v5281
          %v5341 = vpop.f32.mrf.mxu0
          %v5342 = vadd.f32 %v5186, %v5341
          %v5343 = vpop.f32.mrf.mxu0
          %v5344 = vadd.f32 %v5186, %v5343
          %5345 = vmatmul.bf16.gmra.mxu0 %v5284
          %v5346 = vpop.f32.mrf.mxu0
          %v5347 = vadd.f32 %v5186, %v5346
          %v5348 = vpop.f32.mrf.mxu0
          %v5349 = vadd.f32 %v5186, %v5348
          %5350 = vmatmul.bf16.gmra.mxu0 %v5287
          %v5351 = vpop.f32.mrf.mxu0
          %v5352 = vadd.f32 %v5186, %v5351
          %v5353 = vpop.f32.mrf.mxu0
          %v5354 = vadd.f32 %v5186, %v5353
          %5355 = vmatmul.bf16.gmra.mxu0 %v5290
          %v5356 = vpop.f32.mrf.mxu0
          %v5357 = vadd.f32 %v5186, %v5356
          %v5358 = vpop.f32.mrf.mxu0
          %v5359 = vadd.f32 %v5186, %v5358
          %5360 = vmatmul.bf16.gmra.mxu0 %v5293
          %v5361 = vpop.f32.mrf.mxu0
          %v5362 = vadd.f32 %v5186, %v5361
          %v5363 = vpop.f32.mrf.mxu0
          %v5364 = vadd.f32 %v5186, %v5363
          %5365 = vmatmul.bf16.gmra.mxu0 %v5296
          %v5366 = vpop.f32.mrf.mxu0
          %v5367 = vadd.f32 %v5186, %v5366
          %v5368 = vpop.f32.mrf.mxu0
          %v5369 = vadd.f32 %v5186, %v5368
          %5370 = vmatmul.bf16.gmra.mxu0 %v5299
          %v5371 = vpop.f32.mrf.mxu0
          %v5372 = vadd.f32 %v5186, %v5371
          %v5373 = vpop.f32.mrf.mxu0
          %v5374 = vadd.f32 %v5186, %v5373
          %5375 = vmatmul.bf16.gmra.mxu0 %v5302
          %v5376 = vpop.f32.mrf.mxu0
          %v5377 = vadd.f32 %v5186, %v5376
          %v5378 = vpop.f32.mrf.mxu0
          %v5379 = vadd.f32 %v5186, %v5378
          %5380 = vmatmul.bf16.gmra.mxu0 %v5305
          %v5381 = vpop.f32.mrf.mxu0
          %v5382 = vadd.f32 %v5186, %v5381
          %v5383 = vpop.f32.mrf.mxu0
          %v5384 = vadd.f32 %v5186, %v5383
          %5385 = vmatmul.bf16.gmra.mxu0 %v5308
          %v5386 = vpop.f32.mrf.mxu0
          %v5387 = vadd.f32 %v5186, %v5386
          %v5388 = vpop.f32.mrf.mxu0
          %v5389 = vadd.f32 %v5186, %v5388
          %5390 = vmatmul.bf16.gmra.mxu0 %v5311
          %v5391 = vpop.f32.mrf.mxu0
          %v5392 = vadd.f32 %v5186, %v5391
          %v5393 = vpop.f32.mrf.mxu0
          %v5394 = vadd.f32 %v5186, %v5393
          %5395 = vmatmul.bf16.gmra.mxu0 %v5314
          %v5396 = vpop.f32.mrf.mxu0
          %v5397 = vadd.f32 %v5186, %v5396
          %v5398 = vpop.f32.mrf.mxu0
          %v5399 = vadd.f32 %v5186, %v5398
          %5400 = vmatmul.bf16.gmra.mxu0 %v5317
          %v5401 = vpop.f32.mrf.mxu0
          %v5402 = vadd.f32 %v5186, %v5401
          %v5403 = vpop.f32.mrf.mxu0
          %v5404 = vadd.f32 %v5186, %v5403
          %5405 = vmatmul.bf16.gmra.mxu0 %v5320
          %v5406 = vpop.f32.mrf.mxu0
          %v5407 = vadd.f32 %v5186, %v5406
          %v5408 = vpop.f32.mrf.mxu0
          %v5409 = vadd.f32 %v5186, %v5408
          %5410 = vdwg.mxu0
          %5411 = vmatpush.bf16.msra.mxu0 0
          %5412 = vmatpush.bf16.msra.mxu0 0
          %5413 = vmatpush.bf16.msra.mxu0 0
          %5414 = vmatpush.bf16.msra.mxu0 0
          %5415 = vmatpush.bf16.msra.mxu0 %v5255
          %5416 = vmatpush.bf16.msra.mxu0 %v5251
          %5417 = vmatpush.bf16.msra.mxu0 %v5247
          %5418 = vmatpush.bf16.msra.mxu0 %v5243
          %5419 = vmatmul.bf16.gmra.mxu0 %v5275
          %v5420 = vpop.f32.mrf.mxu0
          %v5421 = vadd.f32 %v5187, %v5420
          %v5422 = vpop.f32.mrf.mxu0
          %v5423 = vadd.f32 %v5187, %v5422
          %5424 = vmatmul.bf16.gmra.mxu0 %v5278
          %v5425 = vpop.f32.mrf.mxu0
          %v5426 = vadd.f32 %v5187, %v5425
          %v5427 = vpop.f32.mrf.mxu0
          %v5428 = vadd.f32 %v5187, %v5427
          %5429 = vmatmul.bf16.gmra.mxu0 %v5281
          %v5430 = vpop.f32.mrf.mxu0
          %v5431 = vadd.f32 %v5187, %v5430
          %v5432 = vpop.f32.mrf.mxu0
          %v5433 = vadd.f32 %v5187, %v5432
          %5434 = vmatmul.bf16.gmra.mxu0 %v5284
          %v5435 = vpop.f32.mrf.mxu0
          %v5436 = vadd.f32 %v5187, %v5435
          %v5437 = vpop.f32.mrf.mxu0
          %v5438 = vadd.f32 %v5187, %v5437
          %5439 = vmatmul.bf16.gmra.mxu0 %v5287
          %v5440 = vpop.f32.mrf.mxu0
          %v5441 = vadd.f32 %v5187, %v5440
          %v5442 = vpop.f32.mrf.mxu0
          %v5443 = vadd.f32 %v5187, %v5442
          %5444 = vmatmul.bf16.gmra.mxu0 %v5290
          %v5445 = vpop.f32.mrf.mxu0
          %v5446 = vadd.f32 %v5187, %v5445
          %v5447 = vpop.f32.mrf.mxu0
          %v5448 = vadd.f32 %v5187, %v5447
          %5449 = vmatmul.bf16.gmra.mxu0 %v5293
          %v5450 = vpop.f32.mrf.mxu0
          %v5451 = vadd.f32 %v5187, %v5450
          %v5452 = vpop.f32.mrf.mxu0
          %v5453 = vadd.f32 %v5187, %v5452
          %5454 = vmatmul.bf16.gmra.mxu0 %v5296
          %v5455 = vpop.f32.mrf.mxu0
          %v5456 = vadd.f32 %v5187, %v5455
          %v5457 = vpop.f32.mrf.mxu0
          %v5458 = vadd.f32 %v5187, %v5457
          %5459 = vmatmul.bf16.gmra.mxu0 %v5299
          %v5460 = vpop.f32.mrf.mxu0
          %v5461 = vadd.f32 %v5187, %v5460
          %v5462 = vpop.f32.mrf.mxu0
          %v5463 = vadd.f32 %v5187, %v5462
          %5464 = vmatmul.bf16.gmra.mxu0 %v5302
          %v5465 = vpop.f32.mrf.mxu0
          %v5466 = vadd.f32 %v5187, %v5465
          %v5467 = vpop.f32.mrf.mxu0
          %v5468 = vadd.f32 %v5187, %v5467
          %5469 = vmatmul.bf16.gmra.mxu0 %v5305
          %v5470 = vpop.f32.mrf.mxu0
          %v5471 = vadd.f32 %v5187, %v5470
          %v5472 = vpop.f32.mrf.mxu0
          %v5473 = vadd.f32 %v5187, %v5472
          %5474 = vmatmul.bf16.gmra.mxu0 %v5308
          %v5475 = vpop.f32.mrf.mxu0
          %v5476 = vadd.f32 %v5187, %v5475
          %v5477 = vpop.f32.mrf.mxu0
          %v5478 = vadd.f32 %v5187, %v5477
          %5479 = vmatmul.bf16.gmra.mxu0 %v5311
          %v5480 = vpop.f32.mrf.mxu0
          %v5481 = vadd.f32 %v5187, %v5480
          %v5482 = vpop.f32.mrf.mxu0
          %v5483 = vadd.f32 %v5187, %v5482
          %5484 = vmatmul.bf16.gmra.mxu0 %v5314
          %v5485 = vpop.f32.mrf.mxu0
          %v5486 = vadd.f32 %v5187, %v5485
          %v5487 = vpop.f32.mrf.mxu0
          %v5488 = vadd.f32 %v5187, %v5487
          %5489 = vmatmul.bf16.gmra.mxu0 %v5317
          %v5490 = vpop.f32.mrf.mxu0
          %v5491 = vadd.f32 %v5187, %v5490
          %v5492 = vpop.f32.mrf.mxu0
          %v5493 = vadd.f32 %v5187, %v5492
          %5494 = vmatmul.bf16.gmra.mxu0 %v5320
          %v5495 = vpop.f32.mrf.mxu0
          %v5496 = vadd.f32 %v5187, %v5495
          %v5497 = vpop.f32.mrf.mxu0
          %v5498 = vadd.f32 %v5187, %v5497
          %5499 = vdwg.mxu0
          %5500 = vmatpush.bf16.msra.mxu0 0
          %5501 = vmatpush.bf16.msra.mxu0 0
          %5502 = vmatpush.bf16.msra.mxu0 0
          %5503 = vmatpush.bf16.msra.mxu0 0
          %5504 = vmatpush.bf16.msra.mxu0 %v5256
          %5505 = vmatpush.bf16.msra.mxu0 %v5252
          %5506 = vmatpush.bf16.msra.mxu0 %v5248
          %5507 = vmatpush.bf16.msra.mxu0 %v5244
          %5508 = vmatmul.bf16.gmra.mxu0 %v5275
          %v5509 = vpop.f32.mrf.mxu0
          %v5510 = vadd.f32 %v5188, %v5509
          %v5511 = vpop.f32.mrf.mxu0
          %v5512 = vadd.f32 %v5188, %v5511
          %5513 = vmatmul.bf16.gmra.mxu0 %v5278
          %v5514 = vpop.f32.mrf.mxu0
          %v5515 = vadd.f32 %v5188, %v5514
          %v5516 = vpop.f32.mrf.mxu0
          %v5517 = vadd.f32 %v5188, %v5516
          %5518 = vmatmul.bf16.gmra.mxu0 %v5281
          %v5519 = vpop.f32.mrf.mxu0
          %v5520 = vadd.f32 %v5188, %v5519
          %v5521 = vpop.f32.mrf.mxu0
          %v5522 = vadd.f32 %v5188, %v5521
          %5523 = vmatmul.bf16.gmra.mxu0 %v5284
          %v5524 = vpop.f32.mrf.mxu0
          %v5525 = vadd.f32 %v5188, %v5524
          %v5526 = vpop.f32.mrf.mxu0
          %v5527 = vadd.f32 %v5188, %v5526
          %5528 = vmatmul.bf16.gmra.mxu0 %v5287
          %v5529 = vpop.f32.mrf.mxu0
          %v5530 = vadd.f32 %v5188, %v5529
          %v5531 = vpop.f32.mrf.mxu0
          %v5532 = vadd.f32 %v5188, %v5531
          %5533 = vmatmul.bf16.gmra.mxu0 %v5290
          %v5534 = vpop.f32.mrf.mxu0
          %v5535 = vadd.f32 %v5188, %v5534
          %v5536 = vpop.f32.mrf.mxu0
          %v5537 = vadd.f32 %v5188, %v5536
          %5538 = vmatmul.bf16.gmra.mxu0 %v5293
          %v5539 = vpop.f32.mrf.mxu0
          %v5540 = vadd.f32 %v5188, %v5539
          %v5541 = vpop.f32.mrf.mxu0
          %v5542 = vadd.f32 %v5188, %v5541
          %5543 = vmatmul.bf16.gmra.mxu0 %v5296
          %v5544 = vpop.f32.mrf.mxu0
          %v5545 = vadd.f32 %v5188, %v5544
          %v5546 = vpop.f32.mrf.mxu0
          %v5547 = vadd.f32 %v5188, %v5546
          %5548 = vmatmul.bf16.gmra.mxu0 %v5299
          %v5549 = vpop.f32.mrf.mxu0
          %v5550 = vadd.f32 %v5188, %v5549
          %v5551 = vpop.f32.mrf.mxu0
          %v5552 = vadd.f32 %v5188, %v5551
          %5553 = vmatmul.bf16.gmra.mxu0 %v5302
          %v5554 = vpop.f32.mrf.mxu0
          %v5555 = vadd.f32 %v5188, %v5554
          %v5556 = vpop.f32.mrf.mxu0
          %v5557 = vadd.f32 %v5188, %v5556
          %5558 = vmatmul.bf16.gmra.mxu0 %v5305
          %v5559 = vpop.f32.mrf.mxu0
          %v5560 = vadd.f32 %v5188, %v5559
          %v5561 = vpop.f32.mrf.mxu0
          %v5562 = vadd.f32 %v5188, %v5561
          %5563 = vmatmul.bf16.gmra.mxu0 %v5308
          %v5564 = vpop.f32.mrf.mxu0
          %v5565 = vadd.f32 %v5188, %v5564
          %v5566 = vpop.f32.mrf.mxu0
          %v5567 = vadd.f32 %v5188, %v5566
          %5568 = vmatmul.bf16.gmra.mxu0 %v5311
          %v5569 = vpop.f32.mrf.mxu0
          %v5570 = vadd.f32 %v5188, %v5569
          %v5571 = vpop.f32.mrf.mxu0
          %v5572 = vadd.f32 %v5188, %v5571
          %5573 = vmatmul.bf16.gmra.mxu0 %v5314
          %v5574 = vpop.f32.mrf.mxu0
          %v5575 = vadd.f32 %v5188, %v5574
          %v5576 = vpop.f32.mrf.mxu0
          %v5577 = vadd.f32 %v5188, %v5576
          %5578 = vmatmul.bf16.gmra.mxu0 %v5317
          %v5579 = vpop.f32.mrf.mxu0
          %v5580 = vadd.f32 %v5188, %v5579
          %v5581 = vpop.f32.mrf.mxu0
          %v5582 = vadd.f32 %v5188, %v5581
          %5583 = vmatmul.bf16.gmra.mxu0 %v5320
          %v5584 = vpop.f32.mrf.mxu0
          %v5585 = vadd.f32 %v5188, %v5584
          %v5586 = vpop.f32.mrf.mxu0
          %v5587 = vadd.f32 %v5188, %v5586
          %5588 = vdwg.mxu0
          %5589 = vmatpush.bf16.msra.mxu0 0
          %5590 = vmatpush.bf16.msra.mxu0 0
          %5591 = vmatpush.bf16.msra.mxu0 0
          %5592 = vmatpush.bf16.msra.mxu0 0
          %5593 = vmatpush.bf16.msra.mxu0 %v5257
          %5594 = vmatpush.bf16.msra.mxu0 %v5253
          %5595 = vmatpush.bf16.msra.mxu0 %v5249
          %5596 = vmatpush.bf16.msra.mxu0 %v5245
          %5597 = vmatmul.bf16.gmra.mxu0 %v5275
          %v5598 = vpop.f32.mrf.mxu0
          %v5599 = vadd.f32 %v5189, %v5598
          %v5600 = vpop.f32.mrf.mxu0
          %v5601 = vadd.f32 %v5189, %v5600
          %5602 = vmatmul.bf16.gmra.mxu0 %v5278
          %v5603 = vpop.f32.mrf.mxu0
          %v5604 = vadd.f32 %v5189, %v5603
          %v5605 = vpop.f32.mrf.mxu0
          %v5606 = vadd.f32 %v5189, %v5605
          %5607 = vmatmul.bf16.gmra.mxu0 %v5281
          %v5608 = vpop.f32.mrf.mxu0
          %v5609 = vadd.f32 %v5189, %v5608
          %v5610 = vpop.f32.mrf.mxu0
          %v5611 = vadd.f32 %v5189, %v5610
          %5612 = vmatmul.bf16.gmra.mxu0 %v5284
          %v5613 = vpop.f32.mrf.mxu0
          %v5614 = vadd.f32 %v5189, %v5613
          %v5615 = vpop.f32.mrf.mxu0
          %v5616 = vadd.f32 %v5189, %v5615
          %5617 = vmatmul.bf16.gmra.mxu0 %v5287
          %v5618 = vpop.f32.mrf.mxu0
          %v5619 = vadd.f32 %v5189, %v5618
          %v5620 = vpop.f32.mrf.mxu0
          %v5621 = vadd.f32 %v5189, %v5620
          %5622 = vmatmul.bf16.gmra.mxu0 %v5290
          %v5623 = vpop.f32.mrf.mxu0
          %v5624 = vadd.f32 %v5189, %v5623
          %v5625 = vpop.f32.mrf.mxu0
          %v5626 = vadd.f32 %v5189, %v5625
          %5627 = vmatmul.bf16.gmra.mxu0 %v5293
          %v5628 = vpop.f32.mrf.mxu0
          %v5629 = vadd.f32 %v5189, %v5628
          %v5630 = vpop.f32.mrf.mxu0
          %v5631 = vadd.f32 %v5189, %v5630
          %5632 = vmatmul.bf16.gmra.mxu0 %v5296
          %v5633 = vpop.f32.mrf.mxu0
          %v5634 = vadd.f32 %v5189, %v5633
          %v5635 = vpop.f32.mrf.mxu0
          %v5636 = vadd.f32 %v5189, %v5635
          %5637 = vmatmul.bf16.gmra.mxu0 %v5299
          %v5638 = vpop.f32.mrf.mxu0
          %v5639 = vadd.f32 %v5189, %v5638
          %v5640 = vpop.f32.mrf.mxu0
          %v5641 = vadd.f32 %v5189, %v5640
          %5642 = vmatmul.bf16.gmra.mxu0 %v5302
          %v5643 = vpop.f32.mrf.mxu0
          %v5644 = vadd.f32 %v5189, %v5643
          %v5645 = vpop.f32.mrf.mxu0
          %v5646 = vadd.f32 %v5189, %v5645
          %5647 = vmatmul.bf16.gmra.mxu0 %v5305
          %v5648 = vpop.f32.mrf.mxu0
          %v5649 = vadd.f32 %v5189, %v5648
          %v5650 = vpop.f32.mrf.mxu0
          %v5651 = vadd.f32 %v5189, %v5650
          %5652 = vmatmul.bf16.gmra.mxu0 %v5308
          %v5653 = vpop.f32.mrf.mxu0
          %v5654 = vadd.f32 %v5189, %v5653
          %v5655 = vpop.f32.mrf.mxu0
          %v5656 = vadd.f32 %v5189, %v5655
          %5657 = vmatmul.bf16.gmra.mxu0 %v5311
          %v5658 = vpop.f32.mrf.mxu0
          %v5659 = vadd.f32 %v5189, %v5658
          %v5660 = vpop.f32.mrf.mxu0
          %v5661 = vadd.f32 %v5189, %v5660
          %5662 = vmatmul.bf16.gmra.mxu0 %v5314
          %v5663 = vpop.f32.mrf.mxu0
          %v5664 = vadd.f32 %v5189, %v5663
          %v5665 = vpop.f32.mrf.mxu0
          %v5666 = vadd.f32 %v5189, %v5665
          %5667 = vmatmul.bf16.gmra.mxu0 %v5317
          %v5668 = vpop.f32.mrf.mxu0
          %v5669 = vadd.f32 %v5189, %v5668
          %v5670 = vpop.f32.mrf.mxu0
          %v5671 = vadd.f32 %v5189, %v5670
          %5672 = vmatmul.bf16.gmra.mxu0 %v5320
          %v5673 = vpop.f32.mrf.mxu0
          %v5674 = vadd.f32 %v5189, %v5673
          %v5675 = vpop.f32.mrf.mxu0
          %v5676 = vadd.f32 %v5189, %v5675
          %5677 = vdwg.mxu0
          %v5678 = vmax.f32 %v5332, 0.0
          %v5679 = vmax.f32 %v5421, 0.0
          %v5680 = vmax.f32 %v5510, 0.0
          %v5681 = vmax.f32 %v5599, 0.0
          %v5682 = vmax.f32 %v5334, 0.0
          %v5683 = vmax.f32 %v5423, 0.0
          %v5684 = vmax.f32 %v5512, 0.0
          %v5685 = vmax.f32 %v5601, 0.0
          %v5686 = vmax.f32 %v5337, 0.0
          %v5687 = vmax.f32 %v5426, 0.0
          %v5688 = vmax.f32 %v5515, 0.0
          %v5689 = vmax.f32 %v5604, 0.0
          %v5690 = vmax.f32 %v5339, 0.0
          %v5691 = vmax.f32 %v5428, 0.0
          %v5692 = vmax.f32 %v5517, 0.0
          %v5693 = vmax.f32 %v5606, 0.0
          %v5694 = vmax.f32 %v5342, 0.0
          %v5695 = vmax.f32 %v5431, 0.0
          %v5696 = vmax.f32 %v5520, 0.0
          %v5697 = vmax.f32 %v5609, 0.0
          %v5698 = vmax.f32 %v5344, 0.0
          %v5699 = vmax.f32 %v5433, 0.0
          %v5700 = vmax.f32 %v5522, 0.0
          %v5701 = vmax.f32 %v5611, 0.0
          %v5702 = vmax.f32 %v5347, 0.0
          %v5703 = vmax.f32 %v5436, 0.0
          %v5704 = vmax.f32 %v5525, 0.0
          %v5705 = vmax.f32 %v5614, 0.0
          %v5706 = vmax.f32 %v5349, 0.0
          %v5707 = vmax.f32 %v5438, 0.0
          %v5708 = vmax.f32 %v5527, 0.0
          %v5709 = vmax.f32 %v5616, 0.0
          %v5710 = vmax.f32 %v5352, 0.0
          %v5711 = vmax.f32 %v5441, 0.0
          %v5712 = vmax.f32 %v5530, 0.0
          %v5713 = vmax.f32 %v5619, 0.0
          %v5714 = vmax.f32 %v5354, 0.0
          %v5715 = vmax.f32 %v5443, 0.0
          %v5716 = vmax.f32 %v5532, 0.0
          %v5717 = vmax.f32 %v5621, 0.0
          %v5718 = vmax.f32 %v5357, 0.0
          %v5719 = vmax.f32 %v5446, 0.0
          %v5720 = vmax.f32 %v5535, 0.0
          %v5721 = vmax.f32 %v5624, 0.0
          %v5722 = vmax.f32 %v5359, 0.0
          %v5723 = vmax.f32 %v5448, 0.0
          %v5724 = vmax.f32 %v5537, 0.0
          %v5725 = vmax.f32 %v5626, 0.0
          %v5726 = vmax.f32 %v5362, 0.0
          %v5727 = vmax.f32 %v5451, 0.0
          %v5728 = vmax.f32 %v5540, 0.0
          %v5729 = vmax.f32 %v5629, 0.0
          %v5730 = vmax.f32 %v5364, 0.0
          %v5731 = vmax.f32 %v5453, 0.0
          %v5732 = vmax.f32 %v5542, 0.0
          %v5733 = vmax.f32 %v5631, 0.0
          %v5734 = vmax.f32 %v5367, 0.0
          %v5735 = vmax.f32 %v5456, 0.0
          %v5736 = vmax.f32 %v5545, 0.0
          %v5737 = vmax.f32 %v5634, 0.0
          %v5738 = vmax.f32 %v5369, 0.0
          %v5739 = vmax.f32 %v5458, 0.0
          %v5740 = vmax.f32 %v5547, 0.0
          %v5741 = vmax.f32 %v5636, 0.0
          %v5742 = vmax.f32 %v5372, 0.0
          %v5743 = vmax.f32 %v5461, 0.0
          %v5744 = vmax.f32 %v5550, 0.0
          %v5745 = vmax.f32 %v5639, 0.0
          %v5746 = vmax.f32 %v5374, 0.0
          %v5747 = vmax.f32 %v5463, 0.0
          %v5748 = vmax.f32 %v5552, 0.0
          %v5749 = vmax.f32 %v5641, 0.0
          %v5750 = vmax.f32 %v5377, 0.0
          %v5751 = vmax.f32 %v5466, 0.0
          %v5752 = vmax.f32 %v5555, 0.0
          %v5753 = vmax.f32 %v5644, 0.0
          %v5754 = vmax.f32 %v5379, 0.0
          %v5755 = vmax.f32 %v5468, 0.0
          %v5756 = vmax.f32 %v5557, 0.0
          %v5757 = vmax.f32 %v5646, 0.0
          %v5758 = vmax.f32 %v5382, 0.0
          %v5759 = vmax.f32 %v5471, 0.0
          %v5760 = vmax.f32 %v5560, 0.0
          %v5761 = vmax.f32 %v5649, 0.0
          %v5762 = vmax.f32 %v5384, 0.0
          %v5763 = vmax.f32 %v5473, 0.0
          %v5764 = vmax.f32 %v5562, 0.0
          %v5765 = vmax.f32 %v5651, 0.0
          %v5766 = vmax.f32 %v5387, 0.0
          %v5767 = vmax.f32 %v5476, 0.0
          %v5768 = vmax.f32 %v5565, 0.0
          %v5769 = vmax.f32 %v5654, 0.0
          %v5770 = vmax.f32 %v5389, 0.0
          %v5771 = vmax.f32 %v5478, 0.0
          %v5772 = vmax.f32 %v5567, 0.0
          %v5773 = vmax.f32 %v5656, 0.0
          %v5774 = vmax.f32 %v5392, 0.0
          %v5775 = vmax.f32 %v5481, 0.0
          %v5776 = vmax.f32 %v5570, 0.0
          %v5777 = vmax.f32 %v5659, 0.0
          %v5778 = vmax.f32 %v5394, 0.0
          %v5779 = vmax.f32 %v5483, 0.0
          %v5780 = vmax.f32 %v5572, 0.0
          %v5781 = vmax.f32 %v5661, 0.0
          %v5782 = vmax.f32 %v5397, 0.0
          %v5783 = vmax.f32 %v5486, 0.0
          %v5784 = vmax.f32 %v5575, 0.0
          %v5785 = vmax.f32 %v5664, 0.0
          %v5786 = vmax.f32 %v5399, 0.0
          %v5787 = vmax.f32 %v5488, 0.0
          %v5788 = vmax.f32 %v5577, 0.0
          %v5789 = vmax.f32 %v5666, 0.0
          %v5790 = vmax.f32 %v5402, 0.0
          %v5791 = vmax.f32 %v5491, 0.0
          %v5792 = vmax.f32 %v5580, 0.0
          %v5793 = vmax.f32 %v5669, 0.0
          %v5794 = vmax.f32 %v5404, 0.0
          %v5795 = vmax.f32 %v5493, 0.0
          %v5796 = vmax.f32 %v5582, 0.0
          %v5797 = vmax.f32 %v5671, 0.0
          %v5798 = vmax.f32 %v5407, 0.0
          %v5799 = vmax.f32 %v5496, 0.0
          %v5800 = vmax.f32 %v5585, 0.0
          %v5801 = vmax.f32 %v5674, 0.0
          %v5802 = vmax.f32 %v5409, 0.0
          %v5803 = vmax.f32 %v5498, 0.0
          %v5804 = vmax.f32 %v5587, 0.0
          %v5805 = vmax.f32 %v5676, 0.0
          %v5806 = vpack.c.bf16 %v5682, %v5678
          %v5807 = vpack.c.bf16 %v5683, %v5679
          %v5808 = vpack.c.bf16 %v5684, %v5680
          %v5809 = vpack.c.bf16 %v5685, %v5681
          %v5810 = vpack.c.bf16 %v5690, %v5686
          %v5811 = vpack.c.bf16 %v5691, %v5687
          %v5812 = vpack.c.bf16 %v5692, %v5688
          %v5813 = vpack.c.bf16 %v5693, %v5689
          %v5814 = vpack.c.bf16 %v5698, %v5694
          %v5815 = vpack.c.bf16 %v5699, %v5695
          %v5816 = vpack.c.bf16 %v5700, %v5696
          %v5817 = vpack.c.bf16 %v5701, %v5697
          %v5818 = vpack.c.bf16 %v5706, %v5702
          %v5819 = vpack.c.bf16 %v5707, %v5703
          %v5820 = vpack.c.bf16 %v5708, %v5704
          %v5821 = vpack.c.bf16 %v5709, %v5705
          %v5822 = vpack.c.bf16 %v5714, %v5710
          %v5823 = vpack.c.bf16 %v5715, %v5711
          %v5824 = vpack.c.bf16 %v5716, %v5712
          %v5825 = vpack.c.bf16 %v5717, %v5713
          %v5826 = vpack.c.bf16 %v5722, %v5718
          %v5827 = vpack.c.bf16 %v5723, %v5719
          %v5828 = vpack.c.bf16 %v5724, %v5720
          %v5829 = vpack.c.bf16 %v5725, %v5721
          %v5830 = vpack.c.bf16 %v5730, %v5726
          %v5831 = vpack.c.bf16 %v5731, %v5727
          %v5832 = vpack.c.bf16 %v5732, %v5728
          %v5833 = vpack.c.bf16 %v5733, %v5729
          %v5834 = vpack.c.bf16 %v5738, %v5734
          %v5835 = vpack.c.bf16 %v5739, %v5735
          %v5836 = vpack.c.bf16 %v5740, %v5736
          %v5837 = vpack.c.bf16 %v5741, %v5737
          %v5838 = vpack.c.bf16 %v5746, %v5742
          %v5839 = vpack.c.bf16 %v5747, %v5743
          %v5840 = vpack.c.bf16 %v5748, %v5744
          %v5841 = vpack.c.bf16 %v5749, %v5745
          %v5842 = vpack.c.bf16 %v5754, %v5750
          %v5843 = vpack.c.bf16 %v5755, %v5751
          %v5844 = vpack.c.bf16 %v5756, %v5752
          %v5845 = vpack.c.bf16 %v5757, %v5753
          %v5846 = vpack.c.bf16 %v5762, %v5758
          %v5847 = vpack.c.bf16 %v5763, %v5759
          %v5848 = vpack.c.bf16 %v5764, %v5760
          %v5849 = vpack.c.bf16 %v5765, %v5761
          %v5850 = vpack.c.bf16 %v5770, %v5766
          %v5851 = vpack.c.bf16 %v5771, %v5767
          %v5852 = vpack.c.bf16 %v5772, %v5768
          %v5853 = vpack.c.bf16 %v5773, %v5769
          %v5854 = vpack.c.bf16 %v5778, %v5774
          %v5855 = vpack.c.bf16 %v5779, %v5775
          %v5856 = vpack.c.bf16 %v5780, %v5776
          %v5857 = vpack.c.bf16 %v5781, %v5777
          %v5858 = vpack.c.bf16 %v5786, %v5782
          %v5859 = vpack.c.bf16 %v5787, %v5783
          %v5860 = vpack.c.bf16 %v5788, %v5784
          %v5861 = vpack.c.bf16 %v5789, %v5785
          %v5862 = vpack.c.bf16 %v5794, %v5790
          %v5863 = vpack.c.bf16 %v5795, %v5791
          %v5864 = vpack.c.bf16 %v5796, %v5792
          %v5865 = vpack.c.bf16 %v5797, %v5793
          %v5866 = vpack.c.bf16 %v5802, %v5798
          %v5867 = vpack.c.bf16 %v5803, %v5799
          %v5868 = vpack.c.bf16 %v5804, %v5800
          %v5869 = vpack.c.bf16 %v5805, %v5801
          %v5870 = vld [vmem:[#allocation12] sm:$0xff]
          %v5871 = vld [vmem:[#allocation12 + $0x8] sm:$0xff]
          %v5872 = vld [vmem:[#allocation12 + $0x10] sm:$0xff]
          %v5873 = vld [vmem:[#allocation12 + $0x18] sm:$0xff]
          %v5874 = vld [vmem:[#allocation12 + $0x20] sm:$0xff]
          %v5875 = vld [vmem:[#allocation12 + $0x28] sm:$0xff]
          %v5876 = vld [vmem:[#allocation12 + $0x30] sm:$0xff]
          %v5877 = vld [vmem:[#allocation12 + $0x38] sm:$0xff]
          %v5878 = vld [vmem:[#allocation12 + $0x40] sm:$0xff]
          %v5879 = vld [vmem:[#allocation12 + $0x48] sm:$0xff]
          %v5880 = vld [vmem:[#allocation12 + $0x50] sm:$0xff]
          %v5881 = vld [vmem:[#allocation12 + $0x58] sm:$0xff]
          %v5882 = vld [vmem:[#allocation12 + $0x60] sm:$0xff]
          %v5883 = vld [vmem:[#allocation12 + $0x68] sm:$0xff]
          %v5884 = vld [vmem:[#allocation12 + $0x70] sm:$0xff]
          %v5885 = vld [vmem:[#allocation12 + $0x78] sm:$0xff]
          %v5886 = vld [vmem:[#allocation12 + $0x80] sm:$0xff]
          %v5887 = vld [vmem:[#allocation12 + $0x88] sm:$0xff]
          %v5888 = vld [vmem:[#allocation12 + $0x90] sm:$0xff]
          %v5889 = vld [vmem:[#allocation12 + $0x98] sm:$0xff]
          %v5890 = vld [vmem:[#allocation12 + $0xa0] sm:$0xff]
          %v5891 = vld [vmem:[#allocation12 + $0xa8] sm:$0xff]
          %v5892 = vld [vmem:[#allocation12 + $0xb0] sm:$0xff]
          %v5893 = vld [vmem:[#allocation12 + $0xb8] sm:$0xff]
          %v5894 = vld [vmem:[#allocation12 + $0xc0] sm:$0xff]
          %v5895 = vld [vmem:[#allocation12 + $0xc8] sm:$0xff]
          %v5896 = vld [vmem:[#allocation12 + $0xd0] sm:$0xff]
          %v5897 = vld [vmem:[#allocation12 + $0xd8] sm:$0xff]
          %v5898 = vld [vmem:[#allocation12 + $0xe0] sm:$0xff]
          %v5899 = vld [vmem:[#allocation12 + $0xe8] sm:$0xff]
          %v5900 = vld [vmem:[#allocation12 + $0xf0] sm:$0xff]
          %v5901 = vld [vmem:[#allocation12 + $0xf8] sm:$0xff]
          %v5902 = vld [vmem:[#allocation12 + $0x100] sm:$0xff]
          %v5903 = vld [vmem:[#allocation12 + $0x108] sm:$0xff]
          %v5904 = vld [vmem:[#allocation12 + $0x110] sm:$0xff]
          %v5905 = vld [vmem:[#allocation12 + $0x118] sm:$0xff]
          %v5906 = vld [vmem:[#allocation12 + $0x120] sm:$0xff]
          %v5907 = vld [vmem:[#allocation12 + $0x128] sm:$0xff]
          %v5908 = vld [vmem:[#allocation12 + $0x130] sm:$0xff]
          %v5909 = vld [vmem:[#allocation12 + $0x138] sm:$0xff]
          %v5910 = vld [vmem:[#allocation12 + $0x140] sm:$0xff]
          %v5911 = vld [vmem:[#allocation12 + $0x148] sm:$0xff]
          %v5912 = vld [vmem:[#allocation12 + $0x150] sm:$0xff]
          %v5913 = vld [vmem:[#allocation12 + $0x158] sm:$0xff]
          %v5914 = vld [vmem:[#allocation12 + $0x160] sm:$0xff]
          %v5915 = vld [vmem:[#allocation12 + $0x168] sm:$0xff]
          %v5916 = vld [vmem:[#allocation12 + $0x170] sm:$0xff]
          %v5917 = vld [vmem:[#allocation12 + $0x178] sm:$0xff]
          %v5918 = vld [vmem:[#allocation12 + $0x180] sm:$0xff]
          %v5919 = vld [vmem:[#allocation12 + $0x188] sm:$0xff]
          %v5920 = vld [vmem:[#allocation12 + $0x190] sm:$0xff]
          %v5921 = vld [vmem:[#allocation12 + $0x198] sm:$0xff]
          %v5922 = vld [vmem:[#allocation12 + $0x1a0] sm:$0xff]
          %v5923 = vld [vmem:[#allocation12 + $0x1a8] sm:$0xff]
          %v5924 = vld [vmem:[#allocation12 + $0x1b0] sm:$0xff]
          %v5925 = vld [vmem:[#allocation12 + $0x1b8] sm:$0xff]
          %v5926 = vld [vmem:[#allocation12 + $0x1c0] sm:$0xff]
          %v5927 = vld [vmem:[#allocation12 + $0x1c8] sm:$0xff]
          %v5928 = vld [vmem:[#allocation12 + $0x1d0] sm:$0xff]
          %v5929 = vld [vmem:[#allocation12 + $0x1d8] sm:$0xff]
          %v5930 = vld [vmem:[#allocation12 + $0x1e0] sm:$0xff]
          %v5931 = vld [vmem:[#allocation12 + $0x1e8] sm:$0xff]
          %v5932 = vld [vmem:[#allocation12 + $0x1f0] sm:$0xff]
          %v5933 = vld [vmem:[#allocation12 + $0x1f8] sm:$0xff]
          %v5934 = vld [vmem:[%s13] sm:$0x3]
          %v5936 = vperm.slane %v5934, 0
          %v5937 = vperm.slane %v5934, 1
          %v6004 = vunpack.c.l.b16 %v5870
          %v6005 = vunpack.c.h.b16 %v5870
          %v6006 = vunpack.c.l.b16 %v5871
          %v6007 = vunpack.c.h.b16 %v5871
          %v6008 = vunpack.c.l.b16 %v5872
          %v6009 = vunpack.c.h.b16 %v5872
          %v6010 = vunpack.c.l.b16 %v5873
          %v6011 = vunpack.c.h.b16 %v5873
          %v6012 = vunpack.c.l.b16 %v5874
          %v6013 = vunpack.c.h.b16 %v5874
          %v6014 = vunpack.c.l.b16 %v5875
          %v6015 = vunpack.c.h.b16 %v5875
          %v6016 = vunpack.c.l.b16 %v5876
          %v6017 = vunpack.c.h.b16 %v5876
          %v6018 = vunpack.c.l.b16 %v5877
          %v6019 = vunpack.c.h.b16 %v5877
          %v6020 = vunpack.c.l.b16 %v5878
          %v6021 = vunpack.c.h.b16 %v5878
          %v6022 = vunpack.c.l.b16 %v5879
          %v6023 = vunpack.c.h.b16 %v5879
          %v6024 = vunpack.c.l.b16 %v5880
          %v6025 = vunpack.c.h.b16 %v5880
          %v6026 = vunpack.c.l.b16 %v5881
          %v6027 = vunpack.c.h.b16 %v5881
          %v6028 = vunpack.c.l.b16 %v5882
          %v6029 = vunpack.c.h.b16 %v5882
          %v6030 = vunpack.c.l.b16 %v5883
          %v6031 = vunpack.c.h.b16 %v5883
          %v6032 = vunpack.c.l.b16 %v5884
          %v6033 = vunpack.c.h.b16 %v5884
          %v6034 = vunpack.c.l.b16 %v5885
          %v6035 = vunpack.c.h.b16 %v5885
          %v6036 = vunpack.c.l.b16 %v5886
          %v6037 = vunpack.c.h.b16 %v5886
          %v6038 = vunpack.c.l.b16 %v5887
          %v6039 = vunpack.c.h.b16 %v5887
          %v6040 = vunpack.c.l.b16 %v5888
          %v6041 = vunpack.c.h.b16 %v5888
          %v6042 = vunpack.c.l.b16 %v5889
          %v6043 = vunpack.c.h.b16 %v5889
          %v6044 = vunpack.c.l.b16 %v5890
          %v6045 = vunpack.c.h.b16 %v5890
          %v6046 = vunpack.c.l.b16 %v5891
          %v6047 = vunpack.c.h.b16 %v5891
          %v6048 = vunpack.c.l.b16 %v5892
          %v6049 = vunpack.c.h.b16 %v5892
          %v6050 = vunpack.c.l.b16 %v5893
          %v6051 = vunpack.c.h.b16 %v5893
          %v6052 = vunpack.c.l.b16 %v5894
          %v6053 = vunpack.c.h.b16 %v5894
          %v6054 = vunpack.c.l.b16 %v5895
          %v6055 = vunpack.c.h.b16 %v5895
          %v6056 = vunpack.c.l.b16 %v5896
          %v6057 = vunpack.c.h.b16 %v5896
          %v6058 = vunpack.c.l.b16 %v5897
          %v6059 = vunpack.c.h.b16 %v5897
          %v6060 = vunpack.c.l.b16 %v5898
          %v6061 = vunpack.c.h.b16 %v5898
          %v6062 = vunpack.c.l.b16 %v5899
          %v6063 = vunpack.c.h.b16 %v5899
          %v6064 = vunpack.c.l.b16 %v5900
          %v6065 = vunpack.c.h.b16 %v5900
          %v6066 = vunpack.c.l.b16 %v5901
          %v6067 = vunpack.c.h.b16 %v5901
          %v6068 = vunpack.c.l.b16 %v5902
          %v6069 = vunpack.c.h.b16 %v5902
          %v6070 = vunpack.c.l.b16 %v5903
          %v6071 = vunpack.c.h.b16 %v5903
          %v6072 = vunpack.c.l.b16 %v5904
          %v6073 = vunpack.c.h.b16 %v5904
          %v6074 = vunpack.c.l.b16 %v5905
          %v6075 = vunpack.c.h.b16 %v5905
          %v6076 = vunpack.c.l.b16 %v5906
          %v6077 = vunpack.c.h.b16 %v5906
          %v6078 = vunpack.c.l.b16 %v5907
          %v6079 = vunpack.c.h.b16 %v5907
          %v6080 = vunpack.c.l.b16 %v5908
          %v6081 = vunpack.c.h.b16 %v5908
          %v6082 = vunpack.c.l.b16 %v5909
          %v6083 = vunpack.c.h.b16 %v5909
          %v6084 = vunpack.c.l.b16 %v5910
          %v6085 = vunpack.c.h.b16 %v5910
          %v6086 = vunpack.c.l.b16 %v5911
          %v6087 = vunpack.c.h.b16 %v5911
          %v6088 = vunpack.c.l.b16 %v5912
          %v6089 = vunpack.c.h.b16 %v5912
          %v6090 = vunpack.c.l.b16 %v5913
          %v6091 = vunpack.c.h.b16 %v5913
          %v6092 = vunpack.c.l.b16 %v5914
          %v6093 = vunpack.c.h.b16 %v5914
          %v6094 = vunpack.c.l.b16 %v5915
          %v6095 = vunpack.c.h.b16 %v5915
          %v6096 = vunpack.c.l.b16 %v5916
          %v6097 = vunpack.c.h.b16 %v5916
          %v6098 = vunpack.c.l.b16 %v5917
          %v6099 = vunpack.c.h.b16 %v5917
          %v6100 = vunpack.c.l.b16 %v5918
          %v6101 = vunpack.c.h.b16 %v5918
          %v6102 = vunpack.c.l.b16 %v5919
          %v6103 = vunpack.c.h.b16 %v5919
          %v6104 = vunpack.c.l.b16 %v5920
          %v6105 = vunpack.c.h.b16 %v5920
          %v6106 = vunpack.c.l.b16 %v5921
          %v6107 = vunpack.c.h.b16 %v5921
          %v6108 = vunpack.c.l.b16 %v5922
          %v6109 = vunpack.c.h.b16 %v5922
          %v6110 = vunpack.c.l.b16 %v5923
          %v6111 = vunpack.c.h.b16 %v5923
          %v6112 = vunpack.c.l.b16 %v5924
          %v6113 = vunpack.c.h.b16 %v5924
          %v6114 = vunpack.c.l.b16 %v5925
          %v6115 = vunpack.c.h.b16 %v5925
          %v6116 = vunpack.c.l.b16 %v5926
          %v6117 = vunpack.c.h.b16 %v5926
          %v6118 = vunpack.c.l.b16 %v5927
          %v6119 = vunpack.c.h.b16 %v5927
          %v6120 = vunpack.c.l.b16 %v5928
          %v6121 = vunpack.c.h.b16 %v5928
          %v6122 = vunpack.c.l.b16 %v5929
          %v6123 = vunpack.c.h.b16 %v5929
          %v6124 = vunpack.c.l.b16 %v5930
          %v6125 = vunpack.c.h.b16 %v5930
          %v6126 = vunpack.c.l.b16 %v5931
          %v6127 = vunpack.c.h.b16 %v5931
          %v6128 = vunpack.c.l.b16 %v5932
          %v6129 = vunpack.c.h.b16 %v5932
          %v6130 = vunpack.c.l.b16 %v5933
          %v6131 = vunpack.c.h.b16 %v5933
          %v6132 = vpack.c.b16 %v6006, %v6004
          %v6133 = vpack.c.b16 %v6007, %v6005
          %v6134 = vpack.c.b16 %v6010, %v6008
          %v6135 = vpack.c.b16 %v6011, %v6009
          %v6136 = vpack.c.b16 %v6014, %v6012
          %v6137 = vpack.c.b16 %v6015, %v6013
          %v6138 = vpack.c.b16 %v6018, %v6016
          %v6139 = vpack.c.b16 %v6019, %v6017
          %v6140 = vpack.c.b16 %v6022, %v6020
          %v6141 = vpack.c.b16 %v6023, %v6021
          %v6142 = vpack.c.b16 %v6026, %v6024
          %v6143 = vpack.c.b16 %v6027, %v6025
          %v6144 = vpack.c.b16 %v6030, %v6028
          %v6145 = vpack.c.b16 %v6031, %v6029
          %v6146 = vpack.c.b16 %v6034, %v6032
          %v6147 = vpack.c.b16 %v6035, %v6033
          %v6148 = vpack.c.b16 %v6038, %v6036
          %v6149 = vpack.c.b16 %v6039, %v6037
          %v6150 = vpack.c.b16 %v6042, %v6040
          %v6151 = vpack.c.b16 %v6043, %v6041
          %v6152 = vpack.c.b16 %v6046, %v6044
          %v6153 = vpack.c.b16 %v6047, %v6045
          %v6154 = vpack.c.b16 %v6050, %v6048
          %v6155 = vpack.c.b16 %v6051, %v6049
          %v6156 = vpack.c.b16 %v6054, %v6052
          %v6157 = vpack.c.b16 %v6055, %v6053
          %v6158 = vpack.c.b16 %v6058, %v6056
          %v6159 = vpack.c.b16 %v6059, %v6057
          %v6160 = vpack.c.b16 %v6062, %v6060
          %v6161 = vpack.c.b16 %v6063, %v6061
          %v6162 = vpack.c.b16 %v6066, %v6064
          %v6163 = vpack.c.b16 %v6067, %v6065
          %v6164 = vpack.c.b16 %v6070, %v6068
          %v6165 = vpack.c.b16 %v6071, %v6069
          %v6166 = vpack.c.b16 %v6074, %v6072
          %v6167 = vpack.c.b16 %v6075, %v6073
          %v6168 = vpack.c.b16 %v6078, %v6076
          %v6169 = vpack.c.b16 %v6079, %v6077
          %v6170 = vpack.c.b16 %v6082, %v6080
          %v6171 = vpack.c.b16 %v6083, %v6081
          %v6172 = vpack.c.b16 %v6086, %v6084
          %v6173 = vpack.c.b16 %v6087, %v6085
          %v6174 = vpack.c.b16 %v6090, %v6088
          %v6175 = vpack.c.b16 %v6091, %v6089
          %v6176 = vpack.c.b16 %v6094, %v6092
          %v6177 = vpack.c.b16 %v6095, %v6093
          %v6178 = vpack.c.b16 %v6098, %v6096
          %v6179 = vpack.c.b16 %v6099, %v6097
          %v6180 = vpack.c.b16 %v6102, %v6100
          %v6181 = vpack.c.b16 %v6103, %v6101
          %v6182 = vpack.c.b16 %v6106, %v6104
          %v6183 = vpack.c.b16 %v6107, %v6105
          %v6184 = vpack.c.b16 %v6110, %v6108
          %v6185 = vpack.c.b16 %v6111, %v6109
          %v6186 = vpack.c.b16 %v6114, %v6112
          %v6187 = vpack.c.b16 %v6115, %v6113
          %v6188 = vpack.c.b16 %v6118, %v6116
          %v6189 = vpack.c.b16 %v6119, %v6117
          %v6190 = vpack.c.b16 %v6122, %v6120
          %v6191 = vpack.c.b16 %v6123, %v6121
          %v6192 = vpack.c.b16 %v6126, %v6124
          %v6193 = vpack.c.b16 %v6127, %v6125
          %v6194 = vpack.c.b16 %v6130, %v6128
          %v6195 = vpack.c.b16 %v6131, %v6129
          %6260 = vmatpush.bf16.msra.mxu0 %v6146
          %6261 = vmatpush.bf16.msra.mxu0 %v6144
          %6262 = vmatpush.bf16.msra.mxu0 %v6142
          %6263 = vmatpush.bf16.msra.mxu0 %v6140
          %6264 = vmatpush.bf16.msra.mxu0 %v6138
          %6265 = vmatpush.bf16.msra.mxu0 %v6136
          %6266 = vmatpush.bf16.msra.mxu0 %v6134
          %6267 = vmatpush.bf16.msra.mxu0 %v6132
          %6268 = vmatmul.bf16.gmra.mxu0 %v5806
          %v6269 = vpop.f32.mrf.mxu0
          %v6270 = vadd.f32 %v5936, %v6269
          %v6271 = vpop.f32.mrf.mxu0
          %v6272 = vadd.f32 %v5936, %v6271
          %6273 = vmatmul.bf16.gmra.mxu0 %v5810
          %v6274 = vpop.f32.mrf.mxu0
          %v6275 = vadd.f32 %v5936, %v6274
          %v6276 = vpop.f32.mrf.mxu0
          %v6277 = vadd.f32 %v5936, %v6276
          %6278 = vmatmul.bf16.gmra.mxu0 %v5814
          %v6279 = vpop.f32.mrf.mxu0
          %v6280 = vadd.f32 %v5936, %v6279
          %v6281 = vpop.f32.mrf.mxu0
          %v6282 = vadd.f32 %v5936, %v6281
          %6283 = vmatmul.bf16.gmra.mxu0 %v5818
          %v6284 = vpop.f32.mrf.mxu0
          %v6285 = vadd.f32 %v5936, %v6284
          %v6286 = vpop.f32.mrf.mxu0
          %v6287 = vadd.f32 %v5936, %v6286
          %6288 = vmatmul.bf16.gmra.mxu0 %v5822
          %v6289 = vpop.f32.mrf.mxu0
          %v6290 = vadd.f32 %v5936, %v6289
          %v6291 = vpop.f32.mrf.mxu0
          %v6292 = vadd.f32 %v5936, %v6291
          %6293 = vmatmul.bf16.gmra.mxu0 %v5826
          %v6294 = vpop.f32.mrf.mxu0
          %v6295 = vadd.f32 %v5936, %v6294
          %v6296 = vpop.f32.mrf.mxu0
          %v6297 = vadd.f32 %v5936, %v6296
          %6298 = vmatmul.bf16.gmra.mxu0 %v5830
          %v6299 = vpop.f32.mrf.mxu0
          %v6300 = vadd.f32 %v5936, %v6299
          %v6301 = vpop.f32.mrf.mxu0
          %v6302 = vadd.f32 %v5936, %v6301
          %6303 = vmatmul.bf16.gmra.mxu0 %v5834
          %v6304 = vpop.f32.mrf.mxu0
          %v6305 = vadd.f32 %v5936, %v6304
          %v6306 = vpop.f32.mrf.mxu0
          %v6307 = vadd.f32 %v5936, %v6306
          %6308 = vmatmul.bf16.gmra.mxu0 %v5838
          %v6309 = vpop.f32.mrf.mxu0
          %v6310 = vadd.f32 %v5936, %v6309
          %v6311 = vpop.f32.mrf.mxu0
          %v6312 = vadd.f32 %v5936, %v6311
          %6313 = vmatmul.bf16.gmra.mxu0 %v5842
          %v6314 = vpop.f32.mrf.mxu0
          %v6315 = vadd.f32 %v5936, %v6314
          %v6316 = vpop.f32.mrf.mxu0
          %v6317 = vadd.f32 %v5936, %v6316
          %6318 = vmatmul.bf16.gmra.mxu0 %v5846
          %v6319 = vpop.f32.mrf.mxu0
          %v6320 = vadd.f32 %v5936, %v6319
          %v6321 = vpop.f32.mrf.mxu0
          %v6322 = vadd.f32 %v5936, %v6321
          %6323 = vmatmul.bf16.gmra.mxu0 %v5850
          %v6324 = vpop.f32.mrf.mxu0
          %v6325 = vadd.f32 %v5936, %v6324
          %v6326 = vpop.f32.mrf.mxu0
          %v6327 = vadd.f32 %v5936, %v6326
          %6328 = vmatmul.bf16.gmra.mxu0 %v5854
          %v6329 = vpop.f32.mrf.mxu0
          %v6330 = vadd.f32 %v5936, %v6329
          %v6331 = vpop.f32.mrf.mxu0
          %v6332 = vadd.f32 %v5936, %v6331
          %6333 = vmatmul.bf16.gmra.mxu0 %v5858
          %v6334 = vpop.f32.mrf.mxu0
          %v6335 = vadd.f32 %v5936, %v6334
          %v6336 = vpop.f32.mrf.mxu0
          %v6337 = vadd.f32 %v5936, %v6336
          %6338 = vmatmul.bf16.gmra.mxu0 %v5862
          %v6339 = vpop.f32.mrf.mxu0
          %v6340 = vadd.f32 %v5936, %v6339
          %v6341 = vpop.f32.mrf.mxu0
          %v6342 = vadd.f32 %v5936, %v6341
          %6343 = vmatmul.bf16.gmra.mxu0 %v5866
          %v6344 = vpop.f32.mrf.mxu0
          %v6345 = vadd.f32 %v5936, %v6344
          %v6346 = vpop.f32.mrf.mxu0
          %v6347 = vadd.f32 %v5936, %v6346
          %6348 = vdwg.mxu0
          %6349 = vmatpush.bf16.msra.mxu0 %v6162
          %6350 = vmatpush.bf16.msra.mxu0 %v6160
          %6351 = vmatpush.bf16.msra.mxu0 %v6158
          %6352 = vmatpush.bf16.msra.mxu0 %v6156
          %6353 = vmatpush.bf16.msra.mxu0 %v6154
          %6354 = vmatpush.bf16.msra.mxu0 %v6152
          %6355 = vmatpush.bf16.msra.mxu0 %v6150
          %6356 = vmatpush.bf16.msra.mxu0 %v6148
          %6357 = vmatmul.bf16.gmra.mxu0 %v5807
          %v6358 = vpop.f32.mrf.mxu0
          %v6359 = vadd.f32 %v6270, %v6358
          %v6360 = vpop.f32.mrf.mxu0
          %v6361 = vadd.f32 %v6272, %v6360
          %6362 = vmatmul.bf16.gmra.mxu0 %v5811
          %v6363 = vpop.f32.mrf.mxu0
          %v6364 = vadd.f32 %v6275, %v6363
          %v6365 = vpop.f32.mrf.mxu0
          %v6366 = vadd.f32 %v6277, %v6365
          %6367 = vmatmul.bf16.gmra.mxu0 %v5815
          %v6368 = vpop.f32.mrf.mxu0
          %v6369 = vadd.f32 %v6280, %v6368
          %v6370 = vpop.f32.mrf.mxu0
          %v6371 = vadd.f32 %v6282, %v6370
          %6372 = vmatmul.bf16.gmra.mxu0 %v5819
          %v6373 = vpop.f32.mrf.mxu0
          %v6374 = vadd.f32 %v6285, %v6373
          %v6375 = vpop.f32.mrf.mxu0
          %v6376 = vadd.f32 %v6287, %v6375
          %6377 = vmatmul.bf16.gmra.mxu0 %v5823
          %v6378 = vpop.f32.mrf.mxu0
          %v6379 = vadd.f32 %v6290, %v6378
          %v6380 = vpop.f32.mrf.mxu0
          %v6381 = vadd.f32 %v6292, %v6380
          %6382 = vmatmul.bf16.gmra.mxu0 %v5827
          %v6383 = vpop.f32.mrf.mxu0
          %v6384 = vadd.f32 %v6295, %v6383
          %v6385 = vpop.f32.mrf.mxu0
          %v6386 = vadd.f32 %v6297, %v6385
          %6387 = vmatmul.bf16.gmra.mxu0 %v5831
          %v6388 = vpop.f32.mrf.mxu0
          %v6389 = vadd.f32 %v6300, %v6388
          %v6390 = vpop.f32.mrf.mxu0
          %v6391 = vadd.f32 %v6302, %v6390
          %6392 = vmatmul.bf16.gmra.mxu0 %v5835
          %v6393 = vpop.f32.mrf.mxu0
          %v6394 = vadd.f32 %v6305, %v6393
          %v6395 = vpop.f32.mrf.mxu0
          %v6396 = vadd.f32 %v6307, %v6395
          %6397 = vmatmul.bf16.gmra.mxu0 %v5839
          %v6398 = vpop.f32.mrf.mxu0
          %v6399 = vadd.f32 %v6310, %v6398
          %v6400 = vpop.f32.mrf.mxu0
          %v6401 = vadd.f32 %v6312, %v6400
          %6402 = vmatmul.bf16.gmra.mxu0 %v5843
          %v6403 = vpop.f32.mrf.mxu0
          %v6404 = vadd.f32 %v6315, %v6403
          %v6405 = vpop.f32.mrf.mxu0
          %v6406 = vadd.f32 %v6317, %v6405
          %6407 = vmatmul.bf16.gmra.mxu0 %v5847
          %v6408 = vpop.f32.mrf.mxu0
          %v6409 = vadd.f32 %v6320, %v6408
          %v6410 = vpop.f32.mrf.mxu0
          %v6411 = vadd.f32 %v6322, %v6410
          %6412 = vmatmul.bf16.gmra.mxu0 %v5851
          %v6413 = vpop.f32.mrf.mxu0
          %v6414 = vadd.f32 %v6325, %v6413
          %v6415 = vpop.f32.mrf.mxu0
          %v6416 = vadd.f32 %v6327, %v6415
          %6417 = vmatmul.bf16.gmra.mxu0 %v5855
          %v6418 = vpop.f32.mrf.mxu0
          %v6419 = vadd.f32 %v6330, %v6418
          %v6420 = vpop.f32.mrf.mxu0
          %v6421 = vadd.f32 %v6332, %v6420
          %6422 = vmatmul.bf16.gmra.mxu0 %v5859
          %v6423 = vpop.f32.mrf.mxu0
          %v6424 = vadd.f32 %v6335, %v6423
          %v6425 = vpop.f32.mrf.mxu0
          %v6426 = vadd.f32 %v6337, %v6425
          %6427 = vmatmul.bf16.gmra.mxu0 %v5863
          %v6428 = vpop.f32.mrf.mxu0
          %v6429 = vadd.f32 %v6340, %v6428
          %v6430 = vpop.f32.mrf.mxu0
          %v6431 = vadd.f32 %v6342, %v6430
          %6432 = vmatmul.bf16.gmra.mxu0 %v5867
          %v6433 = vpop.f32.mrf.mxu0
          %v6434 = vadd.f32 %v6345, %v6433
          %v6435 = vpop.f32.mrf.mxu0
          %v6436 = vadd.f32 %v6347, %v6435
          %6437 = vdwg.mxu0
          %6438 = vmatpush.bf16.msra.mxu0 %v6178
          %6439 = vmatpush.bf16.msra.mxu0 %v6176
          %6440 = vmatpush.bf16.msra.mxu0 %v6174
          %6441 = vmatpush.bf16.msra.mxu0 %v6172
          %6442 = vmatpush.bf16.msra.mxu0 %v6170
          %6443 = vmatpush.bf16.msra.mxu0 %v6168
          %6444 = vmatpush.bf16.msra.mxu0 %v6166
          %6445 = vmatpush.bf16.msra.mxu0 %v6164
          %6446 = vmatmul.bf16.gmra.mxu0 %v5808
          %v6447 = vpop.f32.mrf.mxu0
          %v6448 = vadd.f32 %v6359, %v6447
          %v6449 = vpop.f32.mrf.mxu0
          %v6450 = vadd.f32 %v6361, %v6449
          %6451 = vmatmul.bf16.gmra.mxu0 %v5812
          %v6452 = vpop.f32.mrf.mxu0
          %v6453 = vadd.f32 %v6364, %v6452
          %v6454 = vpop.f32.mrf.mxu0
          %v6455 = vadd.f32 %v6366, %v6454
          %6456 = vmatmul.bf16.gmra.mxu0 %v5816
          %v6457 = vpop.f32.mrf.mxu0
          %v6458 = vadd.f32 %v6369, %v6457
          %v6459 = vpop.f32.mrf.mxu0
          %v6460 = vadd.f32 %v6371, %v6459
          %6461 = vmatmul.bf16.gmra.mxu0 %v5820
          %v6462 = vpop.f32.mrf.mxu0
          %v6463 = vadd.f32 %v6374, %v6462
          %v6464 = vpop.f32.mrf.mxu0
          %v6465 = vadd.f32 %v6376, %v6464
          %6466 = vmatmul.bf16.gmra.mxu0 %v5824
          %v6467 = vpop.f32.mrf.mxu0
          %v6468 = vadd.f32 %v6379, %v6467
          %v6469 = vpop.f32.mrf.mxu0
          %v6470 = vadd.f32 %v6381, %v6469
          %6471 = vmatmul.bf16.gmra.mxu0 %v5828
          %v6472 = vpop.f32.mrf.mxu0
          %v6473 = vadd.f32 %v6384, %v6472
          %v6474 = vpop.f32.mrf.mxu0
          %v6475 = vadd.f32 %v6386, %v6474
          %6476 = vmatmul.bf16.gmra.mxu0 %v5832
          %v6477 = vpop.f32.mrf.mxu0
          %v6478 = vadd.f32 %v6389, %v6477
          %v6479 = vpop.f32.mrf.mxu0
          %v6480 = vadd.f32 %v6391, %v6479
          %6481 = vmatmul.bf16.gmra.mxu0 %v5836
          %v6482 = vpop.f32.mrf.mxu0
          %v6483 = vadd.f32 %v6394, %v6482
          %v6484 = vpop.f32.mrf.mxu0
          %v6485 = vadd.f32 %v6396, %v6484
          %6486 = vmatmul.bf16.gmra.mxu0 %v5840
          %v6487 = vpop.f32.mrf.mxu0
          %v6488 = vadd.f32 %v6399, %v6487
          %v6489 = vpop.f32.mrf.mxu0
          %v6490 = vadd.f32 %v6401, %v6489
          %6491 = vmatmul.bf16.gmra.mxu0 %v5844
          %v6492 = vpop.f32.mrf.mxu0
          %v6493 = vadd.f32 %v6404, %v6492
          %v6494 = vpop.f32.mrf.mxu0
          %v6495 = vadd.f32 %v6406, %v6494
          %6496 = vmatmul.bf16.gmra.mxu0 %v5848
          %v6497 = vpop.f32.mrf.mxu0
          %v6498 = vadd.f32 %v6409, %v6497
          %v6499 = vpop.f32.mrf.mxu0
          %v6500 = vadd.f32 %v6411, %v6499
          %6501 = vmatmul.bf16.gmra.mxu0 %v5852
          %v6502 = vpop.f32.mrf.mxu0
          %v6503 = vadd.f32 %v6414, %v6502
          %v6504 = vpop.f32.mrf.mxu0
          %v6505 = vadd.f32 %v6416, %v6504
          %6506 = vmatmul.bf16.gmra.mxu0 %v5856
          %v6507 = vpop.f32.mrf.mxu0
          %v6508 = vadd.f32 %v6419, %v6507
          %v6509 = vpop.f32.mrf.mxu0
          %v6510 = vadd.f32 %v6421, %v6509
          %6511 = vmatmul.bf16.gmra.mxu0 %v5860
          %v6512 = vpop.f32.mrf.mxu0
          %v6513 = vadd.f32 %v6424, %v6512
          %v6514 = vpop.f32.mrf.mxu0
          %v6515 = vadd.f32 %v6426, %v6514
          %6516 = vmatmul.bf16.gmra.mxu0 %v5864
          %v6517 = vpop.f32.mrf.mxu0
          %v6518 = vadd.f32 %v6429, %v6517
          %v6519 = vpop.f32.mrf.mxu0
          %v6520 = vadd.f32 %v6431, %v6519
          %6521 = vmatmul.bf16.gmra.mxu0 %v5868
          %v6522 = vpop.f32.mrf.mxu0
          %v6523 = vadd.f32 %v6434, %v6522
          %v6524 = vpop.f32.mrf.mxu0
          %v6525 = vadd.f32 %v6436, %v6524
          %6526 = vdwg.mxu0
          %6527 = vmatpush.bf16.msra.mxu0 %v6194
          %6528 = vmatpush.bf16.msra.mxu0 %v6192
          %6529 = vmatpush.bf16.msra.mxu0 %v6190
          %6530 = vmatpush.bf16.msra.mxu0 %v6188
          %6531 = vmatpush.bf16.msra.mxu0 %v6186
          %6532 = vmatpush.bf16.msra.mxu0 %v6184
          %6533 = vmatpush.bf16.msra.mxu0 %v6182
          %6534 = vmatpush.bf16.msra.mxu0 %v6180
          %6535 = vmatmul.bf16.gmra.mxu0 %v5809
          %v6536 = vpop.f32.mrf.mxu0
          %v6537 = vadd.f32 %v6448, %v6536
          %v6538 = vpop.f32.mrf.mxu0
          %v6539 = vadd.f32 %v6450, %v6538
          %6540 = vmatmul.bf16.gmra.mxu0 %v5813
          %v6541 = vpop.f32.mrf.mxu0
          %v6542 = vadd.f32 %v6453, %v6541
          %v6543 = vpop.f32.mrf.mxu0
          %v6544 = vadd.f32 %v6455, %v6543
          %6545 = vmatmul.bf16.gmra.mxu0 %v5817
          %v6546 = vpop.f32.mrf.mxu0
          %v6547 = vadd.f32 %v6458, %v6546
          %v6548 = vpop.f32.mrf.mxu0
          %v6549 = vadd.f32 %v6460, %v6548
          %6550 = vmatmul.bf16.gmra.mxu0 %v5821
          %v6551 = vpop.f32.mrf.mxu0
          %v6552 = vadd.f32 %v6463, %v6551
          %v6553 = vpop.f32.mrf.mxu0
          %v6554 = vadd.f32 %v6465, %v6553
          %6555 = vmatmul.bf16.gmra.mxu0 %v5825
          %v6556 = vpop.f32.mrf.mxu0
          %v6557 = vadd.f32 %v6468, %v6556
          %v6558 = vpop.f32.mrf.mxu0
          %v6559 = vadd.f32 %v6470, %v6558
          %6560 = vmatmul.bf16.gmra.mxu0 %v5829
          %v6561 = vpop.f32.mrf.mxu0
          %v6562 = vadd.f32 %v6473, %v6561
          %v6563 = vpop.f32.mrf.mxu0
          %v6564 = vadd.f32 %v6475, %v6563
          %6565 = vmatmul.bf16.gmra.mxu0 %v5833
          %v6566 = vpop.f32.mrf.mxu0
          %v6567 = vadd.f32 %v6478, %v6566
          %v6568 = vpop.f32.mrf.mxu0
          %v6569 = vadd.f32 %v6480, %v6568
          %6570 = vmatmul.bf16.gmra.mxu0 %v5837
          %v6571 = vpop.f32.mrf.mxu0
          %v6572 = vadd.f32 %v6483, %v6571
          %v6573 = vpop.f32.mrf.mxu0
          %v6574 = vadd.f32 %v6485, %v6573
          %6575 = vmatmul.bf16.gmra.mxu0 %v5841
          %v6576 = vpop.f32.mrf.mxu0
          %v6577 = vadd.f32 %v6488, %v6576
          %v6578 = vpop.f32.mrf.mxu0
          %v6579 = vadd.f32 %v6490, %v6578
          %6580 = vmatmul.bf16.gmra.mxu0 %v5845
          %v6581 = vpop.f32.mrf.mxu0
          %v6582 = vadd.f32 %v6493, %v6581
          %v6583 = vpop.f32.mrf.mxu0
          %v6584 = vadd.f32 %v6495, %v6583
          %6585 = vmatmul.bf16.gmra.mxu0 %v5849
          %v6586 = vpop.f32.mrf.mxu0
          %v6587 = vadd.f32 %v6498, %v6586
          %v6588 = vpop.f32.mrf.mxu0
          %v6589 = vadd.f32 %v6500, %v6588
          %6590 = vmatmul.bf16.gmra.mxu0 %v5853
          %v6591 = vpop.f32.mrf.mxu0
          %v6592 = vadd.f32 %v6503, %v6591
          %v6593 = vpop.f32.mrf.mxu0
          %v6594 = vadd.f32 %v6505, %v6593
          %6595 = vmatmul.bf16.gmra.mxu0 %v5857
          %v6596 = vpop.f32.mrf.mxu0
          %v6597 = vadd.f32 %v6508, %v6596
          %v6598 = vpop.f32.mrf.mxu0
          %v6599 = vadd.f32 %v6510, %v6598
          %6600 = vmatmul.bf16.gmra.mxu0 %v5861
          %v6601 = vpop.f32.mrf.mxu0
          %v6602 = vadd.f32 %v6513, %v6601
          %v6603 = vpop.f32.mrf.mxu0
          %v6604 = vadd.f32 %v6515, %v6603
          %6605 = vmatmul.bf16.gmra.mxu0 %v5865
          %v6606 = vpop.f32.mrf.mxu0
          %v6607 = vadd.f32 %v6518, %v6606
          %v6608 = vpop.f32.mrf.mxu0
          %v6609 = vadd.f32 %v6520, %v6608
          %6610 = vmatmul.bf16.gmra.mxu0 %v5869
          %v6611 = vpop.f32.mrf.mxu0
          %v6612 = vadd.f32 %v6523, %v6611
          %v6613 = vpop.f32.mrf.mxu0
          %v6614 = vadd.f32 %v6525, %v6613
          %6615 = vdwg.mxu0
          %6616 = vmatpush.bf16.msra.mxu0 %v6147
          %6617 = vmatpush.bf16.msra.mxu0 %v6145
          %6618 = vmatpush.bf16.msra.mxu0 %v6143
          %6619 = vmatpush.bf16.msra.mxu0 %v6141
          %6620 = vmatpush.bf16.msra.mxu0 %v6139
          %6621 = vmatpush.bf16.msra.mxu0 %v6137
          %6622 = vmatpush.bf16.msra.mxu0 %v6135
          %6623 = vmatpush.bf16.msra.mxu0 %v6133
          %6624 = vmatmul.bf16.gmra.mxu0 %v5806
          %v6625 = vpop.f32.mrf.mxu0
          %v6626 = vadd.f32 %v5937, %v6625
          %v6627 = vpop.f32.mrf.mxu0
          %v6628 = vadd.f32 %v5937, %v6627
          %6629 = vmatmul.bf16.gmra.mxu0 %v5810
          %v6630 = vpop.f32.mrf.mxu0
          %v6631 = vadd.f32 %v5937, %v6630
          %v6632 = vpop.f32.mrf.mxu0
          %v6633 = vadd.f32 %v5937, %v6632
          %6634 = vmatmul.bf16.gmra.mxu0 %v5814
          %v6635 = vpop.f32.mrf.mxu0
          %v6636 = vadd.f32 %v5937, %v6635
          %v6637 = vpop.f32.mrf.mxu0
          %v6638 = vadd.f32 %v5937, %v6637
          %6639 = vmatmul.bf16.gmra.mxu0 %v5818
          %v6640 = vpop.f32.mrf.mxu0
          %v6641 = vadd.f32 %v5937, %v6640
          %v6642 = vpop.f32.mrf.mxu0
          %v6643 = vadd.f32 %v5937, %v6642
          %6644 = vmatmul.bf16.gmra.mxu0 %v5822
          %v6645 = vpop.f32.mrf.mxu0
          %v6646 = vadd.f32 %v5937, %v6645
          %v6647 = vpop.f32.mrf.mxu0
          %v6648 = vadd.f32 %v5937, %v6647
          %6649 = vmatmul.bf16.gmra.mxu0 %v5826
          %v6650 = vpop.f32.mrf.mxu0
          %v6651 = vadd.f32 %v5937, %v6650
          %v6652 = vpop.f32.mrf.mxu0
          %v6653 = vadd.f32 %v5937, %v6652
          %6654 = vmatmul.bf16.gmra.mxu0 %v5830
          %v6655 = vpop.f32.mrf.mxu0
          %v6656 = vadd.f32 %v5937, %v6655
          %v6657 = vpop.f32.mrf.mxu0
          %v6658 = vadd.f32 %v5937, %v6657
          %6659 = vmatmul.bf16.gmra.mxu0 %v5834
          %v6660 = vpop.f32.mrf.mxu0
          %v6661 = vadd.f32 %v5937, %v6660
          %v6662 = vpop.f32.mrf.mxu0
          %v6663 = vadd.f32 %v5937, %v6662
          %6664 = vmatmul.bf16.gmra.mxu0 %v5838
          %v6665 = vpop.f32.mrf.mxu0
          %v6666 = vadd.f32 %v5937, %v6665
          %v6667 = vpop.f32.mrf.mxu0
          %v6668 = vadd.f32 %v5937, %v6667
          %6669 = vmatmul.bf16.gmra.mxu0 %v5842
          %v6670 = vpop.f32.mrf.mxu0
          %v6671 = vadd.f32 %v5937, %v6670
          %v6672 = vpop.f32.mrf.mxu0
          %v6673 = vadd.f32 %v5937, %v6672
          %6674 = vmatmul.bf16.gmra.mxu0 %v5846
          %v6675 = vpop.f32.mrf.mxu0
          %v6676 = vadd.f32 %v5937, %v6675
          %v6677 = vpop.f32.mrf.mxu0
          %v6678 = vadd.f32 %v5937, %v6677
          %6679 = vmatmul.bf16.gmra.mxu0 %v5850
          %v6680 = vpop.f32.mrf.mxu0
          %v6681 = vadd.f32 %v5937, %v6680
          %v6682 = vpop.f32.mrf.mxu0
          %v6683 = vadd.f32 %v5937, %v6682
          %6684 = vmatmul.bf16.gmra.mxu0 %v5854
          %v6685 = vpop.f32.mrf.mxu0
          %v6686 = vadd.f32 %v5937, %v6685
          %v6687 = vpop.f32.mrf.mxu0
          %v6688 = vadd.f32 %v5937, %v6687
          %6689 = vmatmul.bf16.gmra.mxu0 %v5858
          %v6690 = vpop.f32.mrf.mxu0
          %v6691 = vadd.f32 %v5937, %v6690
          %v6692 = vpop.f32.mrf.mxu0
          %v6693 = vadd.f32 %v5937, %v6692
          %6694 = vmatmul.bf16.gmra.mxu0 %v5862
          %v6695 = vpop.f32.mrf.mxu0
          %v6696 = vadd.f32 %v5937, %v6695
          %v6697 = vpop.f32.mrf.mxu0
          %v6698 = vadd.f32 %v5937, %v6697
          %6699 = vmatmul.bf16.gmra.mxu0 %v5866
          %v6700 = vpop.f32.mrf.mxu0
          %v6701 = vadd.f32 %v5937, %v6700
          %v6702 = vpop.f32.mrf.mxu0
          %v6703 = vadd.f32 %v5937, %v6702
          %6704 = vdwg.mxu0
          %6705 = vmatpush.bf16.msra.mxu0 %v6163
          %6706 = vmatpush.bf16.msra.mxu0 %v6161
          %6707 = vmatpush.bf16.msra.mxu0 %v6159
          %6708 = vmatpush.bf16.msra.mxu0 %v6157
          %6709 = vmatpush.bf16.msra.mxu0 %v6155
          %6710 = vmatpush.bf16.msra.mxu0 %v6153
          %6711 = vmatpush.bf16.msra.mxu0 %v6151
          %6712 = vmatpush.bf16.msra.mxu0 %v6149
          %6713 = vmatmul.bf16.gmra.mxu0 %v5807
          %v6714 = vpop.f32.mrf.mxu0
          %v6715 = vadd.f32 %v6626, %v6714
          %v6716 = vpop.f32.mrf.mxu0
          %v6717 = vadd.f32 %v6628, %v6716
          %6718 = vmatmul.bf16.gmra.mxu0 %v5811
          %v6719 = vpop.f32.mrf.mxu0
          %v6720 = vadd.f32 %v6631, %v6719
          %v6721 = vpop.f32.mrf.mxu0
          %v6722 = vadd.f32 %v6633, %v6721
          %6723 = vmatmul.bf16.gmra.mxu0 %v5815
          %v6724 = vpop.f32.mrf.mxu0
          %v6725 = vadd.f32 %v6636, %v6724
          %v6726 = vpop.f32.mrf.mxu0
          %v6727 = vadd.f32 %v6638, %v6726
          %6728 = vmatmul.bf16.gmra.mxu0 %v5819
          %v6729 = vpop.f32.mrf.mxu0
          %v6730 = vadd.f32 %v6641, %v6729
          %v6731 = vpop.f32.mrf.mxu0
          %v6732 = vadd.f32 %v6643, %v6731
          %6733 = vmatmul.bf16.gmra.mxu0 %v5823
          %v6734 = vpop.f32.mrf.mxu0
          %v6735 = vadd.f32 %v6646, %v6734
          %v6736 = vpop.f32.mrf.mxu0
          %v6737 = vadd.f32 %v6648, %v6736
          %6738 = vmatmul.bf16.gmra.mxu0 %v5827
          %v6739 = vpop.f32.mrf.mxu0
          %v6740 = vadd.f32 %v6651, %v6739
          %v6741 = vpop.f32.mrf.mxu0
          %v6742 = vadd.f32 %v6653, %v6741
          %6743 = vmatmul.bf16.gmra.mxu0 %v5831
          %v6744 = vpop.f32.mrf.mxu0
          %v6745 = vadd.f32 %v6656, %v6744
          %v6746 = vpop.f32.mrf.mxu0
          %v6747 = vadd.f32 %v6658, %v6746
          %6748 = vmatmul.bf16.gmra.mxu0 %v5835
          %v6749 = vpop.f32.mrf.mxu0
          %v6750 = vadd.f32 %v6661, %v6749
          %v6751 = vpop.f32.mrf.mxu0
          %v6752 = vadd.f32 %v6663, %v6751
          %6753 = vmatmul.bf16.gmra.mxu0 %v5839
          %v6754 = vpop.f32.mrf.mxu0
          %v6755 = vadd.f32 %v6666, %v6754
          %v6756 = vpop.f32.mrf.mxu0
          %v6757 = vadd.f32 %v6668, %v6756
          %6758 = vmatmul.bf16.gmra.mxu0 %v5843
          %v6759 = vpop.f32.mrf.mxu0
          %v6760 = vadd.f32 %v6671, %v6759
          %v6761 = vpop.f32.mrf.mxu0
          %v6762 = vadd.f32 %v6673, %v6761
          %6763 = vmatmul.bf16.gmra.mxu0 %v5847
          %v6764 = vpop.f32.mrf.mxu0
          %v6765 = vadd.f32 %v6676, %v6764
          %v6766 = vpop.f32.mrf.mxu0
          %v6767 = vadd.f32 %v6678, %v6766
          %6768 = vmatmul.bf16.gmra.mxu0 %v5851
          %v6769 = vpop.f32.mrf.mxu0
          %v6770 = vadd.f32 %v6681, %v6769
          %v6771 = vpop.f32.mrf.mxu0
          %v6772 = vadd.f32 %v6683, %v6771
          %6773 = vmatmul.bf16.gmra.mxu0 %v5855
          %v6774 = vpop.f32.mrf.mxu0
          %v6775 = vadd.f32 %v6686, %v6774
          %v6776 = vpop.f32.mrf.mxu0
          %v6777 = vadd.f32 %v6688, %v6776
          %6778 = vmatmul.bf16.gmra.mxu0 %v5859
          %v6779 = vpop.f32.mrf.mxu0
          %v6780 = vadd.f32 %v6691, %v6779
          %v6781 = vpop.f32.mrf.mxu0
          %v6782 = vadd.f32 %v6693, %v6781
          %6783 = vmatmul.bf16.gmra.mxu0 %v5863
          %v6784 = vpop.f32.mrf.mxu0
          %v6785 = vadd.f32 %v6696, %v6784
          %v6786 = vpop.f32.mrf.mxu0
          %v6787 = vadd.f32 %v6698, %v6786
          %6788 = vmatmul.bf16.gmra.mxu0 %v5867
          %v6789 = vpop.f32.mrf.mxu0
          %v6790 = vadd.f32 %v6701, %v6789
          %v6791 = vpop.f32.mrf.mxu0
          %v6792 = vadd.f32 %v6703, %v6791
          %6793 = vdwg.mxu0
          %6794 = vmatpush.bf16.msra.mxu0 %v6179
          %6795 = vmatpush.bf16.msra.mxu0 %v6177
          %6796 = vmatpush.bf16.msra.mxu0 %v6175
          %6797 = vmatpush.bf16.msra.mxu0 %v6173
          %6798 = vmatpush.bf16.msra.mxu0 %v6171
          %6799 = vmatpush.bf16.msra.mxu0 %v6169
          %6800 = vmatpush.bf16.msra.mxu0 %v6167
          %6801 = vmatpush.bf16.msra.mxu0 %v6165
          %6802 = vmatmul.bf16.gmra.mxu0 %v5808
          %v6803 = vpop.f32.mrf.mxu0
          %v6804 = vadd.f32 %v6715, %v6803
          %v6805 = vpop.f32.mrf.mxu0
          %v6806 = vadd.f32 %v6717, %v6805
          %6807 = vmatmul.bf16.gmra.mxu0 %v5812
          %v6808 = vpop.f32.mrf.mxu0
          %v6809 = vadd.f32 %v6720, %v6808
          %v6810 = vpop.f32.mrf.mxu0
          %v6811 = vadd.f32 %v6722, %v6810
          %6812 = vmatmul.bf16.gmra.mxu0 %v5816
          %v6813 = vpop.f32.mrf.mxu0
          %v6814 = vadd.f32 %v6725, %v6813
          %v6815 = vpop.f32.mrf.mxu0
          %v6816 = vadd.f32 %v6727, %v6815
          %6817 = vmatmul.bf16.gmra.mxu0 %v5820
          %v6818 = vpop.f32.mrf.mxu0
          %v6819 = vadd.f32 %v6730, %v6818
          %v6820 = vpop.f32.mrf.mxu0
          %v6821 = vadd.f32 %v6732, %v6820
          %6822 = vmatmul.bf16.gmra.mxu0 %v5824
          %v6823 = vpop.f32.mrf.mxu0
          %v6824 = vadd.f32 %v6735, %v6823
          %v6825 = vpop.f32.mrf.mxu0
          %v6826 = vadd.f32 %v6737, %v6825
          %6827 = vmatmul.bf16.gmra.mxu0 %v5828
          %v6828 = vpop.f32.mrf.mxu0
          %v6829 = vadd.f32 %v6740, %v6828
          %v6830 = vpop.f32.mrf.mxu0
          %v6831 = vadd.f32 %v6742, %v6830
          %6832 = vmatmul.bf16.gmra.mxu0 %v5832
          %v6833 = vpop.f32.mrf.mxu0
          %v6834 = vadd.f32 %v6745, %v6833
          %v6835 = vpop.f32.mrf.mxu0
          %v6836 = vadd.f32 %v6747, %v6835
          %6837 = vmatmul.bf16.gmra.mxu0 %v5836
          %v6838 = vpop.f32.mrf.mxu0
          %v6839 = vadd.f32 %v6750, %v6838
          %v6840 = vpop.f32.mrf.mxu0
          %v6841 = vadd.f32 %v6752, %v6840
          %6842 = vmatmul.bf16.gmra.mxu0 %v5840
          %v6843 = vpop.f32.mrf.mxu0
          %v6844 = vadd.f32 %v6755, %v6843
          %v6845 = vpop.f32.mrf.mxu0
          %v6846 = vadd.f32 %v6757, %v6845
          %6847 = vmatmul.bf16.gmra.mxu0 %v5844
          %v6848 = vpop.f32.mrf.mxu0
          %v6849 = vadd.f32 %v6760, %v6848
          %v6850 = vpop.f32.mrf.mxu0
          %v6851 = vadd.f32 %v6762, %v6850
          %6852 = vmatmul.bf16.gmra.mxu0 %v5848
          %v6853 = vpop.f32.mrf.mxu0
          %v6854 = vadd.f32 %v6765, %v6853
          %v6855 = vpop.f32.mrf.mxu0
          %v6856 = vadd.f32 %v6767, %v6855
          %6857 = vmatmul.bf16.gmra.mxu0 %v5852
          %v6858 = vpop.f32.mrf.mxu0
          %v6859 = vadd.f32 %v6770, %v6858
          %v6860 = vpop.f32.mrf.mxu0
          %v6861 = vadd.f32 %v6772, %v6860
          %6862 = vmatmul.bf16.gmra.mxu0 %v5856
          %v6863 = vpop.f32.mrf.mxu0
          %v6864 = vadd.f32 %v6775, %v6863
          %v6865 = vpop.f32.mrf.mxu0
          %v6866 = vadd.f32 %v6777, %v6865
          %6867 = vmatmul.bf16.gmra.mxu0 %v5860
          %v6868 = vpop.f32.mrf.mxu0
          %v6869 = vadd.f32 %v6780, %v6868
          %v6870 = vpop.f32.mrf.mxu0
          %v6871 = vadd.f32 %v6782, %v6870
          %6872 = vmatmul.bf16.gmra.mxu0 %v5864
          %v6873 = vpop.f32.mrf.mxu0
          %v6874 = vadd.f32 %v6785, %v6873
          %v6875 = vpop.f32.mrf.mxu0
          %v6876 = vadd.f32 %v6787, %v6875
          %6877 = vmatmul.bf16.gmra.mxu0 %v5868
          %v6878 = vpop.f32.mrf.mxu0
          %v6879 = vadd.f32 %v6790, %v6878
          %v6880 = vpop.f32.mrf.mxu0
          %v6881 = vadd.f32 %v6792, %v6880
          %6882 = vdwg.mxu0
          %6883 = vmatpush.bf16.msra.mxu0 %v6195
          %6884 = vmatpush.bf16.msra.mxu0 %v6193
          %6885 = vmatpush.bf16.msra.mxu0 %v6191
          %6886 = vmatpush.bf16.msra.mxu0 %v6189
          %6887 = vmatpush.bf16.msra.mxu0 %v6187
          %6888 = vmatpush.bf16.msra.mxu0 %v6185
          %6889 = vmatpush.bf16.msra.mxu0 %v6183
          %6890 = vmatpush.bf16.msra.mxu0 %v6181
          %6891 = vmatmul.bf16.gmra.mxu0 %v5809
          %v6892 = vpop.f32.mrf.mxu0
          %v6893 = vadd.f32 %v6804, %v6892
          %v6894 = vpop.f32.mrf.mxu0
          %v6895 = vadd.f32 %v6806, %v6894
          %6896 = vmatmul.bf16.gmra.mxu0 %v5813
          %v6897 = vpop.f32.mrf.mxu0
          %v6898 = vadd.f32 %v6809, %v6897
          %v6899 = vpop.f32.mrf.mxu0
          %v6900 = vadd.f32 %v6811, %v6899
          %6901 = vmatmul.bf16.gmra.mxu0 %v5817
          %v6902 = vpop.f32.mrf.mxu0
          %v6903 = vadd.f32 %v6814, %v6902
          %v6904 = vpop.f32.mrf.mxu0
          %v6905 = vadd.f32 %v6816, %v6904
          %6906 = vmatmul.bf16.gmra.mxu0 %v5821
          %v6907 = vpop.f32.mrf.mxu0
          %v6908 = vadd.f32 %v6819, %v6907
          %v6909 = vpop.f32.mrf.mxu0
          %v6910 = vadd.f32 %v6821, %v6909
          %6911 = vmatmul.bf16.gmra.mxu0 %v5825
          %v6912 = vpop.f32.mrf.mxu0
          %v6913 = vadd.f32 %v6824, %v6912
          %v6914 = vpop.f32.mrf.mxu0
          %v6915 = vadd.f32 %v6826, %v6914
          %6916 = vmatmul.bf16.gmra.mxu0 %v5829
          %v6917 = vpop.f32.mrf.mxu0
          %v6918 = vadd.f32 %v6829, %v6917
          %v6919 = vpop.f32.mrf.mxu0
          %v6920 = vadd.f32 %v6831, %v6919
          %6921 = vmatmul.bf16.gmra.mxu0 %v5833
          %v6922 = vpop.f32.mrf.mxu0
          %v6923 = vadd.f32 %v6834, %v6922
          %v6924 = vpop.f32.mrf.mxu0
          %v6925 = vadd.f32 %v6836, %v6924
          %6926 = vmatmul.bf16.gmra.mxu0 %v5837
          %v6927 = vpop.f32.mrf.mxu0
          %v6928 = vadd.f32 %v6839, %v6927
          %v6929 = vpop.f32.mrf.mxu0
          %v6930 = vadd.f32 %v6841, %v6929
          %6931 = vmatmul.bf16.gmra.mxu0 %v5841
          %v6932 = vpop.f32.mrf.mxu0
          %v6933 = vadd.f32 %v6844, %v6932
          %v6934 = vpop.f32.mrf.mxu0
          %v6935 = vadd.f32 %v6846, %v6934
          %6936 = vmatmul.bf16.gmra.mxu0 %v5845
          %v6937 = vpop.f32.mrf.mxu0
          %v6938 = vadd.f32 %v6849, %v6937
          %v6939 = vpop.f32.mrf.mxu0
          %v6940 = vadd.f32 %v6851, %v6939
          %6941 = vmatmul.bf16.gmra.mxu0 %v5849
          %v6942 = vpop.f32.mrf.mxu0
          %v6943 = vadd.f32 %v6854, %v6942
          %v6944 = vpop.f32.mrf.mxu0
          %v6945 = vadd.f32 %v6856, %v6944
          %6946 = vmatmul.bf16.gmra.mxu0 %v5853
          %v6947 = vpop.f32.mrf.mxu0
          %v6948 = vadd.f32 %v6859, %v6947
          %v6949 = vpop.f32.mrf.mxu0
          %v6950 = vadd.f32 %v6861, %v6949
          %6951 = vmatmul.bf16.gmra.mxu0 %v5857
          %v6952 = vpop.f32.mrf.mxu0
          %v6953 = vadd.f32 %v6864, %v6952
          %v6954 = vpop.f32.mrf.mxu0
          %v6955 = vadd.f32 %v6866, %v6954
          %6956 = vmatmul.bf16.gmra.mxu0 %v5861
          %v6957 = vpop.f32.mrf.mxu0
          %v6958 = vadd.f32 %v6869, %v6957
          %v6959 = vpop.f32.mrf.mxu0
          %v6960 = vadd.f32 %v6871, %v6959
          %6961 = vmatmul.bf16.gmra.mxu0 %v5865
          %v6962 = vpop.f32.mrf.mxu0
          %v6963 = vadd.f32 %v6874, %v6962
          %v6964 = vpop.f32.mrf.mxu0
          %v6965 = vadd.f32 %v6876, %v6964
          %6966 = vmatmul.bf16.gmra.mxu0 %v5869
          %v6967 = vpop.f32.mrf.mxu0
          %v6968 = vadd.f32 %v6879, %v6967
          %v6969 = vpop.f32.mrf.mxu0
          %v6970 = vadd.f32 %v6881, %v6969
          %6971 = vdwg.mxu0
          %v6972 = vmax.f32 %v6537, 0.0
          %v6973 = vmax.f32 %v6893, 0.0
          %v6974 = vmax.f32 %v6539, 0.0
          %v6975 = vmax.f32 %v6895, 0.0
          %v6976 = vmax.f32 %v6542, 0.0
          %v6977 = vmax.f32 %v6898, 0.0
          %v6978 = vmax.f32 %v6544, 0.0
          %v6979 = vmax.f32 %v6900, 0.0
          %v6980 = vmax.f32 %v6547, 0.0
          %v6981 = vmax.f32 %v6903, 0.0
          %v6982 = vmax.f32 %v6549, 0.0
          %v6983 = vmax.f32 %v6905, 0.0
          %v6984 = vmax.f32 %v6552, 0.0
          %v6985 = vmax.f32 %v6908, 0.0
          %v6986 = vmax.f32 %v6554, 0.0
          %v6987 = vmax.f32 %v6910, 0.0
          %v6988 = vmax.f32 %v6557, 0.0
          %v6989 = vmax.f32 %v6913, 0.0
          %v6990 = vmax.f32 %v6559, 0.0
          %v6991 = vmax.f32 %v6915, 0.0
          %v6992 = vmax.f32 %v6562, 0.0
          %v6993 = vmax.f32 %v6918, 0.0
          %v6994 = vmax.f32 %v6564, 0.0
          %v6995 = vmax.f32 %v6920, 0.0
          %v6996 = vmax.f32 %v6567, 0.0
          %v6997 = vmax.f32 %v6923, 0.0
          %v6998 = vmax.f32 %v6569, 0.0
          %v6999 = vmax.f32 %v6925, 0.0
          %v7000 = vmax.f32 %v6572, 0.0
          %v7001 = vmax.f32 %v6928, 0.0
          %v7002 = vmax.f32 %v6574, 0.0
          %v7003 = vmax.f32 %v6930, 0.0
          %v7004 = vmax.f32 %v6577, 0.0
          %v7005 = vmax.f32 %v6933, 0.0
          %v7006 = vmax.f32 %v6579, 0.0
          %v7007 = vmax.f32 %v6935, 0.0
          %v7008 = vmax.f32 %v6582, 0.0
          %v7009 = vmax.f32 %v6938, 0.0
          %v7010 = vmax.f32 %v6584, 0.0
          %v7011 = vmax.f32 %v6940, 0.0
          %v7012 = vmax.f32 %v6587, 0.0
          %v7013 = vmax.f32 %v6943, 0.0
          %v7014 = vmax.f32 %v6589, 0.0
          %v7015 = vmax.f32 %v6945, 0.0
          %v7016 = vmax.f32 %v6592, 0.0
          %v7017 = vmax.f32 %v6948, 0.0
          %v7018 = vmax.f32 %v6594, 0.0
          %v7019 = vmax.f32 %v6950, 0.0
          %v7020 = vmax.f32 %v6597, 0.0
          %v7021 = vmax.f32 %v6953, 0.0
          %v7022 = vmax.f32 %v6599, 0.0
          %v7023 = vmax.f32 %v6955, 0.0
          %v7024 = vmax.f32 %v6602, 0.0
          %v7025 = vmax.f32 %v6958, 0.0
          %v7026 = vmax.f32 %v6604, 0.0
          %v7027 = vmax.f32 %v6960, 0.0
          %v7028 = vmax.f32 %v6607, 0.0
          %v7029 = vmax.f32 %v6963, 0.0
          %v7030 = vmax.f32 %v6609, 0.0
          %v7031 = vmax.f32 %v6965, 0.0
          %v7032 = vmax.f32 %v6612, 0.0
          %v7033 = vmax.f32 %v6968, 0.0
          %v7034 = vmax.f32 %v6614, 0.0
          %v7035 = vmax.f32 %v6970, 0.0
          %v7036 = vpack.c.bf16 %v6974, %v6972
          %v7037 = vpack.c.bf16 %v6975, %v6973
          %v7038 = vpack.c.bf16 %v6978, %v6976
          %v7039 = vpack.c.bf16 %v6979, %v6977
          %v7040 = vpack.c.bf16 %v6982, %v6980
          %v7041 = vpack.c.bf16 %v6983, %v6981
          %v7042 = vpack.c.bf16 %v6986, %v6984
          %v7043 = vpack.c.bf16 %v6987, %v6985
          %v7044 = vpack.c.bf16 %v6990, %v6988
          %v7045 = vpack.c.bf16 %v6991, %v6989
          %v7046 = vpack.c.bf16 %v6994, %v6992
          %v7047 = vpack.c.bf16 %v6995, %v6993
          %v7048 = vpack.c.bf16 %v6998, %v6996
          %v7049 = vpack.c.bf16 %v6999, %v6997
          %v7050 = vpack.c.bf16 %v7002, %v7000
          %v7051 = vpack.c.bf16 %v7003, %v7001
          %v7052 = vpack.c.bf16 %v7006, %v7004
          %v7053 = vpack.c.bf16 %v7007, %v7005
          %v7054 = vpack.c.bf16 %v7010, %v7008
          %v7055 = vpack.c.bf16 %v7011, %v7009
          %v7056 = vpack.c.bf16 %v7014, %v7012
          %v7057 = vpack.c.bf16 %v7015, %v7013
          %v7058 = vpack.c.bf16 %v7018, %v7016
          %v7059 = vpack.c.bf16 %v7019, %v7017
          %v7060 = vpack.c.bf16 %v7022, %v7020
          %v7061 = vpack.c.bf16 %v7023, %v7021
          %v7062 = vpack.c.bf16 %v7026, %v7024
          %v7063 = vpack.c.bf16 %v7027, %v7025
          %v7064 = vpack.c.bf16 %v7030, %v7028
          %v7065 = vpack.c.bf16 %v7031, %v7029
          %v7066 = vpack.c.bf16 %v7034, %v7032
          %v7067 = vpack.c.bf16 %v7035, %v7033
          %v7068 = vld [vmem:[#allocation14] sm:$0xf]
          %v7069 = vld [vmem:[#allocation14 + $0x4] sm:$0xf]
          %v7070 = vld [vmem:[#allocation14 + $0x8] sm:$0xf]
          %v7071 = vld [vmem:[#allocation14 + $0xc] sm:$0xf]
          %v7072 = vld [vmem:[#allocation14 + $0x10] sm:$0xf]
          %v7073 = vld [vmem:[#allocation14 + $0x14] sm:$0xf]
          %v7074 = vld [vmem:[#allocation14 + $0x18] sm:$0xf]
          %v7075 = vld [vmem:[#allocation14 + $0x1c] sm:$0xf]
          %v7076 = vld [vmem:[#allocation14 + $0x20] sm:$0xf]
          %v7077 = vld [vmem:[#allocation14 + $0x24] sm:$0xf]
          %v7078 = vld [vmem:[#allocation14 + $0x28] sm:$0xf]
          %v7079 = vld [vmem:[#allocation14 + $0x2c] sm:$0xf]
          %v7080 = vld [vmem:[#allocation14 + $0x30] sm:$0xf]
          %v7081 = vld [vmem:[#allocation14 + $0x34] sm:$0xf]
          %v7082 = vld [vmem:[#allocation14 + $0x38] sm:$0xf]
          %v7083 = vld [vmem:[#allocation14 + $0x3c] sm:$0xf]
          %v7084 = vld [vmem:[#allocation14 + $0x40] sm:$0xf]
          %v7085 = vld [vmem:[#allocation14 + $0x44] sm:$0xf]
          %v7086 = vld [vmem:[#allocation14 + $0x48] sm:$0xf]
          %v7087 = vld [vmem:[#allocation14 + $0x4c] sm:$0xf]
          %v7088 = vld [vmem:[#allocation14 + $0x50] sm:$0xf]
          %v7089 = vld [vmem:[#allocation14 + $0x54] sm:$0xf]
          %v7090 = vld [vmem:[#allocation14 + $0x58] sm:$0xf]
          %v7091 = vld [vmem:[#allocation14 + $0x5c] sm:$0xf]
          %v7092 = vld [vmem:[#allocation14 + $0x60] sm:$0xf]
          %v7093 = vld [vmem:[#allocation14 + $0x64] sm:$0xf]
          %v7094 = vld [vmem:[#allocation14 + $0x68] sm:$0xf]
          %v7095 = vld [vmem:[#allocation14 + $0x6c] sm:$0xf]
          %v7096 = vld [vmem:[#allocation14 + $0x70] sm:$0xf]
          %v7097 = vld [vmem:[#allocation14 + $0x74] sm:$0xf]
          %v7098 = vld [vmem:[#allocation14 + $0x78] sm:$0xf]
          %v7099 = vld [vmem:[#allocation14 + $0x7c] sm:$0xf]
          %v7100 = vld [vmem:[%s15] sm:$0x1]
          %v7102 = vperm.slane %v7100, 0
          %v7136 = vunpack.c.l.b16 %v7068
          %v7137 = vunpack.c.l.b16 %v7069
          %v7138 = vunpack.c.l.b16 %v7070
          %v7139 = vunpack.c.l.b16 %v7071
          %v7140 = vunpack.c.l.b16 %v7072
          %v7141 = vunpack.c.l.b16 %v7073
          %v7142 = vunpack.c.l.b16 %v7074
          %v7143 = vunpack.c.l.b16 %v7075
          %v7144 = vunpack.c.l.b16 %v7076
          %v7145 = vunpack.c.l.b16 %v7077
          %v7146 = vunpack.c.l.b16 %v7078
          %v7147 = vunpack.c.l.b16 %v7079
          %v7148 = vunpack.c.l.b16 %v7080
          %v7149 = vunpack.c.l.b16 %v7081
          %v7150 = vunpack.c.l.b16 %v7082
          %v7151 = vunpack.c.l.b16 %v7083
          %v7152 = vunpack.c.l.b16 %v7084
          %v7153 = vunpack.c.l.b16 %v7085
          %v7154 = vunpack.c.l.b16 %v7086
          %v7155 = vunpack.c.l.b16 %v7087
          %v7156 = vunpack.c.l.b16 %v7088
          %v7157 = vunpack.c.l.b16 %v7089
          %v7158 = vunpack.c.l.b16 %v7090
          %v7159 = vunpack.c.l.b16 %v7091
          %v7160 = vunpack.c.l.b16 %v7092
          %v7161 = vunpack.c.l.b16 %v7093
          %v7162 = vunpack.c.l.b16 %v7094
          %v7163 = vunpack.c.l.b16 %v7095
          %v7164 = vunpack.c.l.b16 %v7096
          %v7165 = vunpack.c.l.b16 %v7097
          %v7166 = vunpack.c.l.b16 %v7098
          %v7167 = vunpack.c.l.b16 %v7099
          %v7168 = vpack.c.b16 %v7137, %v7136
          %v7169 = vpack.c.b16 %v7139, %v7138
          %v7170 = vpack.c.b16 %v7141, %v7140
          %v7171 = vpack.c.b16 %v7143, %v7142
          %v7172 = vpack.c.b16 %v7145, %v7144
          %v7173 = vpack.c.b16 %v7147, %v7146
          %v7174 = vpack.c.b16 %v7149, %v7148
          %v7175 = vpack.c.b16 %v7151, %v7150
          %v7176 = vpack.c.b16 %v7153, %v7152
          %v7177 = vpack.c.b16 %v7155, %v7154
          %v7178 = vpack.c.b16 %v7157, %v7156
          %v7179 = vpack.c.b16 %v7159, %v7158
          %v7180 = vpack.c.b16 %v7161, %v7160
          %v7181 = vpack.c.b16 %v7163, %v7162
          %v7182 = vpack.c.b16 %v7165, %v7164
          %v7183 = vpack.c.b16 %v7167, %v7166
          %7200 = vmatpush.bf16.msra.mxu0 %v7175
          %7201 = vmatpush.bf16.msra.mxu0 %v7174
          %7202 = vmatpush.bf16.msra.mxu0 %v7173
          %7203 = vmatpush.bf16.msra.mxu0 %v7172
          %7204 = vmatpush.bf16.msra.mxu0 %v7171
          %7205 = vmatpush.bf16.msra.mxu0 %v7170
          %7206 = vmatpush.bf16.msra.mxu0 %v7169
          %7207 = vmatpush.bf16.msra.mxu0 %v7168
          %7208 = vmatmul.bf16.gmra.mxu0 %v7036
          %v7209 = vpop.f32.mrf.mxu0
          %v7210 = vadd.f32 %v7102, %v7209
          %v7211 = vpop.f32.mrf.mxu0
          %v7212 = vadd.f32 %v7102, %v7211
          %7213 = vmatmul.bf16.gmra.mxu0 %v7038
          %v7214 = vpop.f32.mrf.mxu0
          %v7215 = vadd.f32 %v7102, %v7214
          %v7216 = vpop.f32.mrf.mxu0
          %v7217 = vadd.f32 %v7102, %v7216
          %7218 = vmatmul.bf16.gmra.mxu0 %v7040
          %v7219 = vpop.f32.mrf.mxu0
          %v7220 = vadd.f32 %v7102, %v7219
          %v7221 = vpop.f32.mrf.mxu0
          %v7222 = vadd.f32 %v7102, %v7221
          %7223 = vmatmul.bf16.gmra.mxu0 %v7042
          %v7224 = vpop.f32.mrf.mxu0
          %v7225 = vadd.f32 %v7102, %v7224
          %v7226 = vpop.f32.mrf.mxu0
          %v7227 = vadd.f32 %v7102, %v7226
          %7228 = vmatmul.bf16.gmra.mxu0 %v7044
          %v7229 = vpop.f32.mrf.mxu0
          %v7230 = vadd.f32 %v7102, %v7229
          %v7231 = vpop.f32.mrf.mxu0
          %v7232 = vadd.f32 %v7102, %v7231
          %7233 = vmatmul.bf16.gmra.mxu0 %v7046
          %v7234 = vpop.f32.mrf.mxu0
          %v7235 = vadd.f32 %v7102, %v7234
          %v7236 = vpop.f32.mrf.mxu0
          %v7237 = vadd.f32 %v7102, %v7236
          %7238 = vmatmul.bf16.gmra.mxu0 %v7048
          %v7239 = vpop.f32.mrf.mxu0
          %v7240 = vadd.f32 %v7102, %v7239
          %v7241 = vpop.f32.mrf.mxu0
          %v7242 = vadd.f32 %v7102, %v7241
          %7243 = vmatmul.bf16.gmra.mxu0 %v7050
          %v7244 = vpop.f32.mrf.mxu0
          %v7245 = vadd.f32 %v7102, %v7244
          %v7246 = vpop.f32.mrf.mxu0
          %v7247 = vadd.f32 %v7102, %v7246
          %7248 = vmatmul.bf16.gmra.mxu0 %v7052
          %v7249 = vpop.f32.mrf.mxu0
          %v7250 = vadd.f32 %v7102, %v7249
          %v7251 = vpop.f32.mrf.mxu0
          %v7252 = vadd.f32 %v7102, %v7251
          %7253 = vmatmul.bf16.gmra.mxu0 %v7054
          %v7254 = vpop.f32.mrf.mxu0
          %v7255 = vadd.f32 %v7102, %v7254
          %v7256 = vpop.f32.mrf.mxu0
          %v7257 = vadd.f32 %v7102, %v7256
          %7258 = vmatmul.bf16.gmra.mxu0 %v7056
          %v7259 = vpop.f32.mrf.mxu0
          %v7260 = vadd.f32 %v7102, %v7259
          %v7261 = vpop.f32.mrf.mxu0
          %v7262 = vadd.f32 %v7102, %v7261
          %7263 = vmatmul.bf16.gmra.mxu0 %v7058
          %v7264 = vpop.f32.mrf.mxu0
          %v7265 = vadd.f32 %v7102, %v7264
          %v7266 = vpop.f32.mrf.mxu0
          %v7267 = vadd.f32 %v7102, %v7266
          %7268 = vmatmul.bf16.gmra.mxu0 %v7060
          %v7269 = vpop.f32.mrf.mxu0
          %v7270 = vadd.f32 %v7102, %v7269
          %v7271 = vpop.f32.mrf.mxu0
          %v7272 = vadd.f32 %v7102, %v7271
          %7273 = vmatmul.bf16.gmra.mxu0 %v7062
          %v7274 = vpop.f32.mrf.mxu0
          %v7275 = vadd.f32 %v7102, %v7274
          %v7276 = vpop.f32.mrf.mxu0
          %v7277 = vadd.f32 %v7102, %v7276
          %7278 = vmatmul.bf16.gmra.mxu0 %v7064
          %v7279 = vpop.f32.mrf.mxu0
          %v7280 = vadd.f32 %v7102, %v7279
          %v7281 = vpop.f32.mrf.mxu0
          %v7282 = vadd.f32 %v7102, %v7281
          %7283 = vmatmul.bf16.gmra.mxu0 %v7066
          %v7284 = vpop.f32.mrf.mxu0
          %v7285 = vadd.f32 %v7102, %v7284
          %v7286 = vpop.f32.mrf.mxu0
          %v7287 = vadd.f32 %v7102, %v7286
          %7288 = vdwg.mxu0
          %7289 = vmatpush.bf16.msra.mxu0 %v7183
          %7290 = vmatpush.bf16.msra.mxu0 %v7182
          %7291 = vmatpush.bf16.msra.mxu0 %v7181
          %7292 = vmatpush.bf16.msra.mxu0 %v7180
          %7293 = vmatpush.bf16.msra.mxu0 %v7179
          %7294 = vmatpush.bf16.msra.mxu0 %v7178
          %7295 = vmatpush.bf16.msra.mxu0 %v7177
          %7296 = vmatpush.bf16.msra.mxu0 %v7176
          %7297 = vmatmul.bf16.gmra.mxu0 %v7037
          %v7298 = vpop.f32.mrf.mxu0
          %v7299 = vadd.f32 %v7210, %v7298
          %v7300 = vpop.f32.mrf.mxu0
          %v7301 = vadd.f32 %v7212, %v7300
          %7302 = vmatmul.bf16.gmra.mxu0 %v7039
          %v7303 = vpop.f32.mrf.mxu0
          %v7304 = vadd.f32 %v7215, %v7303
          %v7305 = vpop.f32.mrf.mxu0
          %v7306 = vadd.f32 %v7217, %v7305
          %7307 = vmatmul.bf16.gmra.mxu0 %v7041
          %v7308 = vpop.f32.mrf.mxu0
          %v7309 = vadd.f32 %v7220, %v7308
          %v7310 = vpop.f32.mrf.mxu0
          %v7311 = vadd.f32 %v7222, %v7310
          %7312 = vmatmul.bf16.gmra.mxu0 %v7043
          %v7313 = vpop.f32.mrf.mxu0
          %v7314 = vadd.f32 %v7225, %v7313
          %v7315 = vpop.f32.mrf.mxu0
          %v7316 = vadd.f32 %v7227, %v7315
          %7317 = vmatmul.bf16.gmra.mxu0 %v7045
          %v7318 = vpop.f32.mrf.mxu0
          %v7319 = vadd.f32 %v7230, %v7318
          %v7320 = vpop.f32.mrf.mxu0
          %v7321 = vadd.f32 %v7232, %v7320
          %7322 = vmatmul.bf16.gmra.mxu0 %v7047
          %v7323 = vpop.f32.mrf.mxu0
          %v7324 = vadd.f32 %v7235, %v7323
          %v7325 = vpop.f32.mrf.mxu0
          %v7326 = vadd.f32 %v7237, %v7325
          %7327 = vmatmul.bf16.gmra.mxu0 %v7049
          %v7328 = vpop.f32.mrf.mxu0
          %v7329 = vadd.f32 %v7240, %v7328
          %v7330 = vpop.f32.mrf.mxu0
          %v7331 = vadd.f32 %v7242, %v7330
          %7332 = vmatmul.bf16.gmra.mxu0 %v7051
          %v7333 = vpop.f32.mrf.mxu0
          %v7334 = vadd.f32 %v7245, %v7333
          %v7335 = vpop.f32.mrf.mxu0
          %v7336 = vadd.f32 %v7247, %v7335
          %7337 = vmatmul.bf16.gmra.mxu0 %v7053
          %v7338 = vpop.f32.mrf.mxu0
          %v7339 = vadd.f32 %v7250, %v7338
          %v7340 = vpop.f32.mrf.mxu0
          %v7341 = vadd.f32 %v7252, %v7340
          %7342 = vmatmul.bf16.gmra.mxu0 %v7055
          %v7343 = vpop.f32.mrf.mxu0
          %v7344 = vadd.f32 %v7255, %v7343
          %v7345 = vpop.f32.mrf.mxu0
          %v7346 = vadd.f32 %v7257, %v7345
          %7347 = vmatmul.bf16.gmra.mxu0 %v7057
          %v7348 = vpop.f32.mrf.mxu0
          %v7349 = vadd.f32 %v7260, %v7348
          %v7350 = vpop.f32.mrf.mxu0
          %v7351 = vadd.f32 %v7262, %v7350
          %7352 = vmatmul.bf16.gmra.mxu0 %v7059
          %v7353 = vpop.f32.mrf.mxu0
          %v7354 = vadd.f32 %v7265, %v7353
          %v7355 = vpop.f32.mrf.mxu0
          %v7356 = vadd.f32 %v7267, %v7355
          %7357 = vmatmul.bf16.gmra.mxu0 %v7061
          %v7358 = vpop.f32.mrf.mxu0
          %v7359 = vadd.f32 %v7270, %v7358
          %v7360 = vpop.f32.mrf.mxu0
          %v7361 = vadd.f32 %v7272, %v7360
          %7362 = vmatmul.bf16.gmra.mxu0 %v7063
          %v7363 = vpop.f32.mrf.mxu0
          %v7364 = vadd.f32 %v7275, %v7363
          %v7365 = vpop.f32.mrf.mxu0
          %v7366 = vadd.f32 %v7277, %v7365
          %7367 = vmatmul.bf16.gmra.mxu0 %v7065
          %v7368 = vpop.f32.mrf.mxu0
          %v7369 = vadd.f32 %v7280, %v7368
          %v7370 = vpop.f32.mrf.mxu0
          %v7371 = vadd.f32 %v7282, %v7370
          %7372 = vmatmul.bf16.gmra.mxu0 %v7067
          %v7373 = vpop.f32.mrf.mxu0
          %v7374 = vadd.f32 %v7285, %v7373
          %v7375 = vpop.f32.mrf.mxu0
          %v7376 = vadd.f32 %v7287, %v7375
          %7377 = vdwg.mxu0
          %v7378 = vmax.f32 %v7299, 0.0
          %v7379 = vmax.f32 %v7301, 0.0
          %v7380 = vmax.f32 %v7304, 0.0
          %v7381 = vmax.f32 %v7306, 0.0
          %v7382 = vmax.f32 %v7309, 0.0
          %v7383 = vmax.f32 %v7311, 0.0
          %v7384 = vmax.f32 %v7314, 0.0
          %v7385 = vmax.f32 %v7316, 0.0
          %v7386 = vmax.f32 %v7319, 0.0
          %v7387 = vmax.f32 %v7321, 0.0
          %v7388 = vmax.f32 %v7324, 0.0
          %v7389 = vmax.f32 %v7326, 0.0
          %v7390 = vmax.f32 %v7329, 0.0
          %v7391 = vmax.f32 %v7331, 0.0
          %v7392 = vmax.f32 %v7334, 0.0
          %v7393 = vmax.f32 %v7336, 0.0
          %v7394 = vmax.f32 %v7339, 0.0
          %v7395 = vmax.f32 %v7341, 0.0
          %v7396 = vmax.f32 %v7344, 0.0
          %v7397 = vmax.f32 %v7346, 0.0
          %v7398 = vmax.f32 %v7349, 0.0
          %v7399 = vmax.f32 %v7351, 0.0
          %v7400 = vmax.f32 %v7354, 0.0
          %v7401 = vmax.f32 %v7356, 0.0
          %v7402 = vmax.f32 %v7359, 0.0
          %v7403 = vmax.f32 %v7361, 0.0
          %v7404 = vmax.f32 %v7364, 0.0
          %v7405 = vmax.f32 %v7366, 0.0
          %v7406 = vmax.f32 %v7369, 0.0
          %v7407 = vmax.f32 %v7371, 0.0
          %v7408 = vmax.f32 %v7374, 0.0
          %v7409 = vmax.f32 %v7376, 0.0
          %v7410 = vpack.c.bf16 %v7379, %v7378
          %v7411 = vpack.c.bf16 %v7381, %v7380
          %v7412 = vpack.c.bf16 %v7383, %v7382
          %v7413 = vpack.c.bf16 %v7385, %v7384
          %v7414 = vpack.c.bf16 %v7387, %v7386
          %v7415 = vpack.c.bf16 %v7389, %v7388
          %v7416 = vpack.c.bf16 %v7391, %v7390
          %v7417 = vpack.c.bf16 %v7393, %v7392
          %v7418 = vpack.c.bf16 %v7395, %v7394
          %v7419 = vpack.c.bf16 %v7397, %v7396
          %v7420 = vpack.c.bf16 %v7399, %v7398
          %v7421 = vpack.c.bf16 %v7401, %v7400
          %v7422 = vpack.c.bf16 %v7403, %v7402
          %v7423 = vpack.c.bf16 %v7405, %v7404
          %v7424 = vpack.c.bf16 %v7407, %v7406
          %v7425 = vpack.c.bf16 %v7409, %v7408
          %v7426 = vld [vmem:[#allocation15] sm:$0xf]
          %v7427 = vld [vmem:[#allocation15 + $0x4] sm:$0xf]
          %v7428 = vld [vmem:[#allocation15 + $0x8] sm:$0xf]
          %v7429 = vld [vmem:[#allocation15 + $0xc] sm:$0xf]
          %v7430 = vld [vmem:[#allocation15 + $0x10] sm:$0xf]
          %v7431 = vld [vmem:[#allocation15 + $0x14] sm:$0xf]
          %v7432 = vld [vmem:[#allocation15 + $0x18] sm:$0xf]
          %v7433 = vld [vmem:[#allocation15 + $0x1c] sm:$0xf]
          %v7434 = vld [vmem:[#allocation15 + $0x20] sm:$0xf]
          %v7435 = vld [vmem:[#allocation15 + $0x24] sm:$0xf]
          %v7436 = vld [vmem:[#allocation15 + $0x28] sm:$0xf]
          %v7437 = vld [vmem:[#allocation15 + $0x2c] sm:$0xf]
          %v7438 = vld [vmem:[#allocation15 + $0x30] sm:$0xf]
          %v7439 = vld [vmem:[#allocation15 + $0x34] sm:$0xf]
          %v7440 = vld [vmem:[#allocation15 + $0x38] sm:$0xf]
          %v7441 = vld [vmem:[#allocation15 + $0x3c] sm:$0xf]
          %v7442 = vld [vmem:[%s17] sm:$0x1]
          %v7444 = vperm.slane %v7442, 0
          %v7462 = vunpack.c.l.b16 %v7426
          %v7463 = vunpack.c.l.b16 %v7427
          %v7464 = vunpack.c.l.b16 %v7428
          %v7465 = vunpack.c.l.b16 %v7429
          %v7466 = vunpack.c.l.b16 %v7430
          %v7467 = vunpack.c.l.b16 %v7431
          %v7468 = vunpack.c.l.b16 %v7432
          %v7469 = vunpack.c.l.b16 %v7433
          %v7470 = vunpack.c.l.b16 %v7434
          %v7471 = vunpack.c.l.b16 %v7435
          %v7472 = vunpack.c.l.b16 %v7436
          %v7473 = vunpack.c.l.b16 %v7437
          %v7474 = vunpack.c.l.b16 %v7438
          %v7475 = vunpack.c.l.b16 %v7439
          %v7476 = vunpack.c.l.b16 %v7440
          %v7477 = vunpack.c.l.b16 %v7441
          %v7478 = vpack.c.b16 %v7463, %v7462
          %v7479 = vpack.c.b16 %v7465, %v7464
          %v7480 = vpack.c.b16 %v7467, %v7466
          %v7481 = vpack.c.b16 %v7469, %v7468
          %v7482 = vpack.c.b16 %v7471, %v7470
          %v7483 = vpack.c.b16 %v7473, %v7472
          %v7484 = vpack.c.b16 %v7475, %v7474
          %v7485 = vpack.c.b16 %v7477, %v7476
          %7494 = vmatpush.bf16.msra.mxu0 %v7485
          %7495 = vmatpush.bf16.msra.mxu0 %v7484
          %7496 = vmatpush.bf16.msra.mxu0 %v7483
          %7497 = vmatpush.bf16.msra.mxu0 %v7482
          %7498 = vmatpush.bf16.msra.mxu0 %v7481
          %7499 = vmatpush.bf16.msra.mxu0 %v7480
          %7500 = vmatpush.bf16.msra.mxu0 %v7479
          %7501 = vmatpush.bf16.msra.mxu0 %v7478
          %7502 = vmatmul.bf16.gmra.mxu0 %v7410
          %v7503 = vpop.f32.mrf.mxu0
          %v7504 = vadd.f32 %v7444, %v7503
          %v7505 = vpop.f32.mrf.mxu0
          %v7506 = vadd.f32 %v7444, %v7505
          %7507 = vmatmul.bf16.gmra.mxu0 %v7411
          %v7508 = vpop.f32.mrf.mxu0
          %v7509 = vadd.f32 %v7444, %v7508
          %v7510 = vpop.f32.mrf.mxu0
          %v7511 = vadd.f32 %v7444, %v7510
          %7512 = vmatmul.bf16.gmra.mxu0 %v7412
          %v7513 = vpop.f32.mrf.mxu0
          %v7514 = vadd.f32 %v7444, %v7513
          %v7515 = vpop.f32.mrf.mxu0
          %v7516 = vadd.f32 %v7444, %v7515
          %7517 = vmatmul.bf16.gmra.mxu0 %v7413
          %v7518 = vpop.f32.mrf.mxu0
          %v7519 = vadd.f32 %v7444, %v7518
          %v7520 = vpop.f32.mrf.mxu0
          %v7521 = vadd.f32 %v7444, %v7520
          %7522 = vmatmul.bf16.gmra.mxu0 %v7414
          %v7523 = vpop.f32.mrf.mxu0
          %v7524 = vadd.f32 %v7444, %v7523
          %v7525 = vpop.f32.mrf.mxu0
          %v7526 = vadd.f32 %v7444, %v7525
          %7527 = vmatmul.bf16.gmra.mxu0 %v7415
          %v7528 = vpop.f32.mrf.mxu0
          %v7529 = vadd.f32 %v7444, %v7528
          %v7530 = vpop.f32.mrf.mxu0
          %v7531 = vadd.f32 %v7444, %v7530
          %7532 = vmatmul.bf16.gmra.mxu0 %v7416
          %v7533 = vpop.f32.mrf.mxu0
          %v7534 = vadd.f32 %v7444, %v7533
          %v7535 = vpop.f32.mrf.mxu0
          %v7536 = vadd.f32 %v7444, %v7535
          %7537 = vmatmul.bf16.gmra.mxu0 %v7417
          %v7538 = vpop.f32.mrf.mxu0
          %v7539 = vadd.f32 %v7444, %v7538
          %v7540 = vpop.f32.mrf.mxu0
          %v7541 = vadd.f32 %v7444, %v7540
          %7542 = vmatmul.bf16.gmra.mxu0 %v7418
          %v7543 = vpop.f32.mrf.mxu0
          %v7544 = vadd.f32 %v7444, %v7543
          %v7545 = vpop.f32.mrf.mxu0
          %v7546 = vadd.f32 %v7444, %v7545
          %7547 = vmatmul.bf16.gmra.mxu0 %v7419
          %v7548 = vpop.f32.mrf.mxu0
          %v7549 = vadd.f32 %v7444, %v7548
          %v7550 = vpop.f32.mrf.mxu0
          %v7551 = vadd.f32 %v7444, %v7550
          %7552 = vmatmul.bf16.gmra.mxu0 %v7420
          %v7553 = vpop.f32.mrf.mxu0
          %v7554 = vadd.f32 %v7444, %v7553
          %v7555 = vpop.f32.mrf.mxu0
          %v7556 = vadd.f32 %v7444, %v7555
          %7557 = vmatmul.bf16.gmra.mxu0 %v7421
          %v7558 = vpop.f32.mrf.mxu0
          %v7559 = vadd.f32 %v7444, %v7558
          %v7560 = vpop.f32.mrf.mxu0
          %v7561 = vadd.f32 %v7444, %v7560
          %7562 = vmatmul.bf16.gmra.mxu0 %v7422
          %v7563 = vpop.f32.mrf.mxu0
          %v7564 = vadd.f32 %v7444, %v7563
          %v7565 = vpop.f32.mrf.mxu0
          %v7566 = vadd.f32 %v7444, %v7565
          %7567 = vmatmul.bf16.gmra.mxu0 %v7423
          %v7568 = vpop.f32.mrf.mxu0
          %v7569 = vadd.f32 %v7444, %v7568
          %v7570 = vpop.f32.mrf.mxu0
          %v7571 = vadd.f32 %v7444, %v7570
          %7572 = vmatmul.bf16.gmra.mxu0 %v7424
          %v7573 = vpop.f32.mrf.mxu0
          %v7574 = vadd.f32 %v7444, %v7573
          %v7575 = vpop.f32.mrf.mxu0
          %v7576 = vadd.f32 %v7444, %v7575
          %7577 = vmatmul.bf16.gmra.mxu0 %v7425
          %v7578 = vpop.f32.mrf.mxu0
          %v7579 = vadd.f32 %v7444, %v7578
          %v7580 = vpop.f32.mrf.mxu0
          %v7581 = vadd.f32 %v7444, %v7580
          %7582 = vdwg.mxu0
          %7583 = vst [vmem:[%s755] sm:$0xff] %v7504
          %7584 = vst [vmem:[%s755 + $0x8] sm:$0xff] %v7506
          %7585 = vst [vmem:[%s755 + $0x10] sm:$0xff] %v7509
          %7586 = vst [vmem:[%s755 + $0x18] sm:$0xff] %v7511
          %7587 = vst [vmem:[%s755 + $0x20] sm:$0xff] %v7514
          %7588 = vst [vmem:[%s755 + $0x28] sm:$0xff] %v7516
          %7589 = vst [vmem:[%s755 + $0x30] sm:$0xff] %v7519
          %7590 = vst [vmem:[%s755 + $0x38] sm:$0xff] %v7521
          %7591 = vst [vmem:[%s755 + $0x40] sm:$0xff] %v7524
          %7592 = vst [vmem:[%s755 + $0x48] sm:$0xff] %v7526
          %7593 = vst [vmem:[%s755 + $0x50] sm:$0xff] %v7529
          %7594 = vst [vmem:[%s755 + $0x58] sm:$0xff] %v7531
          %7595 = vst [vmem:[%s755 + $0x60] sm:$0xff] %v7534
          %7596 = vst [vmem:[%s755 + $0x68] sm:$0xff] %v7536
          %7597 = vst [vmem:[%s755 + $0x70] sm:$0xff] %v7539
          %7598 = vst [vmem:[%s755 + $0x78] sm:$0xff] %v7541
          %7599 = vst [vmem:[%s755 + $0x80] sm:$0xff] %v7544
          %7600 = vst [vmem:[%s755 + $0x88] sm:$0xff] %v7546
          %7601 = vst [vmem:[%s755 + $0x90] sm:$0xff] %v7549
          %7602 = vst [vmem:[%s755 + $0x98] sm:$0xff] %v7551
          %7603 = vst [vmem:[%s755 + $0xa0] sm:$0xff] %v7554
          %7604 = vst [vmem:[%s755 + $0xa8] sm:$0xff] %v7556
          %7605 = vst [vmem:[%s755 + $0xb0] sm:$0xff] %v7559
          %7606 = vst [vmem:[%s755 + $0xb8] sm:$0xff] %v7561
          %7607 = vst [vmem:[%s755 + $0xc0] sm:$0xff] %v7564
          %7608 = vst [vmem:[%s755 + $0xc8] sm:$0xff] %v7566
          %7609 = vst [vmem:[%s755 + $0xd0] sm:$0xff] %v7569
          %7610 = vst [vmem:[%s755 + $0xd8] sm:$0xff] %v7571
          %7611 = vst [vmem:[%s755 + $0xe0] sm:$0xff] %v7574
          %7612 = vst [vmem:[%s755 + $0xe8] sm:$0xff] %v7576
          %7613 = vst [vmem:[%s755 + $0xf0] sm:$0xff] %v7579
          %7614 = vst [vmem:[%s755 + $0xf8] sm:$0xff] %v7581
        $region140: #{seg_forward.1} parent=91 // pred_fallthru
          _
        %s7615 = smul.u32 %s41, %s40
        %s7616 = smul.u32 32, %s7615
        %p7617 = scmp.lt.s32.totalorder %s39, 1
        %s7618 = scalar_select %p7617, %s39, 1
        %p7619 = scmp.lt.s32.totalorder %s7616, 31
        %s7620 = scalar_select %p7619, %s7616, 31
        %s7621 = smul.addr %s7618, 32
        %s7622 = sadd.s32 %s7620, %s7621
        %s7623 = smul.addr %s7622, 8
        %s7624 = scalar_lea.vmem %s18, %s7623
        // Predicated region
        $region141: #{seg_forward.1} parent=91 // pred_check
          %p7625 = pneg %p460
        $region142: #{seg_forward.1} parent=91 // pred_check_branch
          %7627 = sbr.rel (%p7625) target = $region144
        $region143: #{seg_forward.1} parent=91 // pred_region
          %s7628 = smul.u32 %s41, %s40
          %s7629 = smul.u32 32, %s7628
        $region144: #{seg_forward.1} parent=91 // pred_fallthru
          _
      $region92: #{seg_forward.1} parent=5 // pred_fallthru
        _
      %p7630 = scmp.le.s32.totalorder 2, %s29
      // Predicated region
      $region145: #{seg_forward.1} parent=5 // pred_check
        %p7631 = pneg %p7630
      $region146: #{seg_forward.1} parent=5 // pred_check_branch
        %7633 = sbr.rel (%p7631) target = $region148
      $region147: #{seg_forward.1} parent=5 // pred_region
        %s7634 = ssub.s32 %s29, 2
        // Predicated region
        $region149: #{seg_forward.1} parent=147 // pred_check
          %p7635 = pneg %p466
        $region150: #{seg_forward.1} parent=147 // pred_check_branch
          %7637 = sbr.rel (%p7635) target = $region152
        $region151: #{seg_forward.1} parent=147 // pred_region
          %s7638 = smul.u32 %s44, %s43
          %s7639 = smul.u32 32, %s7638
          %p7640 = scmp.lt.s32.totalorder %s42, 1
          %s7641 = scalar_select %p7640, %s42, 1
          %p7642 = scmp.lt.s32.totalorder %s7639, 31
          %s7643 = scalar_select %p7642, %s7639, 31
          %s7644 = smul.addr %s7641, 32
          %s7645 = sadd.s32 %s7643, %s7644
          %s7646 = smul.addr %s7645, 8
          %s7647 = scalar_lea.vmem %s18, %s7646
        $region152: #{seg_forward.1} parent=147 // pred_fallthru
          _
      $region148: #{seg_forward.1} parent=5 // pred_fallthru
        _
    $region6: #{seg_forward.1} parent=1 // loop_footer
      %s33 = sadd.s32 1, %s29
    $region7: #{seg_forward.1} parent=1 // loop_footer_branch
      %28 = sbr.rel target = $region3
    $region8: #{seg_forward.1} parent=1 // loop_exit
      _
    %7648 = vsyncpa [#allocation5], 1
    %s7649 = scalar_lea.sflag [#allocation5], 1
    %7650 = vsyncpa %s7649, 1
    %7651 = vsyncpa [#allocation7], 1
    %7652 = vsyncpa [#allocation10], 1
    %7653 = vsyncpa [#allocation13], 1
    %7654 = vsyncpa [#allocation16], 1

</llo_original>
